<compile_context>
chip_gen: v7x
topology: tpu7x:2x2x1
jax: 0.10.0
libtpu: 0.0.40
codegen_flags: <defaults>
</compile_context>

<pallas_src>
import functools

import jax
import jax.numpy as jnp
import numpy as np
from jax.experimental import pallas as pl
from jax.experimental.pallas import tpu as pltpu


def _round_up(n, m=128):
    return ((n + m - 1) // m) * m


def _pad_axis(a, target, axis):
    pad = target - a.shape[axis]
    if pad == 0:
        return a
    widths = [(0, 0)] * a.ndim
    widths[axis] = (0, pad)
    return jnp.pad(a, widths)


# --------------------------------------------------------------------------------------
# Fused kernel: one grid step == one image.
#   x_ref     : (H*W, Cinp)            bf16
#   w1_ref    : (Cinp, Cmidp)          bf16   b1_ref : (1, Cmidp) f32
#   w2_ref    : (9, Cmidp, Cmidp)      bf16   b2_ref : (1, Cmidp) f32   (per-tap weights)
#   w3_ref    : (Cmidp, Coutp)         bf16   b3_ref : (1, Coutp) f32
#   wd_ref    : (Cinp, Coutp)          bf16   bd_ref : (1, Coutp) f32
#   out_ref   : (H*W, Coutp)           bf16
#   h1pad_ref : (H+2, W+2, Cmidp)      bf16  VMEM scratch (zero-halo conv1 output)
# --------------------------------------------------------------------------------------
def bottleneck_kernel(x_ref, w1_ref, b1_ref, w2_ref, b2_ref, w3_ref, b3_ref,
                      wd_ref, bd_ref, out_ref, h1pad_ref, *, H, W, scaling_factor):
    bf16 = jnp.bfloat16
    Cm = h1pad_ref.shape[-1]                 # padded mid channels (multiple of 128)
    M = H * W
    KK = w2_ref.shape[0]                     # 9 taps

    # ---- conv1: 1x1 conv + bias + ReLU (bf16 MXU, f32 accumulate), cast bf16 once ----
    h1 = jnp.dot(x_ref[...], w1_ref[...],
                 preferred_element_type=jnp.float32) + b1_ref[...]
    h1 = jnp.maximum(h1, 0.0).astype(bf16)                            # (M, Cm)

    # ---- zero only the 1-pixel halo (interior is fully overwritten every step) ----
    h1pad_ref[0:1, :, :] = jnp.zeros((1, W + 2, Cm), bf16)            # top row
    h1pad_ref[H + 1:H + 2, :, :] = jnp.zeros((1, W + 2, Cm), bf16)    # bottom row
    h1pad_ref[1:H + 1, 0:1, :] = jnp.zeros((H, 1, Cm), bf16)          # left column
    h1pad_ref[1:H + 1, W + 1:W + 2, :] = jnp.zeros((H, 1, Cm), bf16)  # right column
    h1pad_ref[1:H + 1, 1:W + 1, :] = h1.reshape(H, W, Cm)             # interior

    # ---- conv2: 3x3 conv as 9 accumulated MXU matmuls straight from shifted windows ----
    acc = None
    for k in range(KK):
        dy, dx = divmod(k, 3)
        tap = h1pad_ref[dy:dy + H, dx:dx + W, :].reshape(M, Cm)       # bf16 window
        d = jnp.dot(tap, w2_ref[k], preferred_element_type=jnp.float32)
        acc = d if acc is None else acc + d
    h2 = jnp.maximum(acc + b2_ref[...], 0.0).astype(bf16)             # (M, Cm)

    # ---- conv3 + downsample residual + scaled add + final ReLU, row-chunked ----
    MC = 128 if (M > 128 and M % 128 == 0) else M
    for mi in range(0, M, MC):
        h3 = jnp.dot(h2[mi:mi + MC], w3_ref[...],
                     preferred_element_type=jnp.float32) + b3_ref[...]
        h3 = jnp.maximum(h3, 0.0)                                     # ReLU inside conv3
        res = jnp.dot(x_ref[mi:mi + MC, :], wd_ref[...],
                      preferred_element_type=jnp.float32) + bd_ref[...]
        if scaling_factor != 1.0:            # statically skip the multiply when == 1.0
            res = res * scaling_factor
        out_ref[mi:mi + MC, :] = jnp.maximum(h3 + res, 0.0).astype(out_ref.dtype)


def bottleneck_forward(x_nchw, params, *, scaling_factor=1.0):
    """Pallas implementation of BottleneckBlock.forward (stride=1, no batchnorm)."""
    W1, b1, W2, b2, W3, b3, Wd, bd = params
    N, Cin, H, Wsp = x_nchw.shape
    Cmid = W1.shape[0]
    Cout = W3.shape[0]
    K = W2.shape[2]
    assert K == 3, "this kernel is specialized to kernel_size=3, stride=1"
    M_img = H * Wsp
    assert M_img % 8 == 0, "H*W must be a multiple of 8 (sublane tiling)"

    # lane-dense channel padding (multiples of 128)
    Cinp, Cmidp, Coutp = _round_up(Cin), _round_up(Cmid), _round_up(Cout)

    # layout glue: NCHW -> NHWC -> (N*H*W, Cinp), bf16 for the MXU
    x2d = jnp.transpose(x_nchw, (0, 2, 3, 1)).reshape(N * M_img, Cin)
    x2d = _pad_axis(x2d, Cinp, 1).astype(jnp.bfloat16)

    # weights (OIHW) -> matmul layouts, zero-padded, bf16; biases stay f32
    w1m = _pad_axis(_pad_axis(W1[:, :, 0, 0].T, Cinp, 0), Cmidp, 1).astype(jnp.bfloat16)
    wdm = _pad_axis(_pad_axis(Wd[:, :, 0, 0].T, Cinp, 0), Coutp, 1).astype(jnp.bfloat16)
    w3m = _pad_axis(_pad_axis(W3[:, :, 0, 0].T, Cmidp, 0), Coutp, 1).astype(jnp.bfloat16)
    w2t = jnp.transpose(W2, (2, 3, 1, 0)).reshape(K * K, Cmid, Cmid)   # (tap, ci, co)
    w2m = _pad_axis(_pad_axis(w2t, Cmidp, 1), Cmidp, 2).astype(jnp.bfloat16)
    b1m = _pad_axis(b1[None, :], Cmidp, 1)
    b2m = _pad_axis(b2[None, :], Cmidp, 1)
    b3m = _pad_axis(b3[None, :], Coutp, 1)
    bdm = _pad_axis(bd[None, :], Coutp, 1)

    # explicit VMEM budget (double-buffered IO + weights + scratch), capped for v7x
    vmem_est = (
        2 * M_img * Cinp * 2 + 2 * M_img * Coutp * 2
        + 4 * (Cinp * Cmidp + K * K * Cmidp * Cmidp + Cmidp * Coutp + Cinp * Coutp)
        + 32 * (Cmidp + Coutp)
        + (H + 2) * (Wsp + 2) * Cmidp * 2
    )
    vmem_limit = int(min(48 * 2**20, max(32 * 2**20, 4 * vmem_est)))

    out2d = pl.pallas_call(
        functools.partial(bottleneck_kernel, H=H, W=Wsp,
                          scaling_factor=float(scaling_factor)),
        out_shape=jax.ShapeDtypeStruct((N * M_img, Coutp), jnp.bfloat16),
        grid=(N,),
        in_specs=[
            pl.BlockSpec((M_img, Cinp), lambda n: (n, 0)),               # x tile
            pl.BlockSpec((Cinp, Cmidp), lambda n: (0, 0)),               # w1
            pl.BlockSpec((1, Cmidp), lambda n: (0, 0)),                  # b1
            pl.BlockSpec((K * K, Cmidp, Cmidp), lambda n: (0, 0, 0)),    # w2 (per-tap)
            pl.BlockSpec((1, Cmidp), lambda n: (0, 0)),                  # b2
            pl.BlockSpec((Cmidp, Coutp), lambda n: (0, 0)),              # w3
            pl.BlockSpec((1, Coutp), lambda n: (0, 0)),                  # b3
            pl.BlockSpec((Cinp, Coutp), lambda n: (0, 0)),               # wd
            pl.BlockSpec((1, Coutp), lambda n: (0, 0)),                  # bd
        ],
        out_specs=pl.BlockSpec((M_img, Coutp), lambda n: (n, 0)),
        scratch_shapes=[
            pltpu.VMEM((H + 2, Wsp + 2, Cmidp), jnp.bfloat16),           # padded h1 image
        ],
        compiler_params=pltpu.CompilerParams(
            dimension_semantics=("parallel",),
            vmem_limit_bytes=vmem_limit),
    )(x2d, w1m, b1m, w2m, b2m, w3m, b3m, wdm, bdm)

    out = out2d.reshape(N, H, Wsp, Coutp)[..., :Cout]
    return jnp.transpose(out, (0, 3, 1, 2)).astype(x_nchw.dtype)


# --------------------------------------------------------------------------------------
# Pure-JAX f32 reference (same math, NCHW convs) for a correctness check.
# --------------------------------------------------------------------------------------
def ref_forward(x, params, scaling_factor=1.0):
    W1, b1, W2, b2, W3, b3, Wd, bd = params

    def c(x, w, b, pad):
        y = jax.lax.conv_general_dilated(
            x, w, (1, 1), pad, dimension_numbers=("NCHW", "OIHW", "NCHW"))
        return y + b[None, :, None, None]

    residual = c(x, Wd, bd, "VALID")
    h = jax.nn.relu(c(x, W1, b1, "VALID"))
    h = jax.nn.relu(c(h, W2, b2, [(1, 1), (1, 1)]))
    h = jax.nn.relu(c(h, W3, b3, "VALID"))
    return jax.nn.relu(h + residual * scaling_factor)


# --------------------------------------------------------------------------------------
# Deterministic parameter initialization (mirrors the PyTorch init scheme shapes).
# --------------------------------------------------------------------------------------
def init_params(key, in_channels, out_channels, kernel_size):
    mid = out_channels // 4
    ks = jax.random.split(key, 8)

    def kaiming(k, shape):                      # OIHW, fan_in = Ci * kh * kw
        fan_in = shape[1] * shape[2] * shape[3]
        return jax.random.normal(k, shape, jnp.float32) * jnp.sqrt(2.0 / fan_in)

    def xavier(k, shape):
        fan_in = shape[1] * shape[2] * shape[3]
        fan_out = shape[0] * shape[2] * shape[3]
        return jax.random.normal(k, shape, jnp.float32) * jnp.sqrt(2.0 / (fan_in + fan_out))

    def bias(k, fan_in, n):                     # PyTorch default conv bias init
        bound = 1.0 / np.sqrt(fan_in)
        return jax.random.uniform(k, (n,), jnp.float32, -bound, bound)

    W1 = kaiming(ks[0], (mid, in_channels, 1, 1))
    b1 = bias(ks[1], in_channels, mid)
    W2 = kaiming(ks[2], (mid, mid, kernel_size, kernel_size))
    b2 = bias(ks[3], mid * kernel_size * kernel_size, mid)
    W3 = kaiming(ks[4], (out_channels, mid, 1, 1))
    b3 = bias(ks[5], mid, out_channels)
    Wd = xavier(ks[6], (out_channels, in_channels, 1, 1))   # activation_fn=None -> xavier
    bd = bias(ks[7], in_channels, out_channels)
    return (W1, b1, W2, b2, W3, b3, Wd, bd)


if __name__ == "__main__":
    # Small shapes consistent with the module: batch=2, in_channels=4, out_channels=16,
    # kernel_size=3, stride=1, spatial 16x16.
    N, Cin, Cout, K, H, W = 2, 4, 16, 3, 16, 16

    key = jax.random.PRNGKey(0)
    kx, kp = jax.random.split(key)
    x = jax.random.normal(kx, (N, Cin, H, W), jnp.float32)
    params = init_params(kp, Cin, Cout, K)

    out = jax.block_until_ready(bottleneck_forward(x, params, scaling_factor=1.0))
    ref = jax.block_until_ready(ref_forward(x, params, scaling_factor=1.0))
    assert out.shape == (N, Cout, H, W)
    # bf16 MXU inputs with f32 accumulation + bf16 output store vs. an all-f32 reference.
    np.testing.assert_allclose(np.asarray(out), np.asarray(ref), atol=1e-1, rtol=3e-2)

    print("KERNEL_OK")
</pallas_src>

<mosaic_0001>
module attributes {stable_mosaic.version = 11 : i64} {
  func.func @bottleneck_kernel(%arg0: i32, %arg1: memref<256x128xbf16, #tpu.memory_space<vmem>>, %arg2: memref<128x128xbf16, #tpu.memory_space<vmem>>, %arg3: memref<1x128xf32, #tpu.memory_space<vmem>>, %arg4: memref<9x128x128xbf16, #tpu.memory_space<vmem>>, %arg5: memref<1x128xf32, #tpu.memory_space<vmem>>, %arg6: memref<128x128xbf16, #tpu.memory_space<vmem>>, %arg7: memref<1x128xf32, #tpu.memory_space<vmem>>, %arg8: memref<128x128xbf16, #tpu.memory_space<vmem>>, %arg9: memref<1x128xf32, #tpu.memory_space<vmem>>, %arg10: memref<256x128xbf16, #tpu.memory_space<vmem>>, %arg11: memref<18x18x128xbf16, #tpu.memory_space<vmem>>) attributes {dimension_semantics = [#tpu.dimension_semantics<parallel>], iteration_bounds = array<i64: 2>, scalar_prefetch = 0 : i64, scratch_operands = 1 : i64, tpu.core_type = #tpu.core_type<tc>, window_params = [{transform_indices = @transform_0, window_bounds = array<i64: 256, 128>}, {pipeline_mode = #tpu.pipeline_mode<synchronous>, transform_indices = @transform_1, window_bounds = array<i64: 128, 128>}, {pipeline_mode = #tpu.pipeline_mode<synchronous>, transform_indices = @transform_2, window_bounds = array<i64: 1, 128>}, {pipeline_mode = #tpu.pipeline_mode<synchronous>, transform_indices = @transform_3, window_bounds = array<i64: 9, 128, 128>}, {pipeline_mode = #tpu.pipeline_mode<synchronous>, transform_indices = @transform_4, window_bounds = array<i64: 1, 128>}, {pipeline_mode = #tpu.pipeline_mode<synchronous>, transform_indices = @transform_5, window_bounds = array<i64: 128, 128>}, {pipeline_mode = #tpu.pipeline_mode<synchronous>, transform_indices = @transform_6, window_bounds = array<i64: 1, 128>}, {pipeline_mode = #tpu.pipeline_mode<synchronous>, transform_indices = @transform_7, window_bounds = array<i64: 128, 128>}, {pipeline_mode = #tpu.pipeline_mode<synchronous>, transform_indices = @transform_8, window_bounds = array<i64: 1, 128>}, {transform_indices = @transform_9, window_bounds = array<i64: 256, 128>}]} {
    %c0 = arith.constant 0 : index
    %c0_0 = arith.constant 0 : index
    %0 = vector.load %arg1[%c0, %c0_0] : memref<256x128xbf16, #tpu.memory_space<vmem>>, vector<256x128xbf16>
    %c0_1 = arith.constant 0 : index
    %c0_2 = arith.constant 0 : index
    %1 = vector.load %arg2[%c0_1, %c0_2] : memref<128x128xbf16, #tpu.memory_space<vmem>>, vector<128x128xbf16>
    %cst = arith.constant dense<0.000000e+00> : vector<256x128xf32>
    %2 = tpu.matmul %0, %1, %cst {dimension_numbers = #tpu.dot_dimension_numbers<[1], [0], [0], [1], [0, 0, 1, 1], [], []>} : vector<256x128xbf16>, vector<128x128xbf16>, vector<256x128xf32> -> vector<256x128xf32>
    %c0_3 = arith.constant 0 : index
    %c0_4 = arith.constant 0 : index
    %3 = vector.load %arg3[%c0_3, %c0_4] : memref<1x128xf32, #tpu.memory_space<vmem>>, vector<1x128xf32>
    %4 = vector.broadcast %3 : vector<1x128xf32> to vector<256x128xf32>
    %5 = arith.addf %2, %4 : vector<256x128xf32>
    %cst_5 = arith.constant 0.000000e+00 : f32
    %6 = vector.broadcast %cst_5 : f32 to vector<256x128xf32>
    %7 = arith.maximumf %5, %6 : vector<256x128xf32>
    %8 = arith.truncf %7 : vector<256x128xf32> to vector<256x128xbf16>
    %cst_6 = arith.constant 0.000000e+00 : bf16
    %9 = vector.broadcast %cst_6 : bf16 to vector<1x18x128xbf16>
    %c0_7 = arith.constant 0 : index
    %c0_8 = arith.constant 0 : index
    %c0_9 = arith.constant 0 : index
    %10 = vector.load %arg11[%c0_7, %c0_8, %c0_9] : memref<18x18x128xbf16, #tpu.memory_space<vmem>>, vector<1x18x128xbf16>
    tpu.vector_store %arg11[%c0_7, %c0_8, %c0_9], %9 {strides = array<i32>} : memref<18x18x128xbf16, #tpu.memory_space<vmem>>, vector<1x18x128xbf16>,
    %cst_10 = arith.constant 0.000000e+00 : bf16
    %11 = vector.broadcast %cst_10 : bf16 to vector<1x18x128xbf16>
    %c17 = arith.constant 17 : index
    %c0_11 = arith.constant 0 : index
    %c0_12 = arith.constant 0 : index
    %12 = vector.load %arg11[%c17, %c0_11, %c0_12] : memref<18x18x128xbf16, #tpu.memory_space<vmem>>, vector<1x18x128xbf16>
    tpu.vector_store %arg11[%c17, %c0_11, %c0_12], %11 {strides = array<i32>} : memref<18x18x128xbf16, #tpu.memory_space<vmem>>, vector<1x18x128xbf16>,
    %cst_13 = arith.constant 0.000000e+00 : bf16
    %13 = vector.broadcast %cst_13 : bf16 to vector<16x1x128xbf16>
    %c1 = arith.constant 1 : index
    %c0_14 = arith.constant 0 : index
    %c0_15 = arith.constant 0 : index
    %14 = vector.load %arg11[%c1, %c0_14, %c0_15] : memref<18x18x128xbf16, #tpu.memory_space<vmem>>, vector<16x1x128xbf16>
    tpu.vector_store %arg11[%c1, %c0_14, %c0_15], %13 {strides = array<i32>} : memref<18x18x128xbf16, #tpu.memory_space<vmem>>, vector<16x1x128xbf16>,
    %cst_16 = arith.constant 0.000000e+00 : bf16
    %15 = vector.broadcast %cst_16 : bf16 to vector<16x1x128xbf16>
    %c1_17 = arith.constant 1 : index
    %c17_18 = arith.constant 17 : index
    %c0_19 = arith.constant 0 : index
    %16 = vector.load %arg11[%c1_17, %c17_18, %c0_19] : memref<18x18x128xbf16, #tpu.memory_space<vmem>>, vector<16x1x128xbf16>
    tpu.vector_store %arg11[%c1_17, %c17_18, %c0_19], %15 {strides = array<i32>} : memref<18x18x128xbf16, #tpu.memory_space<vmem>>, vector<16x1x128xbf16>,
    %17 = vector.shape_cast %8 : vector<256x128xbf16> to vector<16x16x128xbf16>
    %c1_20 = arith.constant 1 : index
    %c1_21 = arith.constant 1 : index
    %c0_22 = arith.constant 0 : index
    %18 = vector.load %arg11[%c1_20, %c1_21, %c0_22] : memref<18x18x128xbf16, #tpu.memory_space<vmem>>, vector<16x16x128xbf16>
    tpu.vector_store %arg11[%c1_20, %c1_21, %c0_22], %17 {strides = array<i32>} : memref<18x18x128xbf16, #tpu.memory_space<vmem>>, vector<16x16x128xbf16>,
    %c0_23 = arith.constant 0 : index
    %c0_24 = arith.constant 0 : index
    %c0_25 = arith.constant 0 : index
    %19 = vector.load %arg11[%c0_23, %c0_24, %c0_25] : memref<18x18x128xbf16, #tpu.memory_space<vmem>>, vector<16x16x128xbf16>
    %20 = vector.shape_cast %19 : vector<16x16x128xbf16> to vector<256x128xbf16>
    %c0_26 = arith.constant 0 : index
    %c0_27 = arith.constant 0 : index
    %c0_28 = arith.constant 0 : index
    %21 = vector.load %arg4[%c0_26, %c0_27, %c0_28] : memref<9x128x128xbf16, #tpu.memory_space<vmem>>, vector<1x128x128xbf16>
    %22 = vector.shape_cast %21 : vector<1x128x128xbf16> to vector<128x128xbf16>
    %cst_29 = arith.constant dense<0.000000e+00> : vector<256x128xf32>
    %23 = tpu.matmul %20, %22, %cst_29 {dimension_numbers = #tpu.dot_dimension_numbers<[1], [0], [0], [1], [0, 0, 1, 1], [], []>} : vector<256x128xbf16>, vector<128x128xbf16>, vector<256x128xf32> -> vector<256x128xf32>
    %c0_30 = arith.constant 0 : index
    %c1_31 = arith.constant 1 : index
    %c0_32 = arith.constant 0 : index
    %24 = vector.load %arg11[%c0_30, %c1_31, %c0_32] : memref<18x18x128xbf16, #tpu.memory_space<vmem>>, vector<16x16x128xbf16>
    %25 = vector.shape_cast %24 : vector<16x16x128xbf16> to vector<256x128xbf16>
    %c1_33 = arith.constant 1 : index
    %c0_34 = arith.constant 0 : index
    %c0_35 = arith.constant 0 : index
    %26 = vector.load %arg4[%c1_33, %c0_34, %c0_35] : memref<9x128x128xbf16, #tpu.memory_space<vmem>>, vector<1x128x128xbf16>
    %27 = vector.shape_cast %26 : vector<1x128x128xbf16> to vector<128x128xbf16>
    %cst_36 = arith.constant dense<0.000000e+00> : vector<256x128xf32>
    %28 = tpu.matmul %25, %27, %cst_36 {dimension_numbers = #tpu.dot_dimension_numbers<[1], [0], [0], [1], [0, 0, 1, 1], [], []>} : vector<256x128xbf16>, vector<128x128xbf16>, vector<256x128xf32> -> vector<256x128xf32>
    %29 = arith.addf %23, %28 : vector<256x128xf32>
    %c0_37 = arith.constant 0 : index
    %c2 = arith.constant 2 : index
    %c0_38 = arith.constant 0 : index
    %30 = vector.load %arg11[%c0_37, %c2, %c0_38] : memref<18x18x128xbf16, #tpu.memory_space<vmem>>, vector<16x16x128xbf16>
    %31 = vector.shape_cast %30 : vector<16x16x128xbf16> to vector<256x128xbf16>
    %c2_39 = arith.constant 2 : index
    %c0_40 = arith.constant 0 : index
    %c0_41 = arith.constant 0 : index
    %32 = vector.load %arg4[%c2_39, %c0_40, %c0_41] : memref<9x128x128xbf16, #tpu.memory_space<vmem>>, vector<1x128x128xbf16>
    %33 = vector.shape_cast %32 : vector<1x128x128xbf16> to vector<128x128xbf16>
    %cst_42 = arith.constant dense<0.000000e+00> : vector<256x128xf32>
    %34 = tpu.matmul %31, %33, %cst_42 {dimension_numbers = #tpu.dot_dimension_numbers<[1], [0], [0], [1], [0, 0, 1, 1], [], []>} : vector<256x128xbf16>, vector<128x128xbf16>, vector<256x128xf32> -> vector<256x128xf32>
    %35 = arith.addf %29, %34 : vector<256x128xf32>
    %c1_43 = arith.constant 1 : index
    %c0_44 = arith.constant 0 : index
    %c0_45 = arith.constant 0 : index
    %36 = vector.load %arg11[%c1_43, %c0_44, %c0_45] : memref<18x18x128xbf16, #tpu.memory_space<vmem>>, vector<16x16x128xbf16>
    %37 = vector.shape_cast %36 : vector<16x16x128xbf16> to vector<256x128xbf16>
    %c3 = arith.constant 3 : index
    %c0_46 = arith.constant 0 : index
    %c0_47 = arith.constant 0 : index
    %38 = vector.load %arg4[%c3, %c0_46, %c0_47] : memref<9x128x128xbf16, #tpu.memory_space<vmem>>, vector<1x128x128xbf16>
    %39 = vector.shape_cast %38 : vector<1x128x128xbf16> to vector<128x128xbf16>
    %cst_48 = arith.constant dense<0.000000e+00> : vector<256x128xf32>
    %40 = tpu.matmul %37, %39, %cst_48 {dimension_numbers = #tpu.dot_dimension_numbers<[1], [0], [0], [1], [0, 0, 1, 1], [], []>} : vector<256x128xbf16>, vector<128x128xbf16>, vector<256x128xf32> -> vector<256x128xf32>
    %41 = arith.addf %35, %40 : vector<256x128xf32>
    %c1_49 = arith.constant 1 : index
    %c1_50 = arith.constant 1 : index
    %c0_51 = arith.constant 0 : index
    %42 = vector.load %arg11[%c1_49, %c1_50, %c0_51] : memref<18x18x128xbf16, #tpu.memory_space<vmem>>, vector<16x16x128xbf16>
    %43 = vector.shape_cast %42 : vector<16x16x128xbf16> to vector<256x128xbf16>
    %c4 = arith.constant 4 : index
    %c0_52 = arith.constant 0 : index
    %c0_53 = arith.constant 0 : index
    %44 = vector.load %arg4[%c4, %c0_52, %c0_53] : memref<9x128x128xbf16, #tpu.memory_space<vmem>>, vector<1x128x128xbf16>
    %45 = vector.shape_cast %44 : vector<1x128x128xbf16> to vector<128x128xbf16>
    %cst_54 = arith.constant dense<0.000000e+00> : vector<256x128xf32>
    %46 = tpu.matmul %43, %45, %cst_54 {dimension_numbers = #tpu.dot_dimension_numbers<[1], [0], [0], [1], [0, 0, 1, 1], [], []>} : vector<256x128xbf16>, vector<128x128xbf16>, vector<256x128xf32> -> vector<256x128xf32>
    %47 = arith.addf %41, %46 : vector<256x128xf32>
    %c1_55 = arith.constant 1 : index
    %c2_56 = arith.constant 2 : index
    %c0_57 = arith.constant 0 : index
    %48 = vector.load %arg11[%c1_55, %c2_56, %c0_57] : memref<18x18x128xbf16, #tpu.memory_space<vmem>>, vector<16x16x128xbf16>
    %49 = vector.shape_cast %48 : vector<16x16x128xbf16> to vector<256x128xbf16>
    %c5 = arith.constant 5 : index
    %c0_58 = arith.constant 0 : index
    %c0_59 = arith.constant 0 : index
    %50 = vector.load %arg4[%c5, %c0_58, %c0_59] : memref<9x128x128xbf16, #tpu.memory_space<vmem>>, vector<1x128x128xbf16>
    %51 = vector.shape_cast %50 : vector<1x128x128xbf16> to vector<128x128xbf16>
    %cst_60 = arith.constant dense<0.000000e+00> : vector<256x128xf32>
    %52 = tpu.matmul %49, %51, %cst_60 {dimension_numbers = #tpu.dot_dimension_numbers<[1], [0], [0], [1], [0, 0, 1, 1], [], []>} : vector<256x128xbf16>, vector<128x128xbf16>, vector<256x128xf32> -> vector<256x128xf32>
    %53 = arith.addf %47, %52 : vector<256x128xf32>
    %c2_61 = arith.constant 2 : index
    %c0_62 = arith.constant 0 : index
    %c0_63 = arith.constant 0 : index
    %54 = vector.load %arg11[%c2_61, %c0_62, %c0_63] : memref<18x18x128xbf16, #tpu.memory_space<vmem>>, vector<16x16x128xbf16>
    %55 = vector.shape_cast %54 : vector<16x16x128xbf16> to vector<256x128xbf16>
    %c6 = arith.constant 6 : index
    %c0_64 = arith.constant 0 : index
    %c0_65 = arith.constant 0 : index
    %56 = vector.load %arg4[%c6, %c0_64, %c0_65] : memref<9x128x128xbf16, #tpu.memory_space<vmem>>, vector<1x128x128xbf16>
    %57 = vector.shape_cast %56 : vector<1x128x128xbf16> to vector<128x128xbf16>
    %cst_66 = arith.constant dense<0.000000e+00> : vector<256x128xf32>
    %58 = tpu.matmul %55, %57, %cst_66 {dimension_numbers = #tpu.dot_dimension_numbers<[1], [0], [0], [1], [0, 0, 1, 1], [], []>} : vector<256x128xbf16>, vector<128x128xbf16>, vector<256x128xf32> -> vector<256x128xf32>
    %59 = arith.addf %53, %58 : vector<256x128xf32>
    %c2_67 = arith.constant 2 : index
    %c1_68 = arith.constant 1 : index
    %c0_69 = arith.constant 0 : index
    %60 = vector.load %arg11[%c2_67, %c1_68, %c0_69] : memref<18x18x128xbf16, #tpu.memory_space<vmem>>, vector<16x16x128xbf16>
    %61 = vector.shape_cast %60 : vector<16x16x128xbf16> to vector<256x128xbf16>
    %c7 = arith.constant 7 : index
    %c0_70 = arith.constant 0 : index
    %c0_71 = arith.constant 0 : index
    %62 = vector.load %arg4[%c7, %c0_70, %c0_71] : memref<9x128x128xbf16, #tpu.memory_space<vmem>>, vector<1x128x128xbf16>
    %63 = vector.shape_cast %62 : vector<1x128x128xbf16> to vector<128x128xbf16>
    %cst_72 = arith.constant dense<0.000000e+00> : vector<256x128xf32>
    %64 = tpu.matmul %61, %63, %cst_72 {dimension_numbers = #tpu.dot_dimension_numbers<[1], [0], [0], [1], [0, 0, 1, 1], [], []>} : vector<256x128xbf16>, vector<128x128xbf16>, vector<256x128xf32> -> vector<256x128xf32>
    %65 = arith.addf %59, %64 : vector<256x128xf32>
    %c2_73 = arith.constant 2 : index
    %c2_74 = arith.constant 2 : index
    %c0_75 = arith.constant 0 : index
    %66 = vector.load %arg11[%c2_73, %c2_74, %c0_75] : memref<18x18x128xbf16, #tpu.memory_space<vmem>>, vector<16x16x128xbf16>
    %67 = vector.shape_cast %66 : vector<16x16x128xbf16> to vector<256x128xbf16>
    %c8 = arith.constant 8 : index
    %c0_76 = arith.constant 0 : index
    %c0_77 = arith.constant 0 : index
    %68 = vector.load %arg4[%c8, %c0_76, %c0_77] : memref<9x128x128xbf16, #tpu.memory_space<vmem>>, vector<1x128x128xbf16>
    %69 = vector.shape_cast %68 : vector<1x128x128xbf16> to vector<128x128xbf16>
    %cst_78 = arith.constant dense<0.000000e+00> : vector<256x128xf32>
    %70 = tpu.matmul %67, %69, %cst_78 {dimension_numbers = #tpu.dot_dimension_numbers<[1], [0], [0], [1], [0, 0, 1, 1], [], []>} : vector<256x128xbf16>, vector<128x128xbf16>, vector<256x128xf32> -> vector<256x128xf32>
    %71 = arith.addf %65, %70 : vector<256x128xf32>
    %c0_79 = arith.constant 0 : index
    %c0_80 = arith.constant 0 : index
    %72 = vector.load %arg5[%c0_79, %c0_80] : memref<1x128xf32, #tpu.memory_space<vmem>>, vector<1x128xf32>
    %73 = vector.broadcast %72 : vector<1x128xf32> to vector<256x128xf32>
    %74 = arith.addf %71, %73 : vector<256x128xf32>
    %cst_81 = arith.constant 0.000000e+00 : f32
    %75 = vector.broadcast %cst_81 : f32 to vector<256x128xf32>
    %76 = arith.maximumf %74, %75 : vector<256x128xf32>
    %77 = arith.truncf %76 : vector<256x128xf32> to vector<256x128xbf16>
    %78 = vector.extract_strided_slice %77 {offsets = [0, 0], sizes = [128, 128], strides = [1, 1]} : vector<256x128xbf16> to vector<128x128xbf16>
    %c0_82 = arith.constant 0 : index
    %c0_83 = arith.constant 0 : index
    %79 = vector.load %arg6[%c0_82, %c0_83] : memref<128x128xbf16, #tpu.memory_space<vmem>>, vector<128x128xbf16>
    %cst_84 = arith.constant dense<0.000000e+00> : vector<128x128xf32>
    %80 = tpu.matmul %78, %79, %cst_84 {dimension_numbers = #tpu.dot_dimension_numbers<[1], [0], [0], [1], [0, 0, 1, 1], [], []>} : vector<128x128xbf16>, vector<128x128xbf16>, vector<128x128xf32> -> vector<128x128xf32>
    %c0_85 = arith.constant 0 : index
    %c0_86 = arith.constant 0 : index
    %81 = vector.load %arg7[%c0_85, %c0_86] : memref<1x128xf32, #tpu.memory_space<vmem>>, vector<1x128xf32>
    %82 = vector.broadcast %81 : vector<1x128xf32> to vector<128x128xf32>
    %83 = arith.addf %80, %82 : vector<128x128xf32>
    %cst_87 = arith.constant 0.000000e+00 : f32
    %84 = vector.broadcast %cst_87 : f32 to vector<128x128xf32>
    %85 = arith.maximumf %83, %84 : vector<128x128xf32>
    %c0_88 = arith.constant 0 : index
    %c0_89 = arith.constant 0 : index
    %86 = vector.load %arg1[%c0_88, %c0_89] : memref<256x128xbf16, #tpu.memory_space<vmem>>, vector<128x128xbf16>
    %c0_90 = arith.constant 0 : index
    %c0_91 = arith.constant 0 : index
    %87 = vector.load %arg8[%c0_90, %c0_91] : memref<128x128xbf16, #tpu.memory_space<vmem>>, vector<128x128xbf16>
    %cst_92 = arith.constant dense<0.000000e+00> : vector<128x128xf32>
    %88 = tpu.matmul %86, %87, %cst_92 {dimension_numbers = #tpu.dot_dimension_numbers<[1], [0], [0], [1], [0, 0, 1, 1], [], []>} : vector<128x128xbf16>, vector<128x128xbf16>, vector<128x128xf32> -> vector<128x128xf32>
    %c0_93 = arith.constant 0 : index
    %c0_94 = arith.constant 0 : index
    %89 = vector.load %arg9[%c0_93, %c0_94] : memref<1x128xf32, #tpu.memory_space<vmem>>, vector<1x128xf32>
    %90 = vector.broadcast %89 : vector<1x128xf32> to vector<128x128xf32>
    %91 = arith.addf %88, %90 : vector<128x128xf32>
    %92 = arith.addf %85, %91 : vector<128x128xf32>
    %cst_95 = arith.constant 0.000000e+00 : f32
    %93 = vector.broadcast %cst_95 : f32 to vector<128x128xf32>
    %94 = arith.maximumf %92, %93 : vector<128x128xf32>
    %95 = arith.truncf %94 : vector<128x128xf32> to vector<128x128xbf16>
    %c0_96 = arith.constant 0 : index
    %c0_97 = arith.constant 0 : index
    %96 = vector.load %arg10[%c0_96, %c0_97] : memref<256x128xbf16, #tpu.memory_space<vmem>>, vector<128x128xbf16>
    tpu.vector_store %arg10[%c0_96, %c0_97], %95 {strides = array<i32>} : memref<256x128xbf16, #tpu.memory_space<vmem>>, vector<128x128xbf16>,
    %97 = vector.extract_strided_slice %77 {offsets = [128, 0], sizes = [128, 128], strides = [1, 1]} : vector<256x128xbf16> to vector<128x128xbf16>
    %c0_98 = arith.constant 0 : index
    %c0_99 = arith.constant 0 : index
    %98 = vector.load %arg6[%c0_98, %c0_99] : memref<128x128xbf16, #tpu.memory_space<vmem>>, vector<128x128xbf16>
    %cst_100 = arith.constant dense<0.000000e+00> : vector<128x128xf32>
    %99 = tpu.matmul %97, %98, %cst_100 {dimension_numbers = #tpu.dot_dimension_numbers<[1], [0], [0], [1], [0, 0, 1, 1], [], []>} : vector<128x128xbf16>, vector<128x128xbf16>, vector<128x128xf32> -> vector<128x128xf32>
    %c0_101 = arith.constant 0 : index
    %c0_102 = arith.constant 0 : index
    %100 = vector.load %arg7[%c0_101, %c0_102] : memref<1x128xf32, #tpu.memory_space<vmem>>, vector<1x128xf32>
    %101 = vector.broadcast %100 : vector<1x128xf32> to vector<128x128xf32>
    %102 = arith.addf %99, %101 : vector<128x128xf32>
    %cst_103 = arith.constant 0.000000e+00 : f32
    %103 = vector.broadcast %cst_103 : f32 to vector<128x128xf32>
    %104 = arith.maximumf %102, %103 : vector<128x128xf32>
    %c128 = arith.constant 128 : index
    %c0_104 = arith.constant 0 : index
    %105 = vector.load %arg1[%c128, %c0_104] : memref<256x128xbf16, #tpu.memory_space<vmem>>, vector<128x128xbf16>
    %c0_105 = arith.constant 0 : index
    %c0_106 = arith.constant 0 : index
    %106 = vector.load %arg8[%c0_105, %c0_106] : memref<128x128xbf16, #tpu.memory_space<vmem>>, vector<128x128xbf16>
    %cst_107 = arith.constant dense<0.000000e+00> : vector<128x128xf32>
    %107 = tpu.matmul %105, %106, %cst_107 {dimension_numbers = #tpu.dot_dimension_numbers<[1], [0], [0], [1], [0, 0, 1, 1], [], []>} : vector<128x128xbf16>, vector<128x128xbf16>, vector<128x128xf32> -> vector<128x128xf32>
    %c0_108 = arith.constant 0 : index
    %c0_109 = arith.constant 0 : index
    %108 = vector.load %arg9[%c0_108, %c0_109] : memref<1x128xf32, #tpu.memory_space<vmem>>, vector<1x128xf32>
    %109 = vector.broadcast %108 : vector<1x128xf32> to vector<128x128xf32>
    %110 = arith.addf %107, %109 : vector<128x128xf32>
    %111 = arith.addf %104, %110 : vector<128x128xf32>
    %cst_110 = arith.constant 0.000000e+00 : f32
    %112 = vector.broadcast %cst_110 : f32 to vector<128x128xf32>
    %113 = arith.maximumf %111, %112 : vector<128x128xf32>
    %114 = arith.truncf %113 : vector<128x128xf32> to vector<128x128xbf16>
    %c128_111 = arith.constant 128 : index
    %c0_112 = arith.constant 0 : index
    %115 = vector.load %arg10[%c128_111, %c0_112] : memref<256x128xbf16, #tpu.memory_space<vmem>>, vector<128x128xbf16>
    tpu.vector_store %arg10[%c128_111, %c0_112], %114 {strides = array<i32>} : memref<256x128xbf16, #tpu.memory_space<vmem>>, vector<128x128xbf16>,
    return
  }
  func.func @transform_0(%arg0: i32) -> (i32, i32) {
    %c0_i32 = arith.constant 0 : i32
    %c0_i32_0 = arith.constant 0 : i32
    return %arg0, %c0_i32 : i32, i32
  }
  func.func @transform_1(%arg0: i32) -> (i32, i32) {
    %c0_i32 = arith.constant 0 : i32
    %c0_i32_0 = arith.constant 0 : i32
    %c0_i32_1 = arith.constant 0 : i32
    return %c0_i32, %c0_i32_0 : i32, i32
  }
  func.func @transform_2(%arg0: i32) -> (i32, i32) {
    %c0_i32 = arith.constant 0 : i32
    %c0_i32_0 = arith.constant 0 : i32
    %c0_i32_1 = arith.constant 0 : i32
    return %c0_i32, %c0_i32_0 : i32, i32
  }
  func.func @transform_3(%arg0: i32) -> (i32, i32, i32) {
    %c0_i32 = arith.constant 0 : i32
    %c0_i32_0 = arith.constant 0 : i32
    %c0_i32_1 = arith.constant 0 : i32
    %c0_i32_2 = arith.constant 0 : i32
    return %c0_i32, %c0_i32_0, %c0_i32_1 : i32, i32, i32
  }
  func.func @transform_4(%arg0: i32) -> (i32, i32) {
    %c0_i32 = arith.constant 0 : i32
    %c0_i32_0 = arith.constant 0 : i32
    %c0_i32_1 = arith.constant 0 : i32
    return %c0_i32, %c0_i32_0 : i32, i32
  }
  func.func @transform_5(%arg0: i32) -> (i32, i32) {
    %c0_i32 = arith.constant 0 : i32
    %c0_i32_0 = arith.constant 0 : i32
    %c0_i32_1 = arith.constant 0 : i32
    return %c0_i32, %c0_i32_0 : i32, i32
  }
  func.func @transform_6(%arg0: i32) -> (i32, i32) {
    %c0_i32 = arith.constant 0 : i32
    %c0_i32_0 = arith.constant 0 : i32
    %c0_i32_1 = arith.constant 0 : i32
    return %c0_i32, %c0_i32_0 : i32, i32
  }
  func.func @transform_7(%arg0: i32) -> (i32, i32) {
    %c0_i32 = arith.constant 0 : i32
    %c0_i32_0 = arith.constant 0 : i32
    %c0_i32_1 = arith.constant 0 : i32
    return %c0_i32, %c0_i32_0 : i32, i32
  }
  func.func @transform_8(%arg0: i32) -> (i32, i32) {
    %c0_i32 = arith.constant 0 : i32
    %c0_i32_0 = arith.constant 0 : i32
    %c0_i32_1 = arith.constant 0 : i32
    return %c0_i32, %c0_i32_0 : i32, i32
  }
  func.func @transform_9(%arg0: i32) -> (i32, i32) {
    %c0_i32 = arith.constant 0 : i32
    %c0_i32_0 = arith.constant 0 : i32
    return %arg0, %c0_i32 : i32, i32
  }
}

</mosaic_0001>

<llo_original>
// kernel: tpu_custom_call.1
$region0: #{tpu_custom_call.1}
  #allocation0 [shape = 'u32[]', space=smem, size = 0x4, offset = 0x4, fixed_abs, tag = 'smem constant byte address 0x4 - core index']
  #allocation1 [shape = 'u32[144,128]{1,0:T(1,128)}', space=vmem, size = 0x12000, scoped, tag = 'internal scratch']
  #allocation2 [shape = 'bf16[18,18,128]{2,1,0:T(8,128)(2,1)}', space=vmem, size = 0x1b000, scoped, tag = 'scratch operand']
  %s0 = inlined_call_operand.hbm [shape: bf16[512,128], index: 0, kind: input, shape index: {}]
  %s1 = inlined_call_operand.hbm [shape: bf16[128,128], index: 1, kind: input, shape index: {}]
  %s2 = inlined_call_operand.vmem [shape: f32[1,128], index: 2, kind: input, shape index: {}]
  %s3 = inlined_call_operand.hbm [shape: bf16[9,128,128], index: 3, kind: input, shape index: {}]
  %s4 = inlined_call_operand.vmem [shape: f32[1,128], index: 4, kind: input, shape index: {}]
  %s5 = inlined_call_operand.hbm [shape: bf16[128,128], index: 5, kind: input, shape index: {}]
  %s6 = inlined_call_operand.vmem [shape: f32[1,128], index: 6, kind: input, shape index: {}]
  %s7 = inlined_call_operand.hbm [shape: bf16[128,128], index: 7, kind: input, shape index: {}]
  %s8 = inlined_call_operand.vmem [shape: f32[1,128], index: 8, kind: input, shape index: {}]
  %s9 = inlined_call_operand.hbm [shape: bf16[512,128], index: 9, kind: output, shape index: {}]
  %s10 = sld [smem:[#allocation0]]
  $region89: #{tpu_custom_call.1} parent=0
    _
  %s12 = ssub.s32 1, %s10
  %s13 = scalar_select 0, %s12, %s10
  $region1: #{tpu_custom_call.1} parent=0
    #allocation3 [shape = 'u8[131072]{0}', space=vmem, size = 0x20000, scoped, tag = 'input window, operand 0']
    #allocation4 [shape = 's32[2]{0}', space=sflag, size = 0x8, scoped, tag = 'scoped memory for tpu_custom_call.1']
    #allocation5 [shape = 's32[2]{0}', space=sflag, size = 0x8, scoped, tag = 'scoped memory for tpu_custom_call.1']
    #allocation6 [shape = 'u8[32768]{0}', space=vmem, size = 0x8000, scoped, tag = 'input window, operand 1, single buffered']
    #allocation7 [shape = 's32[1]{0}', space=sflag, size = 0x4, scoped, tag = 'scoped memory for tpu_custom_call.1']
    #allocation8 [shape = 'u8[294912]{0}', space=vmem, size = 0x48000, scoped, tag = 'input window, operand 3, single buffered']
    #allocation9 [shape = 'u8[32768]{0}', space=vmem, size = 0x8000, scoped, tag = 'input window, operand 5, single buffered']
    #allocation10 [shape = 's32[1]{0}', space=sflag, size = 0x4, scoped, tag = 'scoped memory for tpu_custom_call.1']
    #allocation11 [shape = 'u8[32768]{0}', space=vmem, size = 0x8000, scoped, tag = 'input window, operand 7, single buffered']
    #allocation12 [shape = 'u8[131072]{0}', space=vmem, size = 0x20000, scoped, tag = 'output window, operand 0']
    %14 = vsyncpa [#allocation4], 0
    %s15 = scalar_lea.sflag [#allocation4], 1
    %16 = vsyncpa %s15, 0
    %17 = vsyncpa [#allocation7], 0
    %18 = vsyncpa [#allocation10], 0
    %19 = vsyncpa [#allocation5], 0
    %s20 = scalar_lea.sflag [#allocation5], 1
    %21 = vsyncpa %s20, 0
    loop: start=0, step=1, limit=4
    $region2: #{tpu_custom_call.1} parent=1 // loop_pre_header
      _
    $region3: #{tpu_custom_call.1} parent=1 // loop_header
      %s23 = sphi 0, %s27
      %p24 = scmp.ge.s32.totalorder %s23, 4
      %s33 = sphi 0, %s35
      %s36 = sphi 0, %s33
      %s37 = sphi 0, %s36
      %s53 = sphi 0, %s37
      %s57 = sphi 0, %s57
      %s59 = sphi 0, %s57
      %s60 = sphi 0, %s59
      %s74 = sphi 0, %s60
      %s78 = sphi 0, %s78
      %s80 = sphi 0, %s78
      %s81 = sphi 0, %s80
      %s95 = sphi 0, %s81
      %s99 = sphi 0, %s99
      %s101 = sphi 0, %s99
      %s102 = sphi 0, %s101
      %s116 = sphi 0, %s102
      %s120 = sphi 0, %s120
      %s122 = sphi 0, %s120
      %s123 = sphi 0, %s122
      %s137 = sphi 0, %s123
      %s141 = sphi 0, %s141
      %s143 = sphi 0, %s141
      %s144 = sphi 0, %s143
      %s158 = sphi 0, %s144
      %s162 = sphi 0, %s162
      %s164 = sphi 0, %s162
      %s165 = sphi 0, %s164
      %s179 = sphi 0, %s165
      %s183 = sphi 0, %s183
      %s185 = sphi 0, %s183
      %s186 = sphi 0, %s185
      %s200 = sphi 0, %s186
      %s204 = sphi 0, %s204
      %s206 = sphi 0, %s204
      %s207 = sphi 0, %s206
      %s221 = sphi 0, %s207
      %s227 = sphi 0, %s229
      %s230 = sphi 0, %s227
      %s231 = sphi 0, %s230
      %s247 = sphi 0, %s231
    $region4: #{tpu_custom_call.1} parent=1 // loop_header_branch
      %26 = sbr.rel (%p24) target = $region8
    $region5: #{tpu_custom_call.1} parent=1 // loop_body
      %s28 = ssub.s32 %s23, 1
      %s29 = ssub.s32 %s23, 2
      %s30 = sadd.s32 %s23, 1
      %s31 = ssub.s32 %s23, %s30
      %p32 = scmp.eq.s32.totalorder %s31, 0
      %s34 = sadd.s32 %s33, 1
      %s35 = scalar_select %p32, %s33, %s34
      %p38 = pneg %p32
      %p39 = scmp.eq.s32.totalorder %s23, 1
      %p40 = por %p38, %p39
      %p41 = scmp.ne.s32.totalorder %s33, %s36
      %p42 = scmp.eq.s32.totalorder %s23, 0
      %p43 = por %p41, %p42
      %p44 = scmp.ne.s32.totalorder %s33, %s36
      %p45 = scmp.eq.s32.totalorder %s28, 1
      %p46 = por %p44, %p45
      %p47 = scmp.ne.s32.totalorder %s36, %s37
      %p48 = scmp.eq.s32.totalorder %s28, 0
      %p49 = por %p47, %p48
      %p50 = scmp.ne.s32.totalorder %s36, %s37
      %p51 = scmp.eq.s32.totalorder %s29, 1
      %p52 = por %p50, %p51
      %p54 = scmp.ne.s32.totalorder %s37, %s53
      %p55 = scmp.eq.s32.totalorder %s29, 0
      %p56 = por %p54, %p55
      %s58 = sadd.s32 %s57, 1
      %p61 = scmp.eq.s32.totalorder %s23, 1
      %p62 = scmp.ne.s32.totalorder %s57, %s59
      %p63 = scmp.eq.s32.totalorder %s23, 0
      %p64 = por %p62, %p63
      %p65 = scmp.ne.s32.totalorder %s57, %s59
      %p66 = scmp.eq.s32.totalorder %s28, 1
      %p67 = por %p65, %p66
      %p68 = scmp.ne.s32.totalorder %s59, %s60
      %p69 = scmp.eq.s32.totalorder %s28, 0
      %p70 = por %p68, %p69
      %p71 = scmp.ne.s32.totalorder %s59, %s60
      %p72 = scmp.eq.s32.totalorder %s29, 1
      %p73 = por %p71, %p72
      %p75 = scmp.ne.s32.totalorder %s60, %s74
      %p76 = scmp.eq.s32.totalorder %s29, 0
      %p77 = por %p75, %p76
      %s79 = sadd.s32 %s78, 1
      %p82 = scmp.eq.s32.totalorder %s23, 1
      %p83 = scmp.ne.s32.totalorder %s78, %s80
      %p84 = scmp.eq.s32.totalorder %s23, 0
      %p85 = por %p83, %p84
      %p86 = scmp.ne.s32.totalorder %s78, %s80
      %p87 = scmp.eq.s32.totalorder %s28, 1
      %p88 = por %p86, %p87
      %p89 = scmp.ne.s32.totalorder %s80, %s81
      %p90 = scmp.eq.s32.totalorder %s28, 0
      %p91 = por %p89, %p90
      %p92 = scmp.ne.s32.totalorder %s80, %s81
      %p93 = scmp.eq.s32.totalorder %s29, 1
      %p94 = por %p92, %p93
      %p96 = scmp.ne.s32.totalorder %s81, %s95
      %p97 = scmp.eq.s32.totalorder %s29, 0
      %p98 = por %p96, %p97
      %s100 = sadd.s32 %s99, 1
      %p103 = scmp.eq.s32.totalorder %s23, 1
      %p104 = scmp.ne.s32.totalorder %s99, %s101
      %p105 = scmp.eq.s32.totalorder %s23, 0
      %p106 = por %p104, %p105
      %p107 = scmp.ne.s32.totalorder %s99, %s101
      %p108 = scmp.eq.s32.totalorder %s28, 1
      %p109 = por %p107, %p108
      %p110 = scmp.ne.s32.totalorder %s101, %s102
      %p111 = scmp.eq.s32.totalorder %s28, 0
      %p112 = por %p110, %p111
      %p113 = scmp.ne.s32.totalorder %s101, %s102
      %p114 = scmp.eq.s32.totalorder %s29, 1
      %p115 = por %p113, %p114
      %p117 = scmp.ne.s32.totalorder %s102, %s116
      %p118 = scmp.eq.s32.totalorder %s29, 0
      %p119 = por %p117, %p118
      %s121 = sadd.s32 %s120, 1
      %p124 = scmp.eq.s32.totalorder %s23, 1
      %p125 = scmp.ne.s32.totalorder %s120, %s122
      %p126 = scmp.eq.s32.totalorder %s23, 0
      %p127 = por %p125, %p126
      %p128 = scmp.ne.s32.totalorder %s120, %s122
      %p129 = scmp.eq.s32.totalorder %s28, 1
      %p130 = por %p128, %p129
      %p131 = scmp.ne.s32.totalorder %s122, %s123
      %p132 = scmp.eq.s32.totalorder %s28, 0
      %p133 = por %p131, %p132
      %p134 = scmp.ne.s32.totalorder %s122, %s123
      %p135 = scmp.eq.s32.totalorder %s29, 1
      %p136 = por %p134, %p135
      %p138 = scmp.ne.s32.totalorder %s123, %s137
      %p139 = scmp.eq.s32.totalorder %s29, 0
      %p140 = por %p138, %p139
      %s142 = sadd.s32 %s141, 1
      %p145 = scmp.eq.s32.totalorder %s23, 1
      %p146 = scmp.ne.s32.totalorder %s141, %s143
      %p147 = scmp.eq.s32.totalorder %s23, 0
      %p148 = por %p146, %p147
      %p149 = scmp.ne.s32.totalorder %s141, %s143
      %p150 = scmp.eq.s32.totalorder %s28, 1
      %p151 = por %p149, %p150
      %p152 = scmp.ne.s32.totalorder %s143, %s144
      %p153 = scmp.eq.s32.totalorder %s28, 0
      %p154 = por %p152, %p153
      %p155 = scmp.ne.s32.totalorder %s143, %s144
      %p156 = scmp.eq.s32.totalorder %s29, 1
      %p157 = por %p155, %p156
      %p159 = scmp.ne.s32.totalorder %s144, %s158
      %p160 = scmp.eq.s32.totalorder %s29, 0
      %p161 = por %p159, %p160
      %s163 = sadd.s32 %s162, 1
      %p166 = scmp.eq.s32.totalorder %s23, 1
      %p167 = scmp.ne.s32.totalorder %s162, %s164
      %p168 = scmp.eq.s32.totalorder %s23, 0
      %p169 = por %p167, %p168
      %p170 = scmp.ne.s32.totalorder %s162, %s164
      %p171 = scmp.eq.s32.totalorder %s28, 1
      %p172 = por %p170, %p171
      %p173 = scmp.ne.s32.totalorder %s164, %s165
      %p174 = scmp.eq.s32.totalorder %s28, 0
      %p175 = por %p173, %p174
      %p176 = scmp.ne.s32.totalorder %s164, %s165
      %p177 = scmp.eq.s32.totalorder %s29, 1
      %p178 = por %p176, %p177
      %p180 = scmp.ne.s32.totalorder %s165, %s179
      %p181 = scmp.eq.s32.totalorder %s29, 0
      %p182 = por %p180, %p181
      %s184 = sadd.s32 %s183, 1
      %p187 = scmp.eq.s32.totalorder %s23, 1
      %p188 = scmp.ne.s32.totalorder %s183, %s185
      %p189 = scmp.eq.s32.totalorder %s23, 0
      %p190 = por %p188, %p189
      %p191 = scmp.ne.s32.totalorder %s183, %s185
      %p192 = scmp.eq.s32.totalorder %s28, 1
      %p193 = por %p191, %p192
      %p194 = scmp.ne.s32.totalorder %s185, %s186
      %p195 = scmp.eq.s32.totalorder %s28, 0
      %p196 = por %p194, %p195
      %p197 = scmp.ne.s32.totalorder %s185, %s186
      %p198 = scmp.eq.s32.totalorder %s29, 1
      %p199 = por %p197, %p198
      %p201 = scmp.ne.s32.totalorder %s186, %s200
      %p202 = scmp.eq.s32.totalorder %s29, 0
      %p203 = por %p201, %p202
      %s205 = sadd.s32 %s204, 1
      %p208 = scmp.eq.s32.totalorder %s23, 1
      %p209 = scmp.ne.s32.totalorder %s204, %s206
      %p210 = scmp.eq.s32.totalorder %s23, 0
      %p211 = por %p209, %p210
      %p212 = scmp.ne.s32.totalorder %s204, %s206
      %p213 = scmp.eq.s32.totalorder %s28, 1
      %p214 = por %p212, %p213
      %p215 = scmp.ne.s32.totalorder %s206, %s207
      %p216 = scmp.eq.s32.totalorder %s28, 0
      %p217 = por %p215, %p216
      %p218 = scmp.ne.s32.totalorder %s206, %s207
      %p219 = scmp.eq.s32.totalorder %s29, 1
      %p220 = por %p218, %p219
      %p222 = scmp.ne.s32.totalorder %s207, %s221
      %p223 = scmp.eq.s32.totalorder %s29, 0
      %p224 = por %p222, %p223
      %s225 = ssub.s32 %s23, %s30
      %p226 = scmp.eq.s32.totalorder %s225, 0
      %s228 = sadd.s32 %s227, 1
      %s229 = scalar_select %p226, %s227, %s228
      %p232 = pneg %p226
      %p233 = scmp.eq.s32.totalorder %s23, 1
      %p234 = por %p232, %p233
      %p235 = scmp.ne.s32.totalorder %s227, %s230
      %p236 = scmp.eq.s32.totalorder %s23, 0
      %p237 = por %p235, %p236
      %p238 = scmp.ne.s32.totalorder %s227, %s230
      %p239 = scmp.eq.s32.totalorder %s28, 1
      %p240 = por %p238, %p239
      %p241 = scmp.ne.s32.totalorder %s230, %s231
      %p242 = scmp.eq.s32.totalorder %s28, 0
      %p243 = por %p241, %p242
      %p244 = scmp.ne.s32.totalorder %s230, %s231
      %p245 = scmp.eq.s32.totalorder %s29, 1
      %p246 = por %p244, %p245
      %p248 = scmp.ne.s32.totalorder %s231, %s247
      %p249 = scmp.eq.s32.totalorder %s29, 0
      %p250 = por %p248, %p249
      %p251 = scmp.le.s32.totalorder 1, %s23
      %p252 = scmp.lt.s32.totalorder %s23, 3
      %p253 = pnand %p251, %p252
      %p254 = pneg %p253
      // Predicated region
      $region9: #{tpu_custom_call.1} parent=5 // pred_check
        _
      $region10: #{tpu_custom_call.1} parent=5 // pred_check_branch
        %256 = sbr.rel (%p253) target = $region12
      $region11: #{tpu_custom_call.1} parent=5 // pred_region
        %s257 = ssub.s32 %s23, 1
        // Predicated region
        $region13: #{tpu_custom_call.1} parent=11 // pred_check
          %p258 = pneg %p70
        $region14: #{tpu_custom_call.1} parent=11 // pred_check_branch
          %260 = sbr.rel (%p258) target = $region16
        $region15: #{tpu_custom_call.1} parent=11 // pred_region
          %s262 = ssub.s32 1024, 1024
          %263 = vsyncadd [#allocation7], %s262
          %s264 = sshll.u32 [#allocation6], 4
          %s265 = int_to_ptr.vmem [resolvable:$true] %s264
          %270 = dma.hbm_to_vmem [thread:$0]  %s1, 1024, %s265, [#allocation7], 64, 64, 4
        $region16: #{tpu_custom_call.1} parent=11 // pred_fallthru
          _
        // Predicated region
        $region17: #{tpu_custom_call.1} parent=11 // pred_check
          %p271 = pneg %p91
        $region18: #{tpu_custom_call.1} parent=11 // pred_check_branch
          %273 = sbr.rel (%p271) target = $region20
        $region19: #{tpu_custom_call.1} parent=11 // pred_region
          _
        $region20: #{tpu_custom_call.1} parent=11 // pred_fallthru
          _
        // Predicated region
        $region21: #{tpu_custom_call.1} parent=11 // pred_check
          %p274 = pneg %p112
        $region22: #{tpu_custom_call.1} parent=11 // pred_check_branch
          %276 = sbr.rel (%p274) target = $region24
        $region23: #{tpu_custom_call.1} parent=11 // pred_region
          %s278 = ssub.s32 9216, 9216
          %279 = vsyncadd [#allocation7], %s278
          %s280 = sshll.u32 [#allocation8], 4
          %s281 = int_to_ptr.vmem [resolvable:$true] %s280
          %286 = dma.hbm_to_vmem [thread:$0]  %s3, 9216, %s281, [#allocation7], 64, 64, 4
        $region24: #{tpu_custom_call.1} parent=11 // pred_fallthru
          _
        // Predicated region
        $region25: #{tpu_custom_call.1} parent=11 // pred_check
          %p287 = pneg %p133
        $region26: #{tpu_custom_call.1} parent=11 // pred_check_branch
          %289 = sbr.rel (%p287) target = $region28
        $region27: #{tpu_custom_call.1} parent=11 // pred_region
          _
        $region28: #{tpu_custom_call.1} parent=11 // pred_fallthru
          _
        // Predicated region
        $region29: #{tpu_custom_call.1} parent=11 // pred_check
          %p290 = pneg %p154
        $region30: #{tpu_custom_call.1} parent=11 // pred_check_branch
          %292 = sbr.rel (%p290) target = $region32
        $region31: #{tpu_custom_call.1} parent=11 // pred_region
          %s294 = ssub.s32 1024, 1024
          %295 = vsyncadd [#allocation10], %s294
          %s296 = sshll.u32 [#allocation9], 4
          %s297 = int_to_ptr.vmem [resolvable:$true] %s296
          %302 = dma.hbm_to_vmem [thread:$0]  %s5, 1024, %s297, [#allocation10], 64, 64, 4
        $region32: #{tpu_custom_call.1} parent=11 // pred_fallthru
          _
        // Predicated region
        $region33: #{tpu_custom_call.1} parent=11 // pred_check
          %p303 = pneg %p175
        $region34: #{tpu_custom_call.1} parent=11 // pred_check_branch
          %305 = sbr.rel (%p303) target = $region36
        $region35: #{tpu_custom_call.1} parent=11 // pred_region
          _
        $region36: #{tpu_custom_call.1} parent=11 // pred_fallthru
          _
        // Predicated region
        $region37: #{tpu_custom_call.1} parent=11 // pred_check
          %p306 = pneg %p196
        $region38: #{tpu_custom_call.1} parent=11 // pred_check_branch
          %308 = sbr.rel (%p306) target = $region40
        $region39: #{tpu_custom_call.1} parent=11 // pred_region
          %s310 = ssub.s32 1024, 1024
          %311 = vsyncadd [#allocation10], %s310
          %s312 = sshll.u32 [#allocation11], 4
          %s313 = int_to_ptr.vmem [resolvable:$true] %s312
          %318 = dma.hbm_to_vmem [thread:$0]  %s7, 1024, %s313, [#allocation10], 64, 64, 4
        $region40: #{tpu_custom_call.1} parent=11 // pred_fallthru
          _
        // Predicated region
        $region41: #{tpu_custom_call.1} parent=11 // pred_check
          %p319 = pneg %p217
        $region42: #{tpu_custom_call.1} parent=11 // pred_check_branch
          %321 = sbr.rel (%p319) target = $region44
        $region43: #{tpu_custom_call.1} parent=11 // pred_region
          _
        $region44: #{tpu_custom_call.1} parent=11 // pred_fallthru
          _
      $region12: #{tpu_custom_call.1} parent=5 // pred_fallthru
        _
      %p322 = scmp.lt.s32.totalorder %s23, 2
      // Predicated region
      $region45: #{tpu_custom_call.1} parent=5 // pred_check
        %p323 = pneg %p322
      $region46: #{tpu_custom_call.1} parent=5 // pred_check_branch
        %325 = sbr.rel (%p323) target = $region48
      $region47: #{tpu_custom_call.1} parent=5 // pred_region
        // Predicated region
        $region49: #{tpu_custom_call.1} parent=47 // pred_check
          %p326 = pneg %p43
        $region50: #{tpu_custom_call.1} parent=47 // pred_check_branch
          %328 = sbr.rel (%p326) target = $region52
        $region51: #{tpu_custom_call.1} parent=47 // pred_region
          %s329 = sand.u32 %s33, 1
          %s330 = scalar_lea.sflag [#allocation4], %s329
          %s331 = sand.u32 %s33, 1
          %s332 = smul.addr %s331, 128
          %s333 = scalar_lea.vmem [#allocation3], %s332
          %s334 = smul.u32 32, %s23
          %s336 = ssub.s32 2048, 2048
          %337 = vsyncadd %s330, %s336
          %s338 = smul.addr %s334, 64
          %s339 = scalar_lea.hbm %s0, %s338
          %s340 = sshll.u32 %s333, 4
          %s341 = int_to_ptr.vmem [resolvable:$true] %s340
          %346 = dma.hbm_to_vmem [thread:$0]  %s339, 2048, %s341, %s330, 64, 64, 4
        $region52: #{tpu_custom_call.1} parent=47 // pred_fallthru
          _
      $region48: #{tpu_custom_call.1} parent=5 // pred_fallthru
        _
      %p347 = scmp.le.s32.totalorder 1, %s23
      %p348 = scmp.lt.s32.totalorder %s23, 3
      %p349 = pnand %p347, %p348
      %p350 = pneg %p349
      // Predicated region
      $region53: #{tpu_custom_call.1} parent=5 // pred_check
        _
      $region54: #{tpu_custom_call.1} parent=5 // pred_check_branch
        %352 = sbr.rel (%p349) target = $region56
      $region55: #{tpu_custom_call.1} parent=5 // pred_region
        %s353 = ssub.s32 %s23, 1
        %s354 = sand.u32 %s36, 1
        %s355 = scalar_lea.sflag [#allocation4], %s354
        %s356 = sand.u32 %s36, 1
        %s357 = smul.addr %s356, 128
        %s358 = scalar_lea.vmem [#allocation3], %s357
        // Predicated region
        $region57: #{tpu_custom_call.1} parent=55 // pred_check
          %p359 = pneg %p49
        $region58: #{tpu_custom_call.1} parent=55 // pred_check_branch
          %361 = sbr.rel (%p359) target = $region60
        $region59: #{tpu_custom_call.1} parent=55 // pred_region
          %362 = dma.done %s355, 2048
        $region60: #{tpu_custom_call.1} parent=55 // pred_fallthru
          _
        // Predicated region
        $region61: #{tpu_custom_call.1} parent=55 // pred_check
          %p363 = pneg %p70
        $region62: #{tpu_custom_call.1} parent=55 // pred_check_branch
          %365 = sbr.rel (%p363) target = $region64
        $region63: #{tpu_custom_call.1} parent=55 // pred_region
          %366 = dma.done [#allocation7], 1024
        $region64: #{tpu_custom_call.1} parent=55 // pred_fallthru
          _
        // Predicated region
        $region65: #{tpu_custom_call.1} parent=55 // pred_check
          %p367 = pneg %p112
        $region66: #{tpu_custom_call.1} parent=55 // pred_check_branch
          %369 = sbr.rel (%p367) target = $region68
        $region67: #{tpu_custom_call.1} parent=55 // pred_region
          %370 = dma.done [#allocation7], 9216
        $region68: #{tpu_custom_call.1} parent=55 // pred_fallthru
          _
        // Predicated region
        $region69: #{tpu_custom_call.1} parent=55 // pred_check
          %p371 = pneg %p154
        $region70: #{tpu_custom_call.1} parent=55 // pred_check_branch
          %373 = sbr.rel (%p371) target = $region72
        $region71: #{tpu_custom_call.1} parent=55 // pred_region
          %374 = dma.done [#allocation10], 1024
        $region72: #{tpu_custom_call.1} parent=55 // pred_fallthru
          _
        // Predicated region
        $region73: #{tpu_custom_call.1} parent=55 // pred_check
          %p375 = pneg %p196
        $region74: #{tpu_custom_call.1} parent=55 // pred_check_branch
          %377 = sbr.rel (%p375) target = $region76
        $region75: #{tpu_custom_call.1} parent=55 // pred_region
          %378 = dma.done [#allocation10], 1024
        $region76: #{tpu_custom_call.1} parent=55 // pred_fallthru
          _
        %s379 = sand.u32 %s36, 1
        %s380 = scalar_lea.sflag [#allocation4], %s379
        %s381 = sand.u32 %s36, 1
        %s382 = smul.addr %s381, 128
        %s383 = scalar_lea.vmem [#allocation3], %s382
        %p384 = pneg %p49
        %p385 = pneg %p46
        %p386 = pneg %p70
        %p387 = pneg %p67
        %p388 = pneg %p91
        %p389 = pneg %p88
        %p390 = pneg %p112
        %p391 = pneg %p109
        %p392 = pneg %p133
        %p393 = pneg %p130
        %p394 = pneg %p154
        %p395 = pneg %p151
        %p396 = pneg %p175
        %p397 = pneg %p172
        %p398 = pneg %p196
        %p399 = pneg %p193
        %p400 = pneg %p217
        %p401 = pneg %p214
        %p402 = pneg %p243
        %p403 = pneg %p240
        %s404 = sand.u32 %s230, 1
        %s405 = scalar_lea.sflag [#allocation5], %s404
        %s406 = sand.u32 %s230, 1
        %s407 = smul.addr %s406, 128
        %s408 = scalar_lea.vmem [#allocation12], %s407
        %s409 = smul.u32 32, %s28
        %s410 = smul.u32 32, %s28
        %v412 = vld [vmem:[%s358] sm:$0xf]
        %v413 = vld [vmem:[%s358 + $0x4] sm:$0xf]
        %v414 = vld [vmem:[%s358 + $0x8] sm:$0xf]
        %v415 = vld [vmem:[%s358 + $0xc] sm:$0xf]
        %v416 = vld [vmem:[%s358 + $0x10] sm:$0xf]
        %v417 = vld [vmem:[%s358 + $0x14] sm:$0xf]
        %v418 = vld [vmem:[%s358 + $0x18] sm:$0xf]
        %v419 = vld [vmem:[%s358 + $0x1c] sm:$0xf]
        %v420 = vld [vmem:[%s358 + $0x20] sm:$0xf]
        %v421 = vld [vmem:[%s358 + $0x24] sm:$0xf]
        %v422 = vld [vmem:[%s358 + $0x28] sm:$0xf]
        %v423 = vld [vmem:[%s358 + $0x2c] sm:$0xf]
        %v424 = vld [vmem:[%s358 + $0x30] sm:$0xf]
        %v425 = vld [vmem:[%s358 + $0x34] sm:$0xf]
        %v426 = vld [vmem:[%s358 + $0x38] sm:$0xf]
        %v427 = vld [vmem:[%s358 + $0x3c] sm:$0xf]
        %v428 = vld [vmem:[%s358 + $0x40] sm:$0xf]
        %v429 = vld [vmem:[%s358 + $0x44] sm:$0xf]
        %v430 = vld [vmem:[%s358 + $0x48] sm:$0xf]
        %v431 = vld [vmem:[%s358 + $0x4c] sm:$0xf]
        %v432 = vld [vmem:[%s358 + $0x50] sm:$0xf]
        %v433 = vld [vmem:[%s358 + $0x54] sm:$0xf]
        %v434 = vld [vmem:[%s358 + $0x58] sm:$0xf]
        %v435 = vld [vmem:[%s358 + $0x5c] sm:$0xf]
        %v436 = vld [vmem:[%s358 + $0x60] sm:$0xf]
        %v437 = vld [vmem:[%s358 + $0x64] sm:$0xf]
        %v438 = vld [vmem:[%s358 + $0x68] sm:$0xf]
        %v439 = vld [vmem:[%s358 + $0x6c] sm:$0xf]
        %v440 = vld [vmem:[%s358 + $0x70] sm:$0xf]
        %v441 = vld [vmem:[%s358 + $0x74] sm:$0xf]
        %v442 = vld [vmem:[%s358 + $0x78] sm:$0xf]
        %v443 = vld [vmem:[%s358 + $0x7c] sm:$0xf]
        %v444 = vld [vmem:[#allocation6] sm:$0xf]
        %v445 = vld [vmem:[#allocation6 + $0x4] sm:$0xf]
        %v446 = vld [vmem:[#allocation6 + $0x8] sm:$0xf]
        %v447 = vld [vmem:[#allocation6 + $0xc] sm:$0xf]
        %v448 = vld [vmem:[#allocation6 + $0x10] sm:$0xf]
        %v449 = vld [vmem:[#allocation6 + $0x14] sm:$0xf]
        %v450 = vld [vmem:[#allocation6 + $0x18] sm:$0xf]
        %v451 = vld [vmem:[#allocation6 + $0x1c] sm:$0xf]
        %v452 = vld [vmem:[#allocation6 + $0x20] sm:$0xf]
        %v453 = vld [vmem:[#allocation6 + $0x24] sm:$0xf]
        %v454 = vld [vmem:[#allocation6 + $0x28] sm:$0xf]
        %v455 = vld [vmem:[#allocation6 + $0x2c] sm:$0xf]
        %v456 = vld [vmem:[#allocation6 + $0x30] sm:$0xf]
        %v457 = vld [vmem:[#allocation6 + $0x34] sm:$0xf]
        %v458 = vld [vmem:[#allocation6 + $0x38] sm:$0xf]
        %v459 = vld [vmem:[#allocation6 + $0x3c] sm:$0xf]
        %v460 = vld [vmem:[%s2] sm:$0x1]
        %v462 = vlaneseq
        %v463 = vshrl.u32 %v462, 7
        %v464 = vsub.s32 0, %v463
        %v465 = vrot.slane %v460, %v464
        %v499 = vunpack.c.l.b16 %v412
        %v500 = vunpack.c.l.b16 %v413
        %v501 = vunpack.c.l.b16 %v414
        %v502 = vunpack.c.l.b16 %v415
        %v503 = vunpack.c.l.b16 %v416
        %v504 = vunpack.c.l.b16 %v417
        %v505 = vunpack.c.l.b16 %v418
        %v506 = vunpack.c.l.b16 %v419
        %v507 = vunpack.c.l.b16 %v420
        %v508 = vunpack.c.l.b16 %v421
        %v509 = vunpack.c.l.b16 %v422
        %v510 = vunpack.c.l.b16 %v423
        %v511 = vunpack.c.l.b16 %v424
        %v512 = vunpack.c.l.b16 %v425
        %v513 = vunpack.c.l.b16 %v426
        %v514 = vunpack.c.l.b16 %v427
        %v515 = vunpack.c.l.b16 %v428
        %v516 = vunpack.c.l.b16 %v429
        %v517 = vunpack.c.l.b16 %v430
        %v518 = vunpack.c.l.b16 %v431
        %v519 = vunpack.c.l.b16 %v432
        %v520 = vunpack.c.l.b16 %v433
        %v521 = vunpack.c.l.b16 %v434
        %v522 = vunpack.c.l.b16 %v435
        %v523 = vunpack.c.l.b16 %v436
        %v524 = vunpack.c.l.b16 %v437
        %v525 = vunpack.c.l.b16 %v438
        %v526 = vunpack.c.l.b16 %v439
        %v527 = vunpack.c.l.b16 %v440
        %v528 = vunpack.c.l.b16 %v441
        %v529 = vunpack.c.l.b16 %v442
        %v530 = vunpack.c.l.b16 %v443
        %v531 = vpack.c.b16 %v500, %v499
        %v532 = vpack.c.b16 %v502, %v501
        %v533 = vpack.c.b16 %v504, %v503
        %v534 = vpack.c.b16 %v506, %v505
        %v535 = vpack.c.b16 %v508, %v507
        %v536 = vpack.c.b16 %v510, %v509
        %v537 = vpack.c.b16 %v512, %v511
        %v538 = vpack.c.b16 %v514, %v513
        %v539 = vpack.c.b16 %v516, %v515
        %v540 = vpack.c.b16 %v518, %v517
        %v541 = vpack.c.b16 %v520, %v519
        %v542 = vpack.c.b16 %v522, %v521
        %v543 = vpack.c.b16 %v524, %v523
        %v544 = vpack.c.b16 %v526, %v525
        %v545 = vpack.c.b16 %v528, %v527
        %v546 = vpack.c.b16 %v530, %v529
        %v579 = vunpack.c.l.b16 %v444
        %v580 = vunpack.c.l.b16 %v445
        %v581 = vunpack.c.l.b16 %v446
        %v582 = vunpack.c.l.b16 %v447
        %v583 = vunpack.c.l.b16 %v448
        %v584 = vunpack.c.l.b16 %v449
        %v585 = vunpack.c.l.b16 %v450
        %v586 = vunpack.c.l.b16 %v451
        %v587 = vunpack.c.l.b16 %v452
        %v588 = vunpack.c.l.b16 %v453
        %v589 = vunpack.c.l.b16 %v454
        %v590 = vunpack.c.l.b16 %v455
        %v591 = vunpack.c.l.b16 %v456
        %v592 = vunpack.c.l.b16 %v457
        %v593 = vunpack.c.l.b16 %v458
        %v594 = vunpack.c.l.b16 %v459
        %v595 = vpack.c.b16 %v580, %v579
        %v596 = vpack.c.b16 %v582, %v581
        %v597 = vpack.c.b16 %v584, %v583
        %v598 = vpack.c.b16 %v586, %v585
        %v599 = vpack.c.b16 %v588, %v587
        %v600 = vpack.c.b16 %v590, %v589
        %v601 = vpack.c.b16 %v592, %v591
        %v602 = vpack.c.b16 %v594, %v593
        %611 = vmatprep.subr.bf16.mxu0 0
        %612 = vmatpush1.bf16.msra.mxu0 %v595
        %613 = vmatprep.subr.bf16.mxu0 0
        %614 = vmatpush1.bf16.msra.mxu0 %v596
        %615 = vmatprep.subr.bf16.mxu0 0
        %616 = vmatpush1.bf16.msra.mxu0 %v597
        %617 = vmatprep.subr.bf16.mxu0 0
        %618 = vmatpush1.bf16.msra.mxu0 %v598
        %619 = vmatprep.subr.bf16.mxu0 0
        %620 = vmatpush1.bf16.msra.mxu0 %v599
        %621 = vmatprep.subr.bf16.mxu0 0
        %622 = vmatpush1.bf16.msra.mxu0 %v600
        %623 = vmatprep.subr.bf16.mxu0 0
        %624 = vmatpush1.bf16.msra.mxu0 %v601
        %625 = vmatprep.subr.bf16.mxu0 0
        %626 = vmatpush1.bf16.msra.mxu0 %v602
        %627 = vmatprep.subr.bf16.mxu0 0
        %628 = vmatpush1.bf16.msra.mxu0 0
        %629 = vmatprep.subr.bf16.mxu0 0
        %630 = vmatpush1.bf16.msra.mxu0 0
        %631 = vmatprep.subr.bf16.mxu0 0
        %632 = vmatpush1.bf16.msra.mxu0 0
        %633 = vmatprep.subr.bf16.mxu0 0
        %634 = vmatpush1.bf16.msra.mxu0 0
        %635 = vmatprep.subr.bf16.mxu0 0
        %636 = vmatpush1.bf16.msra.mxu0 0
        %637 = vmatprep.subr.bf16.mxu0 0
        %638 = vmatpush1.bf16.msra.mxu0 0
        %639 = vmatprep.subr.bf16.mxu0 0
        %640 = vmatpush1.bf16.msra.mxu0 0
        %641 = vmatprep.subr.bf16.mxu0 0
        %642 = vmatpush1.bf16.msra.mxu0 0
        %643 = vmatprep.mubr.bf16.mxu0 0
        %644 = vmatmul.mubr.bf16.gmra.mrb[0].mxu0 %v531
        %v645 = vpop.f32.mrb[0].mxu0
        %v646 = vadd.f32 %v465, %v645
        %v647 = vpop.f32.mrb[0].mxu0
        %v648 = vpop.f32.mrb[0].mxu0
        %v649 = vadd.f32 %v465, %v648
        %v650 = vpop.f32.mrb[0].mxu0
        %651 = vmatprep.mubr.bf16.mxu0 0
        %652 = vmatmul.mubr.bf16.gmra.mrb[0].mxu0 %v532
        %v653 = vpop.f32.mrb[0].mxu0
        %v654 = vadd.f32 %v465, %v653
        %v655 = vpop.f32.mrb[0].mxu0
        %v656 = vpop.f32.mrb[0].mxu0
        %v657 = vadd.f32 %v465, %v656
        %v658 = vpop.f32.mrb[0].mxu0
        %659 = vmatprep.mubr.bf16.mxu0 0
        %660 = vmatmul.mubr.bf16.gmra.mrb[0].mxu0 %v533
        %v661 = vpop.f32.mrb[0].mxu0
        %v662 = vadd.f32 %v465, %v661
        %v663 = vpop.f32.mrb[0].mxu0
        %v664 = vpop.f32.mrb[0].mxu0
        %v665 = vadd.f32 %v465, %v664
        %v666 = vpop.f32.mrb[0].mxu0
        %667 = vmatprep.mubr.bf16.mxu0 0
        %668 = vmatmul.mubr.bf16.gmra.mrb[0].mxu0 %v534
        %v669 = vpop.f32.mrb[0].mxu0
        %v670 = vadd.f32 %v465, %v669
        %v671 = vpop.f32.mrb[0].mxu0
        %v672 = vpop.f32.mrb[0].mxu0
        %v673 = vadd.f32 %v465, %v672
        %v674 = vpop.f32.mrb[0].mxu0
        %675 = vmatprep.mubr.bf16.mxu0 0
        %676 = vmatmul.mubr.bf16.gmra.mrb[0].mxu0 %v535
        %v677 = vpop.f32.mrb[0].mxu0
        %v678 = vadd.f32 %v465, %v677
        %v679 = vpop.f32.mrb[0].mxu0
        %v680 = vpop.f32.mrb[0].mxu0
        %v681 = vadd.f32 %v465, %v680
        %v682 = vpop.f32.mrb[0].mxu0
        %683 = vmatprep.mubr.bf16.mxu0 0
        %684 = vmatmul.mubr.bf16.gmra.mrb[0].mxu0 %v536
        %v685 = vpop.f32.mrb[0].mxu0
        %v686 = vadd.f32 %v465, %v685
        %v687 = vpop.f32.mrb[0].mxu0
        %v688 = vpop.f32.mrb[0].mxu0
        %v689 = vadd.f32 %v465, %v688
        %v690 = vpop.f32.mrb[0].mxu0
        %691 = vmatprep.mubr.bf16.mxu0 0
        %692 = vmatmul.mubr.bf16.gmra.mrb[0].mxu0 %v537
        %v693 = vpop.f32.mrb[0].mxu0
        %v694 = vadd.f32 %v465, %v693
        %v695 = vpop.f32.mrb[0].mxu0
        %v696 = vpop.f32.mrb[0].mxu0
        %v697 = vadd.f32 %v465, %v696
        %v698 = vpop.f32.mrb[0].mxu0
        %699 = vmatprep.mubr.bf16.mxu0 0
        %700 = vmatmul.mubr.bf16.gmra.mrb[0].mxu0 %v538
        %v701 = vpop.f32.mrb[0].mxu0
        %v702 = vadd.f32 %v465, %v701
        %v703 = vpop.f32.mrb[0].mxu0
        %v704 = vpop.f32.mrb[0].mxu0
        %v705 = vadd.f32 %v465, %v704
        %v706 = vpop.f32.mrb[0].mxu0
        %707 = vmatprep.mubr.bf16.mxu0 0
        %708 = vmatmul.mubr.bf16.gmra.mrb[0].mxu0 %v539
        %v709 = vpop.f32.mrb[0].mxu0
        %v710 = vadd.f32 %v465, %v709
        %v711 = vpop.f32.mrb[0].mxu0
        %v712 = vpop.f32.mrb[0].mxu0
        %v713 = vadd.f32 %v465, %v712
        %v714 = vpop.f32.mrb[0].mxu0
        %715 = vmatprep.mubr.bf16.mxu0 0
        %716 = vmatmul.mubr.bf16.gmra.mrb[0].mxu0 %v540
        %v717 = vpop.f32.mrb[0].mxu0
        %v718 = vadd.f32 %v465, %v717
        %v719 = vpop.f32.mrb[0].mxu0
        %v720 = vpop.f32.mrb[0].mxu0
        %v721 = vadd.f32 %v465, %v720
        %v722 = vpop.f32.mrb[0].mxu0
        %723 = vmatprep.mubr.bf16.mxu0 0
        %724 = vmatmul.mubr.bf16.gmra.mrb[0].mxu0 %v541
        %v725 = vpop.f32.mrb[0].mxu0
        %v726 = vadd.f32 %v465, %v725
        %v727 = vpop.f32.mrb[0].mxu0
        %v728 = vpop.f32.mrb[0].mxu0
        %v729 = vadd.f32 %v465, %v728
        %v730 = vpop.f32.mrb[0].mxu0
        %731 = vmatprep.mubr.bf16.mxu0 0
        %732 = vmatmul.mubr.bf16.gmra.mrb[0].mxu0 %v542
        %v733 = vpop.f32.mrb[0].mxu0
        %v734 = vadd.f32 %v465, %v733
        %v735 = vpop.f32.mrb[0].mxu0
        %v736 = vpop.f32.mrb[0].mxu0
        %v737 = vadd.f32 %v465, %v736
        %v738 = vpop.f32.mrb[0].mxu0
        %739 = vmatprep.mubr.bf16.mxu0 0
        %740 = vmatmul.mubr.bf16.gmra.mrb[0].mxu0 %v543
        %v741 = vpop.f32.mrb[0].mxu0
        %v742 = vadd.f32 %v465, %v741
        %v743 = vpop.f32.mrb[0].mxu0
        %v744 = vpop.f32.mrb[0].mxu0
        %v745 = vadd.f32 %v465, %v744
        %v746 = vpop.f32.mrb[0].mxu0
        %747 = vmatprep.mubr.bf16.mxu0 0
        %748 = vmatmul.mubr.bf16.gmra.mrb[0].mxu0 %v544
        %v749 = vpop.f32.mrb[0].mxu0
        %v750 = vadd.f32 %v465, %v749
        %v751 = vpop.f32.mrb[0].mxu0
        %v752 = vpop.f32.mrb[0].mxu0
        %v753 = vadd.f32 %v465, %v752
        %v754 = vpop.f32.mrb[0].mxu0
        %755 = vmatprep.mubr.bf16.mxu0 0
        %756 = vmatmul.mubr.bf16.gmra.mrb[0].mxu0 %v545
        %v757 = vpop.f32.mrb[0].mxu0
        %v758 = vadd.f32 %v465, %v757
        %v759 = vpop.f32.mrb[0].mxu0
        %v760 = vpop.f32.mrb[0].mxu0
        %v761 = vadd.f32 %v465, %v760
        %v762 = vpop.f32.mrb[0].mxu0
        %763 = vmatprep.mubr.bf16.mxu0 0
        %764 = vmatmul.mubr.bf16.gmra.mrb[0].mxu0 %v546
        %v765 = vpop.f32.mrb[0].mxu0
        %v766 = vadd.f32 %v465, %v765
        %v767 = vpop.f32.mrb[0].mxu0
        %v768 = vpop.f32.mrb[0].mxu0
        %v769 = vadd.f32 %v465, %v768
        %v770 = vpop.f32.mrb[0].mxu0
        %771 = vdwg.mxu0
        %v772 = vmax.f32 %v646, 0.0
        %v773 = vmax.f32 %v649, 0.0
        %v774 = vmax.f32 %v654, 0.0
        %v775 = vmax.f32 %v657, 0.0
        %v776 = vmax.f32 %v662, 0.0
        %v777 = vmax.f32 %v665, 0.0
        %v778 = vmax.f32 %v670, 0.0
        %v779 = vmax.f32 %v673, 0.0
        %v780 = vmax.f32 %v678, 0.0
        %v781 = vmax.f32 %v681, 0.0
        %v782 = vmax.f32 %v686, 0.0
        %v783 = vmax.f32 %v689, 0.0
        %v784 = vmax.f32 %v694, 0.0
        %v785 = vmax.f32 %v697, 0.0
        %v786 = vmax.f32 %v702, 0.0
        %v787 = vmax.f32 %v705, 0.0
        %v788 = vmax.f32 %v710, 0.0
        %v789 = vmax.f32 %v713, 0.0
        %v790 = vmax.f32 %v718, 0.0
        %v791 = vmax.f32 %v721, 0.0
        %v792 = vmax.f32 %v726, 0.0
        %v793 = vmax.f32 %v729, 0.0
        %v794 = vmax.f32 %v734, 0.0
        %v795 = vmax.f32 %v737, 0.0
        %v796 = vmax.f32 %v742, 0.0
        %v797 = vmax.f32 %v745, 0.0
        %v798 = vmax.f32 %v750, 0.0
        %v799 = vmax.f32 %v753, 0.0
        %v800 = vmax.f32 %v758, 0.0
        %v801 = vmax.f32 %v761, 0.0
        %v802 = vmax.f32 %v766, 0.0
        %v803 = vmax.f32 %v769, 0.0
        %v804 = vpack.c.bf16 %v773, %v772
        %v805 = vpack.c.bf16 %v775, %v774
        %v806 = vpack.c.bf16 %v777, %v776
        %v807 = vpack.c.bf16 %v779, %v778
        %v808 = vpack.c.bf16 %v781, %v780
        %v809 = vpack.c.bf16 %v783, %v782
        %v810 = vpack.c.bf16 %v785, %v784
        %v811 = vpack.c.bf16 %v787, %v786
        %v812 = vpack.c.bf16 %v789, %v788
        %v813 = vpack.c.bf16 %v791, %v790
        %v814 = vpack.c.bf16 %v793, %v792
        %v815 = vpack.c.bf16 %v795, %v794
        %v816 = vpack.c.bf16 %v797, %v796
        %v817 = vpack.c.bf16 %v799, %v798
        %v818 = vpack.c.bf16 %v801, %v800
        %v819 = vpack.c.bf16 %v803, %v802
        %820 = vst [vmem:[#allocation2] sm:$0xf] 0
        %821 = vst [vmem:[#allocation2 + $0x4] sm:$0xf] 0
        %822 = vst [vmem:[#allocation2 + $0x8] sm:$0x1] 0
        %s823 = scalar_lea.vmem [#allocation2], 204
        %824 = vst [vmem:[%s823] sm:$0xf] 0
        %825 = vst [vmem:[%s823 + $0x4] sm:$0xf] 0
        %826 = vst [vmem:[%s823 + $0x8] sm:$0x1] 0
        %s827 = scalar_lea.vmem [#allocation2], 12
        %vm828 = vcmask 1040384
        %vm829 = vsmask.f32 256
        %vm830 = vmand %vm828, %vm829
        %v831 = vld [vmem:[%s827] sm:$0x1]
        %v832 = vsel %vm830, 0, %v831
        %833 = vst [vmem:[%s827] sm:$0x1] %v832
        %v834 = vld [vmem:[%s827 + $0xc] sm:$0x1]
        %v835 = vsel %vm830, 0, %v834
        %836 = vst [vmem:[%s827 + $0xc] sm:$0x1] %v835
        %v837 = vld [vmem:[%s827 + $0x18] sm:$0x1]
        %v838 = vsel %vm830, 0, %v837
        %839 = vst [vmem:[%s827 + $0x18] sm:$0x1] %v838
        %v840 = vld [vmem:[%s827 + $0x24] sm:$0x1]
        %v841 = vsel %vm830, 0, %v840
        %842 = vst [vmem:[%s827 + $0x24] sm:$0x1] %v841
        %v843 = vld [vmem:[%s827 + $0x30] sm:$0x1]
        %v844 = vsel %vm830, 0, %v843
        %845 = vst [vmem:[%s827 + $0x30] sm:$0x1] %v844
        %v846 = vld [vmem:[%s827 + $0x3c] sm:$0x1]
        %v847 = vsel %vm830, 0, %v846
        %848 = vst [vmem:[%s827 + $0x3c] sm:$0x1] %v847
        %v849 = vld [vmem:[%s827 + $0x48] sm:$0x1]
        %v850 = vsel %vm830, 0, %v849
        %851 = vst [vmem:[%s827 + $0x48] sm:$0x1] %v850
        %v852 = vld [vmem:[%s827 + $0x54] sm:$0x1]
        %v853 = vsel %vm830, 0, %v852
        %854 = vst [vmem:[%s827 + $0x54] sm:$0x1] %v853
        %v855 = vld [vmem:[%s827 + $0x60] sm:$0x1]
        %v856 = vsel %vm830, 0, %v855
        %857 = vst [vmem:[%s827 + $0x60] sm:$0x1] %v856
        %v858 = vld [vmem:[%s827 + $0x6c] sm:$0x1]
        %v859 = vsel %vm830, 0, %v858
        %860 = vst [vmem:[%s827 + $0x6c] sm:$0x1] %v859
        %v861 = vld [vmem:[%s827 + $0x78] sm:$0x1]
        %v862 = vsel %vm830, 0, %v861
        %863 = vst [vmem:[%s827 + $0x78] sm:$0x1] %v862
        %v864 = vld [vmem:[%s827 + $0x84] sm:$0x1]
        %v865 = vsel %vm830, 0, %v864
        %866 = vst [vmem:[%s827 + $0x84] sm:$0x1] %v865
        %v867 = vld [vmem:[%s827 + $0x90] sm:$0x1]
        %v868 = vsel %vm830, 0, %v867
        %869 = vst [vmem:[%s827 + $0x90] sm:$0x1] %v868
        %v870 = vld [vmem:[%s827 + $0x9c] sm:$0x1]
        %v871 = vsel %vm830, 0, %v870
        %872 = vst [vmem:[%s827 + $0x9c] sm:$0x1] %v871
        %v873 = vld [vmem:[%s827 + $0xa8] sm:$0x1]
        %v874 = vsel %vm830, 0, %v873
        %875 = vst [vmem:[%s827 + $0xa8] sm:$0x1] %v874
        %v876 = vld [vmem:[%s827 + $0xb4] sm:$0x1]
        %v877 = vsel %vm830, 0, %v876
        %878 = vst [vmem:[%s827 + $0xb4] sm:$0x1] %v877
        %vm879 = vsmask.f32 7938
        %vm880 = vmand %vm828, %vm879
        %v881 = vld [vmem:[%s827 + $0x8] sm:$0x1]
        %v882 = vsel %vm880, 0, %v881
        %883 = vst [vmem:[%s827 + $0x8] sm:$0x1] %v882
        %v884 = vld [vmem:[%s827 + $0x14] sm:$0x1]
        %v885 = vsel %vm880, 0, %v884
        %886 = vst [vmem:[%s827 + $0x14] sm:$0x1] %v885
        %v887 = vld [vmem:[%s827 + $0x20] sm:$0x1]
        %v888 = vsel %vm880, 0, %v887
        %889 = vst [vmem:[%s827 + $0x20] sm:$0x1] %v888
        %v890 = vld [vmem:[%s827 + $0x2c] sm:$0x1]
        %v891 = vsel %vm880, 0, %v890
        %892 = vst [vmem:[%s827 + $0x2c] sm:$0x1] %v891
        %v893 = vld [vmem:[%s827 + $0x38] sm:$0x1]
        %v894 = vsel %vm880, 0, %v893
        %895 = vst [vmem:[%s827 + $0x38] sm:$0x1] %v894
        %v896 = vld [vmem:[%s827 + $0x44] sm:$0x1]
        %v897 = vsel %vm880, 0, %v896
        %898 = vst [vmem:[%s827 + $0x44] sm:$0x1] %v897
        %v899 = vld [vmem:[%s827 + $0x50] sm:$0x1]
        %v900 = vsel %vm880, 0, %v899
        %901 = vst [vmem:[%s827 + $0x50] sm:$0x1] %v900
        %v902 = vld [vmem:[%s827 + $0x5c] sm:$0x1]
        %v903 = vsel %vm880, 0, %v902
        %904 = vst [vmem:[%s827 + $0x5c] sm:$0x1] %v903
        %v905 = vld [vmem:[%s827 + $0x68] sm:$0x1]
        %v906 = vsel %vm880, 0, %v905
        %907 = vst [vmem:[%s827 + $0x68] sm:$0x1] %v906
        %v908 = vld [vmem:[%s827 + $0x74] sm:$0x1]
        %v909 = vsel %vm880, 0, %v908
        %910 = vst [vmem:[%s827 + $0x74] sm:$0x1] %v909
        %v911 = vld [vmem:[%s827 + $0x80] sm:$0x1]
        %v912 = vsel %vm880, 0, %v911
        %913 = vst [vmem:[%s827 + $0x80] sm:$0x1] %v912
        %v914 = vld [vmem:[%s827 + $0x8c] sm:$0x1]
        %v915 = vsel %vm880, 0, %v914
        %916 = vst [vmem:[%s827 + $0x8c] sm:$0x1] %v915
        %v917 = vld [vmem:[%s827 + $0x98] sm:$0x1]
        %v918 = vsel %vm880, 0, %v917
        %919 = vst [vmem:[%s827 + $0x98] sm:$0x1] %v918
        %v920 = vld [vmem:[%s827 + $0xa4] sm:$0x1]
        %v921 = vsel %vm880, 0, %v920
        %922 = vst [vmem:[%s827 + $0xa4] sm:$0x1] %v921
        %v923 = vld [vmem:[%s827 + $0xb0] sm:$0x1]
        %v924 = vsel %vm880, 0, %v923
        %925 = vst [vmem:[%s827 + $0xb0] sm:$0x1] %v924
        %v926 = vld [vmem:[%s827 + $0xbc] sm:$0x1]
        %v927 = vsel %vm880, 0, %v926
        %928 = vst [vmem:[%s827 + $0xbc] sm:$0x1] %v927
        %v945 = vunpack.c.l.b16 %v804
        %v946 = vunpack.c.h.b16 %v804
        %v947 = vunpack.c.l.b16 %v805
        %v948 = vunpack.c.h.b16 %v805
        %v949 = vunpack.c.l.b16 %v806
        %v950 = vunpack.c.h.b16 %v806
        %v951 = vunpack.c.l.b16 %v807
        %v952 = vunpack.c.h.b16 %v807
        %v953 = vunpack.c.l.b16 %v808
        %v954 = vunpack.c.h.b16 %v808
        %v955 = vunpack.c.l.b16 %v809
        %v956 = vunpack.c.h.b16 %v809
        %v957 = vunpack.c.l.b16 %v810
        %v958 = vunpack.c.h.b16 %v810
        %v959 = vunpack.c.l.b16 %v811
        %v960 = vunpack.c.h.b16 %v811
        %v961 = vunpack.c.l.b16 %v812
        %v962 = vunpack.c.h.b16 %v812
        %v963 = vunpack.c.l.b16 %v813
        %v964 = vunpack.c.h.b16 %v813
        %v965 = vunpack.c.l.b16 %v814
        %v966 = vunpack.c.h.b16 %v814
        %v967 = vunpack.c.l.b16 %v815
        %v968 = vunpack.c.h.b16 %v815
        %v969 = vunpack.c.l.b16 %v816
        %v970 = vunpack.c.h.b16 %v816
        %v971 = vunpack.c.l.b16 %v817
        %v972 = vunpack.c.h.b16 %v817
        %v973 = vunpack.c.l.b16 %v818
        %v974 = vunpack.c.h.b16 %v818
        %v975 = vunpack.c.l.b16 %v819
        %v976 = vunpack.c.h.b16 %v819
        %v977 = vpack.c.b16 %v945, %v945
        %v978 = vpack.c.b16 %v946, %v946
        %v979 = vpack.c.b16 %v947, %v947
        %v980 = vpack.c.b16 %v948, %v948
        %v981 = vpack.c.b16 %v949, %v949
        %v982 = vpack.c.b16 %v950, %v950
        %v983 = vpack.c.b16 %v951, %v951
        %v984 = vpack.c.b16 %v952, %v952
        %v985 = vpack.c.b16 %v953, %v953
        %v986 = vpack.c.b16 %v954, %v954
        %v987 = vpack.c.b16 %v955, %v955
        %v988 = vpack.c.b16 %v956, %v956
        %v989 = vpack.c.b16 %v957, %v957
        %v990 = vpack.c.b16 %v958, %v958
        %v991 = vpack.c.b16 %v959, %v959
        %v992 = vpack.c.b16 %v960, %v960
        %v993 = vpack.c.b16 %v961, %v961
        %v994 = vpack.c.b16 %v962, %v962
        %v995 = vpack.c.b16 %v963, %v963
        %v996 = vpack.c.b16 %v964, %v964
        %v997 = vpack.c.b16 %v965, %v965
        %v998 = vpack.c.b16 %v966, %v966
        %v999 = vpack.c.b16 %v967, %v967
        %v1000 = vpack.c.b16 %v968, %v968
        %v1001 = vpack.c.b16 %v969, %v969
        %v1002 = vpack.c.b16 %v970, %v970
        %v1003 = vpack.c.b16 %v971, %v971
        %v1004 = vpack.c.b16 %v972, %v972
        %v1005 = vpack.c.b16 %v973, %v973
        %v1006 = vpack.c.b16 %v974, %v974
        %v1007 = vpack.c.b16 %v975, %v975
        %v1008 = vpack.c.b16 %v976, %v976
        %vm1009 = vsmask.f32 4368
        %vm1010 = vmor %vm829, %vm1009
        %v1012 = vshrl.u32 %v977, 16
        %v1014 = vrot.slane %v1012, 7
        %v1015 = vshll.u32 %v977, 16
        %v1017 = vor.u32 %v1014, %v1015
        %v1018 = vrot.slane %v1014, 4
        %v1020 = vshrl.u32 %v978, 16
        %v1022 = vrot.slane %v1020, 7
        %v1023 = vshll.u32 %v978, 16
        %v1025 = vor.u32 %v1022, %v1023
        %v1026 = vsel %vm1010, %v1018, %v1025
        %v1027 = vrot.slane %v1022, 4
        %v1029 = vshrl.u32 %v979, 16
        %v1031 = vrot.slane %v1029, 7
        %v1032 = vshll.u32 %v979, 16
        %v1034 = vor.u32 %v1031, %v1032
        %v1035 = vrot.slane %v1031, 4
        %v1037 = vshrl.u32 %v980, 16
        %v1039 = vrot.slane %v1037, 7
        %v1040 = vshll.u32 %v980, 16
        %v1042 = vor.u32 %v1039, %v1040
        %v1043 = vsel %vm1010, %v1035, %v1042
        %v1044 = vrot.slane %v1039, 4
        %v1046 = vshrl.u32 %v981, 16
        %v1048 = vrot.slane %v1046, 7
        %v1049 = vshll.u32 %v981, 16
        %v1051 = vor.u32 %v1048, %v1049
        %v1052 = vrot.slane %v1048, 4
        %v1054 = vshrl.u32 %v982, 16
        %v1056 = vrot.slane %v1054, 7
        %v1057 = vshll.u32 %v982, 16
        %v1059 = vor.u32 %v1056, %v1057
        %v1060 = vsel %vm1010, %v1052, %v1059
        %v1061 = vrot.slane %v1056, 4
        %v1063 = vshrl.u32 %v983, 16
        %v1065 = vrot.slane %v1063, 7
        %v1066 = vshll.u32 %v983, 16
        %v1068 = vor.u32 %v1065, %v1066
        %v1069 = vrot.slane %v1065, 4
        %v1071 = vshrl.u32 %v984, 16
        %v1073 = vrot.slane %v1071, 7
        %v1074 = vshll.u32 %v984, 16
        %v1076 = vor.u32 %v1073, %v1074
        %v1077 = vsel %vm1010, %v1069, %v1076
        %v1078 = vrot.slane %v1073, 4
        %v1080 = vshrl.u32 %v985, 16
        %v1082 = vrot.slane %v1080, 7
        %v1083 = vshll.u32 %v985, 16
        %v1085 = vor.u32 %v1082, %v1083
        %v1086 = vrot.slane %v1082, 4
        %v1088 = vshrl.u32 %v986, 16
        %v1090 = vrot.slane %v1088, 7
        %v1091 = vshll.u32 %v986, 16
        %v1093 = vor.u32 %v1090, %v1091
        %v1094 = vsel %vm1010, %v1086, %v1093
        %v1095 = vrot.slane %v1090, 4
        %v1097 = vshrl.u32 %v987, 16
        %v1099 = vrot.slane %v1097, 7
        %v1100 = vshll.u32 %v987, 16
        %v1102 = vor.u32 %v1099, %v1100
        %v1103 = vrot.slane %v1099, 4
        %v1105 = vshrl.u32 %v988, 16
        %v1107 = vrot.slane %v1105, 7
        %v1108 = vshll.u32 %v988, 16
        %v1110 = vor.u32 %v1107, %v1108
        %v1111 = vsel %vm1010, %v1103, %v1110
        %v1112 = vrot.slane %v1107, 4
        %v1114 = vshrl.u32 %v989, 16
        %v1116 = vrot.slane %v1114, 7
        %v1117 = vshll.u32 %v989, 16
        %v1119 = vor.u32 %v1116, %v1117
        %v1120 = vrot.slane %v1116, 4
        %v1122 = vshrl.u32 %v990, 16
        %v1124 = vrot.slane %v1122, 7
        %v1125 = vshll.u32 %v990, 16
        %v1127 = vor.u32 %v1124, %v1125
        %v1128 = vsel %vm1010, %v1120, %v1127
        %v1129 = vrot.slane %v1124, 4
        %v1131 = vshrl.u32 %v991, 16
        %v1133 = vrot.slane %v1131, 7
        %v1134 = vshll.u32 %v991, 16
        %v1136 = vor.u32 %v1133, %v1134
        %v1137 = vrot.slane %v1133, 4
        %v1139 = vshrl.u32 %v992, 16
        %v1141 = vrot.slane %v1139, 7
        %v1142 = vshll.u32 %v992, 16
        %v1144 = vor.u32 %v1141, %v1142
        %v1145 = vsel %vm1010, %v1137, %v1144
        %v1146 = vrot.slane %v1141, 4
        %v1148 = vshrl.u32 %v993, 16
        %v1150 = vrot.slane %v1148, 7
        %v1151 = vshll.u32 %v993, 16
        %v1153 = vor.u32 %v1150, %v1151
        %v1154 = vrot.slane %v1150, 4
        %v1156 = vshrl.u32 %v994, 16
        %v1158 = vrot.slane %v1156, 7
        %v1159 = vshll.u32 %v994, 16
        %v1161 = vor.u32 %v1158, %v1159
        %v1162 = vsel %vm1010, %v1154, %v1161
        %v1163 = vrot.slane %v1158, 4
        %v1165 = vshrl.u32 %v995, 16
        %v1167 = vrot.slane %v1165, 7
        %v1168 = vshll.u32 %v995, 16
        %v1170 = vor.u32 %v1167, %v1168
        %v1171 = vrot.slane %v1167, 4
        %v1173 = vshrl.u32 %v996, 16
        %v1175 = vrot.slane %v1173, 7
        %v1176 = vshll.u32 %v996, 16
        %v1178 = vor.u32 %v1175, %v1176
        %v1179 = vsel %vm1010, %v1171, %v1178
        %v1180 = vrot.slane %v1175, 4
        %v1182 = vshrl.u32 %v997, 16
        %v1184 = vrot.slane %v1182, 7
        %v1185 = vshll.u32 %v997, 16
        %v1187 = vor.u32 %v1184, %v1185
        %v1188 = vrot.slane %v1184, 4
        %v1190 = vshrl.u32 %v998, 16
        %v1192 = vrot.slane %v1190, 7
        %v1193 = vshll.u32 %v998, 16
        %v1195 = vor.u32 %v1192, %v1193
        %v1196 = vsel %vm1010, %v1188, %v1195
        %v1197 = vrot.slane %v1192, 4
        %v1199 = vshrl.u32 %v999, 16
        %v1201 = vrot.slane %v1199, 7
        %v1202 = vshll.u32 %v999, 16
        %v1204 = vor.u32 %v1201, %v1202
        %v1205 = vrot.slane %v1201, 4
        %v1207 = vshrl.u32 %v1000, 16
        %v1209 = vrot.slane %v1207, 7
        %v1210 = vshll.u32 %v1000, 16
        %v1212 = vor.u32 %v1209, %v1210
        %v1213 = vsel %vm1010, %v1205, %v1212
        %v1214 = vrot.slane %v1209, 4
        %v1216 = vshrl.u32 %v1001, 16
        %v1218 = vrot.slane %v1216, 7
        %v1219 = vshll.u32 %v1001, 16
        %v1221 = vor.u32 %v1218, %v1219
        %v1222 = vrot.slane %v1218, 4
        %v1224 = vshrl.u32 %v1002, 16
        %v1226 = vrot.slane %v1224, 7
        %v1227 = vshll.u32 %v1002, 16
        %v1229 = vor.u32 %v1226, %v1227
        %v1230 = vsel %vm1010, %v1222, %v1229
        %v1231 = vrot.slane %v1226, 4
        %v1233 = vshrl.u32 %v1003, 16
        %v1235 = vrot.slane %v1233, 7
        %v1236 = vshll.u32 %v1003, 16
        %v1238 = vor.u32 %v1235, %v1236
        %v1239 = vrot.slane %v1235, 4
        %v1241 = vshrl.u32 %v1004, 16
        %v1243 = vrot.slane %v1241, 7
        %v1244 = vshll.u32 %v1004, 16
        %v1246 = vor.u32 %v1243, %v1244
        %v1247 = vsel %vm1010, %v1239, %v1246
        %v1248 = vrot.slane %v1243, 4
        %v1250 = vshrl.u32 %v1005, 16
        %v1252 = vrot.slane %v1250, 7
        %v1253 = vshll.u32 %v1005, 16
        %v1255 = vor.u32 %v1252, %v1253
        %v1256 = vrot.slane %v1252, 4
        %v1258 = vshrl.u32 %v1006, 16
        %v1260 = vrot.slane %v1258, 7
        %v1261 = vshll.u32 %v1006, 16
        %v1263 = vor.u32 %v1260, %v1261
        %v1264 = vsel %vm1010, %v1256, %v1263
        %v1265 = vrot.slane %v1260, 4
        %v1267 = vshrl.u32 %v1007, 16
        %v1269 = vrot.slane %v1267, 7
        %v1270 = vshll.u32 %v1007, 16
        %v1272 = vor.u32 %v1269, %v1270
        %v1273 = vrot.slane %v1269, 4
        %v1275 = vshrl.u32 %v1008, 16
        %v1277 = vrot.slane %v1275, 7
        %v1278 = vshll.u32 %v1008, 16
        %v1280 = vor.u32 %v1277, %v1278
        %v1281 = vsel %vm1010, %v1273, %v1280
        %v1282 = vrot.slane %v1277, 4
        %vm1331 = vcmask 1043456
        %vm1332 = vmand %vm1331, %vm879
        %v1333 = vld [vmem:[%s827] sm:$0xf]
        %v1334 = vsel %vm1332, %v1017, %v1333
        %1335 = vst [vmem:[%s827] sm:$0xf] %v1334
        %1336 = vst [vmem:[%s827 + $0x4] sm:$0xf] %v1026
        %v1337 = vld [vmem:[%s827 + $0x8] sm:$0x1]
        %v1338 = vsel %vm830, %v1027, %v1337
        %1339 = vst [vmem:[%s827 + $0x8] sm:$0x1] %v1338
        %v1340 = vld [vmem:[%s827 + $0xc] sm:$0xf]
        %v1341 = vsel %vm1332, %v1034, %v1340
        %1342 = vst [vmem:[%s827 + $0xc] sm:$0xf] %v1341
        %1343 = vst [vmem:[%s827 + $0x10] sm:$0xf] %v1043
        %v1344 = vld [vmem:[%s827 + $0x14] sm:$0x1]
        %v1345 = vsel %vm830, %v1044, %v1344
        %1346 = vst [vmem:[%s827 + $0x14] sm:$0x1] %v1345
        %v1347 = vld [vmem:[%s827 + $0x18] sm:$0xf]
        %v1348 = vsel %vm1332, %v1051, %v1347
        %1349 = vst [vmem:[%s827 + $0x18] sm:$0xf] %v1348
        %1350 = vst [vmem:[%s827 + $0x1c] sm:$0xf] %v1060
        %v1351 = vld [vmem:[%s827 + $0x20] sm:$0x1]
        %v1352 = vsel %vm830, %v1061, %v1351
        %1353 = vst [vmem:[%s827 + $0x20] sm:$0x1] %v1352
        %v1354 = vld [vmem:[%s827 + $0x24] sm:$0xf]
        %v1355 = vsel %vm1332, %v1068, %v1354
        %1356 = vst [vmem:[%s827 + $0x24] sm:$0xf] %v1355
        %1357 = vst [vmem:[%s827 + $0x28] sm:$0xf] %v1077
        %v1358 = vld [vmem:[%s827 + $0x2c] sm:$0x1]
        %v1359 = vsel %vm830, %v1078, %v1358
        %1360 = vst [vmem:[%s827 + $0x2c] sm:$0x1] %v1359
        %v1361 = vld [vmem:[%s827 + $0x30] sm:$0xf]
        %v1362 = vsel %vm1332, %v1085, %v1361
        %1363 = vst [vmem:[%s827 + $0x30] sm:$0xf] %v1362
        %1364 = vst [vmem:[%s827 + $0x34] sm:$0xf] %v1094
        %v1365 = vld [vmem:[%s827 + $0x38] sm:$0x1]
        %v1366 = vsel %vm830, %v1095, %v1365
        %1367 = vst [vmem:[%s827 + $0x38] sm:$0x1] %v1366
        %v1368 = vld [vmem:[%s827 + $0x3c] sm:$0xf]
        %v1369 = vsel %vm1332, %v1102, %v1368
        %1370 = vst [vmem:[%s827 + $0x3c] sm:$0xf] %v1369
        %1371 = vst [vmem:[%s827 + $0x40] sm:$0xf] %v1111
        %v1372 = vld [vmem:[%s827 + $0x44] sm:$0x1]
        %v1373 = vsel %vm830, %v1112, %v1372
        %1374 = vst [vmem:[%s827 + $0x44] sm:$0x1] %v1373
        %v1375 = vld [vmem:[%s827 + $0x48] sm:$0xf]
        %v1376 = vsel %vm1332, %v1119, %v1375
        %1377 = vst [vmem:[%s827 + $0x48] sm:$0xf] %v1376
        %1378 = vst [vmem:[%s827 + $0x4c] sm:$0xf] %v1128
        %v1379 = vld [vmem:[%s827 + $0x50] sm:$0x1]
        %v1380 = vsel %vm830, %v1129, %v1379
        %1381 = vst [vmem:[%s827 + $0x50] sm:$0x1] %v1380
        %v1382 = vld [vmem:[%s827 + $0x54] sm:$0xf]
        %v1383 = vsel %vm1332, %v1136, %v1382
        %1384 = vst [vmem:[%s827 + $0x54] sm:$0xf] %v1383
        %1385 = vst [vmem:[%s827 + $0x58] sm:$0xf] %v1145
        %v1386 = vld [vmem:[%s827 + $0x5c] sm:$0x1]
        %v1387 = vsel %vm830, %v1146, %v1386
        %1388 = vst [vmem:[%s827 + $0x5c] sm:$0x1] %v1387
        %v1389 = vld [vmem:[%s827 + $0x60] sm:$0xf]
        %v1390 = vsel %vm1332, %v1153, %v1389
        %1391 = vst [vmem:[%s827 + $0x60] sm:$0xf] %v1390
        %1392 = vst [vmem:[%s827 + $0x64] sm:$0xf] %v1162
        %v1393 = vld [vmem:[%s827 + $0x68] sm:$0x1]
        %v1394 = vsel %vm830, %v1163, %v1393
        %1395 = vst [vmem:[%s827 + $0x68] sm:$0x1] %v1394
        %v1396 = vld [vmem:[%s827 + $0x6c] sm:$0xf]
        %v1397 = vsel %vm1332, %v1170, %v1396
        %1398 = vst [vmem:[%s827 + $0x6c] sm:$0xf] %v1397
        %1399 = vst [vmem:[%s827 + $0x70] sm:$0xf] %v1179
        %v1400 = vld [vmem:[%s827 + $0x74] sm:$0x1]
        %v1401 = vsel %vm830, %v1180, %v1400
        %1402 = vst [vmem:[%s827 + $0x74] sm:$0x1] %v1401
        %v1403 = vld [vmem:[%s827 + $0x78] sm:$0xf]
        %v1404 = vsel %vm1332, %v1187, %v1403
        %1405 = vst [vmem:[%s827 + $0x78] sm:$0xf] %v1404
        %1406 = vst [vmem:[%s827 + $0x7c] sm:$0xf] %v1196
        %v1407 = vld [vmem:[%s827 + $0x80] sm:$0x1]
        %v1408 = vsel %vm830, %v1197, %v1407
        %1409 = vst [vmem:[%s827 + $0x80] sm:$0x1] %v1408
        %v1410 = vld [vmem:[%s827 + $0x84] sm:$0xf]
        %v1411 = vsel %vm1332, %v1204, %v1410
        %1412 = vst [vmem:[%s827 + $0x84] sm:$0xf] %v1411
        %1413 = vst [vmem:[%s827 + $0x88] sm:$0xf] %v1213
        %v1414 = vld [vmem:[%s827 + $0x8c] sm:$0x1]
        %v1415 = vsel %vm830, %v1214, %v1414
        %1416 = vst [vmem:[%s827 + $0x8c] sm:$0x1] %v1415
        %v1417 = vld [vmem:[%s827 + $0x90] sm:$0xf]
        %v1418 = vsel %vm1332, %v1221, %v1417
        %1419 = vst [vmem:[%s827 + $0x90] sm:$0xf] %v1418
        %1420 = vst [vmem:[%s827 + $0x94] sm:$0xf] %v1230
        %v1421 = vld [vmem:[%s827 + $0x98] sm:$0x1]
        %v1422 = vsel %vm830, %v1231, %v1421
        %1423 = vst [vmem:[%s827 + $0x98] sm:$0x1] %v1422
        %v1424 = vld [vmem:[%s827 + $0x9c] sm:$0xf]
        %v1425 = vsel %vm1332, %v1238, %v1424
        %1426 = vst [vmem:[%s827 + $0x9c] sm:$0xf] %v1425
        %1427 = vst [vmem:[%s827 + $0xa0] sm:$0xf] %v1247
        %v1428 = vld [vmem:[%s827 + $0xa4] sm:$0x1]
        %v1429 = vsel %vm830, %v1248, %v1428
        %1430 = vst [vmem:[%s827 + $0xa4] sm:$0x1] %v1429
        %v1431 = vld [vmem:[%s827 + $0xa8] sm:$0xf]
        %v1432 = vsel %vm1332, %v1255, %v1431
        %1433 = vst [vmem:[%s827 + $0xa8] sm:$0xf] %v1432
        %1434 = vst [vmem:[%s827 + $0xac] sm:$0xf] %v1264
        %v1435 = vld [vmem:[%s827 + $0xb0] sm:$0x1]
        %v1436 = vsel %vm830, %v1265, %v1435
        %1437 = vst [vmem:[%s827 + $0xb0] sm:$0x1] %v1436
        %v1438 = vld [vmem:[%s827 + $0xb4] sm:$0xf]
        %v1439 = vsel %vm1332, %v1272, %v1438
        %1440 = vst [vmem:[%s827 + $0xb4] sm:$0xf] %v1439
        %1441 = vst [vmem:[%s827 + $0xb8] sm:$0xf] %v1281
        %v1442 = vld [vmem:[%s827 + $0xbc] sm:$0x1]
        %v1443 = vsel %vm830, %v1282, %v1442
        %1444 = vst [vmem:[%s827 + $0xbc] sm:$0x1] %v1443
        %v1445 = vld [vmem:[#allocation2] sm:$0xf]
        %v1446 = vld [vmem:[#allocation2 + $0x4] sm:$0xf]
        %v1447 = vld [vmem:[#allocation2 + $0xc] sm:$0xf]
        %v1448 = vld [vmem:[#allocation2 + $0x10] sm:$0xf]
        %v1449 = vld [vmem:[#allocation2 + $0x18] sm:$0xf]
        %v1450 = vld [vmem:[#allocation2 + $0x1c] sm:$0xf]
        %v1451 = vld [vmem:[#allocation2 + $0x24] sm:$0xf]
        %v1452 = vld [vmem:[#allocation2 + $0x28] sm:$0xf]
        %v1453 = vld [vmem:[#allocation2 + $0x30] sm:$0xf]
        %v1454 = vld [vmem:[#allocation2 + $0x34] sm:$0xf]
        %v1455 = vld [vmem:[#allocation2 + $0x3c] sm:$0xf]
        %v1456 = vld [vmem:[#allocation2 + $0x40] sm:$0xf]
        %v1457 = vld [vmem:[#allocation2 + $0x48] sm:$0xf]
        %v1458 = vld [vmem:[#allocation2 + $0x4c] sm:$0xf]
        %v1459 = vld [vmem:[#allocation2 + $0x54] sm:$0xf]
        %v1460 = vld [vmem:[#allocation2 + $0x58] sm:$0xf]
        %v1461 = vld [vmem:[#allocation2 + $0x60] sm:$0xf]
        %v1462 = vld [vmem:[#allocation2 + $0x64] sm:$0xf]
        %v1463 = vld [vmem:[#allocation2 + $0x6c] sm:$0xf]
        %v1464 = vld [vmem:[#allocation2 + $0x70] sm:$0xf]
        %v1465 = vld [vmem:[#allocation2 + $0x78] sm:$0xf]
        %v1466 = vld [vmem:[#allocation2 + $0x7c] sm:$0xf]
        %v1467 = vld [vmem:[#allocation2 + $0x84] sm:$0xf]
        %v1468 = vld [vmem:[#allocation2 + $0x88] sm:$0xf]
        %v1469 = vld [vmem:[#allocation2 + $0x90] sm:$0xf]
        %v1470 = vld [vmem:[#allocation2 + $0x94] sm:$0xf]
        %v1471 = vld [vmem:[#allocation2 + $0x9c] sm:$0xf]
        %v1472 = vld [vmem:[#allocation2 + $0xa0] sm:$0xf]
        %v1473 = vld [vmem:[#allocation2 + $0xa8] sm:$0xf]
        %v1474 = vld [vmem:[#allocation2 + $0xac] sm:$0xf]
        %v1475 = vld [vmem:[#allocation2 + $0xb4] sm:$0xf]
        %v1476 = vld [vmem:[#allocation2 + $0xb8] sm:$0xf]
        %v1477 = vld [vmem:[#allocation8] sm:$0xf]
        %v1478 = vld [vmem:[#allocation8 + $0x4] sm:$0xf]
        %v1479 = vld [vmem:[#allocation8 + $0x8] sm:$0xf]
        %v1480 = vld [vmem:[#allocation8 + $0xc] sm:$0xf]
        %v1481 = vld [vmem:[#allocation8 + $0x10] sm:$0xf]
        %v1482 = vld [vmem:[#allocation8 + $0x14] sm:$0xf]
        %v1483 = vld [vmem:[#allocation8 + $0x18] sm:$0xf]
        %v1484 = vld [vmem:[#allocation8 + $0x1c] sm:$0xf]
        %v1485 = vld [vmem:[#allocation8 + $0x20] sm:$0xf]
        %v1486 = vld [vmem:[#allocation8 + $0x24] sm:$0xf]
        %v1487 = vld [vmem:[#allocation8 + $0x28] sm:$0xf]
        %v1488 = vld [vmem:[#allocation8 + $0x2c] sm:$0xf]
        %v1489 = vld [vmem:[#allocation8 + $0x30] sm:$0xf]
        %v1490 = vld [vmem:[#allocation8 + $0x34] sm:$0xf]
        %v1491 = vld [vmem:[#allocation8 + $0x38] sm:$0xf]
        %v1492 = vld [vmem:[#allocation8 + $0x3c] sm:$0xf]
        %v1493 = vld [vmem:[#allocation2 + $0x8] sm:$0x1]
        %v1494 = vld [vmem:[#allocation2 + $0x14] sm:$0x1]
        %v1495 = vld [vmem:[#allocation2 + $0x20] sm:$0x1]
        %v1496 = vld [vmem:[#allocation2 + $0x2c] sm:$0x1]
        %v1497 = vld [vmem:[#allocation2 + $0x38] sm:$0x1]
        %v1498 = vld [vmem:[#allocation2 + $0x44] sm:$0x1]
        %v1499 = vld [vmem:[#allocation2 + $0x50] sm:$0x1]
        %v1500 = vld [vmem:[#allocation2 + $0x5c] sm:$0x1]
        %v1501 = vld [vmem:[#allocation2 + $0x68] sm:$0x1]
        %v1502 = vld [vmem:[#allocation2 + $0x74] sm:$0x1]
        %v1503 = vld [vmem:[#allocation2 + $0x80] sm:$0x1]
        %v1504 = vld [vmem:[#allocation2 + $0x8c] sm:$0x1]
        %v1505 = vld [vmem:[#allocation2 + $0x98] sm:$0x1]
        %v1506 = vld [vmem:[#allocation2 + $0xa4] sm:$0x1]
        %v1507 = vld [vmem:[#allocation2 + $0xb0] sm:$0x1]
        %v1508 = vld [vmem:[#allocation2 + $0xbc] sm:$0x1]
        %vm1509 = vsmask.f32 3328
        %vm1510 = vsmask.f32 7440
        %vm1511 = vmor %vm1509, %vm1510
        %v1513 = vshrl.u32 %v1445, 16
        %v1515 = vrot.slane %v1513, 4
        %v1516 = vshll.u32 %v1445, 16
        %v1518 = vrot.slane %v1516, 5
        %v1519 = vor.u32 %v1515, %v1518
        %v1520 = vrot.slane %v1519, 4
        %v1522 = vshll.u32 %v1446, 16
        %v1524 = vrot.slane %v1522, 5
        %v1525 = vsel %vm1511, %v1520, %v1524
        %v1526 = vshrl.u32 %v1446, 16
        %v1528 = vrot.slane %v1526, 4
        %v1529 = vor.u32 %v1528, %v1524
        %v1530 = vrot.slane %v1529, 4
        %v1532 = vshll.u32 %v1493, 16
        %v1534 = vrot.slane %v1532, 5
        %v1535 = vsel %vm1511, %v1530, %v1534
        %v1537 = vshrl.u32 %v1447, 16
        %v1539 = vrot.slane %v1537, 4
        %v1540 = vshll.u32 %v1447, 16
        %v1542 = vrot.slane %v1540, 5
        %v1543 = vor.u32 %v1539, %v1542
        %v1544 = vrot.slane %v1543, 4
        %v1546 = vshll.u32 %v1448, 16
        %v1548 = vrot.slane %v1546, 5
        %v1549 = vsel %vm1511, %v1544, %v1548
        %v1550 = vshrl.u32 %v1448, 16
        %v1552 = vrot.slane %v1550, 4
        %v1553 = vor.u32 %v1552, %v1548
        %v1554 = vrot.slane %v1553, 4
        %v1556 = vshll.u32 %v1494, 16
        %v1558 = vrot.slane %v1556, 5
        %v1559 = vsel %vm1511, %v1554, %v1558
        %v1561 = vshrl.u32 %v1449, 16
        %v1563 = vrot.slane %v1561, 4
        %v1564 = vshll.u32 %v1449, 16
        %v1566 = vrot.slane %v1564, 5
        %v1567 = vor.u32 %v1563, %v1566
        %v1568 = vrot.slane %v1567, 4
        %v1570 = vshll.u32 %v1450, 16
        %v1572 = vrot.slane %v1570, 5
        %v1573 = vsel %vm1511, %v1568, %v1572
        %v1574 = vshrl.u32 %v1450, 16
        %v1576 = vrot.slane %v1574, 4
        %v1577 = vor.u32 %v1576, %v1572
        %v1578 = vrot.slane %v1577, 4
        %v1580 = vshll.u32 %v1495, 16
        %v1582 = vrot.slane %v1580, 5
        %v1583 = vsel %vm1511, %v1578, %v1582
        %v1585 = vshrl.u32 %v1451, 16
        %v1587 = vrot.slane %v1585, 4
        %v1588 = vshll.u32 %v1451, 16
        %v1590 = vrot.slane %v1588, 5
        %v1591 = vor.u32 %v1587, %v1590
        %v1592 = vrot.slane %v1591, 4
        %v1594 = vshll.u32 %v1452, 16
        %v1596 = vrot.slane %v1594, 5
        %v1597 = vsel %vm1511, %v1592, %v1596
        %v1598 = vshrl.u32 %v1452, 16
        %v1600 = vrot.slane %v1598, 4
        %v1601 = vor.u32 %v1600, %v1596
        %v1602 = vrot.slane %v1601, 4
        %v1604 = vshll.u32 %v1496, 16
        %v1606 = vrot.slane %v1604, 5
        %v1607 = vsel %vm1511, %v1602, %v1606
        %v1609 = vshrl.u32 %v1453, 16
        %v1611 = vrot.slane %v1609, 4
        %v1612 = vshll.u32 %v1453, 16
        %v1614 = vrot.slane %v1612, 5
        %v1615 = vor.u32 %v1611, %v1614
        %v1616 = vrot.slane %v1615, 4
        %v1618 = vshll.u32 %v1454, 16
        %v1620 = vrot.slane %v1618, 5
        %v1621 = vsel %vm1511, %v1616, %v1620
        %v1622 = vshrl.u32 %v1454, 16
        %v1624 = vrot.slane %v1622, 4
        %v1625 = vor.u32 %v1624, %v1620
        %v1626 = vrot.slane %v1625, 4
        %v1628 = vshll.u32 %v1497, 16
        %v1630 = vrot.slane %v1628, 5
        %v1631 = vsel %vm1511, %v1626, %v1630
        %v1633 = vshrl.u32 %v1455, 16
        %v1635 = vrot.slane %v1633, 4
        %v1636 = vshll.u32 %v1455, 16
        %v1638 = vrot.slane %v1636, 5
        %v1639 = vor.u32 %v1635, %v1638
        %v1640 = vrot.slane %v1639, 4
        %v1642 = vshll.u32 %v1456, 16
        %v1644 = vrot.slane %v1642, 5
        %v1645 = vsel %vm1511, %v1640, %v1644
        %v1646 = vshrl.u32 %v1456, 16
        %v1648 = vrot.slane %v1646, 4
        %v1649 = vor.u32 %v1648, %v1644
        %v1650 = vrot.slane %v1649, 4
        %v1652 = vshll.u32 %v1498, 16
        %v1654 = vrot.slane %v1652, 5
        %v1655 = vsel %vm1511, %v1650, %v1654
        %v1657 = vshrl.u32 %v1457, 16
        %v1659 = vrot.slane %v1657, 4
        %v1660 = vshll.u32 %v1457, 16
        %v1662 = vrot.slane %v1660, 5
        %v1663 = vor.u32 %v1659, %v1662
        %v1664 = vrot.slane %v1663, 4
        %v1666 = vshll.u32 %v1458, 16
        %v1668 = vrot.slane %v1666, 5
        %v1669 = vsel %vm1511, %v1664, %v1668
        %v1670 = vshrl.u32 %v1458, 16
        %v1672 = vrot.slane %v1670, 4
        %v1673 = vor.u32 %v1672, %v1668
        %v1674 = vrot.slane %v1673, 4
        %v1676 = vshll.u32 %v1499, 16
        %v1678 = vrot.slane %v1676, 5
        %v1679 = vsel %vm1511, %v1674, %v1678
        %v1681 = vshrl.u32 %v1459, 16
        %v1683 = vrot.slane %v1681, 4
        %v1684 = vshll.u32 %v1459, 16
        %v1686 = vrot.slane %v1684, 5
        %v1687 = vor.u32 %v1683, %v1686
        %v1688 = vrot.slane %v1687, 4
        %v1690 = vshll.u32 %v1460, 16
        %v1692 = vrot.slane %v1690, 5
        %v1693 = vsel %vm1511, %v1688, %v1692
        %v1694 = vshrl.u32 %v1460, 16
        %v1696 = vrot.slane %v1694, 4
        %v1697 = vor.u32 %v1696, %v1692
        %v1698 = vrot.slane %v1697, 4
        %v1700 = vshll.u32 %v1500, 16
        %v1702 = vrot.slane %v1700, 5
        %v1703 = vsel %vm1511, %v1698, %v1702
        %v1705 = vshrl.u32 %v1461, 16
        %v1707 = vrot.slane %v1705, 4
        %v1708 = vshll.u32 %v1461, 16
        %v1710 = vrot.slane %v1708, 5
        %v1711 = vor.u32 %v1707, %v1710
        %v1712 = vrot.slane %v1711, 4
        %v1714 = vshll.u32 %v1462, 16
        %v1716 = vrot.slane %v1714, 5
        %v1717 = vsel %vm1511, %v1712, %v1716
        %v1718 = vshrl.u32 %v1462, 16
        %v1720 = vrot.slane %v1718, 4
        %v1721 = vor.u32 %v1720, %v1716
        %v1722 = vrot.slane %v1721, 4
        %v1724 = vshll.u32 %v1501, 16
        %v1726 = vrot.slane %v1724, 5
        %v1727 = vsel %vm1511, %v1722, %v1726
        %v1729 = vshrl.u32 %v1463, 16
        %v1731 = vrot.slane %v1729, 4
        %v1732 = vshll.u32 %v1463, 16
        %v1734 = vrot.slane %v1732, 5
        %v1735 = vor.u32 %v1731, %v1734
        %v1736 = vrot.slane %v1735, 4
        %v1738 = vshll.u32 %v1464, 16
        %v1740 = vrot.slane %v1738, 5
        %v1741 = vsel %vm1511, %v1736, %v1740
        %v1742 = vshrl.u32 %v1464, 16
        %v1744 = vrot.slane %v1742, 4
        %v1745 = vor.u32 %v1744, %v1740
        %v1746 = vrot.slane %v1745, 4
        %v1748 = vshll.u32 %v1502, 16
        %v1750 = vrot.slane %v1748, 5
        %v1751 = vsel %vm1511, %v1746, %v1750
        %v1753 = vshrl.u32 %v1465, 16
        %v1755 = vrot.slane %v1753, 4
        %v1756 = vshll.u32 %v1465, 16
        %v1758 = vrot.slane %v1756, 5
        %v1759 = vor.u32 %v1755, %v1758
        %v1760 = vrot.slane %v1759, 4
        %v1762 = vshll.u32 %v1466, 16
        %v1764 = vrot.slane %v1762, 5
        %v1765 = vsel %vm1511, %v1760, %v1764
        %v1766 = vshrl.u32 %v1466, 16
        %v1768 = vrot.slane %v1766, 4
        %v1769 = vor.u32 %v1768, %v1764
        %v1770 = vrot.slane %v1769, 4
        %v1772 = vshll.u32 %v1503, 16
        %v1774 = vrot.slane %v1772, 5
        %v1775 = vsel %vm1511, %v1770, %v1774
        %v1777 = vshrl.u32 %v1467, 16
        %v1779 = vrot.slane %v1777, 4
        %v1780 = vshll.u32 %v1467, 16
        %v1782 = vrot.slane %v1780, 5
        %v1783 = vor.u32 %v1779, %v1782
        %v1784 = vrot.slane %v1783, 4
        %v1786 = vshll.u32 %v1468, 16
        %v1788 = vrot.slane %v1786, 5
        %v1789 = vsel %vm1511, %v1784, %v1788
        %v1790 = vshrl.u32 %v1468, 16
        %v1792 = vrot.slane %v1790, 4
        %v1793 = vor.u32 %v1792, %v1788
        %v1794 = vrot.slane %v1793, 4
        %v1796 = vshll.u32 %v1504, 16
        %v1798 = vrot.slane %v1796, 5
        %v1799 = vsel %vm1511, %v1794, %v1798
        %v1801 = vshrl.u32 %v1469, 16
        %v1803 = vrot.slane %v1801, 4
        %v1804 = vshll.u32 %v1469, 16
        %v1806 = vrot.slane %v1804, 5
        %v1807 = vor.u32 %v1803, %v1806
        %v1808 = vrot.slane %v1807, 4
        %v1810 = vshll.u32 %v1470, 16
        %v1812 = vrot.slane %v1810, 5
        %v1813 = vsel %vm1511, %v1808, %v1812
        %v1814 = vshrl.u32 %v1470, 16
        %v1816 = vrot.slane %v1814, 4
        %v1817 = vor.u32 %v1816, %v1812
        %v1818 = vrot.slane %v1817, 4
        %v1820 = vshll.u32 %v1505, 16
        %v1822 = vrot.slane %v1820, 5
        %v1823 = vsel %vm1511, %v1818, %v1822
        %v1825 = vshrl.u32 %v1471, 16
        %v1827 = vrot.slane %v1825, 4
        %v1828 = vshll.u32 %v1471, 16
        %v1830 = vrot.slane %v1828, 5
        %v1831 = vor.u32 %v1827, %v1830
        %v1832 = vrot.slane %v1831, 4
        %v1834 = vshll.u32 %v1472, 16
        %v1836 = vrot.slane %v1834, 5
        %v1837 = vsel %vm1511, %v1832, %v1836
        %v1838 = vshrl.u32 %v1472, 16
        %v1840 = vrot.slane %v1838, 4
        %v1841 = vor.u32 %v1840, %v1836
        %v1842 = vrot.slane %v1841, 4
        %v1844 = vshll.u32 %v1506, 16
        %v1846 = vrot.slane %v1844, 5
        %v1847 = vsel %vm1511, %v1842, %v1846
        %v1849 = vshrl.u32 %v1473, 16
        %v1851 = vrot.slane %v1849, 4
        %v1852 = vshll.u32 %v1473, 16
        %v1854 = vrot.slane %v1852, 5
        %v1855 = vor.u32 %v1851, %v1854
        %v1856 = vrot.slane %v1855, 4
        %v1858 = vshll.u32 %v1474, 16
        %v1860 = vrot.slane %v1858, 5
        %v1861 = vsel %vm1511, %v1856, %v1860
        %v1862 = vshrl.u32 %v1474, 16
        %v1864 = vrot.slane %v1862, 4
        %v1865 = vor.u32 %v1864, %v1860
        %v1866 = vrot.slane %v1865, 4
        %v1868 = vshll.u32 %v1507, 16
        %v1870 = vrot.slane %v1868, 5
        %v1871 = vsel %vm1511, %v1866, %v1870
        %v1873 = vshrl.u32 %v1475, 16
        %v1875 = vrot.slane %v1873, 4
        %v1876 = vshll.u32 %v1475, 16
        %v1878 = vrot.slane %v1876, 5
        %v1879 = vor.u32 %v1875, %v1878
        %v1880 = vrot.slane %v1879, 4
        %v1882 = vshll.u32 %v1476, 16
        %v1884 = vrot.slane %v1882, 5
        %v1885 = vsel %vm1511, %v1880, %v1884
        %v1886 = vshrl.u32 %v1476, 16
        %v1888 = vrot.slane %v1886, 4
        %v1889 = vor.u32 %v1888, %v1884
        %v1890 = vrot.slane %v1889, 4
        %v1892 = vshll.u32 %v1508, 16
        %v1894 = vrot.slane %v1892, 5
        %v1895 = vsel %vm1511, %v1890, %v1894
        %s1896 = scalar_lea.vmem [#allocation8], 64
        %v1897 = vld [vmem:[%s1896] sm:$0xf]
        %v1898 = vld [vmem:[%s1896 + $0x4] sm:$0xf]
        %v1899 = vld [vmem:[%s1896 + $0x8] sm:$0xf]
        %v1900 = vld [vmem:[%s1896 + $0xc] sm:$0xf]
        %v1901 = vld [vmem:[%s1896 + $0x10] sm:$0xf]
        %v1902 = vld [vmem:[%s1896 + $0x14] sm:$0xf]
        %v1903 = vld [vmem:[%s1896 + $0x18] sm:$0xf]
        %v1904 = vld [vmem:[%s1896 + $0x1c] sm:$0xf]
        %v1905 = vld [vmem:[%s1896 + $0x20] sm:$0xf]
        %v1906 = vld [vmem:[%s1896 + $0x24] sm:$0xf]
        %v1907 = vld [vmem:[%s1896 + $0x28] sm:$0xf]
        %v1908 = vld [vmem:[%s1896 + $0x2c] sm:$0xf]
        %v1909 = vld [vmem:[%s1896 + $0x30] sm:$0xf]
        %v1910 = vld [vmem:[%s1896 + $0x34] sm:$0xf]
        %v1911 = vld [vmem:[%s1896 + $0x38] sm:$0xf]
        %v1912 = vld [vmem:[%s1896 + $0x3c] sm:$0xf]
        %v1913 = vunpack.c.l.b16 %v1525
        %v1914 = vunpack.c.l.b16 %v1535
        %v1915 = vunpack.c.l.b16 %v1549
        %v1916 = vunpack.c.l.b16 %v1559
        %v1917 = vunpack.c.l.b16 %v1573
        %v1918 = vunpack.c.l.b16 %v1583
        %v1919 = vunpack.c.l.b16 %v1597
        %v1920 = vunpack.c.l.b16 %v1607
        %v1921 = vunpack.c.l.b16 %v1621
        %v1922 = vunpack.c.l.b16 %v1631
        %v1923 = vunpack.c.l.b16 %v1645
        %v1924 = vunpack.c.l.b16 %v1655
        %v1925 = vunpack.c.l.b16 %v1669
        %v1926 = vunpack.c.l.b16 %v1679
        %v1927 = vunpack.c.l.b16 %v1693
        %v1928 = vunpack.c.l.b16 %v1703
        %v1929 = vunpack.c.l.b16 %v1717
        %v1930 = vunpack.c.l.b16 %v1727
        %v1931 = vunpack.c.l.b16 %v1741
        %v1932 = vunpack.c.l.b16 %v1751
        %v1933 = vunpack.c.l.b16 %v1765
        %v1934 = vunpack.c.l.b16 %v1775
        %v1935 = vunpack.c.l.b16 %v1789
        %v1936 = vunpack.c.l.b16 %v1799
        %v1937 = vunpack.c.l.b16 %v1813
        %v1938 = vunpack.c.l.b16 %v1823
        %v1939 = vunpack.c.l.b16 %v1837
        %v1940 = vunpack.c.l.b16 %v1847
        %v1941 = vunpack.c.l.b16 %v1861
        %v1942 = vunpack.c.l.b16 %v1871
        %v1943 = vunpack.c.l.b16 %v1885
        %v1944 = vunpack.c.l.b16 %v1895
        %v1945 = vpack.c.b16 %v1914, %v1913
        %v1946 = vpack.c.b16 %v1916, %v1915
        %v1947 = vpack.c.b16 %v1918, %v1917
        %v1948 = vpack.c.b16 %v1920, %v1919
        %v1949 = vpack.c.b16 %v1922, %v1921
        %v1950 = vpack.c.b16 %v1924, %v1923
        %v1951 = vpack.c.b16 %v1926, %v1925
        %v1952 = vpack.c.b16 %v1928, %v1927
        %v1953 = vpack.c.b16 %v1930, %v1929
        %v1954 = vpack.c.b16 %v1932, %v1931
        %v1955 = vpack.c.b16 %v1934, %v1933
        %v1956 = vpack.c.b16 %v1936, %v1935
        %v1957 = vpack.c.b16 %v1938, %v1937
        %v1958 = vpack.c.b16 %v1940, %v1939
        %v1959 = vpack.c.b16 %v1942, %v1941
        %v1960 = vpack.c.b16 %v1944, %v1943
        %v1993 = vunpack.c.l.b16 %v1897
        %v1994 = vunpack.c.l.b16 %v1898
        %v1995 = vunpack.c.l.b16 %v1899
        %v1996 = vunpack.c.l.b16 %v1900
        %v1997 = vunpack.c.l.b16 %v1901
        %v1998 = vunpack.c.l.b16 %v1902
        %v1999 = vunpack.c.l.b16 %v1903
        %v2000 = vunpack.c.l.b16 %v1904
        %v2001 = vunpack.c.l.b16 %v1905
        %v2002 = vunpack.c.l.b16 %v1906
        %v2003 = vunpack.c.l.b16 %v1907
        %v2004 = vunpack.c.l.b16 %v1908
        %v2005 = vunpack.c.l.b16 %v1909
        %v2006 = vunpack.c.l.b16 %v1910
        %v2007 = vunpack.c.l.b16 %v1911
        %v2008 = vunpack.c.l.b16 %v1912
        %v2009 = vpack.c.b16 %v1994, %v1993
        %v2010 = vpack.c.b16 %v1996, %v1995
        %v2011 = vpack.c.b16 %v1998, %v1997
        %v2012 = vpack.c.b16 %v2000, %v1999
        %v2013 = vpack.c.b16 %v2002, %v2001
        %v2014 = vpack.c.b16 %v2004, %v2003
        %v2015 = vpack.c.b16 %v2006, %v2005
        %v2016 = vpack.c.b16 %v2008, %v2007
        %2025 = vmatprep.subr.bf16.mxu0 0
        %2026 = vmatpush1.bf16.msra.mxu0 %v2009
        %2027 = vmatprep.subr.bf16.mxu0 0
        %2028 = vmatpush1.bf16.msra.mxu0 %v2010
        %2029 = vmatprep.subr.bf16.mxu0 0
        %2030 = vmatpush1.bf16.msra.mxu0 %v2011
        %2031 = vmatprep.subr.bf16.mxu0 0
        %2032 = vmatpush1.bf16.msra.mxu0 %v2012
        %2033 = vmatprep.subr.bf16.mxu0 0
        %2034 = vmatpush1.bf16.msra.mxu0 %v2013
        %2035 = vmatprep.subr.bf16.mxu0 0
        %2036 = vmatpush1.bf16.msra.mxu0 %v2014
        %2037 = vmatprep.subr.bf16.mxu0 0
        %2038 = vmatpush1.bf16.msra.mxu0 %v2015
        %2039 = vmatprep.subr.bf16.mxu0 0
        %2040 = vmatpush1.bf16.msra.mxu0 %v2016
        %2041 = vmatprep.subr.bf16.mxu0 0
        %2042 = vmatpush1.bf16.msra.mxu0 0
        %2043 = vmatprep.subr.bf16.mxu0 0
        %2044 = vmatpush1.bf16.msra.mxu0 0
        %2045 = vmatprep.subr.bf16.mxu0 0
        %2046 = vmatpush1.bf16.msra.mxu0 0
        %2047 = vmatprep.subr.bf16.mxu0 0
        %2048 = vmatpush1.bf16.msra.mxu0 0
        %2049 = vmatprep.subr.bf16.mxu0 0
        %2050 = vmatpush1.bf16.msra.mxu0 0
        %2051 = vmatprep.subr.bf16.mxu0 0
        %2052 = vmatpush1.bf16.msra.mxu0 0
        %2053 = vmatprep.subr.bf16.mxu0 0
        %2054 = vmatpush1.bf16.msra.mxu0 0
        %2055 = vmatprep.subr.bf16.mxu0 0
        %2056 = vmatpush1.bf16.msra.mxu0 0
        %2057 = vmatprep.mubr.bf16.mxu0 0
        %2058 = vmatmul.mubr.bf16.gmra.mrb[0].mxu0 %v1945
        %v2059 = vpop.f32.mrb[0].mxu0
        %v2060 = vadd.f32 0.0, %v2059
        %v2061 = vpop.f32.mrb[0].mxu0
        %v2062 = vpop.f32.mrb[0].mxu0
        %v2063 = vadd.f32 0.0, %v2062
        %v2064 = vpop.f32.mrb[0].mxu0
        %2065 = vmatprep.mubr.bf16.mxu0 0
        %2066 = vmatmul.mubr.bf16.gmra.mrb[0].mxu0 %v1946
        %v2067 = vpop.f32.mrb[0].mxu0
        %v2068 = vadd.f32 0.0, %v2067
        %v2069 = vpop.f32.mrb[0].mxu0
        %v2070 = vpop.f32.mrb[0].mxu0
        %v2071 = vadd.f32 0.0, %v2070
        %v2072 = vpop.f32.mrb[0].mxu0
        %2073 = vmatprep.mubr.bf16.mxu0 0
        %2074 = vmatmul.mubr.bf16.gmra.mrb[0].mxu0 %v1947
        %v2075 = vpop.f32.mrb[0].mxu0
        %v2076 = vadd.f32 0.0, %v2075
        %v2077 = vpop.f32.mrb[0].mxu0
        %v2078 = vpop.f32.mrb[0].mxu0
        %v2079 = vadd.f32 0.0, %v2078
        %v2080 = vpop.f32.mrb[0].mxu0
        %2081 = vmatprep.mubr.bf16.mxu0 0
        %2082 = vmatmul.mubr.bf16.gmra.mrb[0].mxu0 %v1948
        %v2083 = vpop.f32.mrb[0].mxu0
        %v2084 = vadd.f32 0.0, %v2083
        %v2085 = vpop.f32.mrb[0].mxu0
        %v2086 = vpop.f32.mrb[0].mxu0
        %v2087 = vadd.f32 0.0, %v2086
        %v2088 = vpop.f32.mrb[0].mxu0
        %2089 = vmatprep.mubr.bf16.mxu0 0
        %2090 = vmatmul.mubr.bf16.gmra.mrb[0].mxu0 %v1949
        %v2091 = vpop.f32.mrb[0].mxu0
        %v2092 = vadd.f32 0.0, %v2091
        %v2093 = vpop.f32.mrb[0].mxu0
        %v2094 = vpop.f32.mrb[0].mxu0
        %v2095 = vadd.f32 0.0, %v2094
        %v2096 = vpop.f32.mrb[0].mxu0
        %2097 = vmatprep.mubr.bf16.mxu0 0
        %2098 = vmatmul.mubr.bf16.gmra.mrb[0].mxu0 %v1950
        %v2099 = vpop.f32.mrb[0].mxu0
        %v2100 = vadd.f32 0.0, %v2099
        %v2101 = vpop.f32.mrb[0].mxu0
        %v2102 = vpop.f32.mrb[0].mxu0
        %v2103 = vadd.f32 0.0, %v2102
        %v2104 = vpop.f32.mrb[0].mxu0
        %2105 = vmatprep.mubr.bf16.mxu0 0
        %2106 = vmatmul.mubr.bf16.gmra.mrb[0].mxu0 %v1951
        %v2107 = vpop.f32.mrb[0].mxu0
        %v2108 = vadd.f32 0.0, %v2107
        %v2109 = vpop.f32.mrb[0].mxu0
        %v2110 = vpop.f32.mrb[0].mxu0
        %v2111 = vadd.f32 0.0, %v2110
        %v2112 = vpop.f32.mrb[0].mxu0
        %2113 = vmatprep.mubr.bf16.mxu0 0
        %2114 = vmatmul.mubr.bf16.gmra.mrb[0].mxu0 %v1952
        %v2115 = vpop.f32.mrb[0].mxu0
        %v2116 = vadd.f32 0.0, %v2115
        %v2117 = vpop.f32.mrb[0].mxu0
        %v2118 = vpop.f32.mrb[0].mxu0
        %v2119 = vadd.f32 0.0, %v2118
        %v2120 = vpop.f32.mrb[0].mxu0
        %2121 = vmatprep.mubr.bf16.mxu0 0
        %2122 = vmatmul.mubr.bf16.gmra.mrb[0].mxu0 %v1953
        %v2123 = vpop.f32.mrb[0].mxu0
        %v2124 = vadd.f32 0.0, %v2123
        %v2125 = vpop.f32.mrb[0].mxu0
        %v2126 = vpop.f32.mrb[0].mxu0
        %v2127 = vadd.f32 0.0, %v2126
        %v2128 = vpop.f32.mrb[0].mxu0
        %2129 = vmatprep.mubr.bf16.mxu0 0
        %2130 = vmatmul.mubr.bf16.gmra.mrb[0].mxu0 %v1954
        %v2131 = vpop.f32.mrb[0].mxu0
        %v2132 = vadd.f32 0.0, %v2131
        %v2133 = vpop.f32.mrb[0].mxu0
        %v2134 = vpop.f32.mrb[0].mxu0
        %v2135 = vadd.f32 0.0, %v2134
        %v2136 = vpop.f32.mrb[0].mxu0
        %2137 = vmatprep.mubr.bf16.mxu0 0
        %2138 = vmatmul.mubr.bf16.gmra.mrb[0].mxu0 %v1955
        %v2139 = vpop.f32.mrb[0].mxu0
        %v2140 = vadd.f32 0.0, %v2139
        %v2141 = vpop.f32.mrb[0].mxu0
        %v2142 = vpop.f32.mrb[0].mxu0
        %v2143 = vadd.f32 0.0, %v2142
        %v2144 = vpop.f32.mrb[0].mxu0
        %2145 = vmatprep.mubr.bf16.mxu0 0
        %2146 = vmatmul.mubr.bf16.gmra.mrb[0].mxu0 %v1956
        %v2147 = vpop.f32.mrb[0].mxu0
        %v2148 = vadd.f32 0.0, %v2147
        %v2149 = vpop.f32.mrb[0].mxu0
        %v2150 = vpop.f32.mrb[0].mxu0
        %v2151 = vadd.f32 0.0, %v2150
        %v2152 = vpop.f32.mrb[0].mxu0
        %2153 = vmatprep.mubr.bf16.mxu0 0
        %2154 = vmatmul.mubr.bf16.gmra.mrb[0].mxu0 %v1957
        %v2155 = vpop.f32.mrb[0].mxu0
        %v2156 = vadd.f32 0.0, %v2155
        %v2157 = vpop.f32.mrb[0].mxu0
        %v2158 = vpop.f32.mrb[0].mxu0
        %v2159 = vadd.f32 0.0, %v2158
        %v2160 = vpop.f32.mrb[0].mxu0
        %2161 = vmatprep.mubr.bf16.mxu0 0
        %2162 = vmatmul.mubr.bf16.gmra.mrb[0].mxu0 %v1958
        %v2163 = vpop.f32.mrb[0].mxu0
        %v2164 = vadd.f32 0.0, %v2163
        %v2165 = vpop.f32.mrb[0].mxu0
        %v2166 = vpop.f32.mrb[0].mxu0
        %v2167 = vadd.f32 0.0, %v2166
        %v2168 = vpop.f32.mrb[0].mxu0
        %2169 = vmatprep.mubr.bf16.mxu0 0
        %2170 = vmatmul.mubr.bf16.gmra.mrb[0].mxu0 %v1959
        %v2171 = vpop.f32.mrb[0].mxu0
        %v2172 = vadd.f32 0.0, %v2171
        %v2173 = vpop.f32.mrb[0].mxu0
        %v2174 = vpop.f32.mrb[0].mxu0
        %v2175 = vadd.f32 0.0, %v2174
        %v2176 = vpop.f32.mrb[0].mxu0
        %2177 = vmatprep.mubr.bf16.mxu0 0
        %2178 = vmatmul.mubr.bf16.gmra.mrb[0].mxu0 %v1960
        %v2179 = vpop.f32.mrb[0].mxu0
        %v2180 = vadd.f32 0.0, %v2179
        %v2181 = vpop.f32.mrb[0].mxu0
        %v2182 = vpop.f32.mrb[0].mxu0
        %v2183 = vadd.f32 0.0, %v2182
        %v2184 = vpop.f32.mrb[0].mxu0
        %2185 = vdwg.mxu0
        %v2218 = vunpack.c.l.b16 %v1445
        %v2219 = vunpack.c.l.b16 %v1446
        %v2220 = vunpack.c.l.b16 %v1447
        %v2221 = vunpack.c.l.b16 %v1448
        %v2222 = vunpack.c.l.b16 %v1449
        %v2223 = vunpack.c.l.b16 %v1450
        %v2224 = vunpack.c.l.b16 %v1451
        %v2225 = vunpack.c.l.b16 %v1452
        %v2226 = vunpack.c.l.b16 %v1453
        %v2227 = vunpack.c.l.b16 %v1454
        %v2228 = vunpack.c.l.b16 %v1455
        %v2229 = vunpack.c.l.b16 %v1456
        %v2230 = vunpack.c.l.b16 %v1457
        %v2231 = vunpack.c.l.b16 %v1458
        %v2232 = vunpack.c.l.b16 %v1459
        %v2233 = vunpack.c.l.b16 %v1460
        %v2234 = vunpack.c.l.b16 %v1461
        %v2235 = vunpack.c.l.b16 %v1462
        %v2236 = vunpack.c.l.b16 %v1463
        %v2237 = vunpack.c.l.b16 %v1464
        %v2238 = vunpack.c.l.b16 %v1465
        %v2239 = vunpack.c.l.b16 %v1466
        %v2240 = vunpack.c.l.b16 %v1467
        %v2241 = vunpack.c.l.b16 %v1468
        %v2242 = vunpack.c.l.b16 %v1469
        %v2243 = vunpack.c.l.b16 %v1470
        %v2244 = vunpack.c.l.b16 %v1471
        %v2245 = vunpack.c.l.b16 %v1472
        %v2246 = vunpack.c.l.b16 %v1473
        %v2247 = vunpack.c.l.b16 %v1474
        %v2248 = vunpack.c.l.b16 %v1475
        %v2249 = vunpack.c.l.b16 %v1476
        %v2250 = vpack.c.b16 %v2219, %v2218
        %v2251 = vpack.c.b16 %v2221, %v2220
        %v2252 = vpack.c.b16 %v2223, %v2222
        %v2253 = vpack.c.b16 %v2225, %v2224
        %v2254 = vpack.c.b16 %v2227, %v2226
        %v2255 = vpack.c.b16 %v2229, %v2228
        %v2256 = vpack.c.b16 %v2231, %v2230
        %v2257 = vpack.c.b16 %v2233, %v2232
        %v2258 = vpack.c.b16 %v2235, %v2234
        %v2259 = vpack.c.b16 %v2237, %v2236
        %v2260 = vpack.c.b16 %v2239, %v2238
        %v2261 = vpack.c.b16 %v2241, %v2240
        %v2262 = vpack.c.b16 %v2243, %v2242
        %v2263 = vpack.c.b16 %v2245, %v2244
        %v2264 = vpack.c.b16 %v2247, %v2246
        %v2265 = vpack.c.b16 %v2249, %v2248
        %v2298 = vunpack.c.l.b16 %v1477
        %v2299 = vunpack.c.l.b16 %v1478
        %v2300 = vunpack.c.l.b16 %v1479
        %v2301 = vunpack.c.l.b16 %v1480
        %v2302 = vunpack.c.l.b16 %v1481
        %v2303 = vunpack.c.l.b16 %v1482
        %v2304 = vunpack.c.l.b16 %v1483
        %v2305 = vunpack.c.l.b16 %v1484
        %v2306 = vunpack.c.l.b16 %v1485
        %v2307 = vunpack.c.l.b16 %v1486
        %v2308 = vunpack.c.l.b16 %v1487
        %v2309 = vunpack.c.l.b16 %v1488
        %v2310 = vunpack.c.l.b16 %v1489
        %v2311 = vunpack.c.l.b16 %v1490
        %v2312 = vunpack.c.l.b16 %v1491
        %v2313 = vunpack.c.l.b16 %v1492
        %v2314 = vpack.c.b16 %v2299, %v2298
        %v2315 = vpack.c.b16 %v2301, %v2300
        %v2316 = vpack.c.b16 %v2303, %v2302
        %v2317 = vpack.c.b16 %v2305, %v2304
        %v2318 = vpack.c.b16 %v2307, %v2306
        %v2319 = vpack.c.b16 %v2309, %v2308
        %v2320 = vpack.c.b16 %v2311, %v2310
        %v2321 = vpack.c.b16 %v2313, %v2312
        %2330 = vmatprep.subr.bf16.mxu0 0
        %2331 = vmatpush1.bf16.msra.mxu0 %v2314
        %2332 = vmatprep.subr.bf16.mxu0 0
        %2333 = vmatpush1.bf16.msra.mxu0 %v2315
        %2334 = vmatprep.subr.bf16.mxu0 0
        %2335 = vmatpush1.bf16.msra.mxu0 %v2316
        %2336 = vmatprep.subr.bf16.mxu0 0
        %2337 = vmatpush1.bf16.msra.mxu0 %v2317
        %2338 = vmatprep.subr.bf16.mxu0 0
        %2339 = vmatpush1.bf16.msra.mxu0 %v2318
        %2340 = vmatprep.subr.bf16.mxu0 0
        %2341 = vmatpush1.bf16.msra.mxu0 %v2319
        %2342 = vmatprep.subr.bf16.mxu0 0
        %2343 = vmatpush1.bf16.msra.mxu0 %v2320
        %2344 = vmatprep.subr.bf16.mxu0 0
        %2345 = vmatpush1.bf16.msra.mxu0 %v2321
        %2346 = vmatprep.subr.bf16.mxu0 0
        %2347 = vmatpush1.bf16.msra.mxu0 0
        %2348 = vmatprep.subr.bf16.mxu0 0
        %2349 = vmatpush1.bf16.msra.mxu0 0
        %2350 = vmatprep.subr.bf16.mxu0 0
        %2351 = vmatpush1.bf16.msra.mxu0 0
        %2352 = vmatprep.subr.bf16.mxu0 0
        %2353 = vmatpush1.bf16.msra.mxu0 0
        %2354 = vmatprep.subr.bf16.mxu0 0
        %2355 = vmatpush1.bf16.msra.mxu0 0
        %2356 = vmatprep.subr.bf16.mxu0 0
        %2357 = vmatpush1.bf16.msra.mxu0 0
        %2358 = vmatprep.subr.bf16.mxu0 0
        %2359 = vmatpush1.bf16.msra.mxu0 0
        %2360 = vmatprep.subr.bf16.mxu0 0
        %2361 = vmatpush1.bf16.msra.mxu0 0
        %2362 = vmatprep.mubr.bf16.mxu0 0
        %2363 = vmatmul.mubr.bf16.gmra.mrb[0].mxu0 %v2250
        %v2364 = vpop.f32.mrb[0].mxu0
        %v2365 = vadd.f32 %v2060, %v2364
        %v2366 = vpop.f32.mrb[0].mxu0
        %v2367 = vpop.f32.mrb[0].mxu0
        %v2368 = vadd.f32 %v2063, %v2367
        %v2369 = vpop.f32.mrb[0].mxu0
        %2370 = vmatprep.mubr.bf16.mxu0 0
        %2371 = vmatmul.mubr.bf16.gmra.mrb[0].mxu0 %v2251
        %v2372 = vpop.f32.mrb[0].mxu0
        %v2373 = vadd.f32 %v2068, %v2372
        %v2374 = vpop.f32.mrb[0].mxu0
        %v2375 = vpop.f32.mrb[0].mxu0
        %v2376 = vadd.f32 %v2071, %v2375
        %v2377 = vpop.f32.mrb[0].mxu0
        %2378 = vmatprep.mubr.bf16.mxu0 0
        %2379 = vmatmul.mubr.bf16.gmra.mrb[0].mxu0 %v2252
        %v2380 = vpop.f32.mrb[0].mxu0
        %v2381 = vadd.f32 %v2076, %v2380
        %v2382 = vpop.f32.mrb[0].mxu0
        %v2383 = vpop.f32.mrb[0].mxu0
        %v2384 = vadd.f32 %v2079, %v2383
        %v2385 = vpop.f32.mrb[0].mxu0
        %2386 = vmatprep.mubr.bf16.mxu0 0
        %2387 = vmatmul.mubr.bf16.gmra.mrb[0].mxu0 %v2253
        %v2388 = vpop.f32.mrb[0].mxu0
        %v2389 = vadd.f32 %v2084, %v2388
        %v2390 = vpop.f32.mrb[0].mxu0
        %v2391 = vpop.f32.mrb[0].mxu0
        %v2392 = vadd.f32 %v2087, %v2391
        %v2393 = vpop.f32.mrb[0].mxu0
        %2394 = vmatprep.mubr.bf16.mxu0 0
        %2395 = vmatmul.mubr.bf16.gmra.mrb[0].mxu0 %v2254
        %v2396 = vpop.f32.mrb[0].mxu0
        %v2397 = vadd.f32 %v2092, %v2396
        %v2398 = vpop.f32.mrb[0].mxu0
        %v2399 = vpop.f32.mrb[0].mxu0
        %v2400 = vadd.f32 %v2095, %v2399
        %v2401 = vpop.f32.mrb[0].mxu0
        %2402 = vmatprep.mubr.bf16.mxu0 0
        %2403 = vmatmul.mubr.bf16.gmra.mrb[0].mxu0 %v2255
        %v2404 = vpop.f32.mrb[0].mxu0
        %v2405 = vadd.f32 %v2100, %v2404
        %v2406 = vpop.f32.mrb[0].mxu0
        %v2407 = vpop.f32.mrb[0].mxu0
        %v2408 = vadd.f32 %v2103, %v2407
        %v2409 = vpop.f32.mrb[0].mxu0
        %2410 = vmatprep.mubr.bf16.mxu0 0
        %2411 = vmatmul.mubr.bf16.gmra.mrb[0].mxu0 %v2256
        %v2412 = vpop.f32.mrb[0].mxu0
        %v2413 = vadd.f32 %v2108, %v2412
        %v2414 = vpop.f32.mrb[0].mxu0
        %v2415 = vpop.f32.mrb[0].mxu0
        %v2416 = vadd.f32 %v2111, %v2415
        %v2417 = vpop.f32.mrb[0].mxu0
        %2418 = vmatprep.mubr.bf16.mxu0 0
        %2419 = vmatmul.mubr.bf16.gmra.mrb[0].mxu0 %v2257
        %v2420 = vpop.f32.mrb[0].mxu0
        %v2421 = vadd.f32 %v2116, %v2420
        %v2422 = vpop.f32.mrb[0].mxu0
        %v2423 = vpop.f32.mrb[0].mxu0
        %v2424 = vadd.f32 %v2119, %v2423
        %v2425 = vpop.f32.mrb[0].mxu0
        %2426 = vmatprep.mubr.bf16.mxu0 0
        %2427 = vmatmul.mubr.bf16.gmra.mrb[0].mxu0 %v2258
        %v2428 = vpop.f32.mrb[0].mxu0
        %v2429 = vadd.f32 %v2124, %v2428
        %v2430 = vpop.f32.mrb[0].mxu0
        %v2431 = vpop.f32.mrb[0].mxu0
        %v2432 = vadd.f32 %v2127, %v2431
        %v2433 = vpop.f32.mrb[0].mxu0
        %2434 = vmatprep.mubr.bf16.mxu0 0
        %2435 = vmatmul.mubr.bf16.gmra.mrb[0].mxu0 %v2259
        %v2436 = vpop.f32.mrb[0].mxu0
        %v2437 = vadd.f32 %v2132, %v2436
        %v2438 = vpop.f32.mrb[0].mxu0
        %v2439 = vpop.f32.mrb[0].mxu0
        %v2440 = vadd.f32 %v2135, %v2439
        %v2441 = vpop.f32.mrb[0].mxu0
        %2442 = vmatprep.mubr.bf16.mxu0 0
        %2443 = vmatmul.mubr.bf16.gmra.mrb[0].mxu0 %v2260
        %v2444 = vpop.f32.mrb[0].mxu0
        %v2445 = vadd.f32 %v2140, %v2444
        %v2446 = vpop.f32.mrb[0].mxu0
        %v2447 = vpop.f32.mrb[0].mxu0
        %v2448 = vadd.f32 %v2143, %v2447
        %v2449 = vpop.f32.mrb[0].mxu0
        %2450 = vmatprep.mubr.bf16.mxu0 0
        %2451 = vmatmul.mubr.bf16.gmra.mrb[0].mxu0 %v2261
        %v2452 = vpop.f32.mrb[0].mxu0
        %v2453 = vadd.f32 %v2148, %v2452
        %v2454 = vpop.f32.mrb[0].mxu0
        %v2455 = vpop.f32.mrb[0].mxu0
        %v2456 = vadd.f32 %v2151, %v2455
        %v2457 = vpop.f32.mrb[0].mxu0
        %2458 = vmatprep.mubr.bf16.mxu0 0
        %2459 = vmatmul.mubr.bf16.gmra.mrb[0].mxu0 %v2262
        %v2460 = vpop.f32.mrb[0].mxu0
        %v2461 = vadd.f32 %v2156, %v2460
        %v2462 = vpop.f32.mrb[0].mxu0
        %v2463 = vpop.f32.mrb[0].mxu0
        %v2464 = vadd.f32 %v2159, %v2463
        %v2465 = vpop.f32.mrb[0].mxu0
        %2466 = vmatprep.mubr.bf16.mxu0 0
        %2467 = vmatmul.mubr.bf16.gmra.mrb[0].mxu0 %v2263
        %v2468 = vpop.f32.mrb[0].mxu0
        %v2469 = vadd.f32 %v2164, %v2468
        %v2470 = vpop.f32.mrb[0].mxu0
        %v2471 = vpop.f32.mrb[0].mxu0
        %v2472 = vadd.f32 %v2167, %v2471
        %v2473 = vpop.f32.mrb[0].mxu0
        %2474 = vmatprep.mubr.bf16.mxu0 0
        %2475 = vmatmul.mubr.bf16.gmra.mrb[0].mxu0 %v2264
        %v2476 = vpop.f32.mrb[0].mxu0
        %v2477 = vadd.f32 %v2172, %v2476
        %v2478 = vpop.f32.mrb[0].mxu0
        %v2479 = vpop.f32.mrb[0].mxu0
        %v2480 = vadd.f32 %v2175, %v2479
        %v2481 = vpop.f32.mrb[0].mxu0
        %2482 = vmatprep.mubr.bf16.mxu0 0
        %2483 = vmatmul.mubr.bf16.gmra.mrb[0].mxu0 %v2265
        %v2484 = vpop.f32.mrb[0].mxu0
        %v2485 = vadd.f32 %v2180, %v2484
        %v2486 = vpop.f32.mrb[0].mxu0
        %v2487 = vpop.f32.mrb[0].mxu0
        %v2488 = vadd.f32 %v2183, %v2487
        %v2489 = vpop.f32.mrb[0].mxu0
        %2490 = vdwg.mxu0
        %v2491 = vld [vmem:[#allocation2] sm:$0xe]
        %v2492 = vld [vmem:[#allocation2 + $0xc] sm:$0xe]
        %v2493 = vld [vmem:[#allocation2 + $0x18] sm:$0xe]
        %v2494 = vld [vmem:[#allocation2 + $0x24] sm:$0xe]
        %v2495 = vld [vmem:[#allocation2 + $0x30] sm:$0xe]
        %v2496 = vld [vmem:[#allocation2 + $0x3c] sm:$0xe]
        %v2497 = vld [vmem:[#allocation2 + $0x48] sm:$0xe]
        %v2498 = vld [vmem:[#allocation2 + $0x54] sm:$0xe]
        %v2499 = vld [vmem:[#allocation2 + $0x60] sm:$0xe]
        %v2500 = vld [vmem:[#allocation2 + $0x6c] sm:$0xe]
        %v2501 = vld [vmem:[#allocation2 + $0x78] sm:$0xe]
        %v2502 = vld [vmem:[#allocation2 + $0x84] sm:$0xe]
        %v2503 = vld [vmem:[#allocation2 + $0x90] sm:$0xe]
        %v2504 = vld [vmem:[#allocation2 + $0x9c] sm:$0xe]
        %v2505 = vld [vmem:[#allocation2 + $0xa8] sm:$0xe]
        %v2506 = vld [vmem:[#allocation2 + $0xb4] sm:$0xe]
        %vm2539 = vcmask 1042432
        %vm2540 = vcmask 1046532
        %vm2541 = vmor %vm2539, %vm2540
        %v2542 = vrot.slane %v2491, 5
        %v2543 = vrot.slane %v2542, 4
        %v2544 = vrot.slane %v1446, 5
        %v2545 = vsel %vm2541, %v2543, %v2544
        %v2546 = vrot.slane %v2544, 4
        %v2547 = vrot.slane %v1493, 5
        %v2548 = vsel %vm2541, %v2546, %v2547
        %v2549 = vrot.slane %v2492, 5
        %v2550 = vrot.slane %v2549, 4
        %v2551 = vrot.slane %v1448, 5
        %v2552 = vsel %vm2541, %v2550, %v2551
        %v2553 = vrot.slane %v2551, 4
        %v2554 = vrot.slane %v1494, 5
        %v2555 = vsel %vm2541, %v2553, %v2554
        %v2556 = vrot.slane %v2493, 5
        %v2557 = vrot.slane %v2556, 4
        %v2558 = vrot.slane %v1450, 5
        %v2559 = vsel %vm2541, %v2557, %v2558
        %v2560 = vrot.slane %v2558, 4
        %v2561 = vrot.slane %v1495, 5
        %v2562 = vsel %vm2541, %v2560, %v2561
        %v2563 = vrot.slane %v2494, 5
        %v2564 = vrot.slane %v2563, 4
        %v2565 = vrot.slane %v1452, 5
        %v2566 = vsel %vm2541, %v2564, %v2565
        %v2567 = vrot.slane %v2565, 4
        %v2568 = vrot.slane %v1496, 5
        %v2569 = vsel %vm2541, %v2567, %v2568
        %v2570 = vrot.slane %v2495, 5
        %v2571 = vrot.slane %v2570, 4
        %v2572 = vrot.slane %v1454, 5
        %v2573 = vsel %vm2541, %v2571, %v2572
        %v2574 = vrot.slane %v2572, 4
        %v2575 = vrot.slane %v1497, 5
        %v2576 = vsel %vm2541, %v2574, %v2575
        %v2577 = vrot.slane %v2496, 5
        %v2578 = vrot.slane %v2577, 4
        %v2579 = vrot.slane %v1456, 5
        %v2580 = vsel %vm2541, %v2578, %v2579
        %v2581 = vrot.slane %v2579, 4
        %v2582 = vrot.slane %v1498, 5
        %v2583 = vsel %vm2541, %v2581, %v2582
        %v2584 = vrot.slane %v2497, 5
        %v2585 = vrot.slane %v2584, 4
        %v2586 = vrot.slane %v1458, 5
        %v2587 = vsel %vm2541, %v2585, %v2586
        %v2588 = vrot.slane %v2586, 4
        %v2589 = vrot.slane %v1499, 5
        %v2590 = vsel %vm2541, %v2588, %v2589
        %v2591 = vrot.slane %v2498, 5
        %v2592 = vrot.slane %v2591, 4
        %v2593 = vrot.slane %v1460, 5
        %v2594 = vsel %vm2541, %v2592, %v2593
        %v2595 = vrot.slane %v2593, 4
        %v2596 = vrot.slane %v1500, 5
        %v2597 = vsel %vm2541, %v2595, %v2596
        %v2598 = vrot.slane %v2499, 5
        %v2599 = vrot.slane %v2598, 4
        %v2600 = vrot.slane %v1462, 5
        %v2601 = vsel %vm2541, %v2599, %v2600
        %v2602 = vrot.slane %v2600, 4
        %v2603 = vrot.slane %v1501, 5
        %v2604 = vsel %vm2541, %v2602, %v2603
        %v2605 = vrot.slane %v2500, 5
        %v2606 = vrot.slane %v2605, 4
        %v2607 = vrot.slane %v1464, 5
        %v2608 = vsel %vm2541, %v2606, %v2607
        %v2609 = vrot.slane %v2607, 4
        %v2610 = vrot.slane %v1502, 5
        %v2611 = vsel %vm2541, %v2609, %v2610
        %v2612 = vrot.slane %v2501, 5
        %v2613 = vrot.slane %v2612, 4
        %v2614 = vrot.slane %v1466, 5
        %v2615 = vsel %vm2541, %v2613, %v2614
        %v2616 = vrot.slane %v2614, 4
        %v2617 = vrot.slane %v1503, 5
        %v2618 = vsel %vm2541, %v2616, %v2617
        %v2619 = vrot.slane %v2502, 5
        %v2620 = vrot.slane %v2619, 4
        %v2621 = vrot.slane %v1468, 5
        %v2622 = vsel %vm2541, %v2620, %v2621
        %v2623 = vrot.slane %v2621, 4
        %v2624 = vrot.slane %v1504, 5
        %v2625 = vsel %vm2541, %v2623, %v2624
        %v2626 = vrot.slane %v2503, 5
        %v2627 = vrot.slane %v2626, 4
        %v2628 = vrot.slane %v1470, 5
        %v2629 = vsel %vm2541, %v2627, %v2628
        %v2630 = vrot.slane %v2628, 4
        %v2631 = vrot.slane %v1505, 5
        %v2632 = vsel %vm2541, %v2630, %v2631
        %v2633 = vrot.slane %v2504, 5
        %v2634 = vrot.slane %v2633, 4
        %v2635 = vrot.slane %v1472, 5
        %v2636 = vsel %vm2541, %v2634, %v2635
        %v2637 = vrot.slane %v2635, 4
        %v2638 = vrot.slane %v1506, 5
        %v2639 = vsel %vm2541, %v2637, %v2638
        %v2640 = vrot.slane %v2505, 5
        %v2641 = vrot.slane %v2640, 4
        %v2642 = vrot.slane %v1474, 5
        %v2643 = vsel %vm2541, %v2641, %v2642
        %v2644 = vrot.slane %v2642, 4
        %v2645 = vrot.slane %v1507, 5
        %v2646 = vsel %vm2541, %v2644, %v2645
        %v2647 = vrot.slane %v2506, 5
        %v2648 = vrot.slane %v2647, 4
        %v2649 = vrot.slane %v1476, 5
        %v2650 = vsel %vm2541, %v2648, %v2649
        %v2651 = vrot.slane %v2649, 4
        %v2652 = vrot.slane %v1508, 5
        %v2653 = vsel %vm2541, %v2651, %v2652
        %s2654 = scalar_lea.vmem [#allocation8], 128
        %v2655 = vld [vmem:[%s2654] sm:$0xf]
        %v2656 = vld [vmem:[%s2654 + $0x4] sm:$0xf]
        %v2657 = vld [vmem:[%s2654 + $0x8] sm:$0xf]
        %v2658 = vld [vmem:[%s2654 + $0xc] sm:$0xf]
        %v2659 = vld [vmem:[%s2654 + $0x10] sm:$0xf]
        %v2660 = vld [vmem:[%s2654 + $0x14] sm:$0xf]
        %v2661 = vld [vmem:[%s2654 + $0x18] sm:$0xf]
        %v2662 = vld [vmem:[%s2654 + $0x1c] sm:$0xf]
        %v2663 = vld [vmem:[%s2654 + $0x20] sm:$0xf]
        %v2664 = vld [vmem:[%s2654 + $0x24] sm:$0xf]
        %v2665 = vld [vmem:[%s2654 + $0x28] sm:$0xf]
        %v2666 = vld [vmem:[%s2654 + $0x2c] sm:$0xf]
        %v2667 = vld [vmem:[%s2654 + $0x30] sm:$0xf]
        %v2668 = vld [vmem:[%s2654 + $0x34] sm:$0xf]
        %v2669 = vld [vmem:[%s2654 + $0x38] sm:$0xf]
        %v2670 = vld [vmem:[%s2654 + $0x3c] sm:$0xf]
        %v2671 = vunpack.c.l.b16 %v2545
        %v2672 = vunpack.c.l.b16 %v2548
        %v2673 = vunpack.c.l.b16 %v2552
        %v2674 = vunpack.c.l.b16 %v2555
        %v2675 = vunpack.c.l.b16 %v2559
        %v2676 = vunpack.c.l.b16 %v2562
        %v2677 = vunpack.c.l.b16 %v2566
        %v2678 = vunpack.c.l.b16 %v2569
        %v2679 = vunpack.c.l.b16 %v2573
        %v2680 = vunpack.c.l.b16 %v2576
        %v2681 = vunpack.c.l.b16 %v2580
        %v2682 = vunpack.c.l.b16 %v2583
        %v2683 = vunpack.c.l.b16 %v2587
        %v2684 = vunpack.c.l.b16 %v2590
        %v2685 = vunpack.c.l.b16 %v2594
        %v2686 = vunpack.c.l.b16 %v2597
        %v2687 = vunpack.c.l.b16 %v2601
        %v2688 = vunpack.c.l.b16 %v2604
        %v2689 = vunpack.c.l.b16 %v2608
        %v2690 = vunpack.c.l.b16 %v2611
        %v2691 = vunpack.c.l.b16 %v2615
        %v2692 = vunpack.c.l.b16 %v2618
        %v2693 = vunpack.c.l.b16 %v2622
        %v2694 = vunpack.c.l.b16 %v2625
        %v2695 = vunpack.c.l.b16 %v2629
        %v2696 = vunpack.c.l.b16 %v2632
        %v2697 = vunpack.c.l.b16 %v2636
        %v2698 = vunpack.c.l.b16 %v2639
        %v2699 = vunpack.c.l.b16 %v2643
        %v2700 = vunpack.c.l.b16 %v2646
        %v2701 = vunpack.c.l.b16 %v2650
        %v2702 = vunpack.c.l.b16 %v2653
        %v2703 = vpack.c.b16 %v2672, %v2671
        %v2704 = vpack.c.b16 %v2674, %v2673
        %v2705 = vpack.c.b16 %v2676, %v2675
        %v2706 = vpack.c.b16 %v2678, %v2677
        %v2707 = vpack.c.b16 %v2680, %v2679
        %v2708 = vpack.c.b16 %v2682, %v2681
        %v2709 = vpack.c.b16 %v2684, %v2683
        %v2710 = vpack.c.b16 %v2686, %v2685
        %v2711 = vpack.c.b16 %v2688, %v2687
        %v2712 = vpack.c.b16 %v2690, %v2689
        %v2713 = vpack.c.b16 %v2692, %v2691
        %v2714 = vpack.c.b16 %v2694, %v2693
        %v2715 = vpack.c.b16 %v2696, %v2695
        %v2716 = vpack.c.b16 %v2698, %v2697
        %v2717 = vpack.c.b16 %v2700, %v2699
        %v2718 = vpack.c.b16 %v2702, %v2701
        %v2751 = vunpack.c.l.b16 %v2655
        %v2752 = vunpack.c.l.b16 %v2656
        %v2753 = vunpack.c.l.b16 %v2657
        %v2754 = vunpack.c.l.b16 %v2658
        %v2755 = vunpack.c.l.b16 %v2659
        %v2756 = vunpack.c.l.b16 %v2660
        %v2757 = vunpack.c.l.b16 %v2661
        %v2758 = vunpack.c.l.b16 %v2662
        %v2759 = vunpack.c.l.b16 %v2663
        %v2760 = vunpack.c.l.b16 %v2664
        %v2761 = vunpack.c.l.b16 %v2665
        %v2762 = vunpack.c.l.b16 %v2666
        %v2763 = vunpack.c.l.b16 %v2667
        %v2764 = vunpack.c.l.b16 %v2668
        %v2765 = vunpack.c.l.b16 %v2669
        %v2766 = vunpack.c.l.b16 %v2670
        %v2767 = vpack.c.b16 %v2752, %v2751
        %v2768 = vpack.c.b16 %v2754, %v2753
        %v2769 = vpack.c.b16 %v2756, %v2755
        %v2770 = vpack.c.b16 %v2758, %v2757
        %v2771 = vpack.c.b16 %v2760, %v2759
        %v2772 = vpack.c.b16 %v2762, %v2761
        %v2773 = vpack.c.b16 %v2764, %v2763
        %v2774 = vpack.c.b16 %v2766, %v2765
        %2783 = vmatprep.subr.bf16.mxu0 0
        %2784 = vmatpush1.bf16.msra.mxu0 %v2767
        %2785 = vmatprep.subr.bf16.mxu0 0
        %2786 = vmatpush1.bf16.msra.mxu0 %v2768
        %2787 = vmatprep.subr.bf16.mxu0 0
        %2788 = vmatpush1.bf16.msra.mxu0 %v2769
        %2789 = vmatprep.subr.bf16.mxu0 0
        %2790 = vmatpush1.bf16.msra.mxu0 %v2770
        %2791 = vmatprep.subr.bf16.mxu0 0
        %2792 = vmatpush1.bf16.msra.mxu0 %v2771
        %2793 = vmatprep.subr.bf16.mxu0 0
        %2794 = vmatpush1.bf16.msra.mxu0 %v2772
        %2795 = vmatprep.subr.bf16.mxu0 0
        %2796 = vmatpush1.bf16.msra.mxu0 %v2773
        %2797 = vmatprep.subr.bf16.mxu0 0
        %2798 = vmatpush1.bf16.msra.mxu0 %v2774
        %2799 = vmatprep.subr.bf16.mxu0 0
        %2800 = vmatpush1.bf16.msra.mxu0 0
        %2801 = vmatprep.subr.bf16.mxu0 0
        %2802 = vmatpush1.bf16.msra.mxu0 0
        %2803 = vmatprep.subr.bf16.mxu0 0
        %2804 = vmatpush1.bf16.msra.mxu0 0
        %2805 = vmatprep.subr.bf16.mxu0 0
        %2806 = vmatpush1.bf16.msra.mxu0 0
        %2807 = vmatprep.subr.bf16.mxu0 0
        %2808 = vmatpush1.bf16.msra.mxu0 0
        %2809 = vmatprep.subr.bf16.mxu0 0
        %2810 = vmatpush1.bf16.msra.mxu0 0
        %2811 = vmatprep.subr.bf16.mxu0 0
        %2812 = vmatpush1.bf16.msra.mxu0 0
        %2813 = vmatprep.subr.bf16.mxu0 0
        %2814 = vmatpush1.bf16.msra.mxu0 0
        %2815 = vmatprep.mubr.bf16.mxu0 0
        %2816 = vmatmul.mubr.bf16.gmra.mrb[0].mxu0 %v2703
        %v2817 = vpop.f32.mrb[0].mxu0
        %v2818 = vadd.f32 0.0, %v2817
        %v2819 = vpop.f32.mrb[0].mxu0
        %v2820 = vpop.f32.mrb[0].mxu0
        %v2821 = vadd.f32 0.0, %v2820
        %v2822 = vpop.f32.mrb[0].mxu0
        %2823 = vmatprep.mubr.bf16.mxu0 0
        %2824 = vmatmul.mubr.bf16.gmra.mrb[0].mxu0 %v2704
        %v2825 = vpop.f32.mrb[0].mxu0
        %v2826 = vadd.f32 0.0, %v2825
        %v2827 = vpop.f32.mrb[0].mxu0
        %v2828 = vpop.f32.mrb[0].mxu0
        %v2829 = vadd.f32 0.0, %v2828
        %v2830 = vpop.f32.mrb[0].mxu0
        %2831 = vmatprep.mubr.bf16.mxu0 0
        %2832 = vmatmul.mubr.bf16.gmra.mrb[0].mxu0 %v2705
        %v2833 = vpop.f32.mrb[0].mxu0
        %v2834 = vadd.f32 0.0, %v2833
        %v2835 = vpop.f32.mrb[0].mxu0
        %v2836 = vpop.f32.mrb[0].mxu0
        %v2837 = vadd.f32 0.0, %v2836
        %v2838 = vpop.f32.mrb[0].mxu0
        %2839 = vmatprep.mubr.bf16.mxu0 0
        %2840 = vmatmul.mubr.bf16.gmra.mrb[0].mxu0 %v2706
        %v2841 = vpop.f32.mrb[0].mxu0
        %v2842 = vadd.f32 0.0, %v2841
        %v2843 = vpop.f32.mrb[0].mxu0
        %v2844 = vpop.f32.mrb[0].mxu0
        %v2845 = vadd.f32 0.0, %v2844
        %v2846 = vpop.f32.mrb[0].mxu0
        %2847 = vmatprep.mubr.bf16.mxu0 0
        %2848 = vmatmul.mubr.bf16.gmra.mrb[0].mxu0 %v2707
        %v2849 = vpop.f32.mrb[0].mxu0
        %v2850 = vadd.f32 0.0, %v2849
        %v2851 = vpop.f32.mrb[0].mxu0
        %v2852 = vpop.f32.mrb[0].mxu0
        %v2853 = vadd.f32 0.0, %v2852
        %v2854 = vpop.f32.mrb[0].mxu0
        %2855 = vmatprep.mubr.bf16.mxu0 0
        %2856 = vmatmul.mubr.bf16.gmra.mrb[0].mxu0 %v2708
        %v2857 = vpop.f32.mrb[0].mxu0
        %v2858 = vadd.f32 0.0, %v2857
        %v2859 = vpop.f32.mrb[0].mxu0
        %v2860 = vpop.f32.mrb[0].mxu0
        %v2861 = vadd.f32 0.0, %v2860
        %v2862 = vpop.f32.mrb[0].mxu0
        %2863 = vmatprep.mubr.bf16.mxu0 0
        %2864 = vmatmul.mubr.bf16.gmra.mrb[0].mxu0 %v2709
        %v2865 = vpop.f32.mrb[0].mxu0
        %v2866 = vadd.f32 0.0, %v2865
        %v2867 = vpop.f32.mrb[0].mxu0
        %v2868 = vpop.f32.mrb[0].mxu0
        %v2869 = vadd.f32 0.0, %v2868
        %v2870 = vpop.f32.mrb[0].mxu0
        %2871 = vmatprep.mubr.bf16.mxu0 0
        %2872 = vmatmul.mubr.bf16.gmra.mrb[0].mxu0 %v2710
        %v2873 = vpop.f32.mrb[0].mxu0
        %v2874 = vadd.f32 0.0, %v2873
        %v2875 = vpop.f32.mrb[0].mxu0
        %v2876 = vpop.f32.mrb[0].mxu0
        %v2877 = vadd.f32 0.0, %v2876
        %v2878 = vpop.f32.mrb[0].mxu0
        %2879 = vmatprep.mubr.bf16.mxu0 0
        %2880 = vmatmul.mubr.bf16.gmra.mrb[0].mxu0 %v2711
        %v2881 = vpop.f32.mrb[0].mxu0
        %v2882 = vadd.f32 0.0, %v2881
        %v2883 = vpop.f32.mrb[0].mxu0
        %v2884 = vpop.f32.mrb[0].mxu0
        %v2885 = vadd.f32 0.0, %v2884
        %v2886 = vpop.f32.mrb[0].mxu0
        %2887 = vmatprep.mubr.bf16.mxu0 0
        %2888 = vmatmul.mubr.bf16.gmra.mrb[0].mxu0 %v2712
        %v2889 = vpop.f32.mrb[0].mxu0
        %v2890 = vadd.f32 0.0, %v2889
        %v2891 = vpop.f32.mrb[0].mxu0
        %v2892 = vpop.f32.mrb[0].mxu0
        %v2893 = vadd.f32 0.0, %v2892
        %v2894 = vpop.f32.mrb[0].mxu0
        %2895 = vmatprep.mubr.bf16.mxu0 0
        %2896 = vmatmul.mubr.bf16.gmra.mrb[0].mxu0 %v2713
        %v2897 = vpop.f32.mrb[0].mxu0
        %v2898 = vadd.f32 0.0, %v2897
        %v2899 = vpop.f32.mrb[0].mxu0
        %v2900 = vpop.f32.mrb[0].mxu0
        %v2901 = vadd.f32 0.0, %v2900
        %v2902 = vpop.f32.mrb[0].mxu0
        %2903 = vmatprep.mubr.bf16.mxu0 0
        %2904 = vmatmul.mubr.bf16.gmra.mrb[0].mxu0 %v2714
        %v2905 = vpop.f32.mrb[0].mxu0
        %v2906 = vadd.f32 0.0, %v2905
        %v2907 = vpop.f32.mrb[0].mxu0
        %v2908 = vpop.f32.mrb[0].mxu0
        %v2909 = vadd.f32 0.0, %v2908
        %v2910 = vpop.f32.mrb[0].mxu0
        %2911 = vmatprep.mubr.bf16.mxu0 0
        %2912 = vmatmul.mubr.bf16.gmra.mrb[0].mxu0 %v2715
        %v2913 = vpop.f32.mrb[0].mxu0
        %v2914 = vadd.f32 0.0, %v2913
        %v2915 = vpop.f32.mrb[0].mxu0
        %v2916 = vpop.f32.mrb[0].mxu0
        %v2917 = vadd.f32 0.0, %v2916
        %v2918 = vpop.f32.mrb[0].mxu0
        %2919 = vmatprep.mubr.bf16.mxu0 0
        %2920 = vmatmul.mubr.bf16.gmra.mrb[0].mxu0 %v2716
        %v2921 = vpop.f32.mrb[0].mxu0
        %v2922 = vadd.f32 0.0, %v2921
        %v2923 = vpop.f32.mrb[0].mxu0
        %v2924 = vpop.f32.mrb[0].mxu0
        %v2925 = vadd.f32 0.0, %v2924
        %v2926 = vpop.f32.mrb[0].mxu0
        %2927 = vmatprep.mubr.bf16.mxu0 0
        %2928 = vmatmul.mubr.bf16.gmra.mrb[0].mxu0 %v2717
        %v2929 = vpop.f32.mrb[0].mxu0
        %v2930 = vadd.f32 0.0, %v2929
        %v2931 = vpop.f32.mrb[0].mxu0
        %v2932 = vpop.f32.mrb[0].mxu0
        %v2933 = vadd.f32 0.0, %v2932
        %v2934 = vpop.f32.mrb[0].mxu0
        %2935 = vmatprep.mubr.bf16.mxu0 0
        %2936 = vmatmul.mubr.bf16.gmra.mrb[0].mxu0 %v2718
        %v2937 = vpop.f32.mrb[0].mxu0
        %v2938 = vadd.f32 0.0, %v2937
        %v2939 = vpop.f32.mrb[0].mxu0
        %v2940 = vpop.f32.mrb[0].mxu0
        %v2941 = vadd.f32 0.0, %v2940
        %v2942 = vpop.f32.mrb[0].mxu0
        %2943 = vdwg.mxu0
        %v2944 = vadd.f32 %v2365, %v2818
        %v2945 = vadd.f32 %v2368, %v2821
        %v2946 = vadd.f32 %v2373, %v2826
        %v2947 = vadd.f32 %v2376, %v2829
        %v2948 = vadd.f32 %v2381, %v2834
        %v2949 = vadd.f32 %v2384, %v2837
        %v2950 = vadd.f32 %v2389, %v2842
        %v2951 = vadd.f32 %v2392, %v2845
        %v2952 = vadd.f32 %v2397, %v2850
        %v2953 = vadd.f32 %v2400, %v2853
        %v2954 = vadd.f32 %v2405, %v2858
        %v2955 = vadd.f32 %v2408, %v2861
        %v2956 = vadd.f32 %v2413, %v2866
        %v2957 = vadd.f32 %v2416, %v2869
        %v2958 = vadd.f32 %v2421, %v2874
        %v2959 = vadd.f32 %v2424, %v2877
        %v2960 = vadd.f32 %v2429, %v2882
        %v2961 = vadd.f32 %v2432, %v2885
        %v2962 = vadd.f32 %v2437, %v2890
        %v2963 = vadd.f32 %v2440, %v2893
        %v2964 = vadd.f32 %v2445, %v2898
        %v2965 = vadd.f32 %v2448, %v2901
        %v2966 = vadd.f32 %v2453, %v2906
        %v2967 = vadd.f32 %v2456, %v2909
        %v2968 = vadd.f32 %v2461, %v2914
        %v2969 = vadd.f32 %v2464, %v2917
        %v2970 = vadd.f32 %v2469, %v2922
        %v2971 = vadd.f32 %v2472, %v2925
        %v2972 = vadd.f32 %v2477, %v2930
        %v2973 = vadd.f32 %v2480, %v2933
        %v2974 = vadd.f32 %v2485, %v2938
        %v2975 = vadd.f32 %v2488, %v2941
        %v2976 = vld [vmem:[%s827] sm:$0xf]
        %v2977 = vld [vmem:[%s827 + $0x4] sm:$0xf]
        %v2978 = vld [vmem:[%s827 + $0xc] sm:$0xf]
        %v2979 = vld [vmem:[%s827 + $0x10] sm:$0xf]
        %v2980 = vld [vmem:[%s827 + $0x18] sm:$0xf]
        %v2981 = vld [vmem:[%s827 + $0x1c] sm:$0xf]
        %v2982 = vld [vmem:[%s827 + $0x24] sm:$0xf]
        %v2983 = vld [vmem:[%s827 + $0x28] sm:$0xf]
        %v2984 = vld [vmem:[%s827 + $0x30] sm:$0xf]
        %v2985 = vld [vmem:[%s827 + $0x34] sm:$0xf]
        %v2986 = vld [vmem:[%s827 + $0x3c] sm:$0xf]
        %v2987 = vld [vmem:[%s827 + $0x40] sm:$0xf]
        %v2988 = vld [vmem:[%s827 + $0x48] sm:$0xf]
        %v2989 = vld [vmem:[%s827 + $0x4c] sm:$0xf]
        %v2990 = vld [vmem:[%s827 + $0x54] sm:$0xf]
        %v2991 = vld [vmem:[%s827 + $0x58] sm:$0xf]
        %v2992 = vld [vmem:[%s827 + $0x60] sm:$0xf]
        %v2993 = vld [vmem:[%s827 + $0x64] sm:$0xf]
        %v2994 = vld [vmem:[%s827 + $0x6c] sm:$0xf]
        %v2995 = vld [vmem:[%s827 + $0x70] sm:$0xf]
        %v2996 = vld [vmem:[%s827 + $0x78] sm:$0xf]
        %v2997 = vld [vmem:[%s827 + $0x7c] sm:$0xf]
        %v2998 = vld [vmem:[%s827 + $0x84] sm:$0xf]
        %v2999 = vld [vmem:[%s827 + $0x88] sm:$0xf]
        %v3000 = vld [vmem:[%s827 + $0x90] sm:$0xf]
        %v3001 = vld [vmem:[%s827 + $0x94] sm:$0xf]
        %v3002 = vld [vmem:[%s827 + $0x9c] sm:$0xf]
        %v3003 = vld [vmem:[%s827 + $0xa0] sm:$0xf]
        %v3004 = vld [vmem:[%s827 + $0xa8] sm:$0xf]
        %v3005 = vld [vmem:[%s827 + $0xac] sm:$0xf]
        %v3006 = vld [vmem:[%s827 + $0xb4] sm:$0xf]
        %v3007 = vld [vmem:[%s827 + $0xb8] sm:$0xf]
        %s3008 = scalar_lea.vmem [#allocation8], 192
        %v3009 = vld [vmem:[%s3008] sm:$0xf]
        %v3010 = vld [vmem:[%s3008 + $0x4] sm:$0xf]
        %v3011 = vld [vmem:[%s3008 + $0x8] sm:$0xf]
        %v3012 = vld [vmem:[%s3008 + $0xc] sm:$0xf]
        %v3013 = vld [vmem:[%s3008 + $0x10] sm:$0xf]
        %v3014 = vld [vmem:[%s3008 + $0x14] sm:$0xf]
        %v3015 = vld [vmem:[%s3008 + $0x18] sm:$0xf]
        %v3016 = vld [vmem:[%s3008 + $0x1c] sm:$0xf]
        %v3017 = vld [vmem:[%s3008 + $0x20] sm:$0xf]
        %v3018 = vld [vmem:[%s3008 + $0x24] sm:$0xf]
        %v3019 = vld [vmem:[%s3008 + $0x28] sm:$0xf]
        %v3020 = vld [vmem:[%s3008 + $0x2c] sm:$0xf]
        %v3021 = vld [vmem:[%s3008 + $0x30] sm:$0xf]
        %v3022 = vld [vmem:[%s3008 + $0x34] sm:$0xf]
        %v3023 = vld [vmem:[%s3008 + $0x38] sm:$0xf]
        %v3024 = vld [vmem:[%s3008 + $0x3c] sm:$0xf]
        %v3057 = vunpack.c.l.b16 %v2976
        %v3058 = vunpack.c.l.b16 %v2977
        %v3059 = vunpack.c.l.b16 %v2978
        %v3060 = vunpack.c.l.b16 %v2979
        %v3061 = vunpack.c.l.b16 %v2980
        %v3062 = vunpack.c.l.b16 %v2981
        %v3063 = vunpack.c.l.b16 %v2982
        %v3064 = vunpack.c.l.b16 %v2983
        %v3065 = vunpack.c.l.b16 %v2984
        %v3066 = vunpack.c.l.b16 %v2985
        %v3067 = vunpack.c.l.b16 %v2986
        %v3068 = vunpack.c.l.b16 %v2987
        %v3069 = vunpack.c.l.b16 %v2988
        %v3070 = vunpack.c.l.b16 %v2989
        %v3071 = vunpack.c.l.b16 %v2990
        %v3072 = vunpack.c.l.b16 %v2991
        %v3073 = vunpack.c.l.b16 %v2992
        %v3074 = vunpack.c.l.b16 %v2993
        %v3075 = vunpack.c.l.b16 %v2994
        %v3076 = vunpack.c.l.b16 %v2995
        %v3077 = vunpack.c.l.b16 %v2996
        %v3078 = vunpack.c.l.b16 %v2997
        %v3079 = vunpack.c.l.b16 %v2998
        %v3080 = vunpack.c.l.b16 %v2999
        %v3081 = vunpack.c.l.b16 %v3000
        %v3082 = vunpack.c.l.b16 %v3001
        %v3083 = vunpack.c.l.b16 %v3002
        %v3084 = vunpack.c.l.b16 %v3003
        %v3085 = vunpack.c.l.b16 %v3004
        %v3086 = vunpack.c.l.b16 %v3005
        %v3087 = vunpack.c.l.b16 %v3006
        %v3088 = vunpack.c.l.b16 %v3007
        %v3089 = vpack.c.b16 %v3058, %v3057
        %v3090 = vpack.c.b16 %v3060, %v3059
        %v3091 = vpack.c.b16 %v3062, %v3061
        %v3092 = vpack.c.b16 %v3064, %v3063
        %v3093 = vpack.c.b16 %v3066, %v3065
        %v3094 = vpack.c.b16 %v3068, %v3067
        %v3095 = vpack.c.b16 %v3070, %v3069
        %v3096 = vpack.c.b16 %v3072, %v3071
        %v3097 = vpack.c.b16 %v3074, %v3073
        %v3098 = vpack.c.b16 %v3076, %v3075
        %v3099 = vpack.c.b16 %v3078, %v3077
        %v3100 = vpack.c.b16 %v3080, %v3079
        %v3101 = vpack.c.b16 %v3082, %v3081
        %v3102 = vpack.c.b16 %v3084, %v3083
        %v3103 = vpack.c.b16 %v3086, %v3085
        %v3104 = vpack.c.b16 %v3088, %v3087
        %v3137 = vunpack.c.l.b16 %v3009
        %v3138 = vunpack.c.l.b16 %v3010
        %v3139 = vunpack.c.l.b16 %v3011
        %v3140 = vunpack.c.l.b16 %v3012
        %v3141 = vunpack.c.l.b16 %v3013
        %v3142 = vunpack.c.l.b16 %v3014
        %v3143 = vunpack.c.l.b16 %v3015
        %v3144 = vunpack.c.l.b16 %v3016
        %v3145 = vunpack.c.l.b16 %v3017
        %v3146 = vunpack.c.l.b16 %v3018
        %v3147 = vunpack.c.l.b16 %v3019
        %v3148 = vunpack.c.l.b16 %v3020
        %v3149 = vunpack.c.l.b16 %v3021
        %v3150 = vunpack.c.l.b16 %v3022
        %v3151 = vunpack.c.l.b16 %v3023
        %v3152 = vunpack.c.l.b16 %v3024
        %v3153 = vpack.c.b16 %v3138, %v3137
        %v3154 = vpack.c.b16 %v3140, %v3139
        %v3155 = vpack.c.b16 %v3142, %v3141
        %v3156 = vpack.c.b16 %v3144, %v3143
        %v3157 = vpack.c.b16 %v3146, %v3145
        %v3158 = vpack.c.b16 %v3148, %v3147
        %v3159 = vpack.c.b16 %v3150, %v3149
        %v3160 = vpack.c.b16 %v3152, %v3151
        %3169 = vmatprep.subr.bf16.mxu0 0
        %3170 = vmatpush1.bf16.msra.mxu0 %v3153
        %3171 = vmatprep.subr.bf16.mxu0 0
        %3172 = vmatpush1.bf16.msra.mxu0 %v3154
        %3173 = vmatprep.subr.bf16.mxu0 0
        %3174 = vmatpush1.bf16.msra.mxu0 %v3155
        %3175 = vmatprep.subr.bf16.mxu0 0
        %3176 = vmatpush1.bf16.msra.mxu0 %v3156
        %3177 = vmatprep.subr.bf16.mxu0 0
        %3178 = vmatpush1.bf16.msra.mxu0 %v3157
        %3179 = vmatprep.subr.bf16.mxu0 0
        %3180 = vmatpush1.bf16.msra.mxu0 %v3158
        %3181 = vmatprep.subr.bf16.mxu0 0
        %3182 = vmatpush1.bf16.msra.mxu0 %v3159
        %3183 = vmatprep.subr.bf16.mxu0 0
        %3184 = vmatpush1.bf16.msra.mxu0 %v3160
        %3185 = vmatprep.subr.bf16.mxu0 0
        %3186 = vmatpush1.bf16.msra.mxu0 0
        %3187 = vmatprep.subr.bf16.mxu0 0
        %3188 = vmatpush1.bf16.msra.mxu0 0
        %3189 = vmatprep.subr.bf16.mxu0 0
        %3190 = vmatpush1.bf16.msra.mxu0 0
        %3191 = vmatprep.subr.bf16.mxu0 0
        %3192 = vmatpush1.bf16.msra.mxu0 0
        %3193 = vmatprep.subr.bf16.mxu0 0
        %3194 = vmatpush1.bf16.msra.mxu0 0
        %3195 = vmatprep.subr.bf16.mxu0 0
        %3196 = vmatpush1.bf16.msra.mxu0 0
        %3197 = vmatprep.subr.bf16.mxu0 0
        %3198 = vmatpush1.bf16.msra.mxu0 0
        %3199 = vmatprep.subr.bf16.mxu0 0
        %3200 = vmatpush1.bf16.msra.mxu0 0
        %3201 = vmatprep.mubr.bf16.mxu0 0
        %3202 = vmatmul.mubr.bf16.gmra.mrb[0].mxu0 %v3089
        %v3203 = vpop.f32.mrb[0].mxu0
        %v3204 = vadd.f32 0.0, %v3203
        %v3205 = vpop.f32.mrb[0].mxu0
        %v3206 = vpop.f32.mrb[0].mxu0
        %v3207 = vadd.f32 0.0, %v3206
        %v3208 = vpop.f32.mrb[0].mxu0
        %3209 = vmatprep.mubr.bf16.mxu0 0
        %3210 = vmatmul.mubr.bf16.gmra.mrb[0].mxu0 %v3090
        %v3211 = vpop.f32.mrb[0].mxu0
        %v3212 = vadd.f32 0.0, %v3211
        %v3213 = vpop.f32.mrb[0].mxu0
        %v3214 = vpop.f32.mrb[0].mxu0
        %v3215 = vadd.f32 0.0, %v3214
        %v3216 = vpop.f32.mrb[0].mxu0
        %3217 = vmatprep.mubr.bf16.mxu0 0
        %3218 = vmatmul.mubr.bf16.gmra.mrb[0].mxu0 %v3091
        %v3219 = vpop.f32.mrb[0].mxu0
        %v3220 = vadd.f32 0.0, %v3219
        %v3221 = vpop.f32.mrb[0].mxu0
        %v3222 = vpop.f32.mrb[0].mxu0
        %v3223 = vadd.f32 0.0, %v3222
        %v3224 = vpop.f32.mrb[0].mxu0
        %3225 = vmatprep.mubr.bf16.mxu0 0
        %3226 = vmatmul.mubr.bf16.gmra.mrb[0].mxu0 %v3092
        %v3227 = vpop.f32.mrb[0].mxu0
        %v3228 = vadd.f32 0.0, %v3227
        %v3229 = vpop.f32.mrb[0].mxu0
        %v3230 = vpop.f32.mrb[0].mxu0
        %v3231 = vadd.f32 0.0, %v3230
        %v3232 = vpop.f32.mrb[0].mxu0
        %3233 = vmatprep.mubr.bf16.mxu0 0
        %3234 = vmatmul.mubr.bf16.gmra.mrb[0].mxu0 %v3093
        %v3235 = vpop.f32.mrb[0].mxu0
        %v3236 = vadd.f32 0.0, %v3235
        %v3237 = vpop.f32.mrb[0].mxu0
        %v3238 = vpop.f32.mrb[0].mxu0
        %v3239 = vadd.f32 0.0, %v3238
        %v3240 = vpop.f32.mrb[0].mxu0
        %3241 = vmatprep.mubr.bf16.mxu0 0
        %3242 = vmatmul.mubr.bf16.gmra.mrb[0].mxu0 %v3094
        %v3243 = vpop.f32.mrb[0].mxu0
        %v3244 = vadd.f32 0.0, %v3243
        %v3245 = vpop.f32.mrb[0].mxu0
        %v3246 = vpop.f32.mrb[0].mxu0
        %v3247 = vadd.f32 0.0, %v3246
        %v3248 = vpop.f32.mrb[0].mxu0
        %3249 = vmatprep.mubr.bf16.mxu0 0
        %3250 = vmatmul.mubr.bf16.gmra.mrb[0].mxu0 %v3095
        %v3251 = vpop.f32.mrb[0].mxu0
        %v3252 = vadd.f32 0.0, %v3251
        %v3253 = vpop.f32.mrb[0].mxu0
        %v3254 = vpop.f32.mrb[0].mxu0
        %v3255 = vadd.f32 0.0, %v3254
        %v3256 = vpop.f32.mrb[0].mxu0
        %3257 = vmatprep.mubr.bf16.mxu0 0
        %3258 = vmatmul.mubr.bf16.gmra.mrb[0].mxu0 %v3096
        %v3259 = vpop.f32.mrb[0].mxu0
        %v3260 = vadd.f32 0.0, %v3259
        %v3261 = vpop.f32.mrb[0].mxu0
        %v3262 = vpop.f32.mrb[0].mxu0
        %v3263 = vadd.f32 0.0, %v3262
        %v3264 = vpop.f32.mrb[0].mxu0
        %3265 = vmatprep.mubr.bf16.mxu0 0
        %3266 = vmatmul.mubr.bf16.gmra.mrb[0].mxu0 %v3097
        %v3267 = vpop.f32.mrb[0].mxu0
        %v3268 = vadd.f32 0.0, %v3267
        %v3269 = vpop.f32.mrb[0].mxu0
        %v3270 = vpop.f32.mrb[0].mxu0
        %v3271 = vadd.f32 0.0, %v3270
        %v3272 = vpop.f32.mrb[0].mxu0
        %3273 = vmatprep.mubr.bf16.mxu0 0
        %3274 = vmatmul.mubr.bf16.gmra.mrb[0].mxu0 %v3098
        %v3275 = vpop.f32.mrb[0].mxu0
        %v3276 = vadd.f32 0.0, %v3275
        %v3277 = vpop.f32.mrb[0].mxu0
        %v3278 = vpop.f32.mrb[0].mxu0
        %v3279 = vadd.f32 0.0, %v3278
        %v3280 = vpop.f32.mrb[0].mxu0
        %3281 = vmatprep.mubr.bf16.mxu0 0
        %3282 = vmatmul.mubr.bf16.gmra.mrb[0].mxu0 %v3099
        %v3283 = vpop.f32.mrb[0].mxu0
        %v3284 = vadd.f32 0.0, %v3283
        %v3285 = vpop.f32.mrb[0].mxu0
        %v3286 = vpop.f32.mrb[0].mxu0
        %v3287 = vadd.f32 0.0, %v3286
        %v3288 = vpop.f32.mrb[0].mxu0
        %3289 = vmatprep.mubr.bf16.mxu0 0
        %3290 = vmatmul.mubr.bf16.gmra.mrb[0].mxu0 %v3100
        %v3291 = vpop.f32.mrb[0].mxu0
        %v3292 = vadd.f32 0.0, %v3291
        %v3293 = vpop.f32.mrb[0].mxu0
        %v3294 = vpop.f32.mrb[0].mxu0
        %v3295 = vadd.f32 0.0, %v3294
        %v3296 = vpop.f32.mrb[0].mxu0
        %3297 = vmatprep.mubr.bf16.mxu0 0
        %3298 = vmatmul.mubr.bf16.gmra.mrb[0].mxu0 %v3101
        %v3299 = vpop.f32.mrb[0].mxu0
        %v3300 = vadd.f32 0.0, %v3299
        %v3301 = vpop.f32.mrb[0].mxu0
        %v3302 = vpop.f32.mrb[0].mxu0
        %v3303 = vadd.f32 0.0, %v3302
        %v3304 = vpop.f32.mrb[0].mxu0
        %3305 = vmatprep.mubr.bf16.mxu0 0
        %3306 = vmatmul.mubr.bf16.gmra.mrb[0].mxu0 %v3102
        %v3307 = vpop.f32.mrb[0].mxu0
        %v3308 = vadd.f32 0.0, %v3307
        %v3309 = vpop.f32.mrb[0].mxu0
        %v3310 = vpop.f32.mrb[0].mxu0
        %v3311 = vadd.f32 0.0, %v3310
        %v3312 = vpop.f32.mrb[0].mxu0
        %3313 = vmatprep.mubr.bf16.mxu0 0
        %3314 = vmatmul.mubr.bf16.gmra.mrb[0].mxu0 %v3103
        %v3315 = vpop.f32.mrb[0].mxu0
        %v3316 = vadd.f32 0.0, %v3315
        %v3317 = vpop.f32.mrb[0].mxu0
        %v3318 = vpop.f32.mrb[0].mxu0
        %v3319 = vadd.f32 0.0, %v3318
        %v3320 = vpop.f32.mrb[0].mxu0
        %3321 = vmatprep.mubr.bf16.mxu0 0
        %3322 = vmatmul.mubr.bf16.gmra.mrb[0].mxu0 %v3104
        %v3323 = vpop.f32.mrb[0].mxu0
        %v3324 = vadd.f32 0.0, %v3323
        %v3325 = vpop.f32.mrb[0].mxu0
        %v3326 = vpop.f32.mrb[0].mxu0
        %v3327 = vadd.f32 0.0, %v3326
        %v3328 = vpop.f32.mrb[0].mxu0
        %3329 = vdwg.mxu0
        %v3330 = vadd.f32 %v2944, %v3204
        %v3331 = vadd.f32 %v2945, %v3207
        %v3332 = vadd.f32 %v2946, %v3212
        %v3333 = vadd.f32 %v2947, %v3215
        %v3334 = vadd.f32 %v2948, %v3220
        %v3335 = vadd.f32 %v2949, %v3223
        %v3336 = vadd.f32 %v2950, %v3228
        %v3337 = vadd.f32 %v2951, %v3231
        %v3338 = vadd.f32 %v2952, %v3236
        %v3339 = vadd.f32 %v2953, %v3239
        %v3340 = vadd.f32 %v2954, %v3244
        %v3341 = vadd.f32 %v2955, %v3247
        %v3342 = vadd.f32 %v2956, %v3252
        %v3343 = vadd.f32 %v2957, %v3255
        %v3344 = vadd.f32 %v2958, %v3260
        %v3345 = vadd.f32 %v2959, %v3263
        %v3346 = vadd.f32 %v2960, %v3268
        %v3347 = vadd.f32 %v2961, %v3271
        %v3348 = vadd.f32 %v2962, %v3276
        %v3349 = vadd.f32 %v2963, %v3279
        %v3350 = vadd.f32 %v2964, %v3284
        %v3351 = vadd.f32 %v2965, %v3287
        %v3352 = vadd.f32 %v2966, %v3292
        %v3353 = vadd.f32 %v2967, %v3295
        %v3354 = vadd.f32 %v2968, %v3300
        %v3355 = vadd.f32 %v2969, %v3303
        %v3356 = vadd.f32 %v2970, %v3308
        %v3357 = vadd.f32 %v2971, %v3311
        %v3358 = vadd.f32 %v2972, %v3316
        %v3359 = vadd.f32 %v2973, %v3319
        %v3360 = vadd.f32 %v2974, %v3324
        %v3361 = vadd.f32 %v2975, %v3327
        %v3362 = vld [vmem:[%s827] sm:$0xf]
        %v3363 = vld [vmem:[%s827 + $0x4] sm:$0xf]
        %v3364 = vld [vmem:[%s827 + $0x8] sm:$0x1]
        %v3365 = vld [vmem:[%s827 + $0xc] sm:$0xf]
        %v3366 = vld [vmem:[%s827 + $0x10] sm:$0xf]
        %v3367 = vld [vmem:[%s827 + $0x14] sm:$0x1]
        %v3368 = vld [vmem:[%s827 + $0x18] sm:$0xf]
        %v3369 = vld [vmem:[%s827 + $0x1c] sm:$0xf]
        %v3370 = vld [vmem:[%s827 + $0x20] sm:$0x1]
        %v3371 = vld [vmem:[%s827 + $0x24] sm:$0xf]
        %v3372 = vld [vmem:[%s827 + $0x28] sm:$0xf]
        %v3373 = vld [vmem:[%s827 + $0x2c] sm:$0x1]
        %v3374 = vld [vmem:[%s827 + $0x30] sm:$0xf]
        %v3375 = vld [vmem:[%s827 + $0x34] sm:$0xf]
        %v3376 = vld [vmem:[%s827 + $0x38] sm:$0x1]
        %v3377 = vld [vmem:[%s827 + $0x3c] sm:$0xf]
        %v3378 = vld [vmem:[%s827 + $0x40] sm:$0xf]
        %v3379 = vld [vmem:[%s827 + $0x44] sm:$0x1]
        %v3380 = vld [vmem:[%s827 + $0x48] sm:$0xf]
        %v3381 = vld [vmem:[%s827 + $0x4c] sm:$0xf]
        %v3382 = vld [vmem:[%s827 + $0x50] sm:$0x1]
        %v3383 = vld [vmem:[%s827 + $0x54] sm:$0xf]
        %v3384 = vld [vmem:[%s827 + $0x58] sm:$0xf]
        %v3385 = vld [vmem:[%s827 + $0x5c] sm:$0x1]
        %v3386 = vld [vmem:[%s827 + $0x60] sm:$0xf]
        %v3387 = vld [vmem:[%s827 + $0x64] sm:$0xf]
        %v3388 = vld [vmem:[%s827 + $0x68] sm:$0x1]
        %v3389 = vld [vmem:[%s827 + $0x6c] sm:$0xf]
        %v3390 = vld [vmem:[%s827 + $0x70] sm:$0xf]
        %v3391 = vld [vmem:[%s827 + $0x74] sm:$0x1]
        %v3392 = vld [vmem:[%s827 + $0x78] sm:$0xf]
        %v3393 = vld [vmem:[%s827 + $0x7c] sm:$0xf]
        %v3394 = vld [vmem:[%s827 + $0x80] sm:$0x1]
        %v3395 = vld [vmem:[%s827 + $0x84] sm:$0xf]
        %v3396 = vld [vmem:[%s827 + $0x88] sm:$0xf]
        %v3397 = vld [vmem:[%s827 + $0x8c] sm:$0x1]
        %v3398 = vld [vmem:[%s827 + $0x90] sm:$0xf]
        %v3399 = vld [vmem:[%s827 + $0x94] sm:$0xf]
        %v3400 = vld [vmem:[%s827 + $0x98] sm:$0x1]
        %v3401 = vld [vmem:[%s827 + $0x9c] sm:$0xf]
        %v3402 = vld [vmem:[%s827 + $0xa0] sm:$0xf]
        %v3403 = vld [vmem:[%s827 + $0xa4] sm:$0x1]
        %v3404 = vld [vmem:[%s827 + $0xa8] sm:$0xf]
        %v3405 = vld [vmem:[%s827 + $0xac] sm:$0xf]
        %v3406 = vld [vmem:[%s827 + $0xb0] sm:$0x1]
        %v3407 = vld [vmem:[%s827 + $0xb4] sm:$0xf]
        %v3408 = vld [vmem:[%s827 + $0xb8] sm:$0xf]
        %v3409 = vld [vmem:[%s827 + $0xbc] sm:$0x1]
        %v3411 = vshrl.u32 %v3362, 16
        %v3413 = vrot.slane %v3411, 4
        %v3414 = vshll.u32 %v3362, 16
        %v3416 = vrot.slane %v3414, 5
        %v3417 = vor.u32 %v3413, %v3416
        %v3418 = vrot.slane %v3417, 4
        %v3420 = vshll.u32 %v3363, 16
        %v3422 = vrot.slane %v3420, 5
        %v3423 = vsel %vm1511, %v3418, %v3422
        %v3424 = vshrl.u32 %v3363, 16
        %v3426 = vrot.slane %v3424, 4
        %v3427 = vor.u32 %v3426, %v3422
        %v3428 = vrot.slane %v3427, 4
        %v3430 = vshll.u32 %v3364, 16
        %v3432 = vrot.slane %v3430, 5
        %v3433 = vsel %vm1511, %v3428, %v3432
        %v3435 = vshrl.u32 %v3365, 16
        %v3437 = vrot.slane %v3435, 4
        %v3438 = vshll.u32 %v3365, 16
        %v3440 = vrot.slane %v3438, 5
        %v3441 = vor.u32 %v3437, %v3440
        %v3442 = vrot.slane %v3441, 4
        %v3444 = vshll.u32 %v3366, 16
        %v3446 = vrot.slane %v3444, 5
        %v3447 = vsel %vm1511, %v3442, %v3446
        %v3448 = vshrl.u32 %v3366, 16
        %v3450 = vrot.slane %v3448, 4
        %v3451 = vor.u32 %v3450, %v3446
        %v3452 = vrot.slane %v3451, 4
        %v3454 = vshll.u32 %v3367, 16
        %v3456 = vrot.slane %v3454, 5
        %v3457 = vsel %vm1511, %v3452, %v3456
        %v3459 = vshrl.u32 %v3368, 16
        %v3461 = vrot.slane %v3459, 4
        %v3462 = vshll.u32 %v3368, 16
        %v3464 = vrot.slane %v3462, 5
        %v3465 = vor.u32 %v3461, %v3464
        %v3466 = vrot.slane %v3465, 4
        %v3468 = vshll.u32 %v3369, 16
        %v3470 = vrot.slane %v3468, 5
        %v3471 = vsel %vm1511, %v3466, %v3470
        %v3472 = vshrl.u32 %v3369, 16
        %v3474 = vrot.slane %v3472, 4
        %v3475 = vor.u32 %v3474, %v3470
        %v3476 = vrot.slane %v3475, 4
        %v3478 = vshll.u32 %v3370, 16
        %v3480 = vrot.slane %v3478, 5
        %v3481 = vsel %vm1511, %v3476, %v3480
        %v3483 = vshrl.u32 %v3371, 16
        %v3485 = vrot.slane %v3483, 4
        %v3486 = vshll.u32 %v3371, 16
        %v3488 = vrot.slane %v3486, 5
        %v3489 = vor.u32 %v3485, %v3488
        %v3490 = vrot.slane %v3489, 4
        %v3492 = vshll.u32 %v3372, 16
        %v3494 = vrot.slane %v3492, 5
        %v3495 = vsel %vm1511, %v3490, %v3494
        %v3496 = vshrl.u32 %v3372, 16
        %v3498 = vrot.slane %v3496, 4
        %v3499 = vor.u32 %v3498, %v3494
        %v3500 = vrot.slane %v3499, 4
        %v3502 = vshll.u32 %v3373, 16
        %v3504 = vrot.slane %v3502, 5
        %v3505 = vsel %vm1511, %v3500, %v3504
        %v3507 = vshrl.u32 %v3374, 16
        %v3509 = vrot.slane %v3507, 4
        %v3510 = vshll.u32 %v3374, 16
        %v3512 = vrot.slane %v3510, 5
        %v3513 = vor.u32 %v3509, %v3512
        %v3514 = vrot.slane %v3513, 4
        %v3516 = vshll.u32 %v3375, 16
        %v3518 = vrot.slane %v3516, 5
        %v3519 = vsel %vm1511, %v3514, %v3518
        %v3520 = vshrl.u32 %v3375, 16
        %v3522 = vrot.slane %v3520, 4
        %v3523 = vor.u32 %v3522, %v3518
        %v3524 = vrot.slane %v3523, 4
        %v3526 = vshll.u32 %v3376, 16
        %v3528 = vrot.slane %v3526, 5
        %v3529 = vsel %vm1511, %v3524, %v3528
        %v3531 = vshrl.u32 %v3377, 16
        %v3533 = vrot.slane %v3531, 4
        %v3534 = vshll.u32 %v3377, 16
        %v3536 = vrot.slane %v3534, 5
        %v3537 = vor.u32 %v3533, %v3536
        %v3538 = vrot.slane %v3537, 4
        %v3540 = vshll.u32 %v3378, 16
        %v3542 = vrot.slane %v3540, 5
        %v3543 = vsel %vm1511, %v3538, %v3542
        %v3544 = vshrl.u32 %v3378, 16
        %v3546 = vrot.slane %v3544, 4
        %v3547 = vor.u32 %v3546, %v3542
        %v3548 = vrot.slane %v3547, 4
        %v3550 = vshll.u32 %v3379, 16
        %v3552 = vrot.slane %v3550, 5
        %v3553 = vsel %vm1511, %v3548, %v3552
        %v3555 = vshrl.u32 %v3380, 16
        %v3557 = vrot.slane %v3555, 4
        %v3558 = vshll.u32 %v3380, 16
        %v3560 = vrot.slane %v3558, 5
        %v3561 = vor.u32 %v3557, %v3560
        %v3562 = vrot.slane %v3561, 4
        %v3564 = vshll.u32 %v3381, 16
        %v3566 = vrot.slane %v3564, 5
        %v3567 = vsel %vm1511, %v3562, %v3566
        %v3568 = vshrl.u32 %v3381, 16
        %v3570 = vrot.slane %v3568, 4
        %v3571 = vor.u32 %v3570, %v3566
        %v3572 = vrot.slane %v3571, 4
        %v3574 = vshll.u32 %v3382, 16
        %v3576 = vrot.slane %v3574, 5
        %v3577 = vsel %vm1511, %v3572, %v3576
        %v3579 = vshrl.u32 %v3383, 16
        %v3581 = vrot.slane %v3579, 4
        %v3582 = vshll.u32 %v3383, 16
        %v3584 = vrot.slane %v3582, 5
        %v3585 = vor.u32 %v3581, %v3584
        %v3586 = vrot.slane %v3585, 4
        %v3588 = vshll.u32 %v3384, 16
        %v3590 = vrot.slane %v3588, 5
        %v3591 = vsel %vm1511, %v3586, %v3590
        %v3592 = vshrl.u32 %v3384, 16
        %v3594 = vrot.slane %v3592, 4
        %v3595 = vor.u32 %v3594, %v3590
        %v3596 = vrot.slane %v3595, 4
        %v3598 = vshll.u32 %v3385, 16
        %v3600 = vrot.slane %v3598, 5
        %v3601 = vsel %vm1511, %v3596, %v3600
        %v3603 = vshrl.u32 %v3386, 16
        %v3605 = vrot.slane %v3603, 4
        %v3606 = vshll.u32 %v3386, 16
        %v3608 = vrot.slane %v3606, 5
        %v3609 = vor.u32 %v3605, %v3608
        %v3610 = vrot.slane %v3609, 4
        %v3612 = vshll.u32 %v3387, 16
        %v3614 = vrot.slane %v3612, 5
        %v3615 = vsel %vm1511, %v3610, %v3614
        %v3616 = vshrl.u32 %v3387, 16
        %v3618 = vrot.slane %v3616, 4
        %v3619 = vor.u32 %v3618, %v3614
        %v3620 = vrot.slane %v3619, 4
        %v3622 = vshll.u32 %v3388, 16
        %v3624 = vrot.slane %v3622, 5
        %v3625 = vsel %vm1511, %v3620, %v3624
        %v3627 = vshrl.u32 %v3389, 16
        %v3629 = vrot.slane %v3627, 4
        %v3630 = vshll.u32 %v3389, 16
        %v3632 = vrot.slane %v3630, 5
        %v3633 = vor.u32 %v3629, %v3632
        %v3634 = vrot.slane %v3633, 4
        %v3636 = vshll.u32 %v3390, 16
        %v3638 = vrot.slane %v3636, 5
        %v3639 = vsel %vm1511, %v3634, %v3638
        %v3640 = vshrl.u32 %v3390, 16
        %v3642 = vrot.slane %v3640, 4
        %v3643 = vor.u32 %v3642, %v3638
        %v3644 = vrot.slane %v3643, 4
        %v3646 = vshll.u32 %v3391, 16
        %v3648 = vrot.slane %v3646, 5
        %v3649 = vsel %vm1511, %v3644, %v3648
        %v3651 = vshrl.u32 %v3392, 16
        %v3653 = vrot.slane %v3651, 4
        %v3654 = vshll.u32 %v3392, 16
        %v3656 = vrot.slane %v3654, 5
        %v3657 = vor.u32 %v3653, %v3656
        %v3658 = vrot.slane %v3657, 4
        %v3660 = vshll.u32 %v3393, 16
        %v3662 = vrot.slane %v3660, 5
        %v3663 = vsel %vm1511, %v3658, %v3662
        %v3664 = vshrl.u32 %v3393, 16
        %v3666 = vrot.slane %v3664, 4
        %v3667 = vor.u32 %v3666, %v3662
        %v3668 = vrot.slane %v3667, 4
        %v3670 = vshll.u32 %v3394, 16
        %v3672 = vrot.slane %v3670, 5
        %v3673 = vsel %vm1511, %v3668, %v3672
        %v3675 = vshrl.u32 %v3395, 16
        %v3677 = vrot.slane %v3675, 4
        %v3678 = vshll.u32 %v3395, 16
        %v3680 = vrot.slane %v3678, 5
        %v3681 = vor.u32 %v3677, %v3680
        %v3682 = vrot.slane %v3681, 4
        %v3684 = vshll.u32 %v3396, 16
        %v3686 = vrot.slane %v3684, 5
        %v3687 = vsel %vm1511, %v3682, %v3686
        %v3688 = vshrl.u32 %v3396, 16
        %v3690 = vrot.slane %v3688, 4
        %v3691 = vor.u32 %v3690, %v3686
        %v3692 = vrot.slane %v3691, 4
        %v3694 = vshll.u32 %v3397, 16
        %v3696 = vrot.slane %v3694, 5
        %v3697 = vsel %vm1511, %v3692, %v3696
        %v3699 = vshrl.u32 %v3398, 16
        %v3701 = vrot.slane %v3699, 4
        %v3702 = vshll.u32 %v3398, 16
        %v3704 = vrot.slane %v3702, 5
        %v3705 = vor.u32 %v3701, %v3704
        %v3706 = vrot.slane %v3705, 4
        %v3708 = vshll.u32 %v3399, 16
        %v3710 = vrot.slane %v3708, 5
        %v3711 = vsel %vm1511, %v3706, %v3710
        %v3712 = vshrl.u32 %v3399, 16
        %v3714 = vrot.slane %v3712, 4
        %v3715 = vor.u32 %v3714, %v3710
        %v3716 = vrot.slane %v3715, 4
        %v3718 = vshll.u32 %v3400, 16
        %v3720 = vrot.slane %v3718, 5
        %v3721 = vsel %vm1511, %v3716, %v3720
        %v3723 = vshrl.u32 %v3401, 16
        %v3725 = vrot.slane %v3723, 4
        %v3726 = vshll.u32 %v3401, 16
        %v3728 = vrot.slane %v3726, 5
        %v3729 = vor.u32 %v3725, %v3728
        %v3730 = vrot.slane %v3729, 4
        %v3732 = vshll.u32 %v3402, 16
        %v3734 = vrot.slane %v3732, 5
        %v3735 = vsel %vm1511, %v3730, %v3734
        %v3736 = vshrl.u32 %v3402, 16
        %v3738 = vrot.slane %v3736, 4
        %v3739 = vor.u32 %v3738, %v3734
        %v3740 = vrot.slane %v3739, 4
        %v3742 = vshll.u32 %v3403, 16
        %v3744 = vrot.slane %v3742, 5
        %v3745 = vsel %vm1511, %v3740, %v3744
        %v3747 = vshrl.u32 %v3404, 16
        %v3749 = vrot.slane %v3747, 4
        %v3750 = vshll.u32 %v3404, 16
        %v3752 = vrot.slane %v3750, 5
        %v3753 = vor.u32 %v3749, %v3752
        %v3754 = vrot.slane %v3753, 4
        %v3756 = vshll.u32 %v3405, 16
        %v3758 = vrot.slane %v3756, 5
        %v3759 = vsel %vm1511, %v3754, %v3758
        %v3760 = vshrl.u32 %v3405, 16
        %v3762 = vrot.slane %v3760, 4
        %v3763 = vor.u32 %v3762, %v3758
        %v3764 = vrot.slane %v3763, 4
        %v3766 = vshll.u32 %v3406, 16
        %v3768 = vrot.slane %v3766, 5
        %v3769 = vsel %vm1511, %v3764, %v3768
        %v3771 = vshrl.u32 %v3407, 16
        %v3773 = vrot.slane %v3771, 4
        %v3774 = vshll.u32 %v3407, 16
        %v3776 = vrot.slane %v3774, 5
        %v3777 = vor.u32 %v3773, %v3776
        %v3778 = vrot.slane %v3777, 4
        %v3780 = vshll.u32 %v3408, 16
        %v3782 = vrot.slane %v3780, 5
        %v3783 = vsel %vm1511, %v3778, %v3782
        %v3784 = vshrl.u32 %v3408, 16
        %v3786 = vrot.slane %v3784, 4
        %v3787 = vor.u32 %v3786, %v3782
        %v3788 = vrot.slane %v3787, 4
        %v3790 = vshll.u32 %v3409, 16
        %v3792 = vrot.slane %v3790, 5
        %v3793 = vsel %vm1511, %v3788, %v3792
        %s3794 = scalar_lea.vmem [#allocation8], 256
        %v3795 = vld [vmem:[%s3794] sm:$0xf]
        %v3796 = vld [vmem:[%s3794 + $0x4] sm:$0xf]
        %v3797 = vld [vmem:[%s3794 + $0x8] sm:$0xf]
        %v3798 = vld [vmem:[%s3794 + $0xc] sm:$0xf]
        %v3799 = vld [vmem:[%s3794 + $0x10] sm:$0xf]
        %v3800 = vld [vmem:[%s3794 + $0x14] sm:$0xf]
        %v3801 = vld [vmem:[%s3794 + $0x18] sm:$0xf]
        %v3802 = vld [vmem:[%s3794 + $0x1c] sm:$0xf]
        %v3803 = vld [vmem:[%s3794 + $0x20] sm:$0xf]
        %v3804 = vld [vmem:[%s3794 + $0x24] sm:$0xf]
        %v3805 = vld [vmem:[%s3794 + $0x28] sm:$0xf]
        %v3806 = vld [vmem:[%s3794 + $0x2c] sm:$0xf]
        %v3807 = vld [vmem:[%s3794 + $0x30] sm:$0xf]
        %v3808 = vld [vmem:[%s3794 + $0x34] sm:$0xf]
        %v3809 = vld [vmem:[%s3794 + $0x38] sm:$0xf]
        %v3810 = vld [vmem:[%s3794 + $0x3c] sm:$0xf]
        %v3811 = vunpack.c.l.b16 %v3423
        %v3812 = vunpack.c.l.b16 %v3433
        %v3813 = vunpack.c.l.b16 %v3447
        %v3814 = vunpack.c.l.b16 %v3457
        %v3815 = vunpack.c.l.b16 %v3471
        %v3816 = vunpack.c.l.b16 %v3481
        %v3817 = vunpack.c.l.b16 %v3495
        %v3818 = vunpack.c.l.b16 %v3505
        %v3819 = vunpack.c.l.b16 %v3519
        %v3820 = vunpack.c.l.b16 %v3529
        %v3821 = vunpack.c.l.b16 %v3543
        %v3822 = vunpack.c.l.b16 %v3553
        %v3823 = vunpack.c.l.b16 %v3567
        %v3824 = vunpack.c.l.b16 %v3577
        %v3825 = vunpack.c.l.b16 %v3591
        %v3826 = vunpack.c.l.b16 %v3601
        %v3827 = vunpack.c.l.b16 %v3615
        %v3828 = vunpack.c.l.b16 %v3625
        %v3829 = vunpack.c.l.b16 %v3639
        %v3830 = vunpack.c.l.b16 %v3649
        %v3831 = vunpack.c.l.b16 %v3663
        %v3832 = vunpack.c.l.b16 %v3673
        %v3833 = vunpack.c.l.b16 %v3687
        %v3834 = vunpack.c.l.b16 %v3697
        %v3835 = vunpack.c.l.b16 %v3711
        %v3836 = vunpack.c.l.b16 %v3721
        %v3837 = vunpack.c.l.b16 %v3735
        %v3838 = vunpack.c.l.b16 %v3745
        %v3839 = vunpack.c.l.b16 %v3759
        %v3840 = vunpack.c.l.b16 %v3769
        %v3841 = vunpack.c.l.b16 %v3783
        %v3842 = vunpack.c.l.b16 %v3793
        %v3843 = vpack.c.b16 %v3812, %v3811
        %v3844 = vpack.c.b16 %v3814, %v3813
        %v3845 = vpack.c.b16 %v3816, %v3815
        %v3846 = vpack.c.b16 %v3818, %v3817
        %v3847 = vpack.c.b16 %v3820, %v3819
        %v3848 = vpack.c.b16 %v3822, %v3821
        %v3849 = vpack.c.b16 %v3824, %v3823
        %v3850 = vpack.c.b16 %v3826, %v3825
        %v3851 = vpack.c.b16 %v3828, %v3827
        %v3852 = vpack.c.b16 %v3830, %v3829
        %v3853 = vpack.c.b16 %v3832, %v3831
        %v3854 = vpack.c.b16 %v3834, %v3833
        %v3855 = vpack.c.b16 %v3836, %v3835
        %v3856 = vpack.c.b16 %v3838, %v3837
        %v3857 = vpack.c.b16 %v3840, %v3839
        %v3858 = vpack.c.b16 %v3842, %v3841
        %v3891 = vunpack.c.l.b16 %v3795
        %v3892 = vunpack.c.l.b16 %v3796
        %v3893 = vunpack.c.l.b16 %v3797
        %v3894 = vunpack.c.l.b16 %v3798
        %v3895 = vunpack.c.l.b16 %v3799
        %v3896 = vunpack.c.l.b16 %v3800
        %v3897 = vunpack.c.l.b16 %v3801
        %v3898 = vunpack.c.l.b16 %v3802
        %v3899 = vunpack.c.l.b16 %v3803
        %v3900 = vunpack.c.l.b16 %v3804
        %v3901 = vunpack.c.l.b16 %v3805
        %v3902 = vunpack.c.l.b16 %v3806
        %v3903 = vunpack.c.l.b16 %v3807
        %v3904 = vunpack.c.l.b16 %v3808
        %v3905 = vunpack.c.l.b16 %v3809
        %v3906 = vunpack.c.l.b16 %v3810
        %v3907 = vpack.c.b16 %v3892, %v3891
        %v3908 = vpack.c.b16 %v3894, %v3893
        %v3909 = vpack.c.b16 %v3896, %v3895
        %v3910 = vpack.c.b16 %v3898, %v3897
        %v3911 = vpack.c.b16 %v3900, %v3899
        %v3912 = vpack.c.b16 %v3902, %v3901
        %v3913 = vpack.c.b16 %v3904, %v3903
        %v3914 = vpack.c.b16 %v3906, %v3905
        %3923 = vmatprep.subr.bf16.mxu0 0
        %3924 = vmatpush1.bf16.msra.mxu0 %v3907
        %3925 = vmatprep.subr.bf16.mxu0 0
        %3926 = vmatpush1.bf16.msra.mxu0 %v3908
        %3927 = vmatprep.subr.bf16.mxu0 0
        %3928 = vmatpush1.bf16.msra.mxu0 %v3909
        %3929 = vmatprep.subr.bf16.mxu0 0
        %3930 = vmatpush1.bf16.msra.mxu0 %v3910
        %3931 = vmatprep.subr.bf16.mxu0 0
        %3932 = vmatpush1.bf16.msra.mxu0 %v3911
        %3933 = vmatprep.subr.bf16.mxu0 0
        %3934 = vmatpush1.bf16.msra.mxu0 %v3912
        %3935 = vmatprep.subr.bf16.mxu0 0
        %3936 = vmatpush1.bf16.msra.mxu0 %v3913
        %3937 = vmatprep.subr.bf16.mxu0 0
        %3938 = vmatpush1.bf16.msra.mxu0 %v3914
        %3939 = vmatprep.subr.bf16.mxu0 0
        %3940 = vmatpush1.bf16.msra.mxu0 0
        %3941 = vmatprep.subr.bf16.mxu0 0
        %3942 = vmatpush1.bf16.msra.mxu0 0
        %3943 = vmatprep.subr.bf16.mxu0 0
        %3944 = vmatpush1.bf16.msra.mxu0 0
        %3945 = vmatprep.subr.bf16.mxu0 0
        %3946 = vmatpush1.bf16.msra.mxu0 0
        %3947 = vmatprep.subr.bf16.mxu0 0
        %3948 = vmatpush1.bf16.msra.mxu0 0
        %3949 = vmatprep.subr.bf16.mxu0 0
        %3950 = vmatpush1.bf16.msra.mxu0 0
        %3951 = vmatprep.subr.bf16.mxu0 0
        %3952 = vmatpush1.bf16.msra.mxu0 0
        %3953 = vmatprep.subr.bf16.mxu0 0
        %3954 = vmatpush1.bf16.msra.mxu0 0
        %3955 = vmatprep.mubr.bf16.mxu0 0
        %3956 = vmatmul.mubr.bf16.gmra.mrb[0].mxu0 %v3843
        %v3957 = vpop.f32.mrb[0].mxu0
        %v3958 = vadd.f32 0.0, %v3957
        %v3959 = vpop.f32.mrb[0].mxu0
        %v3960 = vpop.f32.mrb[0].mxu0
        %v3961 = vadd.f32 0.0, %v3960
        %v3962 = vpop.f32.mrb[0].mxu0
        %3963 = vmatprep.mubr.bf16.mxu0 0
        %3964 = vmatmul.mubr.bf16.gmra.mrb[0].mxu0 %v3844
        %v3965 = vpop.f32.mrb[0].mxu0
        %v3966 = vadd.f32 0.0, %v3965
        %v3967 = vpop.f32.mrb[0].mxu0
        %v3968 = vpop.f32.mrb[0].mxu0
        %v3969 = vadd.f32 0.0, %v3968
        %v3970 = vpop.f32.mrb[0].mxu0
        %3971 = vmatprep.mubr.bf16.mxu0 0
        %3972 = vmatmul.mubr.bf16.gmra.mrb[0].mxu0 %v3845
        %v3973 = vpop.f32.mrb[0].mxu0
        %v3974 = vadd.f32 0.0, %v3973
        %v3975 = vpop.f32.mrb[0].mxu0
        %v3976 = vpop.f32.mrb[0].mxu0
        %v3977 = vadd.f32 0.0, %v3976
        %v3978 = vpop.f32.mrb[0].mxu0
        %3979 = vmatprep.mubr.bf16.mxu0 0
        %3980 = vmatmul.mubr.bf16.gmra.mrb[0].mxu0 %v3846
        %v3981 = vpop.f32.mrb[0].mxu0
        %v3982 = vadd.f32 0.0, %v3981
        %v3983 = vpop.f32.mrb[0].mxu0
        %v3984 = vpop.f32.mrb[0].mxu0
        %v3985 = vadd.f32 0.0, %v3984
        %v3986 = vpop.f32.mrb[0].mxu0
        %3987 = vmatprep.mubr.bf16.mxu0 0
        %3988 = vmatmul.mubr.bf16.gmra.mrb[0].mxu0 %v3847
        %v3989 = vpop.f32.mrb[0].mxu0
        %v3990 = vadd.f32 0.0, %v3989
        %v3991 = vpop.f32.mrb[0].mxu0
        %v3992 = vpop.f32.mrb[0].mxu0
        %v3993 = vadd.f32 0.0, %v3992
        %v3994 = vpop.f32.mrb[0].mxu0
        %3995 = vmatprep.mubr.bf16.mxu0 0
        %3996 = vmatmul.mubr.bf16.gmra.mrb[0].mxu0 %v3848
        %v3997 = vpop.f32.mrb[0].mxu0
        %v3998 = vadd.f32 0.0, %v3997
        %v3999 = vpop.f32.mrb[0].mxu0
        %v4000 = vpop.f32.mrb[0].mxu0
        %v4001 = vadd.f32 0.0, %v4000
        %v4002 = vpop.f32.mrb[0].mxu0
        %4003 = vmatprep.mubr.bf16.mxu0 0
        %4004 = vmatmul.mubr.bf16.gmra.mrb[0].mxu0 %v3849
        %v4005 = vpop.f32.mrb[0].mxu0
        %v4006 = vadd.f32 0.0, %v4005
        %v4007 = vpop.f32.mrb[0].mxu0
        %v4008 = vpop.f32.mrb[0].mxu0
        %v4009 = vadd.f32 0.0, %v4008
        %v4010 = vpop.f32.mrb[0].mxu0
        %4011 = vmatprep.mubr.bf16.mxu0 0
        %4012 = vmatmul.mubr.bf16.gmra.mrb[0].mxu0 %v3850
        %v4013 = vpop.f32.mrb[0].mxu0
        %v4014 = vadd.f32 0.0, %v4013
        %v4015 = vpop.f32.mrb[0].mxu0
        %v4016 = vpop.f32.mrb[0].mxu0
        %v4017 = vadd.f32 0.0, %v4016
        %v4018 = vpop.f32.mrb[0].mxu0
        %4019 = vmatprep.mubr.bf16.mxu0 0
        %4020 = vmatmul.mubr.bf16.gmra.mrb[0].mxu0 %v3851
        %v4021 = vpop.f32.mrb[0].mxu0
        %v4022 = vadd.f32 0.0, %v4021
        %v4023 = vpop.f32.mrb[0].mxu0
        %v4024 = vpop.f32.mrb[0].mxu0
        %v4025 = vadd.f32 0.0, %v4024
        %v4026 = vpop.f32.mrb[0].mxu0
        %4027 = vmatprep.mubr.bf16.mxu0 0
        %4028 = vmatmul.mubr.bf16.gmra.mrb[0].mxu0 %v3852
        %v4029 = vpop.f32.mrb[0].mxu0
        %v4030 = vadd.f32 0.0, %v4029
        %v4031 = vpop.f32.mrb[0].mxu0
        %v4032 = vpop.f32.mrb[0].mxu0
        %v4033 = vadd.f32 0.0, %v4032
        %v4034 = vpop.f32.mrb[0].mxu0
        %4035 = vmatprep.mubr.bf16.mxu0 0
        %4036 = vmatmul.mubr.bf16.gmra.mrb[0].mxu0 %v3853
        %v4037 = vpop.f32.mrb[0].mxu0
        %v4038 = vadd.f32 0.0, %v4037
        %v4039 = vpop.f32.mrb[0].mxu0
        %v4040 = vpop.f32.mrb[0].mxu0
        %v4041 = vadd.f32 0.0, %v4040
        %v4042 = vpop.f32.mrb[0].mxu0
        %4043 = vmatprep.mubr.bf16.mxu0 0
        %4044 = vmatmul.mubr.bf16.gmra.mrb[0].mxu0 %v3854
        %v4045 = vpop.f32.mrb[0].mxu0
        %v4046 = vadd.f32 0.0, %v4045
        %v4047 = vpop.f32.mrb[0].mxu0
        %v4048 = vpop.f32.mrb[0].mxu0
        %v4049 = vadd.f32 0.0, %v4048
        %v4050 = vpop.f32.mrb[0].mxu0
        %4051 = vmatprep.mubr.bf16.mxu0 0
        %4052 = vmatmul.mubr.bf16.gmra.mrb[0].mxu0 %v3855
        %v4053 = vpop.f32.mrb[0].mxu0
        %v4054 = vadd.f32 0.0, %v4053
        %v4055 = vpop.f32.mrb[0].mxu0
        %v4056 = vpop.f32.mrb[0].mxu0
        %v4057 = vadd.f32 0.0, %v4056
        %v4058 = vpop.f32.mrb[0].mxu0
        %4059 = vmatprep.mubr.bf16.mxu0 0
        %4060 = vmatmul.mubr.bf16.gmra.mrb[0].mxu0 %v3856
        %v4061 = vpop.f32.mrb[0].mxu0
        %v4062 = vadd.f32 0.0, %v4061
        %v4063 = vpop.f32.mrb[0].mxu0
        %v4064 = vpop.f32.mrb[0].mxu0
        %v4065 = vadd.f32 0.0, %v4064
        %v4066 = vpop.f32.mrb[0].mxu0
        %4067 = vmatprep.mubr.bf16.mxu0 0
        %4068 = vmatmul.mubr.bf16.gmra.mrb[0].mxu0 %v3857
        %v4069 = vpop.f32.mrb[0].mxu0
        %v4070 = vadd.f32 0.0, %v4069
        %v4071 = vpop.f32.mrb[0].mxu0
        %v4072 = vpop.f32.mrb[0].mxu0
        %v4073 = vadd.f32 0.0, %v4072
        %v4074 = vpop.f32.mrb[0].mxu0
        %4075 = vmatprep.mubr.bf16.mxu0 0
        %4076 = vmatmul.mubr.bf16.gmra.mrb[0].mxu0 %v3858
        %v4077 = vpop.f32.mrb[0].mxu0
        %v4078 = vadd.f32 0.0, %v4077
        %v4079 = vpop.f32.mrb[0].mxu0
        %v4080 = vpop.f32.mrb[0].mxu0
        %v4081 = vadd.f32 0.0, %v4080
        %v4082 = vpop.f32.mrb[0].mxu0
        %4083 = vdwg.mxu0
        %v4084 = vadd.f32 %v3330, %v3958
        %v4085 = vadd.f32 %v3331, %v3961
        %v4086 = vadd.f32 %v3332, %v3966
        %v4087 = vadd.f32 %v3333, %v3969
        %v4088 = vadd.f32 %v3334, %v3974
        %v4089 = vadd.f32 %v3335, %v3977
        %v4090 = vadd.f32 %v3336, %v3982
        %v4091 = vadd.f32 %v3337, %v3985
        %v4092 = vadd.f32 %v3338, %v3990
        %v4093 = vadd.f32 %v3339, %v3993
        %v4094 = vadd.f32 %v3340, %v3998
        %v4095 = vadd.f32 %v3341, %v4001
        %v4096 = vadd.f32 %v3342, %v4006
        %v4097 = vadd.f32 %v3343, %v4009
        %v4098 = vadd.f32 %v3344, %v4014
        %v4099 = vadd.f32 %v3345, %v4017
        %v4100 = vadd.f32 %v3346, %v4022
        %v4101 = vadd.f32 %v3347, %v4025
        %v4102 = vadd.f32 %v3348, %v4030
        %v4103 = vadd.f32 %v3349, %v4033
        %v4104 = vadd.f32 %v3350, %v4038
        %v4105 = vadd.f32 %v3351, %v4041
        %v4106 = vadd.f32 %v3352, %v4046
        %v4107 = vadd.f32 %v3353, %v4049
        %v4108 = vadd.f32 %v3354, %v4054
        %v4109 = vadd.f32 %v3355, %v4057
        %v4110 = vadd.f32 %v3356, %v4062
        %v4111 = vadd.f32 %v3357, %v4065
        %v4112 = vadd.f32 %v3358, %v4070
        %v4113 = vadd.f32 %v3359, %v4073
        %v4114 = vadd.f32 %v3360, %v4078
        %v4115 = vadd.f32 %v3361, %v4081
        %v4116 = vld [vmem:[%s827] sm:$0xe]
        %v4117 = vld [vmem:[%s827 + $0xc] sm:$0xe]
        %v4118 = vld [vmem:[%s827 + $0x18] sm:$0xe]
        %v4119 = vld [vmem:[%s827 + $0x24] sm:$0xe]
        %v4120 = vld [vmem:[%s827 + $0x30] sm:$0xe]
        %v4121 = vld [vmem:[%s827 + $0x3c] sm:$0xe]
        %v4122 = vld [vmem:[%s827 + $0x48] sm:$0xe]
        %v4123 = vld [vmem:[%s827 + $0x54] sm:$0xe]
        %v4124 = vld [vmem:[%s827 + $0x60] sm:$0xe]
        %v4125 = vld [vmem:[%s827 + $0x6c] sm:$0xe]
        %v4126 = vld [vmem:[%s827 + $0x78] sm:$0xe]
        %v4127 = vld [vmem:[%s827 + $0x84] sm:$0xe]
        %v4128 = vld [vmem:[%s827 + $0x90] sm:$0xe]
        %v4129 = vld [vmem:[%s827 + $0x9c] sm:$0xe]
        %v4130 = vld [vmem:[%s827 + $0xa8] sm:$0xe]
        %v4131 = vld [vmem:[%s827 + $0xb4] sm:$0xe]
        %v4180 = vrot.slane %v4116, 5
        %v4181 = vrot.slane %v4180, 4
        %v4182 = vrot.slane %v3363, 5
        %v4183 = vsel %vm2541, %v4181, %v4182
        %v4184 = vrot.slane %v4182, 4
        %v4185 = vrot.slane %v3364, 5
        %v4186 = vsel %vm2541, %v4184, %v4185
        %v4187 = vrot.slane %v4117, 5
        %v4188 = vrot.slane %v4187, 4
        %v4189 = vrot.slane %v3366, 5
        %v4190 = vsel %vm2541, %v4188, %v4189
        %v4191 = vrot.slane %v4189, 4
        %v4192 = vrot.slane %v3367, 5
        %v4193 = vsel %vm2541, %v4191, %v4192
        %v4194 = vrot.slane %v4118, 5
        %v4195 = vrot.slane %v4194, 4
        %v4196 = vrot.slane %v3369, 5
        %v4197 = vsel %vm2541, %v4195, %v4196
        %v4198 = vrot.slane %v4196, 4
        %v4199 = vrot.slane %v3370, 5
        %v4200 = vsel %vm2541, %v4198, %v4199
        %v4201 = vrot.slane %v4119, 5
        %v4202 = vrot.slane %v4201, 4
        %v4203 = vrot.slane %v3372, 5
        %v4204 = vsel %vm2541, %v4202, %v4203
        %v4205 = vrot.slane %v4203, 4
        %v4206 = vrot.slane %v3373, 5
        %v4207 = vsel %vm2541, %v4205, %v4206
        %v4208 = vrot.slane %v4120, 5
        %v4209 = vrot.slane %v4208, 4
        %v4210 = vrot.slane %v3375, 5
        %v4211 = vsel %vm2541, %v4209, %v4210
        %v4212 = vrot.slane %v4210, 4
        %v4213 = vrot.slane %v3376, 5
        %v4214 = vsel %vm2541, %v4212, %v4213
        %v4215 = vrot.slane %v4121, 5
        %v4216 = vrot.slane %v4215, 4
        %v4217 = vrot.slane %v3378, 5
        %v4218 = vsel %vm2541, %v4216, %v4217
        %v4219 = vrot.slane %v4217, 4
        %v4220 = vrot.slane %v3379, 5
        %v4221 = vsel %vm2541, %v4219, %v4220
        %v4222 = vrot.slane %v4122, 5
        %v4223 = vrot.slane %v4222, 4
        %v4224 = vrot.slane %v3381, 5
        %v4225 = vsel %vm2541, %v4223, %v4224
        %v4226 = vrot.slane %v4224, 4
        %v4227 = vrot.slane %v3382, 5
        %v4228 = vsel %vm2541, %v4226, %v4227
        %v4229 = vrot.slane %v4123, 5
        %v4230 = vrot.slane %v4229, 4
        %v4231 = vrot.slane %v3384, 5
        %v4232 = vsel %vm2541, %v4230, %v4231
        %v4233 = vrot.slane %v4231, 4
        %v4234 = vrot.slane %v3385, 5
        %v4235 = vsel %vm2541, %v4233, %v4234
        %v4236 = vrot.slane %v4124, 5
        %v4237 = vrot.slane %v4236, 4
        %v4238 = vrot.slane %v3387, 5
        %v4239 = vsel %vm2541, %v4237, %v4238
        %v4240 = vrot.slane %v4238, 4
        %v4241 = vrot.slane %v3388, 5
        %v4242 = vsel %vm2541, %v4240, %v4241
        %v4243 = vrot.slane %v4125, 5
        %v4244 = vrot.slane %v4243, 4
        %v4245 = vrot.slane %v3390, 5
        %v4246 = vsel %vm2541, %v4244, %v4245
        %v4247 = vrot.slane %v4245, 4
        %v4248 = vrot.slane %v3391, 5
        %v4249 = vsel %vm2541, %v4247, %v4248
        %v4250 = vrot.slane %v4126, 5
        %v4251 = vrot.slane %v4250, 4
        %v4252 = vrot.slane %v3393, 5
        %v4253 = vsel %vm2541, %v4251, %v4252
        %v4254 = vrot.slane %v4252, 4
        %v4255 = vrot.slane %v3394, 5
        %v4256 = vsel %vm2541, %v4254, %v4255
        %v4257 = vrot.slane %v4127, 5
        %v4258 = vrot.slane %v4257, 4
        %v4259 = vrot.slane %v3396, 5
        %v4260 = vsel %vm2541, %v4258, %v4259
        %v4261 = vrot.slane %v4259, 4
        %v4262 = vrot.slane %v3397, 5
        %v4263 = vsel %vm2541, %v4261, %v4262
        %v4264 = vrot.slane %v4128, 5
        %v4265 = vrot.slane %v4264, 4
        %v4266 = vrot.slane %v3399, 5
        %v4267 = vsel %vm2541, %v4265, %v4266
        %v4268 = vrot.slane %v4266, 4
        %v4269 = vrot.slane %v3400, 5
        %v4270 = vsel %vm2541, %v4268, %v4269
        %v4271 = vrot.slane %v4129, 5
        %v4272 = vrot.slane %v4271, 4
        %v4273 = vrot.slane %v3402, 5
        %v4274 = vsel %vm2541, %v4272, %v4273
        %v4275 = vrot.slane %v4273, 4
        %v4276 = vrot.slane %v3403, 5
        %v4277 = vsel %vm2541, %v4275, %v4276
        %v4278 = vrot.slane %v4130, 5
        %v4279 = vrot.slane %v4278, 4
        %v4280 = vrot.slane %v3405, 5
        %v4281 = vsel %vm2541, %v4279, %v4280
        %v4282 = vrot.slane %v4280, 4
        %v4283 = vrot.slane %v3406, 5
        %v4284 = vsel %vm2541, %v4282, %v4283
        %v4285 = vrot.slane %v4131, 5
        %v4286 = vrot.slane %v4285, 4
        %v4287 = vrot.slane %v3408, 5
        %v4288 = vsel %vm2541, %v4286, %v4287
        %v4289 = vrot.slane %v4287, 4
        %v4290 = vrot.slane %v3409, 5
        %v4291 = vsel %vm2541, %v4289, %v4290
        %s4292 = scalar_lea.vmem [#allocation8], 320
        %v4293 = vld [vmem:[%s4292] sm:$0xf]
        %v4294 = vld [vmem:[%s4292 + $0x4] sm:$0xf]
        %v4295 = vld [vmem:[%s4292 + $0x8] sm:$0xf]
        %v4296 = vld [vmem:[%s4292 + $0xc] sm:$0xf]
        %v4297 = vld [vmem:[%s4292 + $0x10] sm:$0xf]
        %v4298 = vld [vmem:[%s4292 + $0x14] sm:$0xf]
        %v4299 = vld [vmem:[%s4292 + $0x18] sm:$0xf]
        %v4300 = vld [vmem:[%s4292 + $0x1c] sm:$0xf]
        %v4301 = vld [vmem:[%s4292 + $0x20] sm:$0xf]
        %v4302 = vld [vmem:[%s4292 + $0x24] sm:$0xf]
        %v4303 = vld [vmem:[%s4292 + $0x28] sm:$0xf]
        %v4304 = vld [vmem:[%s4292 + $0x2c] sm:$0xf]
        %v4305 = vld [vmem:[%s4292 + $0x30] sm:$0xf]
        %v4306 = vld [vmem:[%s4292 + $0x34] sm:$0xf]
        %v4307 = vld [vmem:[%s4292 + $0x38] sm:$0xf]
        %v4308 = vld [vmem:[%s4292 + $0x3c] sm:$0xf]
        %v4309 = vunpack.c.l.b16 %v4183
        %v4310 = vunpack.c.l.b16 %v4186
        %v4311 = vunpack.c.l.b16 %v4190
        %v4312 = vunpack.c.l.b16 %v4193
        %v4313 = vunpack.c.l.b16 %v4197
        %v4314 = vunpack.c.l.b16 %v4200
        %v4315 = vunpack.c.l.b16 %v4204
        %v4316 = vunpack.c.l.b16 %v4207
        %v4317 = vunpack.c.l.b16 %v4211
        %v4318 = vunpack.c.l.b16 %v4214
        %v4319 = vunpack.c.l.b16 %v4218
        %v4320 = vunpack.c.l.b16 %v4221
        %v4321 = vunpack.c.l.b16 %v4225
        %v4322 = vunpack.c.l.b16 %v4228
        %v4323 = vunpack.c.l.b16 %v4232
        %v4324 = vunpack.c.l.b16 %v4235
        %v4325 = vunpack.c.l.b16 %v4239
        %v4326 = vunpack.c.l.b16 %v4242
        %v4327 = vunpack.c.l.b16 %v4246
        %v4328 = vunpack.c.l.b16 %v4249
        %v4329 = vunpack.c.l.b16 %v4253
        %v4330 = vunpack.c.l.b16 %v4256
        %v4331 = vunpack.c.l.b16 %v4260
        %v4332 = vunpack.c.l.b16 %v4263
        %v4333 = vunpack.c.l.b16 %v4267
        %v4334 = vunpack.c.l.b16 %v4270
        %v4335 = vunpack.c.l.b16 %v4274
        %v4336 = vunpack.c.l.b16 %v4277
        %v4337 = vunpack.c.l.b16 %v4281
        %v4338 = vunpack.c.l.b16 %v4284
        %v4339 = vunpack.c.l.b16 %v4288
        %v4340 = vunpack.c.l.b16 %v4291
        %v4341 = vpack.c.b16 %v4310, %v4309
        %v4342 = vpack.c.b16 %v4312, %v4311
        %v4343 = vpack.c.b16 %v4314, %v4313
        %v4344 = vpack.c.b16 %v4316, %v4315
        %v4345 = vpack.c.b16 %v4318, %v4317
        %v4346 = vpack.c.b16 %v4320, %v4319
        %v4347 = vpack.c.b16 %v4322, %v4321
        %v4348 = vpack.c.b16 %v4324, %v4323
        %v4349 = vpack.c.b16 %v4326, %v4325
        %v4350 = vpack.c.b16 %v4328, %v4327
        %v4351 = vpack.c.b16 %v4330, %v4329
        %v4352 = vpack.c.b16 %v4332, %v4331
        %v4353 = vpack.c.b16 %v4334, %v4333
        %v4354 = vpack.c.b16 %v4336, %v4335
        %v4355 = vpack.c.b16 %v4338, %v4337
        %v4356 = vpack.c.b16 %v4340, %v4339
        %v4389 = vunpack.c.l.b16 %v4293
        %v4390 = vunpack.c.l.b16 %v4294
        %v4391 = vunpack.c.l.b16 %v4295
        %v4392 = vunpack.c.l.b16 %v4296
        %v4393 = vunpack.c.l.b16 %v4297
        %v4394 = vunpack.c.l.b16 %v4298
        %v4395 = vunpack.c.l.b16 %v4299
        %v4396 = vunpack.c.l.b16 %v4300
        %v4397 = vunpack.c.l.b16 %v4301
        %v4398 = vunpack.c.l.b16 %v4302
        %v4399 = vunpack.c.l.b16 %v4303
        %v4400 = vunpack.c.l.b16 %v4304
        %v4401 = vunpack.c.l.b16 %v4305
        %v4402 = vunpack.c.l.b16 %v4306
        %v4403 = vunpack.c.l.b16 %v4307
        %v4404 = vunpack.c.l.b16 %v4308
        %v4405 = vpack.c.b16 %v4390, %v4389
        %v4406 = vpack.c.b16 %v4392, %v4391
        %v4407 = vpack.c.b16 %v4394, %v4393
        %v4408 = vpack.c.b16 %v4396, %v4395
        %v4409 = vpack.c.b16 %v4398, %v4397
        %v4410 = vpack.c.b16 %v4400, %v4399
        %v4411 = vpack.c.b16 %v4402, %v4401
        %v4412 = vpack.c.b16 %v4404, %v4403
        %4421 = vmatprep.subr.bf16.mxu0 0
        %4422 = vmatpush1.bf16.msra.mxu0 %v4405
        %4423 = vmatprep.subr.bf16.mxu0 0
        %4424 = vmatpush1.bf16.msra.mxu0 %v4406
        %4425 = vmatprep.subr.bf16.mxu0 0
        %4426 = vmatpush1.bf16.msra.mxu0 %v4407
        %4427 = vmatprep.subr.bf16.mxu0 0
        %4428 = vmatpush1.bf16.msra.mxu0 %v4408
        %4429 = vmatprep.subr.bf16.mxu0 0
        %4430 = vmatpush1.bf16.msra.mxu0 %v4409
        %4431 = vmatprep.subr.bf16.mxu0 0
        %4432 = vmatpush1.bf16.msra.mxu0 %v4410
        %4433 = vmatprep.subr.bf16.mxu0 0
        %4434 = vmatpush1.bf16.msra.mxu0 %v4411
        %4435 = vmatprep.subr.bf16.mxu0 0
        %4436 = vmatpush1.bf16.msra.mxu0 %v4412
        %4437 = vmatprep.subr.bf16.mxu0 0
        %4438 = vmatpush1.bf16.msra.mxu0 0
        %4439 = vmatprep.subr.bf16.mxu0 0
        %4440 = vmatpush1.bf16.msra.mxu0 0
        %4441 = vmatprep.subr.bf16.mxu0 0
        %4442 = vmatpush1.bf16.msra.mxu0 0
        %4443 = vmatprep.subr.bf16.mxu0 0
        %4444 = vmatpush1.bf16.msra.mxu0 0
        %4445 = vmatprep.subr.bf16.mxu0 0
        %4446 = vmatpush1.bf16.msra.mxu0 0
        %4447 = vmatprep.subr.bf16.mxu0 0
        %4448 = vmatpush1.bf16.msra.mxu0 0
        %4449 = vmatprep.subr.bf16.mxu0 0
        %4450 = vmatpush1.bf16.msra.mxu0 0
        %4451 = vmatprep.subr.bf16.mxu0 0
        %4452 = vmatpush1.bf16.msra.mxu0 0
        %4453 = vmatprep.mubr.bf16.mxu0 0
        %4454 = vmatmul.mubr.bf16.gmra.mrb[0].mxu0 %v4341
        %v4455 = vpop.f32.mrb[0].mxu0
        %v4456 = vadd.f32 0.0, %v4455
        %v4457 = vpop.f32.mrb[0].mxu0
        %v4458 = vpop.f32.mrb[0].mxu0
        %v4459 = vadd.f32 0.0, %v4458
        %v4460 = vpop.f32.mrb[0].mxu0
        %4461 = vmatprep.mubr.bf16.mxu0 0
        %4462 = vmatmul.mubr.bf16.gmra.mrb[0].mxu0 %v4342
        %v4463 = vpop.f32.mrb[0].mxu0
        %v4464 = vadd.f32 0.0, %v4463
        %v4465 = vpop.f32.mrb[0].mxu0
        %v4466 = vpop.f32.mrb[0].mxu0
        %v4467 = vadd.f32 0.0, %v4466
        %v4468 = vpop.f32.mrb[0].mxu0
        %4469 = vmatprep.mubr.bf16.mxu0 0
        %4470 = vmatmul.mubr.bf16.gmra.mrb[0].mxu0 %v4343
        %v4471 = vpop.f32.mrb[0].mxu0
        %v4472 = vadd.f32 0.0, %v4471
        %v4473 = vpop.f32.mrb[0].mxu0
        %v4474 = vpop.f32.mrb[0].mxu0
        %v4475 = vadd.f32 0.0, %v4474
        %v4476 = vpop.f32.mrb[0].mxu0
        %4477 = vmatprep.mubr.bf16.mxu0 0
        %4478 = vmatmul.mubr.bf16.gmra.mrb[0].mxu0 %v4344
        %v4479 = vpop.f32.mrb[0].mxu0
        %v4480 = vadd.f32 0.0, %v4479
        %v4481 = vpop.f32.mrb[0].mxu0
        %v4482 = vpop.f32.mrb[0].mxu0
        %v4483 = vadd.f32 0.0, %v4482
        %v4484 = vpop.f32.mrb[0].mxu0
        %4485 = vmatprep.mubr.bf16.mxu0 0
        %4486 = vmatmul.mubr.bf16.gmra.mrb[0].mxu0 %v4345
        %v4487 = vpop.f32.mrb[0].mxu0
        %v4488 = vadd.f32 0.0, %v4487
        %v4489 = vpop.f32.mrb[0].mxu0
        %v4490 = vpop.f32.mrb[0].mxu0
        %v4491 = vadd.f32 0.0, %v4490
        %v4492 = vpop.f32.mrb[0].mxu0
        %4493 = vmatprep.mubr.bf16.mxu0 0
        %4494 = vmatmul.mubr.bf16.gmra.mrb[0].mxu0 %v4346
        %v4495 = vpop.f32.mrb[0].mxu0
        %v4496 = vadd.f32 0.0, %v4495
        %v4497 = vpop.f32.mrb[0].mxu0
        %v4498 = vpop.f32.mrb[0].mxu0
        %v4499 = vadd.f32 0.0, %v4498
        %v4500 = vpop.f32.mrb[0].mxu0
        %4501 = vmatprep.mubr.bf16.mxu0 0
        %4502 = vmatmul.mubr.bf16.gmra.mrb[0].mxu0 %v4347
        %v4503 = vpop.f32.mrb[0].mxu0
        %v4504 = vadd.f32 0.0, %v4503
        %v4505 = vpop.f32.mrb[0].mxu0
        %v4506 = vpop.f32.mrb[0].mxu0
        %v4507 = vadd.f32 0.0, %v4506
        %v4508 = vpop.f32.mrb[0].mxu0
        %4509 = vmatprep.mubr.bf16.mxu0 0
        %4510 = vmatmul.mubr.bf16.gmra.mrb[0].mxu0 %v4348
        %v4511 = vpop.f32.mrb[0].mxu0
        %v4512 = vadd.f32 0.0, %v4511
        %v4513 = vpop.f32.mrb[0].mxu0
        %v4514 = vpop.f32.mrb[0].mxu0
        %v4515 = vadd.f32 0.0, %v4514
        %v4516 = vpop.f32.mrb[0].mxu0
        %4517 = vmatprep.mubr.bf16.mxu0 0
        %4518 = vmatmul.mubr.bf16.gmra.mrb[0].mxu0 %v4349
        %v4519 = vpop.f32.mrb[0].mxu0
        %v4520 = vadd.f32 0.0, %v4519
        %v4521 = vpop.f32.mrb[0].mxu0
        %v4522 = vpop.f32.mrb[0].mxu0
        %v4523 = vadd.f32 0.0, %v4522
        %v4524 = vpop.f32.mrb[0].mxu0
        %4525 = vmatprep.mubr.bf16.mxu0 0
        %4526 = vmatmul.mubr.bf16.gmra.mrb[0].mxu0 %v4350
        %v4527 = vpop.f32.mrb[0].mxu0
        %v4528 = vadd.f32 0.0, %v4527
        %v4529 = vpop.f32.mrb[0].mxu0
        %v4530 = vpop.f32.mrb[0].mxu0
        %v4531 = vadd.f32 0.0, %v4530
        %v4532 = vpop.f32.mrb[0].mxu0
        %4533 = vmatprep.mubr.bf16.mxu0 0
        %4534 = vmatmul.mubr.bf16.gmra.mrb[0].mxu0 %v4351
        %v4535 = vpop.f32.mrb[0].mxu0
        %v4536 = vadd.f32 0.0, %v4535
        %v4537 = vpop.f32.mrb[0].mxu0
        %v4538 = vpop.f32.mrb[0].mxu0
        %v4539 = vadd.f32 0.0, %v4538
        %v4540 = vpop.f32.mrb[0].mxu0
        %4541 = vmatprep.mubr.bf16.mxu0 0
        %4542 = vmatmul.mubr.bf16.gmra.mrb[0].mxu0 %v4352
        %v4543 = vpop.f32.mrb[0].mxu0
        %v4544 = vadd.f32 0.0, %v4543
        %v4545 = vpop.f32.mrb[0].mxu0
        %v4546 = vpop.f32.mrb[0].mxu0
        %v4547 = vadd.f32 0.0, %v4546
        %v4548 = vpop.f32.mrb[0].mxu0
        %4549 = vmatprep.mubr.bf16.mxu0 0
        %4550 = vmatmul.mubr.bf16.gmra.mrb[0].mxu0 %v4353
        %v4551 = vpop.f32.mrb[0].mxu0
        %v4552 = vadd.f32 0.0, %v4551
        %v4553 = vpop.f32.mrb[0].mxu0
        %v4554 = vpop.f32.mrb[0].mxu0
        %v4555 = vadd.f32 0.0, %v4554
        %v4556 = vpop.f32.mrb[0].mxu0
        %4557 = vmatprep.mubr.bf16.mxu0 0
        %4558 = vmatmul.mubr.bf16.gmra.mrb[0].mxu0 %v4354
        %v4559 = vpop.f32.mrb[0].mxu0
        %v4560 = vadd.f32 0.0, %v4559
        %v4561 = vpop.f32.mrb[0].mxu0
        %v4562 = vpop.f32.mrb[0].mxu0
        %v4563 = vadd.f32 0.0, %v4562
        %v4564 = vpop.f32.mrb[0].mxu0
        %4565 = vmatprep.mubr.bf16.mxu0 0
        %4566 = vmatmul.mubr.bf16.gmra.mrb[0].mxu0 %v4355
        %v4567 = vpop.f32.mrb[0].mxu0
        %v4568 = vadd.f32 0.0, %v4567
        %v4569 = vpop.f32.mrb[0].mxu0
        %v4570 = vpop.f32.mrb[0].mxu0
        %v4571 = vadd.f32 0.0, %v4570
        %v4572 = vpop.f32.mrb[0].mxu0
        %4573 = vmatprep.mubr.bf16.mxu0 0
        %4574 = vmatmul.mubr.bf16.gmra.mrb[0].mxu0 %v4356
        %v4575 = vpop.f32.mrb[0].mxu0
        %v4576 = vadd.f32 0.0, %v4575
        %v4577 = vpop.f32.mrb[0].mxu0
        %v4578 = vpop.f32.mrb[0].mxu0
        %v4579 = vadd.f32 0.0, %v4578
        %v4580 = vpop.f32.mrb[0].mxu0
        %4581 = vdwg.mxu0
        %v4582 = vadd.f32 %v4084, %v4456
        %v4583 = vadd.f32 %v4085, %v4459
        %v4584 = vadd.f32 %v4086, %v4464
        %v4585 = vadd.f32 %v4087, %v4467
        %v4586 = vadd.f32 %v4088, %v4472
        %v4587 = vadd.f32 %v4089, %v4475
        %v4588 = vadd.f32 %v4090, %v4480
        %v4589 = vadd.f32 %v4091, %v4483
        %v4590 = vadd.f32 %v4092, %v4488
        %v4591 = vadd.f32 %v4093, %v4491
        %v4592 = vadd.f32 %v4094, %v4496
        %v4593 = vadd.f32 %v4095, %v4499
        %v4594 = vadd.f32 %v4096, %v4504
        %v4595 = vadd.f32 %v4097, %v4507
        %v4596 = vadd.f32 %v4098, %v4512
        %v4597 = vadd.f32 %v4099, %v4515
        %v4598 = vadd.f32 %v4100, %v4520
        %v4599 = vadd.f32 %v4101, %v4523
        %v4600 = vadd.f32 %v4102, %v4528
        %v4601 = vadd.f32 %v4103, %v4531
        %v4602 = vadd.f32 %v4104, %v4536
        %v4603 = vadd.f32 %v4105, %v4539
        %v4604 = vadd.f32 %v4106, %v4544
        %v4605 = vadd.f32 %v4107, %v4547
        %v4606 = vadd.f32 %v4108, %v4552
        %v4607 = vadd.f32 %v4109, %v4555
        %v4608 = vadd.f32 %v4110, %v4560
        %v4609 = vadd.f32 %v4111, %v4563
        %v4610 = vadd.f32 %v4112, %v4568
        %v4611 = vadd.f32 %v4113, %v4571
        %v4612 = vadd.f32 %v4114, %v4576
        %v4613 = vadd.f32 %v4115, %v4579
        %s4614 = scalar_lea.vmem [#allocation2], 24
        %v4615 = vld [vmem:[%s4614] sm:$0xf]
        %v4616 = vld [vmem:[%s4614 + $0x4] sm:$0xf]
        %v4617 = vld [vmem:[%s4614 + $0xc] sm:$0xf]
        %v4618 = vld [vmem:[%s4614 + $0x10] sm:$0xf]
        %v4619 = vld [vmem:[%s4614 + $0x18] sm:$0xf]
        %v4620 = vld [vmem:[%s4614 + $0x1c] sm:$0xf]
        %v4621 = vld [vmem:[%s4614 + $0x24] sm:$0xf]
        %v4622 = vld [vmem:[%s4614 + $0x28] sm:$0xf]
        %v4623 = vld [vmem:[%s4614 + $0x30] sm:$0xf]
        %v4624 = vld [vmem:[%s4614 + $0x34] sm:$0xf]
        %v4625 = vld [vmem:[%s4614 + $0x3c] sm:$0xf]
        %v4626 = vld [vmem:[%s4614 + $0x40] sm:$0xf]
        %v4627 = vld [vmem:[%s4614 + $0x48] sm:$0xf]
        %v4628 = vld [vmem:[%s4614 + $0x4c] sm:$0xf]
        %v4629 = vld [vmem:[%s4614 + $0x54] sm:$0xf]
        %v4630 = vld [vmem:[%s4614 + $0x58] sm:$0xf]
        %v4631 = vld [vmem:[%s4614 + $0x60] sm:$0xf]
        %v4632 = vld [vmem:[%s4614 + $0x64] sm:$0xf]
        %v4633 = vld [vmem:[%s4614 + $0x6c] sm:$0xf]
        %v4634 = vld [vmem:[%s4614 + $0x70] sm:$0xf]
        %v4635 = vld [vmem:[%s4614 + $0x78] sm:$0xf]
        %v4636 = vld [vmem:[%s4614 + $0x7c] sm:$0xf]
        %v4637 = vld [vmem:[%s4614 + $0x84] sm:$0xf]
        %v4638 = vld [vmem:[%s4614 + $0x88] sm:$0xf]
        %v4639 = vld [vmem:[%s4614 + $0x90] sm:$0xf]
        %v4640 = vld [vmem:[%s4614 + $0x94] sm:$0xf]
        %v4641 = vld [vmem:[%s4614 + $0x9c] sm:$0xf]
        %v4642 = vld [vmem:[%s4614 + $0xa0] sm:$0xf]
        %v4643 = vld [vmem:[%s4614 + $0xa8] sm:$0xf]
        %v4644 = vld [vmem:[%s4614 + $0xac] sm:$0xf]
        %v4645 = vld [vmem:[%s4614 + $0xb4] sm:$0xf]
        %v4646 = vld [vmem:[%s4614 + $0xb8] sm:$0xf]
        %s4647 = scalar_lea.vmem [#allocation8], 384
        %v4648 = vld [vmem:[%s4647] sm:$0xf]
        %v4649 = vld [vmem:[%s4647 + $0x4] sm:$0xf]
        %v4650 = vld [vmem:[%s4647 + $0x8] sm:$0xf]
        %v4651 = vld [vmem:[%s4647 + $0xc] sm:$0xf]
        %v4652 = vld [vmem:[%s4647 + $0x10] sm:$0xf]
        %v4653 = vld [vmem:[%s4647 + $0x14] sm:$0xf]
        %v4654 = vld [vmem:[%s4647 + $0x18] sm:$0xf]
        %v4655 = vld [vmem:[%s4647 + $0x1c] sm:$0xf]
        %v4656 = vld [vmem:[%s4647 + $0x20] sm:$0xf]
        %v4657 = vld [vmem:[%s4647 + $0x24] sm:$0xf]
        %v4658 = vld [vmem:[%s4647 + $0x28] sm:$0xf]
        %v4659 = vld [vmem:[%s4647 + $0x2c] sm:$0xf]
        %v4660 = vld [vmem:[%s4647 + $0x30] sm:$0xf]
        %v4661 = vld [vmem:[%s4647 + $0x34] sm:$0xf]
        %v4662 = vld [vmem:[%s4647 + $0x38] sm:$0xf]
        %v4663 = vld [vmem:[%s4647 + $0x3c] sm:$0xf]
        %v4696 = vunpack.c.l.b16 %v4615
        %v4697 = vunpack.c.l.b16 %v4616
        %v4698 = vunpack.c.l.b16 %v4617
        %v4699 = vunpack.c.l.b16 %v4618
        %v4700 = vunpack.c.l.b16 %v4619
        %v4701 = vunpack.c.l.b16 %v4620
        %v4702 = vunpack.c.l.b16 %v4621
        %v4703 = vunpack.c.l.b16 %v4622
        %v4704 = vunpack.c.l.b16 %v4623
        %v4705 = vunpack.c.l.b16 %v4624
        %v4706 = vunpack.c.l.b16 %v4625
        %v4707 = vunpack.c.l.b16 %v4626
        %v4708 = vunpack.c.l.b16 %v4627
        %v4709 = vunpack.c.l.b16 %v4628
        %v4710 = vunpack.c.l.b16 %v4629
        %v4711 = vunpack.c.l.b16 %v4630
        %v4712 = vunpack.c.l.b16 %v4631
        %v4713 = vunpack.c.l.b16 %v4632
        %v4714 = vunpack.c.l.b16 %v4633
        %v4715 = vunpack.c.l.b16 %v4634
        %v4716 = vunpack.c.l.b16 %v4635
        %v4717 = vunpack.c.l.b16 %v4636
        %v4718 = vunpack.c.l.b16 %v4637
        %v4719 = vunpack.c.l.b16 %v4638
        %v4720 = vunpack.c.l.b16 %v4639
        %v4721 = vunpack.c.l.b16 %v4640
        %v4722 = vunpack.c.l.b16 %v4641
        %v4723 = vunpack.c.l.b16 %v4642
        %v4724 = vunpack.c.l.b16 %v4643
        %v4725 = vunpack.c.l.b16 %v4644
        %v4726 = vunpack.c.l.b16 %v4645
        %v4727 = vunpack.c.l.b16 %v4646
        %v4728 = vpack.c.b16 %v4697, %v4696
        %v4729 = vpack.c.b16 %v4699, %v4698
        %v4730 = vpack.c.b16 %v4701, %v4700
        %v4731 = vpack.c.b16 %v4703, %v4702
        %v4732 = vpack.c.b16 %v4705, %v4704
        %v4733 = vpack.c.b16 %v4707, %v4706
        %v4734 = vpack.c.b16 %v4709, %v4708
        %v4735 = vpack.c.b16 %v4711, %v4710
        %v4736 = vpack.c.b16 %v4713, %v4712
        %v4737 = vpack.c.b16 %v4715, %v4714
        %v4738 = vpack.c.b16 %v4717, %v4716
        %v4739 = vpack.c.b16 %v4719, %v4718
        %v4740 = vpack.c.b16 %v4721, %v4720
        %v4741 = vpack.c.b16 %v4723, %v4722
        %v4742 = vpack.c.b16 %v4725, %v4724
        %v4743 = vpack.c.b16 %v4727, %v4726
        %v4776 = vunpack.c.l.b16 %v4648
        %v4777 = vunpack.c.l.b16 %v4649
        %v4778 = vunpack.c.l.b16 %v4650
        %v4779 = vunpack.c.l.b16 %v4651
        %v4780 = vunpack.c.l.b16 %v4652
        %v4781 = vunpack.c.l.b16 %v4653
        %v4782 = vunpack.c.l.b16 %v4654
        %v4783 = vunpack.c.l.b16 %v4655
        %v4784 = vunpack.c.l.b16 %v4656
        %v4785 = vunpack.c.l.b16 %v4657
        %v4786 = vunpack.c.l.b16 %v4658
        %v4787 = vunpack.c.l.b16 %v4659
        %v4788 = vunpack.c.l.b16 %v4660
        %v4789 = vunpack.c.l.b16 %v4661
        %v4790 = vunpack.c.l.b16 %v4662
        %v4791 = vunpack.c.l.b16 %v4663
        %v4792 = vpack.c.b16 %v4777, %v4776
        %v4793 = vpack.c.b16 %v4779, %v4778
        %v4794 = vpack.c.b16 %v4781, %v4780
        %v4795 = vpack.c.b16 %v4783, %v4782
        %v4796 = vpack.c.b16 %v4785, %v4784
        %v4797 = vpack.c.b16 %v4787, %v4786
        %v4798 = vpack.c.b16 %v4789, %v4788
        %v4799 = vpack.c.b16 %v4791, %v4790
        %4808 = vmatprep.subr.bf16.mxu0 0
        %4809 = vmatpush1.bf16.msra.mxu0 %v4792
        %4810 = vmatprep.subr.bf16.mxu0 0
        %4811 = vmatpush1.bf16.msra.mxu0 %v4793
        %4812 = vmatprep.subr.bf16.mxu0 0
        %4813 = vmatpush1.bf16.msra.mxu0 %v4794
        %4814 = vmatprep.subr.bf16.mxu0 0
        %4815 = vmatpush1.bf16.msra.mxu0 %v4795
        %4816 = vmatprep.subr.bf16.mxu0 0
        %4817 = vmatpush1.bf16.msra.mxu0 %v4796
        %4818 = vmatprep.subr.bf16.mxu0 0
        %4819 = vmatpush1.bf16.msra.mxu0 %v4797
        %4820 = vmatprep.subr.bf16.mxu0 0
        %4821 = vmatpush1.bf16.msra.mxu0 %v4798
        %4822 = vmatprep.subr.bf16.mxu0 0
        %4823 = vmatpush1.bf16.msra.mxu0 %v4799
        %4824 = vmatprep.subr.bf16.mxu0 0
        %4825 = vmatpush1.bf16.msra.mxu0 0
        %4826 = vmatprep.subr.bf16.mxu0 0
        %4827 = vmatpush1.bf16.msra.mxu0 0
        %4828 = vmatprep.subr.bf16.mxu0 0
        %4829 = vmatpush1.bf16.msra.mxu0 0
        %4830 = vmatprep.subr.bf16.mxu0 0
        %4831 = vmatpush1.bf16.msra.mxu0 0
        %4832 = vmatprep.subr.bf16.mxu0 0
        %4833 = vmatpush1.bf16.msra.mxu0 0
        %4834 = vmatprep.subr.bf16.mxu0 0
        %4835 = vmatpush1.bf16.msra.mxu0 0
        %4836 = vmatprep.subr.bf16.mxu0 0
        %4837 = vmatpush1.bf16.msra.mxu0 0
        %4838 = vmatprep.subr.bf16.mxu0 0
        %4839 = vmatpush1.bf16.msra.mxu0 0
        %4840 = vmatprep.mubr.bf16.mxu0 0
        %4841 = vmatmul.mubr.bf16.gmra.mrb[0].mxu0 %v4728
        %v4842 = vpop.f32.mrb[0].mxu0
        %v4843 = vadd.f32 0.0, %v4842
        %v4844 = vpop.f32.mrb[0].mxu0
        %v4845 = vpop.f32.mrb[0].mxu0
        %v4846 = vadd.f32 0.0, %v4845
        %v4847 = vpop.f32.mrb[0].mxu0
        %4848 = vmatprep.mubr.bf16.mxu0 0
        %4849 = vmatmul.mubr.bf16.gmra.mrb[0].mxu0 %v4729
        %v4850 = vpop.f32.mrb[0].mxu0
        %v4851 = vadd.f32 0.0, %v4850
        %v4852 = vpop.f32.mrb[0].mxu0
        %v4853 = vpop.f32.mrb[0].mxu0
        %v4854 = vadd.f32 0.0, %v4853
        %v4855 = vpop.f32.mrb[0].mxu0
        %4856 = vmatprep.mubr.bf16.mxu0 0
        %4857 = vmatmul.mubr.bf16.gmra.mrb[0].mxu0 %v4730
        %v4858 = vpop.f32.mrb[0].mxu0
        %v4859 = vadd.f32 0.0, %v4858
        %v4860 = vpop.f32.mrb[0].mxu0
        %v4861 = vpop.f32.mrb[0].mxu0
        %v4862 = vadd.f32 0.0, %v4861
        %v4863 = vpop.f32.mrb[0].mxu0
        %4864 = vmatprep.mubr.bf16.mxu0 0
        %4865 = vmatmul.mubr.bf16.gmra.mrb[0].mxu0 %v4731
        %v4866 = vpop.f32.mrb[0].mxu0
        %v4867 = vadd.f32 0.0, %v4866
        %v4868 = vpop.f32.mrb[0].mxu0
        %v4869 = vpop.f32.mrb[0].mxu0
        %v4870 = vadd.f32 0.0, %v4869
        %v4871 = vpop.f32.mrb[0].mxu0
        %4872 = vmatprep.mubr.bf16.mxu0 0
        %4873 = vmatmul.mubr.bf16.gmra.mrb[0].mxu0 %v4732
        %v4874 = vpop.f32.mrb[0].mxu0
        %v4875 = vadd.f32 0.0, %v4874
        %v4876 = vpop.f32.mrb[0].mxu0
        %v4877 = vpop.f32.mrb[0].mxu0
        %v4878 = vadd.f32 0.0, %v4877
        %v4879 = vpop.f32.mrb[0].mxu0
        %4880 = vmatprep.mubr.bf16.mxu0 0
        %4881 = vmatmul.mubr.bf16.gmra.mrb[0].mxu0 %v4733
        %v4882 = vpop.f32.mrb[0].mxu0
        %v4883 = vadd.f32 0.0, %v4882
        %v4884 = vpop.f32.mrb[0].mxu0
        %v4885 = vpop.f32.mrb[0].mxu0
        %v4886 = vadd.f32 0.0, %v4885
        %v4887 = vpop.f32.mrb[0].mxu0
        %4888 = vmatprep.mubr.bf16.mxu0 0
        %4889 = vmatmul.mubr.bf16.gmra.mrb[0].mxu0 %v4734
        %v4890 = vpop.f32.mrb[0].mxu0
        %v4891 = vadd.f32 0.0, %v4890
        %v4892 = vpop.f32.mrb[0].mxu0
        %v4893 = vpop.f32.mrb[0].mxu0
        %v4894 = vadd.f32 0.0, %v4893
        %v4895 = vpop.f32.mrb[0].mxu0
        %4896 = vmatprep.mubr.bf16.mxu0 0
        %4897 = vmatmul.mubr.bf16.gmra.mrb[0].mxu0 %v4735
        %v4898 = vpop.f32.mrb[0].mxu0
        %v4899 = vadd.f32 0.0, %v4898
        %v4900 = vpop.f32.mrb[0].mxu0
        %v4901 = vpop.f32.mrb[0].mxu0
        %v4902 = vadd.f32 0.0, %v4901
        %v4903 = vpop.f32.mrb[0].mxu0
        %4904 = vmatprep.mubr.bf16.mxu0 0
        %4905 = vmatmul.mubr.bf16.gmra.mrb[0].mxu0 %v4736
        %v4906 = vpop.f32.mrb[0].mxu0
        %v4907 = vadd.f32 0.0, %v4906
        %v4908 = vpop.f32.mrb[0].mxu0
        %v4909 = vpop.f32.mrb[0].mxu0
        %v4910 = vadd.f32 0.0, %v4909
        %v4911 = vpop.f32.mrb[0].mxu0
        %4912 = vmatprep.mubr.bf16.mxu0 0
        %4913 = vmatmul.mubr.bf16.gmra.mrb[0].mxu0 %v4737
        %v4914 = vpop.f32.mrb[0].mxu0
        %v4915 = vadd.f32 0.0, %v4914
        %v4916 = vpop.f32.mrb[0].mxu0
        %v4917 = vpop.f32.mrb[0].mxu0
        %v4918 = vadd.f32 0.0, %v4917
        %v4919 = vpop.f32.mrb[0].mxu0
        %4920 = vmatprep.mubr.bf16.mxu0 0
        %4921 = vmatmul.mubr.bf16.gmra.mrb[0].mxu0 %v4738
        %v4922 = vpop.f32.mrb[0].mxu0
        %v4923 = vadd.f32 0.0, %v4922
        %v4924 = vpop.f32.mrb[0].mxu0
        %v4925 = vpop.f32.mrb[0].mxu0
        %v4926 = vadd.f32 0.0, %v4925
        %v4927 = vpop.f32.mrb[0].mxu0
        %4928 = vmatprep.mubr.bf16.mxu0 0
        %4929 = vmatmul.mubr.bf16.gmra.mrb[0].mxu0 %v4739
        %v4930 = vpop.f32.mrb[0].mxu0
        %v4931 = vadd.f32 0.0, %v4930
        %v4932 = vpop.f32.mrb[0].mxu0
        %v4933 = vpop.f32.mrb[0].mxu0
        %v4934 = vadd.f32 0.0, %v4933
        %v4935 = vpop.f32.mrb[0].mxu0
        %4936 = vmatprep.mubr.bf16.mxu0 0
        %4937 = vmatmul.mubr.bf16.gmra.mrb[0].mxu0 %v4740
        %v4938 = vpop.f32.mrb[0].mxu0
        %v4939 = vadd.f32 0.0, %v4938
        %v4940 = vpop.f32.mrb[0].mxu0
        %v4941 = vpop.f32.mrb[0].mxu0
        %v4942 = vadd.f32 0.0, %v4941
        %v4943 = vpop.f32.mrb[0].mxu0
        %4944 = vmatprep.mubr.bf16.mxu0 0
        %4945 = vmatmul.mubr.bf16.gmra.mrb[0].mxu0 %v4741
        %v4946 = vpop.f32.mrb[0].mxu0
        %v4947 = vadd.f32 0.0, %v4946
        %v4948 = vpop.f32.mrb[0].mxu0
        %v4949 = vpop.f32.mrb[0].mxu0
        %v4950 = vadd.f32 0.0, %v4949
        %v4951 = vpop.f32.mrb[0].mxu0
        %4952 = vmatprep.mubr.bf16.mxu0 0
        %4953 = vmatmul.mubr.bf16.gmra.mrb[0].mxu0 %v4742
        %v4954 = vpop.f32.mrb[0].mxu0
        %v4955 = vadd.f32 0.0, %v4954
        %v4956 = vpop.f32.mrb[0].mxu0
        %v4957 = vpop.f32.mrb[0].mxu0
        %v4958 = vadd.f32 0.0, %v4957
        %v4959 = vpop.f32.mrb[0].mxu0
        %4960 = vmatprep.mubr.bf16.mxu0 0
        %4961 = vmatmul.mubr.bf16.gmra.mrb[0].mxu0 %v4743
        %v4962 = vpop.f32.mrb[0].mxu0
        %v4963 = vadd.f32 0.0, %v4962
        %v4964 = vpop.f32.mrb[0].mxu0
        %v4965 = vpop.f32.mrb[0].mxu0
        %v4966 = vadd.f32 0.0, %v4965
        %v4967 = vpop.f32.mrb[0].mxu0
        %4968 = vdwg.mxu0
        %v4969 = vadd.f32 %v4582, %v4843
        %v4970 = vadd.f32 %v4583, %v4846
        %v4971 = vadd.f32 %v4584, %v4851
        %v4972 = vadd.f32 %v4585, %v4854
        %v4973 = vadd.f32 %v4586, %v4859
        %v4974 = vadd.f32 %v4587, %v4862
        %v4975 = vadd.f32 %v4588, %v4867
        %v4976 = vadd.f32 %v4589, %v4870
        %v4977 = vadd.f32 %v4590, %v4875
        %v4978 = vadd.f32 %v4591, %v4878
        %v4979 = vadd.f32 %v4592, %v4883
        %v4980 = vadd.f32 %v4593, %v4886
        %v4981 = vadd.f32 %v4594, %v4891
        %v4982 = vadd.f32 %v4595, %v4894
        %v4983 = vadd.f32 %v4596, %v4899
        %v4984 = vadd.f32 %v4597, %v4902
        %v4985 = vadd.f32 %v4598, %v4907
        %v4986 = vadd.f32 %v4599, %v4910
        %v4987 = vadd.f32 %v4600, %v4915
        %v4988 = vadd.f32 %v4601, %v4918
        %v4989 = vadd.f32 %v4602, %v4923
        %v4990 = vadd.f32 %v4603, %v4926
        %v4991 = vadd.f32 %v4604, %v4931
        %v4992 = vadd.f32 %v4605, %v4934
        %v4993 = vadd.f32 %v4606, %v4939
        %v4994 = vadd.f32 %v4607, %v4942
        %v4995 = vadd.f32 %v4608, %v4947
        %v4996 = vadd.f32 %v4609, %v4950
        %v4997 = vadd.f32 %v4610, %v4955
        %v4998 = vadd.f32 %v4611, %v4958
        %v4999 = vadd.f32 %v4612, %v4963
        %v5000 = vadd.f32 %v4613, %v4966
        %v5001 = vld [vmem:[%s4614] sm:$0xf]
        %v5002 = vld [vmem:[%s4614 + $0x4] sm:$0xf]
        %v5003 = vld [vmem:[%s4614 + $0x8] sm:$0x1]
        %v5004 = vld [vmem:[%s4614 + $0xc] sm:$0xf]
        %v5005 = vld [vmem:[%s4614 + $0x10] sm:$0xf]
        %v5006 = vld [vmem:[%s4614 + $0x14] sm:$0x1]
        %v5007 = vld [vmem:[%s4614 + $0x18] sm:$0xf]
        %v5008 = vld [vmem:[%s4614 + $0x1c] sm:$0xf]
        %v5009 = vld [vmem:[%s4614 + $0x20] sm:$0x1]
        %v5010 = vld [vmem:[%s4614 + $0x24] sm:$0xf]
        %v5011 = vld [vmem:[%s4614 + $0x28] sm:$0xf]
        %v5012 = vld [vmem:[%s4614 + $0x2c] sm:$0x1]
        %v5013 = vld [vmem:[%s4614 + $0x30] sm:$0xf]
        %v5014 = vld [vmem:[%s4614 + $0x34] sm:$0xf]
        %v5015 = vld [vmem:[%s4614 + $0x38] sm:$0x1]
        %v5016 = vld [vmem:[%s4614 + $0x3c] sm:$0xf]
        %v5017 = vld [vmem:[%s4614 + $0x40] sm:$0xf]
        %v5018 = vld [vmem:[%s4614 + $0x44] sm:$0x1]
        %v5019 = vld [vmem:[%s4614 + $0x48] sm:$0xf]
        %v5020 = vld [vmem:[%s4614 + $0x4c] sm:$0xf]
        %v5021 = vld [vmem:[%s4614 + $0x50] sm:$0x1]
        %v5022 = vld [vmem:[%s4614 + $0x54] sm:$0xf]
        %v5023 = vld [vmem:[%s4614 + $0x58] sm:$0xf]
        %v5024 = vld [vmem:[%s4614 + $0x5c] sm:$0x1]
        %v5025 = vld [vmem:[%s4614 + $0x60] sm:$0xf]
        %v5026 = vld [vmem:[%s4614 + $0x64] sm:$0xf]
        %v5027 = vld [vmem:[%s4614 + $0x68] sm:$0x1]
        %v5028 = vld [vmem:[%s4614 + $0x6c] sm:$0xf]
        %v5029 = vld [vmem:[%s4614 + $0x70] sm:$0xf]
        %v5030 = vld [vmem:[%s4614 + $0x74] sm:$0x1]
        %v5031 = vld [vmem:[%s4614 + $0x78] sm:$0xf]
        %v5032 = vld [vmem:[%s4614 + $0x7c] sm:$0xf]
        %v5033 = vld [vmem:[%s4614 + $0x80] sm:$0x1]
        %v5034 = vld [vmem:[%s4614 + $0x84] sm:$0xf]
        %v5035 = vld [vmem:[%s4614 + $0x88] sm:$0xf]
        %v5036 = vld [vmem:[%s4614 + $0x8c] sm:$0x1]
        %v5037 = vld [vmem:[%s4614 + $0x90] sm:$0xf]
        %v5038 = vld [vmem:[%s4614 + $0x94] sm:$0xf]
        %v5039 = vld [vmem:[%s4614 + $0x98] sm:$0x1]
        %v5040 = vld [vmem:[%s4614 + $0x9c] sm:$0xf]
        %v5041 = vld [vmem:[%s4614 + $0xa0] sm:$0xf]
        %v5042 = vld [vmem:[%s4614 + $0xa4] sm:$0x1]
        %v5043 = vld [vmem:[%s4614 + $0xa8] sm:$0xf]
        %v5044 = vld [vmem:[%s4614 + $0xac] sm:$0xf]
        %v5045 = vld [vmem:[%s4614 + $0xb0] sm:$0x1]
        %v5046 = vld [vmem:[%s4614 + $0xb4] sm:$0xf]
        %v5047 = vld [vmem:[%s4614 + $0xb8] sm:$0xf]
        %v5048 = vld [vmem:[%s4614 + $0xbc] sm:$0x1]
        %v5050 = vshrl.u32 %v5001, 16
        %v5052 = vrot.slane %v5050, 4
        %v5053 = vshll.u32 %v5001, 16
        %v5055 = vrot.slane %v5053, 5
        %v5056 = vor.u32 %v5052, %v5055
        %v5057 = vrot.slane %v5056, 4
        %v5059 = vshll.u32 %v5002, 16
        %v5061 = vrot.slane %v5059, 5
        %v5062 = vsel %vm1511, %v5057, %v5061
        %v5063 = vshrl.u32 %v5002, 16
        %v5065 = vrot.slane %v5063, 4
        %v5066 = vor.u32 %v5065, %v5061
        %v5067 = vrot.slane %v5066, 4
        %v5069 = vshll.u32 %v5003, 16
        %v5071 = vrot.slane %v5069, 5
        %v5072 = vsel %vm1511, %v5067, %v5071
        %v5074 = vshrl.u32 %v5004, 16
        %v5076 = vrot.slane %v5074, 4
        %v5077 = vshll.u32 %v5004, 16
        %v5079 = vrot.slane %v5077, 5
        %v5080 = vor.u32 %v5076, %v5079
        %v5081 = vrot.slane %v5080, 4
        %v5083 = vshll.u32 %v5005, 16
        %v5085 = vrot.slane %v5083, 5
        %v5086 = vsel %vm1511, %v5081, %v5085
        %v5087 = vshrl.u32 %v5005, 16
        %v5089 = vrot.slane %v5087, 4
        %v5090 = vor.u32 %v5089, %v5085
        %v5091 = vrot.slane %v5090, 4
        %v5093 = vshll.u32 %v5006, 16
        %v5095 = vrot.slane %v5093, 5
        %v5096 = vsel %vm1511, %v5091, %v5095
        %v5098 = vshrl.u32 %v5007, 16
        %v5100 = vrot.slane %v5098, 4
        %v5101 = vshll.u32 %v5007, 16
        %v5103 = vrot.slane %v5101, 5
        %v5104 = vor.u32 %v5100, %v5103
        %v5105 = vrot.slane %v5104, 4
        %v5107 = vshll.u32 %v5008, 16
        %v5109 = vrot.slane %v5107, 5
        %v5110 = vsel %vm1511, %v5105, %v5109
        %v5111 = vshrl.u32 %v5008, 16
        %v5113 = vrot.slane %v5111, 4
        %v5114 = vor.u32 %v5113, %v5109
        %v5115 = vrot.slane %v5114, 4
        %v5117 = vshll.u32 %v5009, 16
        %v5119 = vrot.slane %v5117, 5
        %v5120 = vsel %vm1511, %v5115, %v5119
        %v5122 = vshrl.u32 %v5010, 16
        %v5124 = vrot.slane %v5122, 4
        %v5125 = vshll.u32 %v5010, 16
        %v5127 = vrot.slane %v5125, 5
        %v5128 = vor.u32 %v5124, %v5127
        %v5129 = vrot.slane %v5128, 4
        %v5131 = vshll.u32 %v5011, 16
        %v5133 = vrot.slane %v5131, 5
        %v5134 = vsel %vm1511, %v5129, %v5133
        %v5135 = vshrl.u32 %v5011, 16
        %v5137 = vrot.slane %v5135, 4
        %v5138 = vor.u32 %v5137, %v5133
        %v5139 = vrot.slane %v5138, 4
        %v5141 = vshll.u32 %v5012, 16
        %v5143 = vrot.slane %v5141, 5
        %v5144 = vsel %vm1511, %v5139, %v5143
        %v5146 = vshrl.u32 %v5013, 16
        %v5148 = vrot.slane %v5146, 4
        %v5149 = vshll.u32 %v5013, 16
        %v5151 = vrot.slane %v5149, 5
        %v5152 = vor.u32 %v5148, %v5151
        %v5153 = vrot.slane %v5152, 4
        %v5155 = vshll.u32 %v5014, 16
        %v5157 = vrot.slane %v5155, 5
        %v5158 = vsel %vm1511, %v5153, %v5157
        %v5159 = vshrl.u32 %v5014, 16
        %v5161 = vrot.slane %v5159, 4
        %v5162 = vor.u32 %v5161, %v5157
        %v5163 = vrot.slane %v5162, 4
        %v5165 = vshll.u32 %v5015, 16
        %v5167 = vrot.slane %v5165, 5
        %v5168 = vsel %vm1511, %v5163, %v5167
        %v5170 = vshrl.u32 %v5016, 16
        %v5172 = vrot.slane %v5170, 4
        %v5173 = vshll.u32 %v5016, 16
        %v5175 = vrot.slane %v5173, 5
        %v5176 = vor.u32 %v5172, %v5175
        %v5177 = vrot.slane %v5176, 4
        %v5179 = vshll.u32 %v5017, 16
        %v5181 = vrot.slane %v5179, 5
        %v5182 = vsel %vm1511, %v5177, %v5181
        %v5183 = vshrl.u32 %v5017, 16
        %v5185 = vrot.slane %v5183, 4
        %v5186 = vor.u32 %v5185, %v5181
        %v5187 = vrot.slane %v5186, 4
        %v5189 = vshll.u32 %v5018, 16
        %v5191 = vrot.slane %v5189, 5
        %v5192 = vsel %vm1511, %v5187, %v5191
        %v5194 = vshrl.u32 %v5019, 16
        %v5196 = vrot.slane %v5194, 4
        %v5197 = vshll.u32 %v5019, 16
        %v5199 = vrot.slane %v5197, 5
        %v5200 = vor.u32 %v5196, %v5199
        %v5201 = vrot.slane %v5200, 4
        %v5203 = vshll.u32 %v5020, 16
        %v5205 = vrot.slane %v5203, 5
        %v5206 = vsel %vm1511, %v5201, %v5205
        %v5207 = vshrl.u32 %v5020, 16
        %v5209 = vrot.slane %v5207, 4
        %v5210 = vor.u32 %v5209, %v5205
        %v5211 = vrot.slane %v5210, 4
        %v5213 = vshll.u32 %v5021, 16
        %v5215 = vrot.slane %v5213, 5
        %v5216 = vsel %vm1511, %v5211, %v5215
        %v5218 = vshrl.u32 %v5022, 16
        %v5220 = vrot.slane %v5218, 4
        %v5221 = vshll.u32 %v5022, 16
        %v5223 = vrot.slane %v5221, 5
        %v5224 = vor.u32 %v5220, %v5223
        %v5225 = vrot.slane %v5224, 4
        %v5227 = vshll.u32 %v5023, 16
        %v5229 = vrot.slane %v5227, 5
        %v5230 = vsel %vm1511, %v5225, %v5229
        %v5231 = vshrl.u32 %v5023, 16
        %v5233 = vrot.slane %v5231, 4
        %v5234 = vor.u32 %v5233, %v5229
        %v5235 = vrot.slane %v5234, 4
        %v5237 = vshll.u32 %v5024, 16
        %v5239 = vrot.slane %v5237, 5
        %v5240 = vsel %vm1511, %v5235, %v5239
        %v5242 = vshrl.u32 %v5025, 16
        %v5244 = vrot.slane %v5242, 4
        %v5245 = vshll.u32 %v5025, 16
        %v5247 = vrot.slane %v5245, 5
        %v5248 = vor.u32 %v5244, %v5247
        %v5249 = vrot.slane %v5248, 4
        %v5251 = vshll.u32 %v5026, 16
        %v5253 = vrot.slane %v5251, 5
        %v5254 = vsel %vm1511, %v5249, %v5253
        %v5255 = vshrl.u32 %v5026, 16
        %v5257 = vrot.slane %v5255, 4
        %v5258 = vor.u32 %v5257, %v5253
        %v5259 = vrot.slane %v5258, 4
        %v5261 = vshll.u32 %v5027, 16
        %v5263 = vrot.slane %v5261, 5
        %v5264 = vsel %vm1511, %v5259, %v5263
        %v5266 = vshrl.u32 %v5028, 16
        %v5268 = vrot.slane %v5266, 4
        %v5269 = vshll.u32 %v5028, 16
        %v5271 = vrot.slane %v5269, 5
        %v5272 = vor.u32 %v5268, %v5271
        %v5273 = vrot.slane %v5272, 4
        %v5275 = vshll.u32 %v5029, 16
        %v5277 = vrot.slane %v5275, 5
        %v5278 = vsel %vm1511, %v5273, %v5277
        %v5279 = vshrl.u32 %v5029, 16
        %v5281 = vrot.slane %v5279, 4
        %v5282 = vor.u32 %v5281, %v5277
        %v5283 = vrot.slane %v5282, 4
        %v5285 = vshll.u32 %v5030, 16
        %v5287 = vrot.slane %v5285, 5
        %v5288 = vsel %vm1511, %v5283, %v5287
        %v5290 = vshrl.u32 %v5031, 16
        %v5292 = vrot.slane %v5290, 4
        %v5293 = vshll.u32 %v5031, 16
        %v5295 = vrot.slane %v5293, 5
        %v5296 = vor.u32 %v5292, %v5295
        %v5297 = vrot.slane %v5296, 4
        %v5299 = vshll.u32 %v5032, 16
        %v5301 = vrot.slane %v5299, 5
        %v5302 = vsel %vm1511, %v5297, %v5301
        %v5303 = vshrl.u32 %v5032, 16
        %v5305 = vrot.slane %v5303, 4
        %v5306 = vor.u32 %v5305, %v5301
        %v5307 = vrot.slane %v5306, 4
        %v5309 = vshll.u32 %v5033, 16
        %v5311 = vrot.slane %v5309, 5
        %v5312 = vsel %vm1511, %v5307, %v5311
        %v5314 = vshrl.u32 %v5034, 16
        %v5316 = vrot.slane %v5314, 4
        %v5317 = vshll.u32 %v5034, 16
        %v5319 = vrot.slane %v5317, 5
        %v5320 = vor.u32 %v5316, %v5319
        %v5321 = vrot.slane %v5320, 4
        %v5323 = vshll.u32 %v5035, 16
        %v5325 = vrot.slane %v5323, 5
        %v5326 = vsel %vm1511, %v5321, %v5325
        %v5327 = vshrl.u32 %v5035, 16
        %v5329 = vrot.slane %v5327, 4
        %v5330 = vor.u32 %v5329, %v5325
        %v5331 = vrot.slane %v5330, 4
        %v5333 = vshll.u32 %v5036, 16
        %v5335 = vrot.slane %v5333, 5
        %v5336 = vsel %vm1511, %v5331, %v5335
        %v5338 = vshrl.u32 %v5037, 16
        %v5340 = vrot.slane %v5338, 4
        %v5341 = vshll.u32 %v5037, 16
        %v5343 = vrot.slane %v5341, 5
        %v5344 = vor.u32 %v5340, %v5343
        %v5345 = vrot.slane %v5344, 4
        %v5347 = vshll.u32 %v5038, 16
        %v5349 = vrot.slane %v5347, 5
        %v5350 = vsel %vm1511, %v5345, %v5349
        %v5351 = vshrl.u32 %v5038, 16
        %v5353 = vrot.slane %v5351, 4
        %v5354 = vor.u32 %v5353, %v5349
        %v5355 = vrot.slane %v5354, 4
        %v5357 = vshll.u32 %v5039, 16
        %v5359 = vrot.slane %v5357, 5
        %v5360 = vsel %vm1511, %v5355, %v5359
        %v5362 = vshrl.u32 %v5040, 16
        %v5364 = vrot.slane %v5362, 4
        %v5365 = vshll.u32 %v5040, 16
        %v5367 = vrot.slane %v5365, 5
        %v5368 = vor.u32 %v5364, %v5367
        %v5369 = vrot.slane %v5368, 4
        %v5371 = vshll.u32 %v5041, 16
        %v5373 = vrot.slane %v5371, 5
        %v5374 = vsel %vm1511, %v5369, %v5373
        %v5375 = vshrl.u32 %v5041, 16
        %v5377 = vrot.slane %v5375, 4
        %v5378 = vor.u32 %v5377, %v5373
        %v5379 = vrot.slane %v5378, 4
        %v5381 = vshll.u32 %v5042, 16
        %v5383 = vrot.slane %v5381, 5
        %v5384 = vsel %vm1511, %v5379, %v5383
        %v5386 = vshrl.u32 %v5043, 16
        %v5388 = vrot.slane %v5386, 4
        %v5389 = vshll.u32 %v5043, 16
        %v5391 = vrot.slane %v5389, 5
        %v5392 = vor.u32 %v5388, %v5391
        %v5393 = vrot.slane %v5392, 4
        %v5395 = vshll.u32 %v5044, 16
        %v5397 = vrot.slane %v5395, 5
        %v5398 = vsel %vm1511, %v5393, %v5397
        %v5399 = vshrl.u32 %v5044, 16
        %v5401 = vrot.slane %v5399, 4
        %v5402 = vor.u32 %v5401, %v5397
        %v5403 = vrot.slane %v5402, 4
        %v5405 = vshll.u32 %v5045, 16
        %v5407 = vrot.slane %v5405, 5
        %v5408 = vsel %vm1511, %v5403, %v5407
        %v5410 = vshrl.u32 %v5046, 16
        %v5412 = vrot.slane %v5410, 4
        %v5413 = vshll.u32 %v5046, 16
        %v5415 = vrot.slane %v5413, 5
        %v5416 = vor.u32 %v5412, %v5415
        %v5417 = vrot.slane %v5416, 4
        %v5419 = vshll.u32 %v5047, 16
        %v5421 = vrot.slane %v5419, 5
        %v5422 = vsel %vm1511, %v5417, %v5421
        %v5423 = vshrl.u32 %v5047, 16
        %v5425 = vrot.slane %v5423, 4
        %v5426 = vor.u32 %v5425, %v5421
        %v5427 = vrot.slane %v5426, 4
        %v5429 = vshll.u32 %v5048, 16
        %v5431 = vrot.slane %v5429, 5
        %v5432 = vsel %vm1511, %v5427, %v5431
        %s5433 = scalar_lea.vmem [#allocation8], 448
        %v5434 = vld [vmem:[%s5433] sm:$0xf]
        %v5435 = vld [vmem:[%s5433 + $0x4] sm:$0xf]
        %v5436 = vld [vmem:[%s5433 + $0x8] sm:$0xf]
        %v5437 = vld [vmem:[%s5433 + $0xc] sm:$0xf]
        %v5438 = vld [vmem:[%s5433 + $0x10] sm:$0xf]
        %v5439 = vld [vmem:[%s5433 + $0x14] sm:$0xf]
        %v5440 = vld [vmem:[%s5433 + $0x18] sm:$0xf]
        %v5441 = vld [vmem:[%s5433 + $0x1c] sm:$0xf]
        %v5442 = vld [vmem:[%s5433 + $0x20] sm:$0xf]
        %v5443 = vld [vmem:[%s5433 + $0x24] sm:$0xf]
        %v5444 = vld [vmem:[%s5433 + $0x28] sm:$0xf]
        %v5445 = vld [vmem:[%s5433 + $0x2c] sm:$0xf]
        %v5446 = vld [vmem:[%s5433 + $0x30] sm:$0xf]
        %v5447 = vld [vmem:[%s5433 + $0x34] sm:$0xf]
        %v5448 = vld [vmem:[%s5433 + $0x38] sm:$0xf]
        %v5449 = vld [vmem:[%s5433 + $0x3c] sm:$0xf]
        %v5450 = vunpack.c.l.b16 %v5062
        %v5451 = vunpack.c.l.b16 %v5072
        %v5452 = vunpack.c.l.b16 %v5086
        %v5453 = vunpack.c.l.b16 %v5096
        %v5454 = vunpack.c.l.b16 %v5110
        %v5455 = vunpack.c.l.b16 %v5120
        %v5456 = vunpack.c.l.b16 %v5134
        %v5457 = vunpack.c.l.b16 %v5144
        %v5458 = vunpack.c.l.b16 %v5158
        %v5459 = vunpack.c.l.b16 %v5168
        %v5460 = vunpack.c.l.b16 %v5182
        %v5461 = vunpack.c.l.b16 %v5192
        %v5462 = vunpack.c.l.b16 %v5206
        %v5463 = vunpack.c.l.b16 %v5216
        %v5464 = vunpack.c.l.b16 %v5230
        %v5465 = vunpack.c.l.b16 %v5240
        %v5466 = vunpack.c.l.b16 %v5254
        %v5467 = vunpack.c.l.b16 %v5264
        %v5468 = vunpack.c.l.b16 %v5278
        %v5469 = vunpack.c.l.b16 %v5288
        %v5470 = vunpack.c.l.b16 %v5302
        %v5471 = vunpack.c.l.b16 %v5312
        %v5472 = vunpack.c.l.b16 %v5326
        %v5473 = vunpack.c.l.b16 %v5336
        %v5474 = vunpack.c.l.b16 %v5350
        %v5475 = vunpack.c.l.b16 %v5360
        %v5476 = vunpack.c.l.b16 %v5374
        %v5477 = vunpack.c.l.b16 %v5384
        %v5478 = vunpack.c.l.b16 %v5398
        %v5479 = vunpack.c.l.b16 %v5408
        %v5480 = vunpack.c.l.b16 %v5422
        %v5481 = vunpack.c.l.b16 %v5432
        %v5482 = vpack.c.b16 %v5451, %v5450
        %v5483 = vpack.c.b16 %v5453, %v5452
        %v5484 = vpack.c.b16 %v5455, %v5454
        %v5485 = vpack.c.b16 %v5457, %v5456
        %v5486 = vpack.c.b16 %v5459, %v5458
        %v5487 = vpack.c.b16 %v5461, %v5460
        %v5488 = vpack.c.b16 %v5463, %v5462
        %v5489 = vpack.c.b16 %v5465, %v5464
        %v5490 = vpack.c.b16 %v5467, %v5466
        %v5491 = vpack.c.b16 %v5469, %v5468
        %v5492 = vpack.c.b16 %v5471, %v5470
        %v5493 = vpack.c.b16 %v5473, %v5472
        %v5494 = vpack.c.b16 %v5475, %v5474
        %v5495 = vpack.c.b16 %v5477, %v5476
        %v5496 = vpack.c.b16 %v5479, %v5478
        %v5497 = vpack.c.b16 %v5481, %v5480
        %v5530 = vunpack.c.l.b16 %v5434
        %v5531 = vunpack.c.l.b16 %v5435
        %v5532 = vunpack.c.l.b16 %v5436
        %v5533 = vunpack.c.l.b16 %v5437
        %v5534 = vunpack.c.l.b16 %v5438
        %v5535 = vunpack.c.l.b16 %v5439
        %v5536 = vunpack.c.l.b16 %v5440
        %v5537 = vunpack.c.l.b16 %v5441
        %v5538 = vunpack.c.l.b16 %v5442
        %v5539 = vunpack.c.l.b16 %v5443
        %v5540 = vunpack.c.l.b16 %v5444
        %v5541 = vunpack.c.l.b16 %v5445
        %v5542 = vunpack.c.l.b16 %v5446
        %v5543 = vunpack.c.l.b16 %v5447
        %v5544 = vunpack.c.l.b16 %v5448
        %v5545 = vunpack.c.l.b16 %v5449
        %v5546 = vpack.c.b16 %v5531, %v5530
        %v5547 = vpack.c.b16 %v5533, %v5532
        %v5548 = vpack.c.b16 %v5535, %v5534
        %v5549 = vpack.c.b16 %v5537, %v5536
        %v5550 = vpack.c.b16 %v5539, %v5538
        %v5551 = vpack.c.b16 %v5541, %v5540
        %v5552 = vpack.c.b16 %v5543, %v5542
        %v5553 = vpack.c.b16 %v5545, %v5544
        %5562 = vmatprep.subr.bf16.mxu0 0
        %5563 = vmatpush1.bf16.msra.mxu0 %v5546
        %5564 = vmatprep.subr.bf16.mxu0 0
        %5565 = vmatpush1.bf16.msra.mxu0 %v5547
        %5566 = vmatprep.subr.bf16.mxu0 0
        %5567 = vmatpush1.bf16.msra.mxu0 %v5548
        %5568 = vmatprep.subr.bf16.mxu0 0
        %5569 = vmatpush1.bf16.msra.mxu0 %v5549
        %5570 = vmatprep.subr.bf16.mxu0 0
        %5571 = vmatpush1.bf16.msra.mxu0 %v5550
        %5572 = vmatprep.subr.bf16.mxu0 0
        %5573 = vmatpush1.bf16.msra.mxu0 %v5551
        %5574 = vmatprep.subr.bf16.mxu0 0
        %5575 = vmatpush1.bf16.msra.mxu0 %v5552
        %5576 = vmatprep.subr.bf16.mxu0 0
        %5577 = vmatpush1.bf16.msra.mxu0 %v5553
        %5578 = vmatprep.subr.bf16.mxu0 0
        %5579 = vmatpush1.bf16.msra.mxu0 0
        %5580 = vmatprep.subr.bf16.mxu0 0
        %5581 = vmatpush1.bf16.msra.mxu0 0
        %5582 = vmatprep.subr.bf16.mxu0 0
        %5583 = vmatpush1.bf16.msra.mxu0 0
        %5584 = vmatprep.subr.bf16.mxu0 0
        %5585 = vmatpush1.bf16.msra.mxu0 0
        %5586 = vmatprep.subr.bf16.mxu0 0
        %5587 = vmatpush1.bf16.msra.mxu0 0
        %5588 = vmatprep.subr.bf16.mxu0 0
        %5589 = vmatpush1.bf16.msra.mxu0 0
        %5590 = vmatprep.subr.bf16.mxu0 0
        %5591 = vmatpush1.bf16.msra.mxu0 0
        %5592 = vmatprep.subr.bf16.mxu0 0
        %5593 = vmatpush1.bf16.msra.mxu0 0
        %5594 = vmatprep.mubr.bf16.mxu0 0
        %5595 = vmatmul.mubr.bf16.gmra.mrb[0].mxu0 %v5482
        %v5596 = vpop.f32.mrb[0].mxu0
        %v5597 = vadd.f32 0.0, %v5596
        %v5598 = vpop.f32.mrb[0].mxu0
        %v5599 = vpop.f32.mrb[0].mxu0
        %v5600 = vadd.f32 0.0, %v5599
        %v5601 = vpop.f32.mrb[0].mxu0
        %5602 = vmatprep.mubr.bf16.mxu0 0
        %5603 = vmatmul.mubr.bf16.gmra.mrb[0].mxu0 %v5483
        %v5604 = vpop.f32.mrb[0].mxu0
        %v5605 = vadd.f32 0.0, %v5604
        %v5606 = vpop.f32.mrb[0].mxu0
        %v5607 = vpop.f32.mrb[0].mxu0
        %v5608 = vadd.f32 0.0, %v5607
        %v5609 = vpop.f32.mrb[0].mxu0
        %5610 = vmatprep.mubr.bf16.mxu0 0
        %5611 = vmatmul.mubr.bf16.gmra.mrb[0].mxu0 %v5484
        %v5612 = vpop.f32.mrb[0].mxu0
        %v5613 = vadd.f32 0.0, %v5612
        %v5614 = vpop.f32.mrb[0].mxu0
        %v5615 = vpop.f32.mrb[0].mxu0
        %v5616 = vadd.f32 0.0, %v5615
        %v5617 = vpop.f32.mrb[0].mxu0
        %5618 = vmatprep.mubr.bf16.mxu0 0
        %5619 = vmatmul.mubr.bf16.gmra.mrb[0].mxu0 %v5485
        %v5620 = vpop.f32.mrb[0].mxu0
        %v5621 = vadd.f32 0.0, %v5620
        %v5622 = vpop.f32.mrb[0].mxu0
        %v5623 = vpop.f32.mrb[0].mxu0
        %v5624 = vadd.f32 0.0, %v5623
        %v5625 = vpop.f32.mrb[0].mxu0
        %5626 = vmatprep.mubr.bf16.mxu0 0
        %5627 = vmatmul.mubr.bf16.gmra.mrb[0].mxu0 %v5486
        %v5628 = vpop.f32.mrb[0].mxu0
        %v5629 = vadd.f32 0.0, %v5628
        %v5630 = vpop.f32.mrb[0].mxu0
        %v5631 = vpop.f32.mrb[0].mxu0
        %v5632 = vadd.f32 0.0, %v5631
        %v5633 = vpop.f32.mrb[0].mxu0
        %5634 = vmatprep.mubr.bf16.mxu0 0
        %5635 = vmatmul.mubr.bf16.gmra.mrb[0].mxu0 %v5487
        %v5636 = vpop.f32.mrb[0].mxu0
        %v5637 = vadd.f32 0.0, %v5636
        %v5638 = vpop.f32.mrb[0].mxu0
        %v5639 = vpop.f32.mrb[0].mxu0
        %v5640 = vadd.f32 0.0, %v5639
        %v5641 = vpop.f32.mrb[0].mxu0
        %5642 = vmatprep.mubr.bf16.mxu0 0
        %5643 = vmatmul.mubr.bf16.gmra.mrb[0].mxu0 %v5488
        %v5644 = vpop.f32.mrb[0].mxu0
        %v5645 = vadd.f32 0.0, %v5644
        %v5646 = vpop.f32.mrb[0].mxu0
        %v5647 = vpop.f32.mrb[0].mxu0
        %v5648 = vadd.f32 0.0, %v5647
        %v5649 = vpop.f32.mrb[0].mxu0
        %5650 = vmatprep.mubr.bf16.mxu0 0
        %5651 = vmatmul.mubr.bf16.gmra.mrb[0].mxu0 %v5489
        %v5652 = vpop.f32.mrb[0].mxu0
        %v5653 = vadd.f32 0.0, %v5652
        %v5654 = vpop.f32.mrb[0].mxu0
        %v5655 = vpop.f32.mrb[0].mxu0
        %v5656 = vadd.f32 0.0, %v5655
        %v5657 = vpop.f32.mrb[0].mxu0
        %5658 = vmatprep.mubr.bf16.mxu0 0
        %5659 = vmatmul.mubr.bf16.gmra.mrb[0].mxu0 %v5490
        %v5660 = vpop.f32.mrb[0].mxu0
        %v5661 = vadd.f32 0.0, %v5660
        %v5662 = vpop.f32.mrb[0].mxu0
        %v5663 = vpop.f32.mrb[0].mxu0
        %v5664 = vadd.f32 0.0, %v5663
        %v5665 = vpop.f32.mrb[0].mxu0
        %5666 = vmatprep.mubr.bf16.mxu0 0
        %5667 = vmatmul.mubr.bf16.gmra.mrb[0].mxu0 %v5491
        %v5668 = vpop.f32.mrb[0].mxu0
        %v5669 = vadd.f32 0.0, %v5668
        %v5670 = vpop.f32.mrb[0].mxu0
        %v5671 = vpop.f32.mrb[0].mxu0
        %v5672 = vadd.f32 0.0, %v5671
        %v5673 = vpop.f32.mrb[0].mxu0
        %5674 = vmatprep.mubr.bf16.mxu0 0
        %5675 = vmatmul.mubr.bf16.gmra.mrb[0].mxu0 %v5492
        %v5676 = vpop.f32.mrb[0].mxu0
        %v5677 = vadd.f32 0.0, %v5676
        %v5678 = vpop.f32.mrb[0].mxu0
        %v5679 = vpop.f32.mrb[0].mxu0
        %v5680 = vadd.f32 0.0, %v5679
        %v5681 = vpop.f32.mrb[0].mxu0
        %5682 = vmatprep.mubr.bf16.mxu0 0
        %5683 = vmatmul.mubr.bf16.gmra.mrb[0].mxu0 %v5493
        %v5684 = vpop.f32.mrb[0].mxu0
        %v5685 = vadd.f32 0.0, %v5684
        %v5686 = vpop.f32.mrb[0].mxu0
        %v5687 = vpop.f32.mrb[0].mxu0
        %v5688 = vadd.f32 0.0, %v5687
        %v5689 = vpop.f32.mrb[0].mxu0
        %5690 = vmatprep.mubr.bf16.mxu0 0
        %5691 = vmatmul.mubr.bf16.gmra.mrb[0].mxu0 %v5494
        %v5692 = vpop.f32.mrb[0].mxu0
        %v5693 = vadd.f32 0.0, %v5692
        %v5694 = vpop.f32.mrb[0].mxu0
        %v5695 = vpop.f32.mrb[0].mxu0
        %v5696 = vadd.f32 0.0, %v5695
        %v5697 = vpop.f32.mrb[0].mxu0
        %5698 = vmatprep.mubr.bf16.mxu0 0
        %5699 = vmatmul.mubr.bf16.gmra.mrb[0].mxu0 %v5495
        %v5700 = vpop.f32.mrb[0].mxu0
        %v5701 = vadd.f32 0.0, %v5700
        %v5702 = vpop.f32.mrb[0].mxu0
        %v5703 = vpop.f32.mrb[0].mxu0
        %v5704 = vadd.f32 0.0, %v5703
        %v5705 = vpop.f32.mrb[0].mxu0
        %5706 = vmatprep.mubr.bf16.mxu0 0
        %5707 = vmatmul.mubr.bf16.gmra.mrb[0].mxu0 %v5496
        %v5708 = vpop.f32.mrb[0].mxu0
        %v5709 = vadd.f32 0.0, %v5708
        %v5710 = vpop.f32.mrb[0].mxu0
        %v5711 = vpop.f32.mrb[0].mxu0
        %v5712 = vadd.f32 0.0, %v5711
        %v5713 = vpop.f32.mrb[0].mxu0
        %5714 = vmatprep.mubr.bf16.mxu0 0
        %5715 = vmatmul.mubr.bf16.gmra.mrb[0].mxu0 %v5497
        %v5716 = vpop.f32.mrb[0].mxu0
        %v5717 = vadd.f32 0.0, %v5716
        %v5718 = vpop.f32.mrb[0].mxu0
        %v5719 = vpop.f32.mrb[0].mxu0
        %v5720 = vadd.f32 0.0, %v5719
        %v5721 = vpop.f32.mrb[0].mxu0
        %5722 = vdwg.mxu0
        %v5723 = vadd.f32 %v4969, %v5597
        %v5724 = vadd.f32 %v4970, %v5600
        %v5725 = vadd.f32 %v4971, %v5605
        %v5726 = vadd.f32 %v4972, %v5608
        %v5727 = vadd.f32 %v4973, %v5613
        %v5728 = vadd.f32 %v4974, %v5616
        %v5729 = vadd.f32 %v4975, %v5621
        %v5730 = vadd.f32 %v4976, %v5624
        %v5731 = vadd.f32 %v4977, %v5629
        %v5732 = vadd.f32 %v4978, %v5632
        %v5733 = vadd.f32 %v4979, %v5637
        %v5734 = vadd.f32 %v4980, %v5640
        %v5735 = vadd.f32 %v4981, %v5645
        %v5736 = vadd.f32 %v4982, %v5648
        %v5737 = vadd.f32 %v4983, %v5653
        %v5738 = vadd.f32 %v4984, %v5656
        %v5739 = vadd.f32 %v4985, %v5661
        %v5740 = vadd.f32 %v4986, %v5664
        %v5741 = vadd.f32 %v4987, %v5669
        %v5742 = vadd.f32 %v4988, %v5672
        %v5743 = vadd.f32 %v4989, %v5677
        %v5744 = vadd.f32 %v4990, %v5680
        %v5745 = vadd.f32 %v4991, %v5685
        %v5746 = vadd.f32 %v4992, %v5688
        %v5747 = vadd.f32 %v4993, %v5693
        %v5748 = vadd.f32 %v4994, %v5696
        %v5749 = vadd.f32 %v4995, %v5701
        %v5750 = vadd.f32 %v4996, %v5704
        %v5751 = vadd.f32 %v4997, %v5709
        %v5752 = vadd.f32 %v4998, %v5712
        %v5753 = vadd.f32 %v4999, %v5717
        %v5754 = vadd.f32 %v5000, %v5720
        %v5755 = vld [vmem:[%s4614] sm:$0xe]
        %v5756 = vld [vmem:[%s4614 + $0xc] sm:$0xe]
        %v5757 = vld [vmem:[%s4614 + $0x18] sm:$0xe]
        %v5758 = vld [vmem:[%s4614 + $0x24] sm:$0xe]
        %v5759 = vld [vmem:[%s4614 + $0x30] sm:$0xe]
        %v5760 = vld [vmem:[%s4614 + $0x3c] sm:$0xe]
        %v5761 = vld [vmem:[%s4614 + $0x48] sm:$0xe]
        %v5762 = vld [vmem:[%s4614 + $0x54] sm:$0xe]
        %v5763 = vld [vmem:[%s4614 + $0x60] sm:$0xe]
        %v5764 = vld [vmem:[%s4614 + $0x6c] sm:$0xe]
        %v5765 = vld [vmem:[%s4614 + $0x78] sm:$0xe]
        %v5766 = vld [vmem:[%s4614 + $0x84] sm:$0xe]
        %v5767 = vld [vmem:[%s4614 + $0x90] sm:$0xe]
        %v5768 = vld [vmem:[%s4614 + $0x9c] sm:$0xe]
        %v5769 = vld [vmem:[%s4614 + $0xa8] sm:$0xe]
        %v5770 = vld [vmem:[%s4614 + $0xb4] sm:$0xe]
        %v5819 = vrot.slane %v5755, 5
        %v5820 = vrot.slane %v5819, 4
        %v5821 = vrot.slane %v5002, 5
        %v5822 = vsel %vm2541, %v5820, %v5821
        %v5823 = vrot.slane %v5821, 4
        %v5824 = vrot.slane %v5003, 5
        %v5825 = vsel %vm2541, %v5823, %v5824
        %v5826 = vrot.slane %v5756, 5
        %v5827 = vrot.slane %v5826, 4
        %v5828 = vrot.slane %v5005, 5
        %v5829 = vsel %vm2541, %v5827, %v5828
        %v5830 = vrot.slane %v5828, 4
        %v5831 = vrot.slane %v5006, 5
        %v5832 = vsel %vm2541, %v5830, %v5831
        %v5833 = vrot.slane %v5757, 5
        %v5834 = vrot.slane %v5833, 4
        %v5835 = vrot.slane %v5008, 5
        %v5836 = vsel %vm2541, %v5834, %v5835
        %v5837 = vrot.slane %v5835, 4
        %v5838 = vrot.slane %v5009, 5
        %v5839 = vsel %vm2541, %v5837, %v5838
        %v5840 = vrot.slane %v5758, 5
        %v5841 = vrot.slane %v5840, 4
        %v5842 = vrot.slane %v5011, 5
        %v5843 = vsel %vm2541, %v5841, %v5842
        %v5844 = vrot.slane %v5842, 4
        %v5845 = vrot.slane %v5012, 5
        %v5846 = vsel %vm2541, %v5844, %v5845
        %v5847 = vrot.slane %v5759, 5
        %v5848 = vrot.slane %v5847, 4
        %v5849 = vrot.slane %v5014, 5
        %v5850 = vsel %vm2541, %v5848, %v5849
        %v5851 = vrot.slane %v5849, 4
        %v5852 = vrot.slane %v5015, 5
        %v5853 = vsel %vm2541, %v5851, %v5852
        %v5854 = vrot.slane %v5760, 5
        %v5855 = vrot.slane %v5854, 4
        %v5856 = vrot.slane %v5017, 5
        %v5857 = vsel %vm2541, %v5855, %v5856
        %v5858 = vrot.slane %v5856, 4
        %v5859 = vrot.slane %v5018, 5
        %v5860 = vsel %vm2541, %v5858, %v5859
        %v5861 = vrot.slane %v5761, 5
        %v5862 = vrot.slane %v5861, 4
        %v5863 = vrot.slane %v5020, 5
        %v5864 = vsel %vm2541, %v5862, %v5863
        %v5865 = vrot.slane %v5863, 4
        %v5866 = vrot.slane %v5021, 5
        %v5867 = vsel %vm2541, %v5865, %v5866
        %v5868 = vrot.slane %v5762, 5
        %v5869 = vrot.slane %v5868, 4
        %v5870 = vrot.slane %v5023, 5
        %v5871 = vsel %vm2541, %v5869, %v5870
        %v5872 = vrot.slane %v5870, 4
        %v5873 = vrot.slane %v5024, 5
        %v5874 = vsel %vm2541, %v5872, %v5873
        %v5875 = vrot.slane %v5763, 5
        %v5876 = vrot.slane %v5875, 4
        %v5877 = vrot.slane %v5026, 5
        %v5878 = vsel %vm2541, %v5876, %v5877
        %v5879 = vrot.slane %v5877, 4
        %v5880 = vrot.slane %v5027, 5
        %v5881 = vsel %vm2541, %v5879, %v5880
        %v5882 = vrot.slane %v5764, 5
        %v5883 = vrot.slane %v5882, 4
        %v5884 = vrot.slane %v5029, 5
        %v5885 = vsel %vm2541, %v5883, %v5884
        %v5886 = vrot.slane %v5884, 4
        %v5887 = vrot.slane %v5030, 5
        %v5888 = vsel %vm2541, %v5886, %v5887
        %v5889 = vrot.slane %v5765, 5
        %v5890 = vrot.slane %v5889, 4
        %v5891 = vrot.slane %v5032, 5
        %v5892 = vsel %vm2541, %v5890, %v5891
        %v5893 = vrot.slane %v5891, 4
        %v5894 = vrot.slane %v5033, 5
        %v5895 = vsel %vm2541, %v5893, %v5894
        %v5896 = vrot.slane %v5766, 5
        %v5897 = vrot.slane %v5896, 4
        %v5898 = vrot.slane %v5035, 5
        %v5899 = vsel %vm2541, %v5897, %v5898
        %v5900 = vrot.slane %v5898, 4
        %v5901 = vrot.slane %v5036, 5
        %v5902 = vsel %vm2541, %v5900, %v5901
        %v5903 = vrot.slane %v5767, 5
        %v5904 = vrot.slane %v5903, 4
        %v5905 = vrot.slane %v5038, 5
        %v5906 = vsel %vm2541, %v5904, %v5905
        %v5907 = vrot.slane %v5905, 4
        %v5908 = vrot.slane %v5039, 5
        %v5909 = vsel %vm2541, %v5907, %v5908
        %v5910 = vrot.slane %v5768, 5
        %v5911 = vrot.slane %v5910, 4
        %v5912 = vrot.slane %v5041, 5
        %v5913 = vsel %vm2541, %v5911, %v5912
        %v5914 = vrot.slane %v5912, 4
        %v5915 = vrot.slane %v5042, 5
        %v5916 = vsel %vm2541, %v5914, %v5915
        %v5917 = vrot.slane %v5769, 5
        %v5918 = vrot.slane %v5917, 4
        %v5919 = vrot.slane %v5044, 5
        %v5920 = vsel %vm2541, %v5918, %v5919
        %v5921 = vrot.slane %v5919, 4
        %v5922 = vrot.slane %v5045, 5
        %v5923 = vsel %vm2541, %v5921, %v5922
        %v5924 = vrot.slane %v5770, 5
        %v5925 = vrot.slane %v5924, 4
        %v5926 = vrot.slane %v5047, 5
        %v5927 = vsel %vm2541, %v5925, %v5926
        %v5928 = vrot.slane %v5926, 4
        %v5929 = vrot.slane %v5048, 5
        %v5930 = vsel %vm2541, %v5928, %v5929
        %s5931 = scalar_lea.vmem [#allocation8], 512
        %v5932 = vld [vmem:[%s5931] sm:$0xf]
        %v5933 = vld [vmem:[%s5931 + $0x4] sm:$0xf]
        %v5934 = vld [vmem:[%s5931 + $0x8] sm:$0xf]
        %v5935 = vld [vmem:[%s5931 + $0xc] sm:$0xf]
        %v5936 = vld [vmem:[%s5931 + $0x10] sm:$0xf]
        %v5937 = vld [vmem:[%s5931 + $0x14] sm:$0xf]
        %v5938 = vld [vmem:[%s5931 + $0x18] sm:$0xf]
        %v5939 = vld [vmem:[%s5931 + $0x1c] sm:$0xf]
        %v5940 = vld [vmem:[%s5931 + $0x20] sm:$0xf]
        %v5941 = vld [vmem:[%s5931 + $0x24] sm:$0xf]
        %v5942 = vld [vmem:[%s5931 + $0x28] sm:$0xf]
        %v5943 = vld [vmem:[%s5931 + $0x2c] sm:$0xf]
        %v5944 = vld [vmem:[%s5931 + $0x30] sm:$0xf]
        %v5945 = vld [vmem:[%s5931 + $0x34] sm:$0xf]
        %v5946 = vld [vmem:[%s5931 + $0x38] sm:$0xf]
        %v5947 = vld [vmem:[%s5931 + $0x3c] sm:$0xf]
        %v5948 = vunpack.c.l.b16 %v5822
        %v5949 = vunpack.c.l.b16 %v5825
        %v5950 = vunpack.c.l.b16 %v5829
        %v5951 = vunpack.c.l.b16 %v5832
        %v5952 = vunpack.c.l.b16 %v5836
        %v5953 = vunpack.c.l.b16 %v5839
        %v5954 = vunpack.c.l.b16 %v5843
        %v5955 = vunpack.c.l.b16 %v5846
        %v5956 = vunpack.c.l.b16 %v5850
        %v5957 = vunpack.c.l.b16 %v5853
        %v5958 = vunpack.c.l.b16 %v5857
        %v5959 = vunpack.c.l.b16 %v5860
        %v5960 = vunpack.c.l.b16 %v5864
        %v5961 = vunpack.c.l.b16 %v5867
        %v5962 = vunpack.c.l.b16 %v5871
        %v5963 = vunpack.c.l.b16 %v5874
        %v5964 = vunpack.c.l.b16 %v5878
        %v5965 = vunpack.c.l.b16 %v5881
        %v5966 = vunpack.c.l.b16 %v5885
        %v5967 = vunpack.c.l.b16 %v5888
        %v5968 = vunpack.c.l.b16 %v5892
        %v5969 = vunpack.c.l.b16 %v5895
        %v5970 = vunpack.c.l.b16 %v5899
        %v5971 = vunpack.c.l.b16 %v5902
        %v5972 = vunpack.c.l.b16 %v5906
        %v5973 = vunpack.c.l.b16 %v5909
        %v5974 = vunpack.c.l.b16 %v5913
        %v5975 = vunpack.c.l.b16 %v5916
        %v5976 = vunpack.c.l.b16 %v5920
        %v5977 = vunpack.c.l.b16 %v5923
        %v5978 = vunpack.c.l.b16 %v5927
        %v5979 = vunpack.c.l.b16 %v5930
        %v5980 = vpack.c.b16 %v5949, %v5948
        %v5981 = vpack.c.b16 %v5951, %v5950
        %v5982 = vpack.c.b16 %v5953, %v5952
        %v5983 = vpack.c.b16 %v5955, %v5954
        %v5984 = vpack.c.b16 %v5957, %v5956
        %v5985 = vpack.c.b16 %v5959, %v5958
        %v5986 = vpack.c.b16 %v5961, %v5960
        %v5987 = vpack.c.b16 %v5963, %v5962
        %v5988 = vpack.c.b16 %v5965, %v5964
        %v5989 = vpack.c.b16 %v5967, %v5966
        %v5990 = vpack.c.b16 %v5969, %v5968
        %v5991 = vpack.c.b16 %v5971, %v5970
        %v5992 = vpack.c.b16 %v5973, %v5972
        %v5993 = vpack.c.b16 %v5975, %v5974
        %v5994 = vpack.c.b16 %v5977, %v5976
        %v5995 = vpack.c.b16 %v5979, %v5978
        %v6028 = vunpack.c.l.b16 %v5932
        %v6029 = vunpack.c.l.b16 %v5933
        %v6030 = vunpack.c.l.b16 %v5934
        %v6031 = vunpack.c.l.b16 %v5935
        %v6032 = vunpack.c.l.b16 %v5936
        %v6033 = vunpack.c.l.b16 %v5937
        %v6034 = vunpack.c.l.b16 %v5938
        %v6035 = vunpack.c.l.b16 %v5939
        %v6036 = vunpack.c.l.b16 %v5940
        %v6037 = vunpack.c.l.b16 %v5941
        %v6038 = vunpack.c.l.b16 %v5942
        %v6039 = vunpack.c.l.b16 %v5943
        %v6040 = vunpack.c.l.b16 %v5944
        %v6041 = vunpack.c.l.b16 %v5945
        %v6042 = vunpack.c.l.b16 %v5946
        %v6043 = vunpack.c.l.b16 %v5947
        %v6044 = vpack.c.b16 %v6029, %v6028
        %v6045 = vpack.c.b16 %v6031, %v6030
        %v6046 = vpack.c.b16 %v6033, %v6032
        %v6047 = vpack.c.b16 %v6035, %v6034
        %v6048 = vpack.c.b16 %v6037, %v6036
        %v6049 = vpack.c.b16 %v6039, %v6038
        %v6050 = vpack.c.b16 %v6041, %v6040
        %v6051 = vpack.c.b16 %v6043, %v6042
        %6060 = vmatprep.subr.bf16.mxu0 0
        %6061 = vmatpush1.bf16.msra.mxu0 %v6044
        %6062 = vmatprep.subr.bf16.mxu0 0
        %6063 = vmatpush1.bf16.msra.mxu0 %v6045
        %6064 = vmatprep.subr.bf16.mxu0 0
        %6065 = vmatpush1.bf16.msra.mxu0 %v6046
        %6066 = vmatprep.subr.bf16.mxu0 0
        %6067 = vmatpush1.bf16.msra.mxu0 %v6047
        %6068 = vmatprep.subr.bf16.mxu0 0
        %6069 = vmatpush1.bf16.msra.mxu0 %v6048
        %6070 = vmatprep.subr.bf16.mxu0 0
        %6071 = vmatpush1.bf16.msra.mxu0 %v6049
        %6072 = vmatprep.subr.bf16.mxu0 0
        %6073 = vmatpush1.bf16.msra.mxu0 %v6050
        %6074 = vmatprep.subr.bf16.mxu0 0
        %6075 = vmatpush1.bf16.msra.mxu0 %v6051
        %6076 = vmatprep.subr.bf16.mxu0 0
        %6077 = vmatpush1.bf16.msra.mxu0 0
        %6078 = vmatprep.subr.bf16.mxu0 0
        %6079 = vmatpush1.bf16.msra.mxu0 0
        %6080 = vmatprep.subr.bf16.mxu0 0
        %6081 = vmatpush1.bf16.msra.mxu0 0
        %6082 = vmatprep.subr.bf16.mxu0 0
        %6083 = vmatpush1.bf16.msra.mxu0 0
        %6084 = vmatprep.subr.bf16.mxu0 0
        %6085 = vmatpush1.bf16.msra.mxu0 0
        %6086 = vmatprep.subr.bf16.mxu0 0
        %6087 = vmatpush1.bf16.msra.mxu0 0
        %6088 = vmatprep.subr.bf16.mxu0 0
        %6089 = vmatpush1.bf16.msra.mxu0 0
        %6090 = vmatprep.subr.bf16.mxu0 0
        %6091 = vmatpush1.bf16.msra.mxu0 0
        %6092 = vmatprep.mubr.bf16.mxu0 0
        %6093 = vmatmul.mubr.bf16.gmra.mrb[0].mxu0 %v5980
        %v6094 = vpop.f32.mrb[0].mxu0
        %v6095 = vadd.f32 0.0, %v6094
        %v6096 = vpop.f32.mrb[0].mxu0
        %v6097 = vpop.f32.mrb[0].mxu0
        %v6098 = vadd.f32 0.0, %v6097
        %v6099 = vpop.f32.mrb[0].mxu0
        %6100 = vmatprep.mubr.bf16.mxu0 0
        %6101 = vmatmul.mubr.bf16.gmra.mrb[0].mxu0 %v5981
        %v6102 = vpop.f32.mrb[0].mxu0
        %v6103 = vadd.f32 0.0, %v6102
        %v6104 = vpop.f32.mrb[0].mxu0
        %v6105 = vpop.f32.mrb[0].mxu0
        %v6106 = vadd.f32 0.0, %v6105
        %v6107 = vpop.f32.mrb[0].mxu0
        %6108 = vmatprep.mubr.bf16.mxu0 0
        %6109 = vmatmul.mubr.bf16.gmra.mrb[0].mxu0 %v5982
        %v6110 = vpop.f32.mrb[0].mxu0
        %v6111 = vadd.f32 0.0, %v6110
        %v6112 = vpop.f32.mrb[0].mxu0
        %v6113 = vpop.f32.mrb[0].mxu0
        %v6114 = vadd.f32 0.0, %v6113
        %v6115 = vpop.f32.mrb[0].mxu0
        %6116 = vmatprep.mubr.bf16.mxu0 0
        %6117 = vmatmul.mubr.bf16.gmra.mrb[0].mxu0 %v5983
        %v6118 = vpop.f32.mrb[0].mxu0
        %v6119 = vadd.f32 0.0, %v6118
        %v6120 = vpop.f32.mrb[0].mxu0
        %v6121 = vpop.f32.mrb[0].mxu0
        %v6122 = vadd.f32 0.0, %v6121
        %v6123 = vpop.f32.mrb[0].mxu0
        %6124 = vmatprep.mubr.bf16.mxu0 0
        %6125 = vmatmul.mubr.bf16.gmra.mrb[0].mxu0 %v5984
        %v6126 = vpop.f32.mrb[0].mxu0
        %v6127 = vadd.f32 0.0, %v6126
        %v6128 = vpop.f32.mrb[0].mxu0
        %v6129 = vpop.f32.mrb[0].mxu0
        %v6130 = vadd.f32 0.0, %v6129
        %v6131 = vpop.f32.mrb[0].mxu0
        %6132 = vmatprep.mubr.bf16.mxu0 0
        %6133 = vmatmul.mubr.bf16.gmra.mrb[0].mxu0 %v5985
        %v6134 = vpop.f32.mrb[0].mxu0
        %v6135 = vadd.f32 0.0, %v6134
        %v6136 = vpop.f32.mrb[0].mxu0
        %v6137 = vpop.f32.mrb[0].mxu0
        %v6138 = vadd.f32 0.0, %v6137
        %v6139 = vpop.f32.mrb[0].mxu0
        %6140 = vmatprep.mubr.bf16.mxu0 0
        %6141 = vmatmul.mubr.bf16.gmra.mrb[0].mxu0 %v5986
        %v6142 = vpop.f32.mrb[0].mxu0
        %v6143 = vadd.f32 0.0, %v6142
        %v6144 = vpop.f32.mrb[0].mxu0
        %v6145 = vpop.f32.mrb[0].mxu0
        %v6146 = vadd.f32 0.0, %v6145
        %v6147 = vpop.f32.mrb[0].mxu0
        %6148 = vmatprep.mubr.bf16.mxu0 0
        %6149 = vmatmul.mubr.bf16.gmra.mrb[0].mxu0 %v5987
        %v6150 = vpop.f32.mrb[0].mxu0
        %v6151 = vadd.f32 0.0, %v6150
        %v6152 = vpop.f32.mrb[0].mxu0
        %v6153 = vpop.f32.mrb[0].mxu0
        %v6154 = vadd.f32 0.0, %v6153
        %v6155 = vpop.f32.mrb[0].mxu0
        %6156 = vmatprep.mubr.bf16.mxu0 0
        %6157 = vmatmul.mubr.bf16.gmra.mrb[0].mxu0 %v5988
        %v6158 = vpop.f32.mrb[0].mxu0
        %v6159 = vadd.f32 0.0, %v6158
        %v6160 = vpop.f32.mrb[0].mxu0
        %v6161 = vpop.f32.mrb[0].mxu0
        %v6162 = vadd.f32 0.0, %v6161
        %v6163 = vpop.f32.mrb[0].mxu0
        %6164 = vmatprep.mubr.bf16.mxu0 0
        %6165 = vmatmul.mubr.bf16.gmra.mrb[0].mxu0 %v5989
        %v6166 = vpop.f32.mrb[0].mxu0
        %v6167 = vadd.f32 0.0, %v6166
        %v6168 = vpop.f32.mrb[0].mxu0
        %v6169 = vpop.f32.mrb[0].mxu0
        %v6170 = vadd.f32 0.0, %v6169
        %v6171 = vpop.f32.mrb[0].mxu0
        %6172 = vmatprep.mubr.bf16.mxu0 0
        %6173 = vmatmul.mubr.bf16.gmra.mrb[0].mxu0 %v5990
        %v6174 = vpop.f32.mrb[0].mxu0
        %v6175 = vadd.f32 0.0, %v6174
        %v6176 = vpop.f32.mrb[0].mxu0
        %v6177 = vpop.f32.mrb[0].mxu0
        %v6178 = vadd.f32 0.0, %v6177
        %v6179 = vpop.f32.mrb[0].mxu0
        %6180 = vmatprep.mubr.bf16.mxu0 0
        %6181 = vmatmul.mubr.bf16.gmra.mrb[0].mxu0 %v5991
        %v6182 = vpop.f32.mrb[0].mxu0
        %v6183 = vadd.f32 0.0, %v6182
        %v6184 = vpop.f32.mrb[0].mxu0
        %v6185 = vpop.f32.mrb[0].mxu0
        %v6186 = vadd.f32 0.0, %v6185
        %v6187 = vpop.f32.mrb[0].mxu0
        %6188 = vmatprep.mubr.bf16.mxu0 0
        %6189 = vmatmul.mubr.bf16.gmra.mrb[0].mxu0 %v5992
        %v6190 = vpop.f32.mrb[0].mxu0
        %v6191 = vadd.f32 0.0, %v6190
        %v6192 = vpop.f32.mrb[0].mxu0
        %v6193 = vpop.f32.mrb[0].mxu0
        %v6194 = vadd.f32 0.0, %v6193
        %v6195 = vpop.f32.mrb[0].mxu0
        %6196 = vmatprep.mubr.bf16.mxu0 0
        %6197 = vmatmul.mubr.bf16.gmra.mrb[0].mxu0 %v5993
        %v6198 = vpop.f32.mrb[0].mxu0
        %v6199 = vadd.f32 0.0, %v6198
        %v6200 = vpop.f32.mrb[0].mxu0
        %v6201 = vpop.f32.mrb[0].mxu0
        %v6202 = vadd.f32 0.0, %v6201
        %v6203 = vpop.f32.mrb[0].mxu0
        %6204 = vmatprep.mubr.bf16.mxu0 0
        %6205 = vmatmul.mubr.bf16.gmra.mrb[0].mxu0 %v5994
        %v6206 = vpop.f32.mrb[0].mxu0
        %v6207 = vadd.f32 0.0, %v6206
        %v6208 = vpop.f32.mrb[0].mxu0
        %v6209 = vpop.f32.mrb[0].mxu0
        %v6210 = vadd.f32 0.0, %v6209
        %v6211 = vpop.f32.mrb[0].mxu0
        %6212 = vmatprep.mubr.bf16.mxu0 0
        %6213 = vmatmul.mubr.bf16.gmra.mrb[0].mxu0 %v5995
        %v6214 = vpop.f32.mrb[0].mxu0
        %v6215 = vadd.f32 0.0, %v6214
        %v6216 = vpop.f32.mrb[0].mxu0
        %v6217 = vpop.f32.mrb[0].mxu0
        %v6218 = vadd.f32 0.0, %v6217
        %v6219 = vpop.f32.mrb[0].mxu0
        %6220 = vdwg.mxu0
        %v6221 = vadd.f32 %v5723, %v6095
        %v6222 = vadd.f32 %v5724, %v6098
        %v6223 = vadd.f32 %v5725, %v6103
        %v6224 = vadd.f32 %v5726, %v6106
        %v6225 = vadd.f32 %v5727, %v6111
        %v6226 = vadd.f32 %v5728, %v6114
        %v6227 = vadd.f32 %v5729, %v6119
        %v6228 = vadd.f32 %v5730, %v6122
        %v6229 = vadd.f32 %v5731, %v6127
        %v6230 = vadd.f32 %v5732, %v6130
        %v6231 = vadd.f32 %v5733, %v6135
        %v6232 = vadd.f32 %v5734, %v6138
        %v6233 = vadd.f32 %v5735, %v6143
        %v6234 = vadd.f32 %v5736, %v6146
        %v6235 = vadd.f32 %v5737, %v6151
        %v6236 = vadd.f32 %v5738, %v6154
        %v6237 = vadd.f32 %v5739, %v6159
        %v6238 = vadd.f32 %v5740, %v6162
        %v6239 = vadd.f32 %v5741, %v6167
        %v6240 = vadd.f32 %v5742, %v6170
        %v6241 = vadd.f32 %v5743, %v6175
        %v6242 = vadd.f32 %v5744, %v6178
        %v6243 = vadd.f32 %v5745, %v6183
        %v6244 = vadd.f32 %v5746, %v6186
        %v6245 = vadd.f32 %v5747, %v6191
        %v6246 = vadd.f32 %v5748, %v6194
        %v6247 = vadd.f32 %v5749, %v6199
        %v6248 = vadd.f32 %v5750, %v6202
        %v6249 = vadd.f32 %v5751, %v6207
        %v6250 = vadd.f32 %v5752, %v6210
        %v6251 = vadd.f32 %v5753, %v6215
        %v6252 = vadd.f32 %v5754, %v6218
        %v6253 = vld [vmem:[%s4] sm:$0x1]
        %v6255 = vlaneseq
        %v6256 = vshrl.u32 %v6255, 7
        %v6257 = vsub.s32 0, %v6256
        %v6258 = vrot.slane %v6253, %v6257
        %v6260 = vadd.f32 %v6221, %v6258
        %v6261 = vadd.f32 %v6222, %v6258
        %v6262 = vadd.f32 %v6223, %v6258
        %v6263 = vadd.f32 %v6224, %v6258
        %v6264 = vadd.f32 %v6225, %v6258
        %v6265 = vadd.f32 %v6226, %v6258
        %v6266 = vadd.f32 %v6227, %v6258
        %v6267 = vadd.f32 %v6228, %v6258
        %v6268 = vadd.f32 %v6229, %v6258
        %v6269 = vadd.f32 %v6230, %v6258
        %v6270 = vadd.f32 %v6231, %v6258
        %v6271 = vadd.f32 %v6232, %v6258
        %v6272 = vadd.f32 %v6233, %v6258
        %v6273 = vadd.f32 %v6234, %v6258
        %v6274 = vadd.f32 %v6235, %v6258
        %v6275 = vadd.f32 %v6236, %v6258
        %v6276 = vadd.f32 %v6237, %v6258
        %v6277 = vadd.f32 %v6238, %v6258
        %v6278 = vadd.f32 %v6239, %v6258
        %v6279 = vadd.f32 %v6240, %v6258
        %v6280 = vadd.f32 %v6241, %v6258
        %v6281 = vadd.f32 %v6242, %v6258
        %v6282 = vadd.f32 %v6243, %v6258
        %v6283 = vadd.f32 %v6244, %v6258
        %v6284 = vadd.f32 %v6245, %v6258
        %v6285 = vadd.f32 %v6246, %v6258
        %v6286 = vadd.f32 %v6247, %v6258
        %v6287 = vadd.f32 %v6248, %v6258
        %v6288 = vadd.f32 %v6249, %v6258
        %v6289 = vadd.f32 %v6250, %v6258
        %v6290 = vadd.f32 %v6251, %v6258
        %v6291 = vadd.f32 %v6252, %v6258
        %v6292 = vmax.f32 %v6260, 0.0
        %v6293 = vmax.f32 %v6261, 0.0
        %v6294 = vmax.f32 %v6262, 0.0
        %v6295 = vmax.f32 %v6263, 0.0
        %v6296 = vmax.f32 %v6264, 0.0
        %v6297 = vmax.f32 %v6265, 0.0
        %v6298 = vmax.f32 %v6266, 0.0
        %v6299 = vmax.f32 %v6267, 0.0
        %v6300 = vmax.f32 %v6268, 0.0
        %v6301 = vmax.f32 %v6269, 0.0
        %v6302 = vmax.f32 %v6270, 0.0
        %v6303 = vmax.f32 %v6271, 0.0
        %v6304 = vmax.f32 %v6272, 0.0
        %v6305 = vmax.f32 %v6273, 0.0
        %v6306 = vmax.f32 %v6274, 0.0
        %v6307 = vmax.f32 %v6275, 0.0
        %v6308 = vmax.f32 %v6276, 0.0
        %v6309 = vmax.f32 %v6277, 0.0
        %v6310 = vmax.f32 %v6278, 0.0
        %v6311 = vmax.f32 %v6279, 0.0
        %v6312 = vmax.f32 %v6280, 0.0
        %v6313 = vmax.f32 %v6281, 0.0
        %v6314 = vmax.f32 %v6282, 0.0
        %v6315 = vmax.f32 %v6283, 0.0
        %v6316 = vmax.f32 %v6284, 0.0
        %v6317 = vmax.f32 %v6285, 0.0
        %v6318 = vmax.f32 %v6286, 0.0
        %v6319 = vmax.f32 %v6287, 0.0
        %v6320 = vmax.f32 %v6288, 0.0
        %v6321 = vmax.f32 %v6289, 0.0
        %v6322 = vmax.f32 %v6290, 0.0
        %v6323 = vmax.f32 %v6291, 0.0
        %v6324 = vpack.c.bf16 %v6293, %v6292
        %v6325 = vpack.c.bf16 %v6295, %v6294
        %v6326 = vpack.c.bf16 %v6297, %v6296
        %v6327 = vpack.c.bf16 %v6299, %v6298
        %v6328 = vpack.c.bf16 %v6301, %v6300
        %v6329 = vpack.c.bf16 %v6303, %v6302
        %v6330 = vpack.c.bf16 %v6305, %v6304
        %v6331 = vpack.c.bf16 %v6307, %v6306
        %v6332 = vpack.c.bf16 %v6309, %v6308
        %v6333 = vpack.c.bf16 %v6311, %v6310
        %v6334 = vpack.c.bf16 %v6313, %v6312
        %v6335 = vpack.c.bf16 %v6315, %v6314
        %v6336 = vpack.c.bf16 %v6317, %v6316
        %v6337 = vpack.c.bf16 %v6319, %v6318
        %v6338 = vpack.c.bf16 %v6321, %v6320
        %v6339 = vpack.c.bf16 %v6323, %v6322
        %v6340 = vld [vmem:[#allocation9] sm:$0xf]
        %v6341 = vld [vmem:[#allocation9 + $0x4] sm:$0xf]
        %v6342 = vld [vmem:[#allocation9 + $0x8] sm:$0xf]
        %v6343 = vld [vmem:[#allocation9 + $0xc] sm:$0xf]
        %v6344 = vld [vmem:[#allocation9 + $0x10] sm:$0xf]
        %v6345 = vld [vmem:[#allocation9 + $0x14] sm:$0xf]
        %v6346 = vld [vmem:[#allocation9 + $0x18] sm:$0xf]
        %v6347 = vld [vmem:[#allocation9 + $0x1c] sm:$0xf]
        %v6348 = vld [vmem:[#allocation9 + $0x20] sm:$0xf]
        %v6349 = vld [vmem:[#allocation9 + $0x24] sm:$0xf]
        %v6350 = vld [vmem:[#allocation9 + $0x28] sm:$0xf]
        %v6351 = vld [vmem:[#allocation9 + $0x2c] sm:$0xf]
        %v6352 = vld [vmem:[#allocation9 + $0x30] sm:$0xf]
        %v6353 = vld [vmem:[#allocation9 + $0x34] sm:$0xf]
        %v6354 = vld [vmem:[#allocation9 + $0x38] sm:$0xf]
        %v6355 = vld [vmem:[#allocation9 + $0x3c] sm:$0xf]
        %v6356 = vld [vmem:[%s6] sm:$0x1]
        %v6358 = vlaneseq
        %v6359 = vshrl.u32 %v6358, 7
        %v6360 = vsub.s32 0, %v6359
        %v6361 = vrot.slane %v6356, %v6360
        %v6379 = vunpack.c.l.b16 %v6340
        %v6380 = vunpack.c.l.b16 %v6341
        %v6381 = vunpack.c.l.b16 %v6342
        %v6382 = vunpack.c.l.b16 %v6343
        %v6383 = vunpack.c.l.b16 %v6344
        %v6384 = vunpack.c.l.b16 %v6345
        %v6385 = vunpack.c.l.b16 %v6346
        %v6386 = vunpack.c.l.b16 %v6347
        %v6387 = vunpack.c.l.b16 %v6348
        %v6388 = vunpack.c.l.b16 %v6349
        %v6389 = vunpack.c.l.b16 %v6350
        %v6390 = vunpack.c.l.b16 %v6351
        %v6391 = vunpack.c.l.b16 %v6352
        %v6392 = vunpack.c.l.b16 %v6353
        %v6393 = vunpack.c.l.b16 %v6354
        %v6394 = vunpack.c.l.b16 %v6355
        %v6395 = vpack.c.b16 %v6380, %v6379
        %v6396 = vpack.c.b16 %v6382, %v6381
        %v6397 = vpack.c.b16 %v6384, %v6383
        %v6398 = vpack.c.b16 %v6386, %v6385
        %v6399 = vpack.c.b16 %v6388, %v6387
        %v6400 = vpack.c.b16 %v6390, %v6389
        %v6401 = vpack.c.b16 %v6392, %v6391
        %v6402 = vpack.c.b16 %v6394, %v6393
        %6411 = vmatprep.subr.bf16.mxu0 0
        %6412 = vmatpush1.bf16.msra.mxu0 %v6395
        %6413 = vmatprep.subr.bf16.mxu0 0
        %6414 = vmatpush1.bf16.msra.mxu0 %v6396
        %6415 = vmatprep.subr.bf16.mxu0 0
        %6416 = vmatpush1.bf16.msra.mxu0 %v6397
        %6417 = vmatprep.subr.bf16.mxu0 0
        %6418 = vmatpush1.bf16.msra.mxu0 %v6398
        %6419 = vmatprep.subr.bf16.mxu0 0
        %6420 = vmatpush1.bf16.msra.mxu0 %v6399
        %6421 = vmatprep.subr.bf16.mxu0 0
        %6422 = vmatpush1.bf16.msra.mxu0 %v6400
        %6423 = vmatprep.subr.bf16.mxu0 0
        %6424 = vmatpush1.bf16.msra.mxu0 %v6401
        %6425 = vmatprep.subr.bf16.mxu0 0
        %6426 = vmatpush1.bf16.msra.mxu0 %v6402
        %6427 = vmatprep.subr.bf16.mxu0 0
        %6428 = vmatpush1.bf16.msra.mxu0 0
        %6429 = vmatprep.subr.bf16.mxu0 0
        %6430 = vmatpush1.bf16.msra.mxu0 0
        %6431 = vmatprep.subr.bf16.mxu0 0
        %6432 = vmatpush1.bf16.msra.mxu0 0
        %6433 = vmatprep.subr.bf16.mxu0 0
        %6434 = vmatpush1.bf16.msra.mxu0 0
        %6435 = vmatprep.subr.bf16.mxu0 0
        %6436 = vmatpush1.bf16.msra.mxu0 0
        %6437 = vmatprep.subr.bf16.mxu0 0
        %6438 = vmatpush1.bf16.msra.mxu0 0
        %6439 = vmatprep.subr.bf16.mxu0 0
        %6440 = vmatpush1.bf16.msra.mxu0 0
        %6441 = vmatprep.subr.bf16.mxu0 0
        %6442 = vmatpush1.bf16.msra.mxu0 0
        %6443 = vmatprep.mubr.bf16.mxu0 0
        %6444 = vmatmul.mubr.bf16.gmra.mrb[0].mxu0 %v6324
        %v6445 = vpop.f32.mrb[0].mxu0
        %v6446 = vadd.f32 %v6361, %v6445
        %v6447 = vpop.f32.mrb[0].mxu0
        %v6448 = vpop.f32.mrb[0].mxu0
        %v6449 = vadd.f32 %v6361, %v6448
        %v6450 = vpop.f32.mrb[0].mxu0
        %6451 = vmatprep.mubr.bf16.mxu0 0
        %6452 = vmatmul.mubr.bf16.gmra.mrb[0].mxu0 %v6325
        %v6453 = vpop.f32.mrb[0].mxu0
        %v6454 = vadd.f32 %v6361, %v6453
        %v6455 = vpop.f32.mrb[0].mxu0
        %v6456 = vpop.f32.mrb[0].mxu0
        %v6457 = vadd.f32 %v6361, %v6456
        %v6458 = vpop.f32.mrb[0].mxu0
        %6459 = vmatprep.mubr.bf16.mxu0 0
        %6460 = vmatmul.mubr.bf16.gmra.mrb[0].mxu0 %v6326
        %v6461 = vpop.f32.mrb[0].mxu0
        %v6462 = vadd.f32 %v6361, %v6461
        %v6463 = vpop.f32.mrb[0].mxu0
        %v6464 = vpop.f32.mrb[0].mxu0
        %v6465 = vadd.f32 %v6361, %v6464
        %v6466 = vpop.f32.mrb[0].mxu0
        %6467 = vmatprep.mubr.bf16.mxu0 0
        %6468 = vmatmul.mubr.bf16.gmra.mrb[0].mxu0 %v6327
        %v6469 = vpop.f32.mrb[0].mxu0
        %v6470 = vadd.f32 %v6361, %v6469
        %v6471 = vpop.f32.mrb[0].mxu0
        %v6472 = vpop.f32.mrb[0].mxu0
        %v6473 = vadd.f32 %v6361, %v6472
        %v6474 = vpop.f32.mrb[0].mxu0
        %6475 = vmatprep.mubr.bf16.mxu0 0
        %6476 = vmatmul.mubr.bf16.gmra.mrb[0].mxu0 %v6328
        %v6477 = vpop.f32.mrb[0].mxu0
        %v6478 = vadd.f32 %v6361, %v6477
        %v6479 = vpop.f32.mrb[0].mxu0
        %v6480 = vpop.f32.mrb[0].mxu0
        %v6481 = vadd.f32 %v6361, %v6480
        %v6482 = vpop.f32.mrb[0].mxu0
        %6483 = vmatprep.mubr.bf16.mxu0 0
        %6484 = vmatmul.mubr.bf16.gmra.mrb[0].mxu0 %v6329
        %v6485 = vpop.f32.mrb[0].mxu0
        %v6486 = vadd.f32 %v6361, %v6485
        %v6487 = vpop.f32.mrb[0].mxu0
        %v6488 = vpop.f32.mrb[0].mxu0
        %v6489 = vadd.f32 %v6361, %v6488
        %v6490 = vpop.f32.mrb[0].mxu0
        %6491 = vmatprep.mubr.bf16.mxu0 0
        %6492 = vmatmul.mubr.bf16.gmra.mrb[0].mxu0 %v6330
        %v6493 = vpop.f32.mrb[0].mxu0
        %v6494 = vadd.f32 %v6361, %v6493
        %v6495 = vpop.f32.mrb[0].mxu0
        %v6496 = vpop.f32.mrb[0].mxu0
        %v6497 = vadd.f32 %v6361, %v6496
        %v6498 = vpop.f32.mrb[0].mxu0
        %6499 = vmatprep.mubr.bf16.mxu0 0
        %6500 = vmatmul.mubr.bf16.gmra.mrb[0].mxu0 %v6331
        %v6501 = vpop.f32.mrb[0].mxu0
        %v6502 = vadd.f32 %v6361, %v6501
        %v6503 = vpop.f32.mrb[0].mxu0
        %v6504 = vpop.f32.mrb[0].mxu0
        %v6505 = vadd.f32 %v6361, %v6504
        %v6506 = vpop.f32.mrb[0].mxu0
        %6507 = vdwg.mxu0
        %v6508 = vmax.f32 %v6446, 0.0
        %v6509 = vmax.f32 %v6449, 0.0
        %v6510 = vmax.f32 %v6454, 0.0
        %v6511 = vmax.f32 %v6457, 0.0
        %v6512 = vmax.f32 %v6462, 0.0
        %v6513 = vmax.f32 %v6465, 0.0
        %v6514 = vmax.f32 %v6470, 0.0
        %v6515 = vmax.f32 %v6473, 0.0
        %v6516 = vmax.f32 %v6478, 0.0
        %v6517 = vmax.f32 %v6481, 0.0
        %v6518 = vmax.f32 %v6486, 0.0
        %v6519 = vmax.f32 %v6489, 0.0
        %v6520 = vmax.f32 %v6494, 0.0
        %v6521 = vmax.f32 %v6497, 0.0
        %v6522 = vmax.f32 %v6502, 0.0
        %v6523 = vmax.f32 %v6505, 0.0
        %v6524 = vld [vmem:[%s358] sm:$0xf]
        %v6525 = vld [vmem:[%s358 + $0x4] sm:$0xf]
        %v6526 = vld [vmem:[%s358 + $0x8] sm:$0xf]
        %v6527 = vld [vmem:[%s358 + $0xc] sm:$0xf]
        %v6528 = vld [vmem:[%s358 + $0x10] sm:$0xf]
        %v6529 = vld [vmem:[%s358 + $0x14] sm:$0xf]
        %v6530 = vld [vmem:[%s358 + $0x18] sm:$0xf]
        %v6531 = vld [vmem:[%s358 + $0x1c] sm:$0xf]
        %v6532 = vld [vmem:[%s358 + $0x20] sm:$0xf]
        %v6533 = vld [vmem:[%s358 + $0x24] sm:$0xf]
        %v6534 = vld [vmem:[%s358 + $0x28] sm:$0xf]
        %v6535 = vld [vmem:[%s358 + $0x2c] sm:$0xf]
        %v6536 = vld [vmem:[%s358 + $0x30] sm:$0xf]
        %v6537 = vld [vmem:[%s358 + $0x34] sm:$0xf]
        %v6538 = vld [vmem:[%s358 + $0x38] sm:$0xf]
        %v6539 = vld [vmem:[%s358 + $0x3c] sm:$0xf]
        %v6540 = vld [vmem:[#allocation11] sm:$0xf]
        %v6541 = vld [vmem:[#allocation11 + $0x4] sm:$0xf]
        %v6542 = vld [vmem:[#allocation11 + $0x8] sm:$0xf]
        %v6543 = vld [vmem:[#allocation11 + $0xc] sm:$0xf]
        %v6544 = vld [vmem:[#allocation11 + $0x10] sm:$0xf]
        %v6545 = vld [vmem:[#allocation11 + $0x14] sm:$0xf]
        %v6546 = vld [vmem:[#allocation11 + $0x18] sm:$0xf]
        %v6547 = vld [vmem:[#allocation11 + $0x1c] sm:$0xf]
        %v6548 = vld [vmem:[#allocation11 + $0x20] sm:$0xf]
        %v6549 = vld [vmem:[#allocation11 + $0x24] sm:$0xf]
        %v6550 = vld [vmem:[#allocation11 + $0x28] sm:$0xf]
        %v6551 = vld [vmem:[#allocation11 + $0x2c] sm:$0xf]
        %v6552 = vld [vmem:[#allocation11 + $0x30] sm:$0xf]
        %v6553 = vld [vmem:[#allocation11 + $0x34] sm:$0xf]
        %v6554 = vld [vmem:[#allocation11 + $0x38] sm:$0xf]
        %v6555 = vld [vmem:[#allocation11 + $0x3c] sm:$0xf]
        %v6556 = vld [vmem:[%s8] sm:$0x1]
        %v6558 = vlaneseq
        %v6559 = vshrl.u32 %v6558, 7
        %v6560 = vsub.s32 0, %v6559
        %v6561 = vrot.slane %v6556, %v6560
        %v6579 = vunpack.c.l.b16 %v6524
        %v6580 = vunpack.c.l.b16 %v6525
        %v6581 = vunpack.c.l.b16 %v6526
        %v6582 = vunpack.c.l.b16 %v6527
        %v6583 = vunpack.c.l.b16 %v6528
        %v6584 = vunpack.c.l.b16 %v6529
        %v6585 = vunpack.c.l.b16 %v6530
        %v6586 = vunpack.c.l.b16 %v6531
        %v6587 = vunpack.c.l.b16 %v6532
        %v6588 = vunpack.c.l.b16 %v6533
        %v6589 = vunpack.c.l.b16 %v6534
        %v6590 = vunpack.c.l.b16 %v6535
        %v6591 = vunpack.c.l.b16 %v6536
        %v6592 = vunpack.c.l.b16 %v6537
        %v6593 = vunpack.c.l.b16 %v6538
        %v6594 = vunpack.c.l.b16 %v6539
        %v6595 = vpack.c.b16 %v6580, %v6579
        %v6596 = vpack.c.b16 %v6582, %v6581
        %v6597 = vpack.c.b16 %v6584, %v6583
        %v6598 = vpack.c.b16 %v6586, %v6585
        %v6599 = vpack.c.b16 %v6588, %v6587
        %v6600 = vpack.c.b16 %v6590, %v6589
        %v6601 = vpack.c.b16 %v6592, %v6591
        %v6602 = vpack.c.b16 %v6594, %v6593
        %v6627 = vunpack.c.l.b16 %v6540
        %v6628 = vunpack.c.l.b16 %v6541
        %v6629 = vunpack.c.l.b16 %v6542
        %v6630 = vunpack.c.l.b16 %v6543
        %v6631 = vunpack.c.l.b16 %v6544
        %v6632 = vunpack.c.l.b16 %v6545
        %v6633 = vunpack.c.l.b16 %v6546
        %v6634 = vunpack.c.l.b16 %v6547
        %v6635 = vunpack.c.l.b16 %v6548
        %v6636 = vunpack.c.l.b16 %v6549
        %v6637 = vunpack.c.l.b16 %v6550
        %v6638 = vunpack.c.l.b16 %v6551
        %v6639 = vunpack.c.l.b16 %v6552
        %v6640 = vunpack.c.l.b16 %v6553
        %v6641 = vunpack.c.l.b16 %v6554
        %v6642 = vunpack.c.l.b16 %v6555
        %v6643 = vpack.c.b16 %v6628, %v6627
        %v6644 = vpack.c.b16 %v6630, %v6629
        %v6645 = vpack.c.b16 %v6632, %v6631
        %v6646 = vpack.c.b16 %v6634, %v6633
        %v6647 = vpack.c.b16 %v6636, %v6635
        %v6648 = vpack.c.b16 %v6638, %v6637
        %v6649 = vpack.c.b16 %v6640, %v6639
        %v6650 = vpack.c.b16 %v6642, %v6641
        %6659 = vmatprep.subr.bf16.mxu0 0
        %6660 = vmatpush1.bf16.msra.mxu0 %v6643
        %6661 = vmatprep.subr.bf16.mxu0 0
        %6662 = vmatpush1.bf16.msra.mxu0 %v6644
        %6663 = vmatprep.subr.bf16.mxu0 0
        %6664 = vmatpush1.bf16.msra.mxu0 %v6645
        %6665 = vmatprep.subr.bf16.mxu0 0
        %6666 = vmatpush1.bf16.msra.mxu0 %v6646
        %6667 = vmatprep.subr.bf16.mxu0 0
        %6668 = vmatpush1.bf16.msra.mxu0 %v6647
        %6669 = vmatprep.subr.bf16.mxu0 0
        %6670 = vmatpush1.bf16.msra.mxu0 %v6648
        %6671 = vmatprep.subr.bf16.mxu0 0
        %6672 = vmatpush1.bf16.msra.mxu0 %v6649
        %6673 = vmatprep.subr.bf16.mxu0 0
        %6674 = vmatpush1.bf16.msra.mxu0 %v6650
        %6675 = vmatprep.subr.bf16.mxu0 0
        %6676 = vmatpush1.bf16.msra.mxu0 0
        %6677 = vmatprep.subr.bf16.mxu0 0
        %6678 = vmatpush1.bf16.msra.mxu0 0
        %6679 = vmatprep.subr.bf16.mxu0 0
        %6680 = vmatpush1.bf16.msra.mxu0 0
        %6681 = vmatprep.subr.bf16.mxu0 0
        %6682 = vmatpush1.bf16.msra.mxu0 0
        %6683 = vmatprep.subr.bf16.mxu0 0
        %6684 = vmatpush1.bf16.msra.mxu0 0
        %6685 = vmatprep.subr.bf16.mxu0 0
        %6686 = vmatpush1.bf16.msra.mxu0 0
        %6687 = vmatprep.subr.bf16.mxu0 0
        %6688 = vmatpush1.bf16.msra.mxu0 0
        %6689 = vmatprep.subr.bf16.mxu0 0
        %6690 = vmatpush1.bf16.msra.mxu0 0
        %6691 = vmatprep.mubr.bf16.mxu0 0
        %6692 = vmatmul.mubr.bf16.gmra.mrb[0].mxu0 %v6595
        %v6693 = vpop.f32.mrb[0].mxu0
        %v6694 = vadd.f32 %v6561, %v6693
        %v6695 = vpop.f32.mrb[0].mxu0
        %v6696 = vpop.f32.mrb[0].mxu0
        %v6697 = vadd.f32 %v6561, %v6696
        %v6698 = vpop.f32.mrb[0].mxu0
        %6699 = vmatprep.mubr.bf16.mxu0 0
        %6700 = vmatmul.mubr.bf16.gmra.mrb[0].mxu0 %v6596
        %v6701 = vpop.f32.mrb[0].mxu0
        %v6702 = vadd.f32 %v6561, %v6701
        %v6703 = vpop.f32.mrb[0].mxu0
        %v6704 = vpop.f32.mrb[0].mxu0
        %v6705 = vadd.f32 %v6561, %v6704
        %v6706 = vpop.f32.mrb[0].mxu0
        %6707 = vmatprep.mubr.bf16.mxu0 0
        %6708 = vmatmul.mubr.bf16.gmra.mrb[0].mxu0 %v6597
        %v6709 = vpop.f32.mrb[0].mxu0
        %v6710 = vadd.f32 %v6561, %v6709
        %v6711 = vpop.f32.mrb[0].mxu0
        %v6712 = vpop.f32.mrb[0].mxu0
        %v6713 = vadd.f32 %v6561, %v6712
        %v6714 = vpop.f32.mrb[0].mxu0
        %6715 = vmatprep.mubr.bf16.mxu0 0
        %6716 = vmatmul.mubr.bf16.gmra.mrb[0].mxu0 %v6598
        %v6717 = vpop.f32.mrb[0].mxu0
        %v6718 = vadd.f32 %v6561, %v6717
        %v6719 = vpop.f32.mrb[0].mxu0
        %v6720 = vpop.f32.mrb[0].mxu0
        %v6721 = vadd.f32 %v6561, %v6720
        %v6722 = vpop.f32.mrb[0].mxu0
        %6723 = vmatprep.mubr.bf16.mxu0 0
        %6724 = vmatmul.mubr.bf16.gmra.mrb[0].mxu0 %v6599
        %v6725 = vpop.f32.mrb[0].mxu0
        %v6726 = vadd.f32 %v6561, %v6725
        %v6727 = vpop.f32.mrb[0].mxu0
        %v6728 = vpop.f32.mrb[0].mxu0
        %v6729 = vadd.f32 %v6561, %v6728
        %v6730 = vpop.f32.mrb[0].mxu0
        %6731 = vmatprep.mubr.bf16.mxu0 0
        %6732 = vmatmul.mubr.bf16.gmra.mrb[0].mxu0 %v6600
        %v6733 = vpop.f32.mrb[0].mxu0
        %v6734 = vadd.f32 %v6561, %v6733
        %v6735 = vpop.f32.mrb[0].mxu0
        %v6736 = vpop.f32.mrb[0].mxu0
        %v6737 = vadd.f32 %v6561, %v6736
        %v6738 = vpop.f32.mrb[0].mxu0
        %6739 = vmatprep.mubr.bf16.mxu0 0
        %6740 = vmatmul.mubr.bf16.gmra.mrb[0].mxu0 %v6601
        %v6741 = vpop.f32.mrb[0].mxu0
        %v6742 = vadd.f32 %v6561, %v6741
        %v6743 = vpop.f32.mrb[0].mxu0
        %v6744 = vpop.f32.mrb[0].mxu0
        %v6745 = vadd.f32 %v6561, %v6744
        %v6746 = vpop.f32.mrb[0].mxu0
        %6747 = vmatprep.mubr.bf16.mxu0 0
        %6748 = vmatmul.mubr.bf16.gmra.mrb[0].mxu0 %v6602
        %v6749 = vpop.f32.mrb[0].mxu0
        %v6750 = vadd.f32 %v6561, %v6749
        %v6751 = vpop.f32.mrb[0].mxu0
        %v6752 = vpop.f32.mrb[0].mxu0
        %v6753 = vadd.f32 %v6561, %v6752
        %v6754 = vpop.f32.mrb[0].mxu0
        %6755 = vdwg.mxu0
        %v6756 = vadd.f32 %v6508, %v6694
        %v6757 = vadd.f32 %v6509, %v6697
        %v6758 = vadd.f32 %v6510, %v6702
        %v6759 = vadd.f32 %v6511, %v6705
        %v6760 = vadd.f32 %v6512, %v6710
        %v6761 = vadd.f32 %v6513, %v6713
        %v6762 = vadd.f32 %v6514, %v6718
        %v6763 = vadd.f32 %v6515, %v6721
        %v6764 = vadd.f32 %v6516, %v6726
        %v6765 = vadd.f32 %v6517, %v6729
        %v6766 = vadd.f32 %v6518, %v6734
        %v6767 = vadd.f32 %v6519, %v6737
        %v6768 = vadd.f32 %v6520, %v6742
        %v6769 = vadd.f32 %v6521, %v6745
        %v6770 = vadd.f32 %v6522, %v6750
        %v6771 = vadd.f32 %v6523, %v6753
        %v6772 = vmax.f32 %v6756, 0.0
        %v6773 = vmax.f32 %v6757, 0.0
        %v6774 = vmax.f32 %v6758, 0.0
        %v6775 = vmax.f32 %v6759, 0.0
        %v6776 = vmax.f32 %v6760, 0.0
        %v6777 = vmax.f32 %v6761, 0.0
        %v6778 = vmax.f32 %v6762, 0.0
        %v6779 = vmax.f32 %v6763, 0.0
        %v6780 = vmax.f32 %v6764, 0.0
        %v6781 = vmax.f32 %v6765, 0.0
        %v6782 = vmax.f32 %v6766, 0.0
        %v6783 = vmax.f32 %v6767, 0.0
        %v6784 = vmax.f32 %v6768, 0.0
        %v6785 = vmax.f32 %v6769, 0.0
        %v6786 = vmax.f32 %v6770, 0.0
        %v6787 = vmax.f32 %v6771, 0.0
        %v6788 = vpack.c.bf16 %v6773, %v6772
        %v6789 = vpack.c.bf16 %v6775, %v6774
        %v6790 = vpack.c.bf16 %v6777, %v6776
        %v6791 = vpack.c.bf16 %v6779, %v6778
        %v6792 = vpack.c.bf16 %v6781, %v6780
        %v6793 = vpack.c.bf16 %v6783, %v6782
        %v6794 = vpack.c.bf16 %v6785, %v6784
        %v6795 = vpack.c.bf16 %v6787, %v6786
        %v6804 = vunpack.c.l.b16 %v6788
        %v6805 = vunpack.c.h.b16 %v6788
        %v6806 = vunpack.c.l.b16 %v6789
        %v6807 = vunpack.c.h.b16 %v6789
        %v6808 = vunpack.c.l.b16 %v6790
        %v6809 = vunpack.c.h.b16 %v6790
        %v6810 = vunpack.c.l.b16 %v6791
        %v6811 = vunpack.c.h.b16 %v6791
        %v6812 = vunpack.c.l.b16 %v6792
        %v6813 = vunpack.c.h.b16 %v6792
        %v6814 = vunpack.c.l.b16 %v6793
        %v6815 = vunpack.c.h.b16 %v6793
        %v6816 = vunpack.c.l.b16 %v6794
        %v6817 = vunpack.c.h.b16 %v6794
        %v6818 = vunpack.c.l.b16 %v6795
        %v6819 = vunpack.c.h.b16 %v6795
        %v6820 = vpack.c.b16 %v6804, %v6804
        %v6821 = vpack.c.b16 %v6805, %v6805
        %v6822 = vpack.c.b16 %v6806, %v6806
        %v6823 = vpack.c.b16 %v6807, %v6807
        %v6824 = vpack.c.b16 %v6808, %v6808
        %v6825 = vpack.c.b16 %v6809, %v6809
        %v6826 = vpack.c.b16 %v6810, %v6810
        %v6827 = vpack.c.b16 %v6811, %v6811
        %v6828 = vpack.c.b16 %v6812, %v6812
        %v6829 = vpack.c.b16 %v6813, %v6813
        %v6830 = vpack.c.b16 %v6814, %v6814
        %v6831 = vpack.c.b16 %v6815, %v6815
        %v6832 = vpack.c.b16 %v6816, %v6816
        %v6833 = vpack.c.b16 %v6817, %v6817
        %v6834 = vpack.c.b16 %v6818, %v6818
        %v6835 = vpack.c.b16 %v6819, %v6819
        %6852 = vst [vmem:[%s408] sm:$0xf] %v6820
        %6853 = vst [vmem:[%s408 + $0x4] sm:$0xf] %v6821
        %6854 = vst [vmem:[%s408 + $0x8] sm:$0xf] %v6822
        %6855 = vst [vmem:[%s408 + $0xc] sm:$0xf] %v6823
        %6856 = vst [vmem:[%s408 + $0x10] sm:$0xf] %v6824
        %6857 = vst [vmem:[%s408 + $0x14] sm:$0xf] %v6825
        %6858 = vst [vmem:[%s408 + $0x18] sm:$0xf] %v6826
        %6859 = vst [vmem:[%s408 + $0x1c] sm:$0xf] %v6827
        %6860 = vst [vmem:[%s408 + $0x20] sm:$0xf] %v6828
        %6861 = vst [vmem:[%s408 + $0x24] sm:$0xf] %v6829
        %6862 = vst [vmem:[%s408 + $0x28] sm:$0xf] %v6830
        %6863 = vst [vmem:[%s408 + $0x2c] sm:$0xf] %v6831
        %6864 = vst [vmem:[%s408 + $0x30] sm:$0xf] %v6832
        %6865 = vst [vmem:[%s408 + $0x34] sm:$0xf] %v6833
        %6866 = vst [vmem:[%s408 + $0x38] sm:$0xf] %v6834
        %6867 = vst [vmem:[%s408 + $0x3c] sm:$0xf] %v6835
        %v6868 = vld [vmem:[#allocation9] sm:$0xf]
        %v6869 = vld [vmem:[#allocation9 + $0x4] sm:$0xf]
        %v6870 = vld [vmem:[#allocation9 + $0x8] sm:$0xf]
        %v6871 = vld [vmem:[#allocation9 + $0xc] sm:$0xf]
        %v6872 = vld [vmem:[#allocation9 + $0x10] sm:$0xf]
        %v6873 = vld [vmem:[#allocation9 + $0x14] sm:$0xf]
        %v6874 = vld [vmem:[#allocation9 + $0x18] sm:$0xf]
        %v6875 = vld [vmem:[#allocation9 + $0x1c] sm:$0xf]
        %v6876 = vld [vmem:[#allocation9 + $0x20] sm:$0xf]
        %v6877 = vld [vmem:[#allocation9 + $0x24] sm:$0xf]
        %v6878 = vld [vmem:[#allocation9 + $0x28] sm:$0xf]
        %v6879 = vld [vmem:[#allocation9 + $0x2c] sm:$0xf]
        %v6880 = vld [vmem:[#allocation9 + $0x30] sm:$0xf]
        %v6881 = vld [vmem:[#allocation9 + $0x34] sm:$0xf]
        %v6882 = vld [vmem:[#allocation9 + $0x38] sm:$0xf]
        %v6883 = vld [vmem:[#allocation9 + $0x3c] sm:$0xf]
        %v6884 = vld [vmem:[%s6] sm:$0x1]
        %v6886 = vlaneseq
        %v6887 = vshrl.u32 %v6886, 7
        %v6888 = vsub.s32 0, %v6887
        %v6889 = vrot.slane %v6884, %v6888
        %v6907 = vunpack.c.l.b16 %v6868
        %v6908 = vunpack.c.l.b16 %v6869
        %v6909 = vunpack.c.l.b16 %v6870
        %v6910 = vunpack.c.l.b16 %v6871
        %v6911 = vunpack.c.l.b16 %v6872
        %v6912 = vunpack.c.l.b16 %v6873
        %v6913 = vunpack.c.l.b16 %v6874
        %v6914 = vunpack.c.l.b16 %v6875
        %v6915 = vunpack.c.l.b16 %v6876
        %v6916 = vunpack.c.l.b16 %v6877
        %v6917 = vunpack.c.l.b16 %v6878
        %v6918 = vunpack.c.l.b16 %v6879
        %v6919 = vunpack.c.l.b16 %v6880
        %v6920 = vunpack.c.l.b16 %v6881
        %v6921 = vunpack.c.l.b16 %v6882
        %v6922 = vunpack.c.l.b16 %v6883
        %v6923 = vpack.c.b16 %v6908, %v6907
        %v6924 = vpack.c.b16 %v6910, %v6909
        %v6925 = vpack.c.b16 %v6912, %v6911
        %v6926 = vpack.c.b16 %v6914, %v6913
        %v6927 = vpack.c.b16 %v6916, %v6915
        %v6928 = vpack.c.b16 %v6918, %v6917
        %v6929 = vpack.c.b16 %v6920, %v6919
        %v6930 = vpack.c.b16 %v6922, %v6921
        %6939 = vmatprep.subr.bf16.mxu0 0
        %6940 = vmatpush1.bf16.msra.mxu0 %v6923
        %6941 = vmatprep.subr.bf16.mxu0 0
        %6942 = vmatpush1.bf16.msra.mxu0 %v6924
        %6943 = vmatprep.subr.bf16.mxu0 0
        %6944 = vmatpush1.bf16.msra.mxu0 %v6925
        %6945 = vmatprep.subr.bf16.mxu0 0
        %6946 = vmatpush1.bf16.msra.mxu0 %v6926
        %6947 = vmatprep.subr.bf16.mxu0 0
        %6948 = vmatpush1.bf16.msra.mxu0 %v6927
        %6949 = vmatprep.subr.bf16.mxu0 0
        %6950 = vmatpush1.bf16.msra.mxu0 %v6928
        %6951 = vmatprep.subr.bf16.mxu0 0
        %6952 = vmatpush1.bf16.msra.mxu0 %v6929
        %6953 = vmatprep.subr.bf16.mxu0 0
        %6954 = vmatpush1.bf16.msra.mxu0 %v6930
        %6955 = vmatprep.subr.bf16.mxu0 0
        %6956 = vmatpush1.bf16.msra.mxu0 0
        %6957 = vmatprep.subr.bf16.mxu0 0
        %6958 = vmatpush1.bf16.msra.mxu0 0
        %6959 = vmatprep.subr.bf16.mxu0 0
        %6960 = vmatpush1.bf16.msra.mxu0 0
        %6961 = vmatprep.subr.bf16.mxu0 0
        %6962 = vmatpush1.bf16.msra.mxu0 0
        %6963 = vmatprep.subr.bf16.mxu0 0
        %6964 = vmatpush1.bf16.msra.mxu0 0
        %6965 = vmatprep.subr.bf16.mxu0 0
        %6966 = vmatpush1.bf16.msra.mxu0 0
        %6967 = vmatprep.subr.bf16.mxu0 0
        %6968 = vmatpush1.bf16.msra.mxu0 0
        %6969 = vmatprep.subr.bf16.mxu0 0
        %6970 = vmatpush1.bf16.msra.mxu0 0
        %6971 = vmatprep.mubr.bf16.mxu0 0
        %6972 = vmatmul.mubr.bf16.gmra.mrb[0].mxu0 %v6332
        %v6973 = vpop.f32.mrb[0].mxu0
        %v6974 = vadd.f32 %v6889, %v6973
        %v6975 = vpop.f32.mrb[0].mxu0
        %v6976 = vpop.f32.mrb[0].mxu0
        %v6977 = vadd.f32 %v6889, %v6976
        %v6978 = vpop.f32.mrb[0].mxu0
        %6979 = vmatprep.mubr.bf16.mxu0 0
        %6980 = vmatmul.mubr.bf16.gmra.mrb[0].mxu0 %v6333
        %v6981 = vpop.f32.mrb[0].mxu0
        %v6982 = vadd.f32 %v6889, %v6981
        %v6983 = vpop.f32.mrb[0].mxu0
        %v6984 = vpop.f32.mrb[0].mxu0
        %v6985 = vadd.f32 %v6889, %v6984
        %v6986 = vpop.f32.mrb[0].mxu0
        %6987 = vmatprep.mubr.bf16.mxu0 0
        %6988 = vmatmul.mubr.bf16.gmra.mrb[0].mxu0 %v6334
        %v6989 = vpop.f32.mrb[0].mxu0
        %v6990 = vadd.f32 %v6889, %v6989
        %v6991 = vpop.f32.mrb[0].mxu0
        %v6992 = vpop.f32.mrb[0].mxu0
        %v6993 = vadd.f32 %v6889, %v6992
        %v6994 = vpop.f32.mrb[0].mxu0
        %6995 = vmatprep.mubr.bf16.mxu0 0
        %6996 = vmatmul.mubr.bf16.gmra.mrb[0].mxu0 %v6335
        %v6997 = vpop.f32.mrb[0].mxu0
        %v6998 = vadd.f32 %v6889, %v6997
        %v6999 = vpop.f32.mrb[0].mxu0
        %v7000 = vpop.f32.mrb[0].mxu0
        %v7001 = vadd.f32 %v6889, %v7000
        %v7002 = vpop.f32.mrb[0].mxu0
        %7003 = vmatprep.mubr.bf16.mxu0 0
        %7004 = vmatmul.mubr.bf16.gmra.mrb[0].mxu0 %v6336
        %v7005 = vpop.f32.mrb[0].mxu0
        %v7006 = vadd.f32 %v6889, %v7005
        %v7007 = vpop.f32.mrb[0].mxu0
        %v7008 = vpop.f32.mrb[0].mxu0
        %v7009 = vadd.f32 %v6889, %v7008
        %v7010 = vpop.f32.mrb[0].mxu0
        %7011 = vmatprep.mubr.bf16.mxu0 0
        %7012 = vmatmul.mubr.bf16.gmra.mrb[0].mxu0 %v6337
        %v7013 = vpop.f32.mrb[0].mxu0
        %v7014 = vadd.f32 %v6889, %v7013
        %v7015 = vpop.f32.mrb[0].mxu0
        %v7016 = vpop.f32.mrb[0].mxu0
        %v7017 = vadd.f32 %v6889, %v7016
        %v7018 = vpop.f32.mrb[0].mxu0
        %7019 = vmatprep.mubr.bf16.mxu0 0
        %7020 = vmatmul.mubr.bf16.gmra.mrb[0].mxu0 %v6338
        %v7021 = vpop.f32.mrb[0].mxu0
        %v7022 = vadd.f32 %v6889, %v7021
        %v7023 = vpop.f32.mrb[0].mxu0
        %v7024 = vpop.f32.mrb[0].mxu0
        %v7025 = vadd.f32 %v6889, %v7024
        %v7026 = vpop.f32.mrb[0].mxu0
        %7027 = vmatprep.mubr.bf16.mxu0 0
        %7028 = vmatmul.mubr.bf16.gmra.mrb[0].mxu0 %v6339
        %v7029 = vpop.f32.mrb[0].mxu0
        %v7030 = vadd.f32 %v6889, %v7029
        %v7031 = vpop.f32.mrb[0].mxu0
        %v7032 = vpop.f32.mrb[0].mxu0
        %v7033 = vadd.f32 %v6889, %v7032
        %v7034 = vpop.f32.mrb[0].mxu0
        %7035 = vdwg.mxu0
        %v7036 = vmax.f32 %v6974, 0.0
        %v7037 = vmax.f32 %v6977, 0.0
        %v7038 = vmax.f32 %v6982, 0.0
        %v7039 = vmax.f32 %v6985, 0.0
        %v7040 = vmax.f32 %v6990, 0.0
        %v7041 = vmax.f32 %v6993, 0.0
        %v7042 = vmax.f32 %v6998, 0.0
        %v7043 = vmax.f32 %v7001, 0.0
        %v7044 = vmax.f32 %v7006, 0.0
        %v7045 = vmax.f32 %v7009, 0.0
        %v7046 = vmax.f32 %v7014, 0.0
        %v7047 = vmax.f32 %v7017, 0.0
        %v7048 = vmax.f32 %v7022, 0.0
        %v7049 = vmax.f32 %v7025, 0.0
        %v7050 = vmax.f32 %v7030, 0.0
        %v7051 = vmax.f32 %v7033, 0.0
        %v7052 = vld [vmem:[%s358 + $0x40] sm:$0xf]
        %v7053 = vld [vmem:[%s358 + $0x44] sm:$0xf]
        %v7054 = vld [vmem:[%s358 + $0x48] sm:$0xf]
        %v7055 = vld [vmem:[%s358 + $0x4c] sm:$0xf]
        %v7056 = vld [vmem:[%s358 + $0x50] sm:$0xf]
        %v7057 = vld [vmem:[%s358 + $0x54] sm:$0xf]
        %v7058 = vld [vmem:[%s358 + $0x58] sm:$0xf]
        %v7059 = vld [vmem:[%s358 + $0x5c] sm:$0xf]
        %v7060 = vld [vmem:[%s358 + $0x60] sm:$0xf]
        %v7061 = vld [vmem:[%s358 + $0x64] sm:$0xf]
        %v7062 = vld [vmem:[%s358 + $0x68] sm:$0xf]
        %v7063 = vld [vmem:[%s358 + $0x6c] sm:$0xf]
        %v7064 = vld [vmem:[%s358 + $0x70] sm:$0xf]
        %v7065 = vld [vmem:[%s358 + $0x74] sm:$0xf]
        %v7066 = vld [vmem:[%s358 + $0x78] sm:$0xf]
        %v7067 = vld [vmem:[%s358 + $0x7c] sm:$0xf]
        %v7068 = vld [vmem:[#allocation11] sm:$0xf]
        %v7069 = vld [vmem:[#allocation11 + $0x4] sm:$0xf]
        %v7070 = vld [vmem:[#allocation11 + $0x8] sm:$0xf]
        %v7071 = vld [vmem:[#allocation11 + $0xc] sm:$0xf]
        %v7072 = vld [vmem:[#allocation11 + $0x10] sm:$0xf]
        %v7073 = vld [vmem:[#allocation11 + $0x14] sm:$0xf]
        %v7074 = vld [vmem:[#allocation11 + $0x18] sm:$0xf]
        %v7075 = vld [vmem:[#allocation11 + $0x1c] sm:$0xf]
        %v7076 = vld [vmem:[#allocation11 + $0x20] sm:$0xf]
        %v7077 = vld [vmem:[#allocation11 + $0x24] sm:$0xf]
        %v7078 = vld [vmem:[#allocation11 + $0x28] sm:$0xf]
        %v7079 = vld [vmem:[#allocation11 + $0x2c] sm:$0xf]
        %v7080 = vld [vmem:[#allocation11 + $0x30] sm:$0xf]
        %v7081 = vld [vmem:[#allocation11 + $0x34] sm:$0xf]
        %v7082 = vld [vmem:[#allocation11 + $0x38] sm:$0xf]
        %v7083 = vld [vmem:[#allocation11 + $0x3c] sm:$0xf]
        %v7084 = vld [vmem:[%s8] sm:$0x1]
        %v7086 = vlaneseq
        %v7087 = vshrl.u32 %v7086, 7
        %v7088 = vsub.s32 0, %v7087
        %v7089 = vrot.slane %v7084, %v7088
        %v7107 = vunpack.c.l.b16 %v7052
        %v7108 = vunpack.c.l.b16 %v7053
        %v7109 = vunpack.c.l.b16 %v7054
        %v7110 = vunpack.c.l.b16 %v7055
        %v7111 = vunpack.c.l.b16 %v7056
        %v7112 = vunpack.c.l.b16 %v7057
        %v7113 = vunpack.c.l.b16 %v7058
        %v7114 = vunpack.c.l.b16 %v7059
        %v7115 = vunpack.c.l.b16 %v7060
        %v7116 = vunpack.c.l.b16 %v7061
        %v7117 = vunpack.c.l.b16 %v7062
        %v7118 = vunpack.c.l.b16 %v7063
        %v7119 = vunpack.c.l.b16 %v7064
        %v7120 = vunpack.c.l.b16 %v7065
        %v7121 = vunpack.c.l.b16 %v7066
        %v7122 = vunpack.c.l.b16 %v7067
        %v7123 = vpack.c.b16 %v7108, %v7107
        %v7124 = vpack.c.b16 %v7110, %v7109
        %v7125 = vpack.c.b16 %v7112, %v7111
        %v7126 = vpack.c.b16 %v7114, %v7113
        %v7127 = vpack.c.b16 %v7116, %v7115
        %v7128 = vpack.c.b16 %v7118, %v7117
        %v7129 = vpack.c.b16 %v7120, %v7119
        %v7130 = vpack.c.b16 %v7122, %v7121
        %v7155 = vunpack.c.l.b16 %v7068
        %v7156 = vunpack.c.l.b16 %v7069
        %v7157 = vunpack.c.l.b16 %v7070
        %v7158 = vunpack.c.l.b16 %v7071
        %v7159 = vunpack.c.l.b16 %v7072
        %v7160 = vunpack.c.l.b16 %v7073
        %v7161 = vunpack.c.l.b16 %v7074
        %v7162 = vunpack.c.l.b16 %v7075
        %v7163 = vunpack.c.l.b16 %v7076
        %v7164 = vunpack.c.l.b16 %v7077
        %v7165 = vunpack.c.l.b16 %v7078
        %v7166 = vunpack.c.l.b16 %v7079
        %v7167 = vunpack.c.l.b16 %v7080
        %v7168 = vunpack.c.l.b16 %v7081
        %v7169 = vunpack.c.l.b16 %v7082
        %v7170 = vunpack.c.l.b16 %v7083
        %v7171 = vpack.c.b16 %v7156, %v7155
        %v7172 = vpack.c.b16 %v7158, %v7157
        %v7173 = vpack.c.b16 %v7160, %v7159
        %v7174 = vpack.c.b16 %v7162, %v7161
        %v7175 = vpack.c.b16 %v7164, %v7163
        %v7176 = vpack.c.b16 %v7166, %v7165
        %v7177 = vpack.c.b16 %v7168, %v7167
        %v7178 = vpack.c.b16 %v7170, %v7169
        %7187 = vmatprep.subr.bf16.mxu0 0
        %7188 = vmatpush1.bf16.msra.mxu0 %v7171
        %7189 = vmatprep.subr.bf16.mxu0 0
        %7190 = vmatpush1.bf16.msra.mxu0 %v7172
        %7191 = vmatprep.subr.bf16.mxu0 0
        %7192 = vmatpush1.bf16.msra.mxu0 %v7173
        %7193 = vmatprep.subr.bf16.mxu0 0
        %7194 = vmatpush1.bf16.msra.mxu0 %v7174
        %7195 = vmatprep.subr.bf16.mxu0 0
        %7196 = vmatpush1.bf16.msra.mxu0 %v7175
        %7197 = vmatprep.subr.bf16.mxu0 0
        %7198 = vmatpush1.bf16.msra.mxu0 %v7176
        %7199 = vmatprep.subr.bf16.mxu0 0
        %7200 = vmatpush1.bf16.msra.mxu0 %v7177
        %7201 = vmatprep.subr.bf16.mxu0 0
        %7202 = vmatpush1.bf16.msra.mxu0 %v7178
        %7203 = vmatprep.subr.bf16.mxu0 0
        %7204 = vmatpush1.bf16.msra.mxu0 0
        %7205 = vmatprep.subr.bf16.mxu0 0
        %7206 = vmatpush1.bf16.msra.mxu0 0
        %7207 = vmatprep.subr.bf16.mxu0 0
        %7208 = vmatpush1.bf16.msra.mxu0 0
        %7209 = vmatprep.subr.bf16.mxu0 0
        %7210 = vmatpush1.bf16.msra.mxu0 0
        %7211 = vmatprep.subr.bf16.mxu0 0
        %7212 = vmatpush1.bf16.msra.mxu0 0
        %7213 = vmatprep.subr.bf16.mxu0 0
        %7214 = vmatpush1.bf16.msra.mxu0 0
        %7215 = vmatprep.subr.bf16.mxu0 0
        %7216 = vmatpush1.bf16.msra.mxu0 0
        %7217 = vmatprep.subr.bf16.mxu0 0
        %7218 = vmatpush1.bf16.msra.mxu0 0
        %7219 = vmatprep.mubr.bf16.mxu0 0
        %7220 = vmatmul.mubr.bf16.gmra.mrb[0].mxu0 %v7123
        %v7221 = vpop.f32.mrb[0].mxu0
        %v7222 = vadd.f32 %v7089, %v7221
        %v7223 = vpop.f32.mrb[0].mxu0
        %v7224 = vpop.f32.mrb[0].mxu0
        %v7225 = vadd.f32 %v7089, %v7224
        %v7226 = vpop.f32.mrb[0].mxu0
        %7227 = vmatprep.mubr.bf16.mxu0 0
        %7228 = vmatmul.mubr.bf16.gmra.mrb[0].mxu0 %v7124
        %v7229 = vpop.f32.mrb[0].mxu0
        %v7230 = vadd.f32 %v7089, %v7229
        %v7231 = vpop.f32.mrb[0].mxu0
        %v7232 = vpop.f32.mrb[0].mxu0
        %v7233 = vadd.f32 %v7089, %v7232
        %v7234 = vpop.f32.mrb[0].mxu0
        %7235 = vmatprep.mubr.bf16.mxu0 0
        %7236 = vmatmul.mubr.bf16.gmra.mrb[0].mxu0 %v7125
        %v7237 = vpop.f32.mrb[0].mxu0
        %v7238 = vadd.f32 %v7089, %v7237
        %v7239 = vpop.f32.mrb[0].mxu0
        %v7240 = vpop.f32.mrb[0].mxu0
        %v7241 = vadd.f32 %v7089, %v7240
        %v7242 = vpop.f32.mrb[0].mxu0
        %7243 = vmatprep.mubr.bf16.mxu0 0
        %7244 = vmatmul.mubr.bf16.gmra.mrb[0].mxu0 %v7126
        %v7245 = vpop.f32.mrb[0].mxu0
        %v7246 = vadd.f32 %v7089, %v7245
        %v7247 = vpop.f32.mrb[0].mxu0
        %v7248 = vpop.f32.mrb[0].mxu0
        %v7249 = vadd.f32 %v7089, %v7248
        %v7250 = vpop.f32.mrb[0].mxu0
        %7251 = vmatprep.mubr.bf16.mxu0 0
        %7252 = vmatmul.mubr.bf16.gmra.mrb[0].mxu0 %v7127
        %v7253 = vpop.f32.mrb[0].mxu0
        %v7254 = vadd.f32 %v7089, %v7253
        %v7255 = vpop.f32.mrb[0].mxu0
        %v7256 = vpop.f32.mrb[0].mxu0
        %v7257 = vadd.f32 %v7089, %v7256
        %v7258 = vpop.f32.mrb[0].mxu0
        %7259 = vmatprep.mubr.bf16.mxu0 0
        %7260 = vmatmul.mubr.bf16.gmra.mrb[0].mxu0 %v7128
        %v7261 = vpop.f32.mrb[0].mxu0
        %v7262 = vadd.f32 %v7089, %v7261
        %v7263 = vpop.f32.mrb[0].mxu0
        %v7264 = vpop.f32.mrb[0].mxu0
        %v7265 = vadd.f32 %v7089, %v7264
        %v7266 = vpop.f32.mrb[0].mxu0
        %7267 = vmatprep.mubr.bf16.mxu0 0
        %7268 = vmatmul.mubr.bf16.gmra.mrb[0].mxu0 %v7129
        %v7269 = vpop.f32.mrb[0].mxu0
        %v7270 = vadd.f32 %v7089, %v7269
        %v7271 = vpop.f32.mrb[0].mxu0
        %v7272 = vpop.f32.mrb[0].mxu0
        %v7273 = vadd.f32 %v7089, %v7272
        %v7274 = vpop.f32.mrb[0].mxu0
        %7275 = vmatprep.mubr.bf16.mxu0 0
        %7276 = vmatmul.mubr.bf16.gmra.mrb[0].mxu0 %v7130
        %v7277 = vpop.f32.mrb[0].mxu0
        %v7278 = vadd.f32 %v7089, %v7277
        %v7279 = vpop.f32.mrb[0].mxu0
        %v7280 = vpop.f32.mrb[0].mxu0
        %v7281 = vadd.f32 %v7089, %v7280
        %v7282 = vpop.f32.mrb[0].mxu0
        %7283 = vdwg.mxu0
        %v7284 = vadd.f32 %v7036, %v7222
        %v7285 = vadd.f32 %v7037, %v7225
        %v7286 = vadd.f32 %v7038, %v7230
        %v7287 = vadd.f32 %v7039, %v7233
        %v7288 = vadd.f32 %v7040, %v7238
        %v7289 = vadd.f32 %v7041, %v7241
        %v7290 = vadd.f32 %v7042, %v7246
        %v7291 = vadd.f32 %v7043, %v7249
        %v7292 = vadd.f32 %v7044, %v7254
        %v7293 = vadd.f32 %v7045, %v7257
        %v7294 = vadd.f32 %v7046, %v7262
        %v7295 = vadd.f32 %v7047, %v7265
        %v7296 = vadd.f32 %v7048, %v7270
        %v7297 = vadd.f32 %v7049, %v7273
        %v7298 = vadd.f32 %v7050, %v7278
        %v7299 = vadd.f32 %v7051, %v7281
        %v7300 = vmax.f32 %v7284, 0.0
        %v7301 = vmax.f32 %v7285, 0.0
        %v7302 = vmax.f32 %v7286, 0.0
        %v7303 = vmax.f32 %v7287, 0.0
        %v7304 = vmax.f32 %v7288, 0.0
        %v7305 = vmax.f32 %v7289, 0.0
        %v7306 = vmax.f32 %v7290, 0.0
        %v7307 = vmax.f32 %v7291, 0.0
        %v7308 = vmax.f32 %v7292, 0.0
        %v7309 = vmax.f32 %v7293, 0.0
        %v7310 = vmax.f32 %v7294, 0.0
        %v7311 = vmax.f32 %v7295, 0.0
        %v7312 = vmax.f32 %v7296, 0.0
        %v7313 = vmax.f32 %v7297, 0.0
        %v7314 = vmax.f32 %v7298, 0.0
        %v7315 = vmax.f32 %v7299, 0.0
        %v7316 = vpack.c.bf16 %v7301, %v7300
        %v7317 = vpack.c.bf16 %v7303, %v7302
        %v7318 = vpack.c.bf16 %v7305, %v7304
        %v7319 = vpack.c.bf16 %v7307, %v7306
        %v7320 = vpack.c.bf16 %v7309, %v7308
        %v7321 = vpack.c.bf16 %v7311, %v7310
        %v7322 = vpack.c.bf16 %v7313, %v7312
        %v7323 = vpack.c.bf16 %v7315, %v7314
        %v7332 = vunpack.c.l.b16 %v7316
        %v7333 = vunpack.c.h.b16 %v7316
        %v7334 = vunpack.c.l.b16 %v7317
        %v7335 = vunpack.c.h.b16 %v7317
        %v7336 = vunpack.c.l.b16 %v7318
        %v7337 = vunpack.c.h.b16 %v7318
        %v7338 = vunpack.c.l.b16 %v7319
        %v7339 = vunpack.c.h.b16 %v7319
        %v7340 = vunpack.c.l.b16 %v7320
        %v7341 = vunpack.c.h.b16 %v7320
        %v7342 = vunpack.c.l.b16 %v7321
        %v7343 = vunpack.c.h.b16 %v7321
        %v7344 = vunpack.c.l.b16 %v7322
        %v7345 = vunpack.c.h.b16 %v7322
        %v7346 = vunpack.c.l.b16 %v7323
        %v7347 = vunpack.c.h.b16 %v7323
        %v7348 = vpack.c.b16 %v7332, %v7332
        %v7349 = vpack.c.b16 %v7333, %v7333
        %v7350 = vpack.c.b16 %v7334, %v7334
        %v7351 = vpack.c.b16 %v7335, %v7335
        %v7352 = vpack.c.b16 %v7336, %v7336
        %v7353 = vpack.c.b16 %v7337, %v7337
        %v7354 = vpack.c.b16 %v7338, %v7338
        %v7355 = vpack.c.b16 %v7339, %v7339
        %v7356 = vpack.c.b16 %v7340, %v7340
        %v7357 = vpack.c.b16 %v7341, %v7341
        %v7358 = vpack.c.b16 %v7342, %v7342
        %v7359 = vpack.c.b16 %v7343, %v7343
        %v7360 = vpack.c.b16 %v7344, %v7344
        %v7361 = vpack.c.b16 %v7345, %v7345
        %v7362 = vpack.c.b16 %v7346, %v7346
        %v7363 = vpack.c.b16 %v7347, %v7347
        %7380 = vst [vmem:[%s408 + $0x40] sm:$0xf] %v7348
        %7381 = vst [vmem:[%s408 + $0x44] sm:$0xf] %v7349
        %7382 = vst [vmem:[%s408 + $0x48] sm:$0xf] %v7350
        %7383 = vst [vmem:[%s408 + $0x4c] sm:$0xf] %v7351
        %7384 = vst [vmem:[%s408 + $0x50] sm:$0xf] %v7352
        %7385 = vst [vmem:[%s408 + $0x54] sm:$0xf] %v7353
        %7386 = vst [vmem:[%s408 + $0x58] sm:$0xf] %v7354
        %7387 = vst [vmem:[%s408 + $0x5c] sm:$0xf] %v7355
        %7388 = vst [vmem:[%s408 + $0x60] sm:$0xf] %v7356
        %7389 = vst [vmem:[%s408 + $0x64] sm:$0xf] %v7357
        %7390 = vst [vmem:[%s408 + $0x68] sm:$0xf] %v7358
        %7391 = vst [vmem:[%s408 + $0x6c] sm:$0xf] %v7359
        %7392 = vst [vmem:[%s408 + $0x70] sm:$0xf] %v7360
        %7393 = vst [vmem:[%s408 + $0x74] sm:$0xf] %v7361
        %7394 = vst [vmem:[%s408 + $0x78] sm:$0xf] %v7362
        %7395 = vst [vmem:[%s408 + $0x7c] sm:$0xf] %v7363
        %s7396 = sand.u32 %s230, 1
        %s7397 = scalar_lea.sflag [#allocation5], %s7396
        %s7398 = sand.u32 %s230, 1
        %s7399 = smul.addr %s7398, 128
        %s7400 = scalar_lea.vmem [#allocation12], %s7399
        // Predicated region
        $region77: #{tpu_custom_call.1} parent=55 // pred_check
          %p7401 = pneg %p240
        $region78: #{tpu_custom_call.1} parent=55 // pred_check_branch
          %7403 = sbr.rel (%p7401) target = $region80
        $region79: #{tpu_custom_call.1} parent=55 // pred_region
          %s7404 = smul.u32 32, %s28
          %s7406 = ssub.s32 2048, 2048
          %7407 = vsyncadd %s7397, %s7406
          %s7408 = smul.addr %s7404, 64
          %s7409 = scalar_lea.hbm %s9, %s7408
          %s7410 = sshll.u32 %s7400, 4
          %s7411 = int_to_ptr.vmem [resolvable:$true] %s7410
          %7416 = dma.vmem_to_hbm [thread:$0]  %s7411, 2048, %s7409, %s7397, 64, 64, 4
        $region80: #{tpu_custom_call.1} parent=55 // pred_fallthru
          _
      $region56: #{tpu_custom_call.1} parent=5 // pred_fallthru
        _
      %p7417 = scmp.le.s32.totalorder 2, %s23
      // Predicated region
      $region81: #{tpu_custom_call.1} parent=5 // pred_check
        %p7418 = pneg %p7417
      $region82: #{tpu_custom_call.1} parent=5 // pred_check_branch
        %7420 = sbr.rel (%p7418) target = $region84
      $region83: #{tpu_custom_call.1} parent=5 // pred_region
        %s7421 = ssub.s32 %s23, 2
        // Predicated region
        $region85: #{tpu_custom_call.1} parent=83 // pred_check
          %p7422 = pneg %p246
        $region86: #{tpu_custom_call.1} parent=83 // pred_check_branch
          %7424 = sbr.rel (%p7422) target = $region88
        $region87: #{tpu_custom_call.1} parent=83 // pred_region
          %s7425 = sand.u32 %s231, 1
          %s7426 = scalar_lea.sflag [#allocation5], %s7425
          %s7427 = sand.u32 %s231, 1
          %s7428 = smul.addr %s7427, 128
          %s7429 = scalar_lea.vmem [#allocation12], %s7428
          %7430 = dma.done %s7426, 2048
        $region88: #{tpu_custom_call.1} parent=83 // pred_fallthru
          _
      $region84: #{tpu_custom_call.1} parent=5 // pred_fallthru
        _
    $region6: #{tpu_custom_call.1} parent=1 // loop_footer
      %s27 = sadd.s32 1, %s23
    $region7: #{tpu_custom_call.1} parent=1 // loop_footer_branch
      %22 = sbr.rel target = $region3
    $region8: #{tpu_custom_call.1} parent=1 // loop_exit
      _
    %7431 = vsyncpa [#allocation4], 1
    %s7432 = scalar_lea.sflag [#allocation4], 1
    %7433 = vsyncpa %s7432, 1
    %7434 = vsyncpa [#allocation7], 1
    %7435 = vsyncpa [#allocation10], 1
    %7436 = vsyncpa [#allocation5], 1
    %s7437 = scalar_lea.sflag [#allocation5], 1
    %7438 = vsyncpa %s7437, 1

</llo_original>
